<compile_context>
chip_gen: v7x
topology: tpu7x:2x2x1
jax: 0.10.0
libtpu: 0.0.40
codegen_flags: <defaults>
</compile_context>

<pallas_src>
import math
from functools import partial

import jax
import jax.numpy as jnp
from jax.experimental import pallas as pl
from jax.experimental.pallas import tpu as pltpu


# ----------------------------------------------------------------------------
# Fused conv kernel: tap-reduction matmuls + BN + Mish + residual, one store.
# ----------------------------------------------------------------------------
def _make_conv_kernel(taps, wout, tile_r, act, has_res):
    """taps: tuple of (slab_index, col_base, weight_tap_index) -- all static."""

    def kernel(xs_ref, w_ref, s_ref, b_ref, *rest):
        if has_res:
            r_ref, o_ref = rest
        else:
            (o_ref,) = rest
        scale = s_ref[...]  # (1, tile_n) f32
        bias = b_ref[...]
        for rloc in range(tile_r):  # static unroll over output rows in this tile
            acc = None
            for slab, base, t in taps:  # static unroll over the KH*KW taps
                a = xs_ref[slab, rloc, base:base + wout, :]          # (wout, Cin) bf16
                d = jnp.dot(a, w_ref[t], preferred_element_type=jnp.float32)
                acc = d if acc is None else acc + d
            acc = acc * scale + bias
            if act == "mish":
                # mish(x) = x * tanh(softplus(x)) = x * (1 - 2/(e^{2x} + 2 e^x + 2))
                e = jnp.exp(jnp.minimum(acc, 30.0))
                acc = acc * (1.0 - 2.0 * pl.reciprocal(e * (e + 2.0) + 2.0, approx=True))
            if has_res:
                acc = acc + r_ref[rloc].astype(jnp.float32)
            o_ref[rloc] = acc.astype(o_ref.dtype)

    return kernel


def _row_tile(R, wout, target_rows=512, max_unroll=8):
    """Largest divisor of R with tile_r*wout <= ~target_rows (and bounded unroll)."""
    cap = max(1, min(max_unroll, target_rows // max(1, wout)))
    cap = min(cap, R)
    best = 1
    for d in range(1, cap + 1):
        if R % d == 0:
            best = d
    return best


# ----------------------------------------------------------------------------
# Conv + folded BN + activation (+ fused residual add)
# ----------------------------------------------------------------------------
@partial(jax.jit, static_argnames=("stride", "padding", "dilation", "act"))
def conv2d_bn_act(x, w, scale, bias, residual=None, *, stride, padding, dilation, act):
    """x: (N,H,W,Cin).  w: (KH,KW,Cin,Cout) f32.  scale,bias: (Cout,) f32.
    residual: optional (N,Hout,Wout,Cout) added to the conv+BN output in-kernel.
    Returns (N,Hout,Wout,Cout) bf16."""
    N, H, W, Cin = x.shape
    KH, KW, _, Cout = w.shape
    sh, sw = stride
    ph, pw = padding
    dh, dw = dilation
    Hout = (H + 2 * ph - dh * (KH - 1) - 1) // sh + 1
    Wout = (W + 2 * pw - dw * (KW - 1) - 1) // sw + 1
    R = N * Hout
    M = R * Wout

    # --- glue: pad once, build KH*sw "phase" slabs (H-offset + both strides folded) ---
    # Each slab is (R, Wd, Cin); tap (kh,kw) reads a *contiguous* width-Wout window of
    # slab kh*sw + (kw*dw)%sw at column offset (kw*dw)//sw.  Total materialized bytes
    # ~KH x activation (vs 9x for full im2col) and no concat copies.
    x = x.astype(jnp.bfloat16)
    xp = jnp.pad(x, ((0, 0), (ph, ph), (pw, pw), (0, 0)))
    if xp.shape[2] % sw:
        xp = jnp.pad(xp, ((0, 0), (0, 0), (0, sw - xp.shape[2] % sw), (0, 0)))
    Wd = xp.shape[2] // sw
    slabs = []
    for kh in range(KH):
        hs = jax.lax.slice(
            xp,
            (0, kh * dh, 0, 0),
            (N, kh * dh + sh * (Hout - 1) + 1, xp.shape[2], Cin),
            (1, sh, 1, 1),
        )
        hs = hs.reshape(R, Wd, sw, Cin)
        for p in range(sw):
            slabs.append(hs[:, :, p, :])
    xs = jnp.stack(slabs, axis=0)  # (KH*sw, R, Wd, Cin) bf16
    S = KH * sw

    taps = tuple(
        (kh * sw + (kw * dw) % sw, (kw * dw) // sw, kh * KW + kw)
        for kh in range(KH)
        for kw in range(KW)
    )

    K2 = KH * KW
    wr = w.reshape(K2, Cin, Cout).astype(jnp.bfloat16)
    s2 = scale.reshape(1, Cout).astype(jnp.float32)
    b2 = bias.reshape(1, Cout).astype(jnp.float32)

    # --- tiling: exact Cout (no padding); split to 256 only for 512-wide layers ---
    tile_n = 256 if (Cout % 256 == 0 and Cout > 256) else Cout
    tile_r = _row_tile(R, Wout)
    grid = (R // tile_r, Cout // tile_n)

    has_res = residual is not None
    inputs = [xs, wr, s2, b2]
    in_specs = [
        pl.BlockSpec((S, tile_r, Wd, Cin), lambda i, j: (0, i, 0, 0)),
        pl.BlockSpec((K2, Cin, tile_n), lambda i, j: (0, 0, j)),
        pl.BlockSpec((1, tile_n), lambda i, j: (0, j)),
        pl.BlockSpec((1, tile_n), lambda i, j: (0, j)),
    ]
    if has_res:
        inputs.append(residual.astype(jnp.bfloat16).reshape(R, Wout, Cout))
        in_specs.append(pl.BlockSpec((tile_r, Wout, tile_n), lambda i, j: (i, 0, j)))

    out_spec = pl.BlockSpec((tile_r, Wout, tile_n), lambda i, j: (i, 0, j))

    # VMEM request: ~3x the (double-buffered) per-step working set, clamped 32..64 MiB.
    work = (
        2 * S * tile_r * Wd * Cin
        + 2 * K2 * Cin * tile_n
        + (4 if has_res else 2) * tile_r * Wout * tile_n
        + 8 * Wout * tile_n
        + 8 * tile_n
    )
    vmem_limit = int(min(64 * 2 ** 20, max(32 * 2 ** 20, 3 * work)))

    cost = pl.CostEstimate(
        flops=2 * M * K2 * Cin * Cout,
        transcendentals=(2 * M * Cout) if act == "mish" else 0,
        bytes_accessed=2 * (S * R * Wd * Cin + K2 * Cin * Cout
                            + M * Cout * (2 if has_res else 1)) + 8 * Cout,
    )

    out = pl.pallas_call(
        _make_conv_kernel(taps, Wout, tile_r, act, has_res),
        out_shape=jax.ShapeDtypeStruct((R, Wout, Cout), jnp.bfloat16),
        grid_spec=pltpu.PrefetchScalarGridSpec(
            num_scalar_prefetch=0,
            grid=grid,
            in_specs=in_specs,
            out_specs=out_spec,
        ),
        compiler_params=pltpu.CompilerParams(
            dimension_semantics=("parallel", "parallel"),
            vmem_limit_bytes=vmem_limit,
        ),
        cost_estimate=cost,
    )(*inputs)

    return out.reshape(N, Hout, Wout, Cout)


# ----------------------------------------------------------------------------
# Deterministic parameter generation (synthetic weights, no checkpoint load)
# ----------------------------------------------------------------------------
class _ParamGen:
    def __init__(self, seed=0):
        self.key = jax.random.PRNGKey(seed)
        self.n = 0

    def _next(self):
        k = jax.random.fold_in(self.key, self.n)
        self.n += 1
        return k

    def conv(self, kh, kw, cin, cout):
        std = math.sqrt(2.0 / (kh * kw * cin))
        return std * jax.random.normal(self._next(), (kh, kw, cin, cout), jnp.float32)

    def bn(self, c, eps=1e-5):
        gamma = 1.0 + 0.1 * jax.random.normal(self._next(), (c,), jnp.float32)
        beta = 0.05 * jax.random.normal(self._next(), (c,), jnp.float32)
        mean = 0.02 * jax.random.normal(self._next(), (c,), jnp.float32)
        var = jnp.abs(1.0 + 0.1 * jax.random.normal(self._next(), (c,), jnp.float32))
        scale = gamma / jnp.sqrt(var + eps)
        bias = beta - mean * scale
        return scale, bias


def _convbn(pg, cin, cout, k, stride, pad, dilation):
    padding = dilation if dilation > 1 else pad
    w = pg.conv(k, k, cin, cout)
    scale, bias = pg.bn(cout)
    return dict(w=w, scale=scale, bias=bias,
                stride=(stride, stride), pad=(padding, padding), dil=(dilation, dilation))


def _conv_nobn(pg, cin, cout, k, stride, pad):
    w = pg.conv(k, k, cin, cout)
    return dict(w=w, scale=jnp.ones((cout,), jnp.float32),
                bias=jnp.zeros((cout,), jnp.float32),
                stride=(stride, stride), pad=(pad, pad), dil=(1, 1))


def _basic_block(pg, inplanes, planes, stride, pad, dilation, need_down):
    blk = dict(
        conv1=_convbn(pg, inplanes, planes, 3, stride, pad, dilation),
        conv2=_convbn(pg, planes, planes, 3, 1, pad, dilation),
        down=None,
    )
    if need_down:
        w = pg.conv(1, 1, inplanes, planes)
        scale, bias = pg.bn(planes)
        blk["down"] = dict(w=w, scale=scale, bias=bias,
                           stride=(stride, stride), pad=(0, 0), dil=(1, 1))
    return blk


def _make_layer(pg, inplanes, planes, blocks, stride, pad, dilation):
    need_down = (stride != 1) or (inplanes != planes)  # BasicBlock.expansion == 1
    layers = [_basic_block(pg, inplanes, planes, stride, pad, dilation, need_down)]
    for _ in range(1, blocks):
        layers.append(_basic_block(pg, planes, planes, 1, pad, dilation, False))
    return layers, planes


def init_feature_extraction(seed=0, concat_feature=False, concat_feature_channel=12):
    pg = _ParamGen(seed)
    p = {}
    p["firstconv"] = [
        _convbn(pg, 3, 32, 3, 2, 1, 1),
        _convbn(pg, 32, 32, 3, 1, 1, 1),
        _convbn(pg, 32, 32, 3, 1, 1, 1),
    ]
    inplanes = 32
    p["layer1"], inplanes = _make_layer(pg, inplanes, 32, 3, 1, 1, 1)
    p["layer2"], inplanes = _make_layer(pg, inplanes, 64, 16, 2, 1, 1)
    p["layer3"], inplanes = _make_layer(pg, inplanes, 128, 3, 1, 1, 1)
    p["layer4"], inplanes = _make_layer(pg, inplanes, 128, 3, 1, 1, 2)
    p["layer5"], inplanes = _make_layer(pg, inplanes, 192, 3, 2, 1, 1)
    p["layer7"], inplanes = _make_layer(pg, inplanes, 256, 3, 2, 1, 1)
    p["layer9"], inplanes = _make_layer(pg, inplanes, 512, 3, 2, 1, 1)
    p["gw2"] = [_convbn(pg, 192, 320, 3, 1, 1, 1), _conv_nobn(pg, 320, 320, 1, 1, 0)]
    p["gw3"] = [_convbn(pg, 256, 320, 3, 1, 1, 1), _conv_nobn(pg, 320, 320, 1, 1, 0)]
    p["gw4"] = [_convbn(pg, 512, 320, 3, 1, 1, 1), _conv_nobn(pg, 320, 320, 1, 1, 0)]
    p["layer11"] = [_convbn(pg, 320, 320, 3, 1, 1, 1), _conv_nobn(pg, 320, 320, 1, 1, 0)]
    p["layer_refine"] = [_convbn(pg, 320, 128, 3, 1, 1, 1), _convbn(pg, 128, 32, 1, 1, 0, 1)]
    if concat_feature:
        cc = concat_feature_channel
        p["lastconv"] = [_convbn(pg, 320, 128, 3, 1, 1, 1), _conv_nobn(pg, 128, cc, 1, 1, 0)]
        p["concat2"] = [_convbn(pg, 192, 128, 3, 1, 1, 1), _conv_nobn(pg, 128, cc, 1, 1, 0)]
        p["concat3"] = [_convbn(pg, 256, 128, 3, 1, 1, 1), _conv_nobn(pg, 128, cc, 1, 1, 0)]
        p["concat4"] = [_convbn(pg, 512, 128, 3, 1, 1, 1), _conv_nobn(pg, 128, cc, 1, 1, 0)]
    return p


# ----------------------------------------------------------------------------
# Forward pass (module semantics)
# ----------------------------------------------------------------------------
def _apply_convbn(p, x, act, residual=None):
    return conv2d_bn_act(x, p["w"], p["scale"], p["bias"], residual,
                         stride=p["stride"], padding=p["pad"], dilation=p["dil"], act=act)


def _apply_block(blk, x):
    out = _apply_convbn(blk["conv1"], x, "mish")                        # convbn + Mish
    shortcut = x if blk["down"] is None else _apply_convbn(blk["down"], x, "none")
    return _apply_convbn(blk["conv2"], out, "none", residual=shortcut)  # convbn + fused add


def _apply_layer(layer, x):
    for blk in layer:
        x = _apply_block(blk, x)
    return x


def _apply_head(head, x):
    x = _apply_convbn(head[0], x, "mish")      # convbn + Mish
    return _apply_convbn(head[1], x, "none")   # plain 1x1 conv (no BN/act)


def feature_extraction_forward(params, x_nchw, concat_feature=False):
    x = jnp.transpose(x_nchw, (0, 2, 3, 1)).astype(jnp.bfloat16)  # NCHW -> NHWC, bf16

    for p in params["firstconv"]:
        x = _apply_convbn(p, x, "mish")
    x = _apply_layer(params["layer1"], x)
    l2 = _apply_layer(params["layer2"], x)
    l3 = _apply_layer(params["layer3"], l2)
    l4 = _apply_layer(params["layer4"], l3)
    l5 = _apply_layer(params["layer5"], l4)
    l6 = _apply_layer(params["layer7"], l5)
    l7 = _apply_layer(params["layer9"], l6)

    featurecombine = jnp.concatenate((l2, l3, l4), axis=-1)  # channel concat (dim=1 in NCHW)
    gw1 = _apply_head(params["layer11"], featurecombine)
    gw2 = _apply_head(params["gw2"], l5)
    gw3 = _apply_head(params["gw3"], l6)
    gw4 = _apply_head(params["gw4"], l7)

    # computed in the PyTorch forward regardless of concat_feature
    feature_refine = _apply_convbn(params["layer_refine"][0], featurecombine, "mish")
    feature_refine = _apply_convbn(params["layer_refine"][1], feature_refine, "mish")

    to_nchw = lambda t: jnp.transpose(t, (0, 3, 1, 2)).astype(jnp.float32)
    if not concat_feature:
        return {"gw1": to_nchw(gw1), "gw2": to_nchw(gw2),
                "gw3": to_nchw(gw3), "gw4": to_nchw(gw4)}
    cf1 = _apply_head(params["lastconv"], featurecombine)
    cf2 = _apply_head(params["concat2"], l5)
    cf3 = _apply_head(params["concat3"], l6)
    cf4 = _apply_head(params["concat4"], l7)
    return {"gw1": to_nchw(gw1), "gw2": to_nchw(gw2), "gw3": to_nchw(gw3), "gw4": to_nchw(gw4),
            "concat_feature1": to_nchw(cf1), "finetune_feature": to_nchw(feature_refine),
            "concat_feature2": to_nchw(cf2), "concat_feature3": to_nchw(cf3),
            "concat_feature4": to_nchw(cf4)}


# ----------------------------------------------------------------------------
if __name__ == "__main__":
    key = jax.random.PRNGKey(0)
    # PyTorch-convention NCHW input, small shapes: batch=2, 3 channels, 16x16
    x = jax.random.normal(key, (2, 3, 16, 16), jnp.float32)

    params = init_feature_extraction(seed=0, concat_feature=False)
    out = feature_extraction_forward(params, x, concat_feature=False)
    out = jax.block_until_ready(out)

    # spatial: 16 -> 8 (firstconv) -> 4 (layer2) -> 2 (layer5) -> 1 (layer7) -> 1 (layer9)
    assert out["gw1"].shape == (2, 320, 4, 4), out["gw1"].shape
    assert out["gw2"].shape == (2, 320, 2, 2), out["gw2"].shape
    assert out["gw3"].shape == (2, 320, 1, 1), out["gw3"].shape
    assert out["gw4"].shape == (2, 320, 1, 1), out["gw4"].shape
    for v in out.values():
        assert bool(jnp.all(jnp.isfinite(v)))

    print("KERNEL_OK")
</pallas_src>

<mosaic_0001>
module attributes {stable_mosaic.version = 11 : i64} {
  func.func @kernel(%arg0: i32, %arg1: i32, %arg2: memref<6x8x9x3xbf16, #tpu.memory_space<vmem>>, %arg3: memref<9x3x32xbf16, #tpu.memory_space<vmem>>, %arg4: memref<1x32xf32, #tpu.memory_space<vmem>>, %arg5: memref<1x32xf32, #tpu.memory_space<vmem>>, %arg6: memref<8x8x32xbf16, #tpu.memory_space<vmem>>) attributes {dimension_semantics = [#tpu.dimension_semantics<parallel>, #tpu.dimension_semantics<parallel>], iteration_bounds = array<i64: 2, 1>, scalar_prefetch = 0 : i64, scratch_operands = 0 : i64, tpu.core_type = #tpu.core_type<tc>, window_params = [{transform_indices = @transform_0, window_bounds = array<i64: 6, 8, 9, 3>}, {transform_indices = @transform_1, window_bounds = array<i64: 9, 3, 32>}, {transform_indices = @transform_2, window_bounds = array<i64: 1, 32>}, {transform_indices = @transform_3, window_bounds = array<i64: 1, 32>}, {transform_indices = @transform_4, window_bounds = array<i64: 8, 8, 32>}]} {
    %c0 = arith.constant 0 : index
    %c0_0 = arith.constant 0 : index
    %0 = vector.load %arg4[%c0, %c0_0] : memref<1x32xf32, #tpu.memory_space<vmem>>, vector<1x32xf32>
    %c0_1 = arith.constant 0 : index
    %c0_2 = arith.constant 0 : index
    %1 = vector.load %arg5[%c0_1, %c0_2] : memref<1x32xf32, #tpu.memory_space<vmem>>, vector<1x32xf32>
    %c0_3 = arith.constant 0 : index
    %c0_4 = arith.constant 0 : index
    %c0_5 = arith.constant 0 : index
    %c0_6 = arith.constant 0 : index
    %2 = vector.load %arg2[%c0_3, %c0_4, %c0_5, %c0_6] : memref<6x8x9x3xbf16, #tpu.memory_space<vmem>>, vector<1x1x8x3xbf16>
    %3 = vector.shape_cast %2 : vector<1x1x8x3xbf16> to vector<8x3xbf16>
    %c0_7 = arith.constant 0 : index
    %c0_8 = arith.constant 0 : index
    %c0_9 = arith.constant 0 : index
    %4 = vector.load %arg3[%c0_7, %c0_8, %c0_9] : memref<9x3x32xbf16, #tpu.memory_space<vmem>>, vector<1x3x32xbf16>
    %5 = vector.shape_cast %4 : vector<1x3x32xbf16> to vector<3x32xbf16>
    %cst = arith.constant dense<0.000000e+00> : vector<8x32xf32>
    %6 = tpu.matmul %3, %5, %cst {dimension_numbers = #tpu.dot_dimension_numbers<[1], [0], [0], [1], [0, 0, 1, 1], [], []>} : vector<8x3xbf16>, vector<3x32xbf16>, vector<8x32xf32> -> vector<8x32xf32>
    %c1 = arith.constant 1 : index
    %c0_10 = arith.constant 0 : index
    %c0_11 = arith.constant 0 : index
    %c0_12 = arith.constant 0 : index
    %7 = vector.load %arg2[%c1, %c0_10, %c0_11, %c0_12] : memref<6x8x9x3xbf16, #tpu.memory_space<vmem>>, vector<1x1x8x3xbf16>
    %8 = vector.shape_cast %7 : vector<1x1x8x3xbf16> to vector<8x3xbf16>
    %c1_13 = arith.constant 1 : index
    %c0_14 = arith.constant 0 : index
    %c0_15 = arith.constant 0 : index
    %9 = vector.load %arg3[%c1_13, %c0_14, %c0_15] : memref<9x3x32xbf16, #tpu.memory_space<vmem>>, vector<1x3x32xbf16>
    %10 = vector.shape_cast %9 : vector<1x3x32xbf16> to vector<3x32xbf16>
    %cst_16 = arith.constant dense<0.000000e+00> : vector<8x32xf32>
    %11 = tpu.matmul %8, %10, %cst_16 {dimension_numbers = #tpu.dot_dimension_numbers<[1], [0], [0], [1], [0, 0, 1, 1], [], []>} : vector<8x3xbf16>, vector<3x32xbf16>, vector<8x32xf32> -> vector<8x32xf32>
    %12 = arith.addf %6, %11 : vector<8x32xf32>
    %c0_17 = arith.constant 0 : index
    %c0_18 = arith.constant 0 : index
    %c1_19 = arith.constant 1 : index
    %c0_20 = arith.constant 0 : index
    %13 = vector.load %arg2[%c0_17, %c0_18, %c1_19, %c0_20] : memref<6x8x9x3xbf16, #tpu.memory_space<vmem>>, vector<1x1x8x3xbf16>
    %14 = vector.shape_cast %13 : vector<1x1x8x3xbf16> to vector<8x3xbf16>
    %c2 = arith.constant 2 : index
    %c0_21 = arith.constant 0 : index
    %c0_22 = arith.constant 0 : index
    %15 = vector.load %arg3[%c2, %c0_21, %c0_22] : memref<9x3x32xbf16, #tpu.memory_space<vmem>>, vector<1x3x32xbf16>
    %16 = vector.shape_cast %15 : vector<1x3x32xbf16> to vector<3x32xbf16>
    %cst_23 = arith.constant dense<0.000000e+00> : vector<8x32xf32>
    %17 = tpu.matmul %14, %16, %cst_23 {dimension_numbers = #tpu.dot_dimension_numbers<[1], [0], [0], [1], [0, 0, 1, 1], [], []>} : vector<8x3xbf16>, vector<3x32xbf16>, vector<8x32xf32> -> vector<8x32xf32>
    %18 = arith.addf %12, %17 : vector<8x32xf32>
    %c2_24 = arith.constant 2 : index
    %c0_25 = arith.constant 0 : index
    %c0_26 = arith.constant 0 : index
    %c0_27 = arith.constant 0 : index
    %19 = vector.load %arg2[%c2_24, %c0_25, %c0_26, %c0_27] : memref<6x8x9x3xbf16, #tpu.memory_space<vmem>>, vector<1x1x8x3xbf16>
    %20 = vector.shape_cast %19 : vector<1x1x8x3xbf16> to vector<8x3xbf16>
    %c3 = arith.constant 3 : index
    %c0_28 = arith.constant 0 : index
    %c0_29 = arith.constant 0 : index
    %21 = vector.load %arg3[%c3, %c0_28, %c0_29] : memref<9x3x32xbf16, #tpu.memory_space<vmem>>, vector<1x3x32xbf16>
    %22 = vector.shape_cast %21 : vector<1x3x32xbf16> to vector<3x32xbf16>
    %cst_30 = arith.constant dense<0.000000e+00> : vector<8x32xf32>
    %23 = tpu.matmul %20, %22, %cst_30 {dimension_numbers = #tpu.dot_dimension_numbers<[1], [0], [0], [1], [0, 0, 1, 1], [], []>} : vector<8x3xbf16>, vector<3x32xbf16>, vector<8x32xf32> -> vector<8x32xf32>
    %24 = arith.addf %18, %23 : vector<8x32xf32>
    %c3_31 = arith.constant 3 : index
    %c0_32 = arith.constant 0 : index
    %c0_33 = arith.constant 0 : index
    %c0_34 = arith.constant 0 : index
    %25 = vector.load %arg2[%c3_31, %c0_32, %c0_33, %c0_34] : memref<6x8x9x3xbf16, #tpu.memory_space<vmem>>, vector<1x1x8x3xbf16>
    %26 = vector.shape_cast %25 : vector<1x1x8x3xbf16> to vector<8x3xbf16>
    %c4 = arith.constant 4 : index
    %c0_35 = arith.constant 0 : index
    %c0_36 = arith.constant 0 : index
    %27 = vector.load %arg3[%c4, %c0_35, %c0_36] : memref<9x3x32xbf16, #tpu.memory_space<vmem>>, vector<1x3x32xbf16>
    %28 = vector.shape_cast %27 : vector<1x3x32xbf16> to vector<3x32xbf16>
    %cst_37 = arith.constant dense<0.000000e+00> : vector<8x32xf32>
    %29 = tpu.matmul %26, %28, %cst_37 {dimension_numbers = #tpu.dot_dimension_numbers<[1], [0], [0], [1], [0, 0, 1, 1], [], []>} : vector<8x3xbf16>, vector<3x32xbf16>, vector<8x32xf32> -> vector<8x32xf32>
    %30 = arith.addf %24, %29 : vector<8x32xf32>
    %c2_38 = arith.constant 2 : index
    %c0_39 = arith.constant 0 : index
    %c1_40 = arith.constant 1 : index
    %c0_41 = arith.constant 0 : index
    %31 = vector.load %arg2[%c2_38, %c0_39, %c1_40, %c0_41] : memref<6x8x9x3xbf16, #tpu.memory_space<vmem>>, vector<1x1x8x3xbf16>
    %32 = vector.shape_cast %31 : vector<1x1x8x3xbf16> to vector<8x3xbf16>
    %c5 = arith.constant 5 : index
    %c0_42 = arith.constant 0 : index
    %c0_43 = arith.constant 0 : index
    %33 = vector.load %arg3[%c5, %c0_42, %c0_43] : memref<9x3x32xbf16, #tpu.memory_space<vmem>>, vector<1x3x32xbf16>
    %34 = vector.shape_cast %33 : vector<1x3x32xbf16> to vector<3x32xbf16>
    %cst_44 = arith.constant dense<0.000000e+00> : vector<8x32xf32>
    %35 = tpu.matmul %32, %34, %cst_44 {dimension_numbers = #tpu.dot_dimension_numbers<[1], [0], [0], [1], [0, 0, 1, 1], [], []>} : vector<8x3xbf16>, vector<3x32xbf16>, vector<8x32xf32> -> vector<8x32xf32>
    %36 = arith.addf %30, %35 : vector<8x32xf32>
    %c4_45 = arith.constant 4 : index
    %c0_46 = arith.constant 0 : index
    %c0_47 = arith.constant 0 : index
    %c0_48 = arith.constant 0 : index
    %37 = vector.load %arg2[%c4_45, %c0_46, %c0_47, %c0_48] : memref<6x8x9x3xbf16, #tpu.memory_space<vmem>>, vector<1x1x8x3xbf16>
    %38 = vector.shape_cast %37 : vector<1x1x8x3xbf16> to vector<8x3xbf16>
    %c6 = arith.constant 6 : index
    %c0_49 = arith.constant 0 : index
    %c0_50 = arith.constant 0 : index
    %39 = vector.load %arg3[%c6, %c0_49, %c0_50] : memref<9x3x32xbf16, #tpu.memory_space<vmem>>, vector<1x3x32xbf16>
    %40 = vector.shape_cast %39 : vector<1x3x32xbf16> to vector<3x32xbf16>
    %cst_51 = arith.constant dense<0.000000e+00> : vector<8x32xf32>
    %41 = tpu.matmul %38, %40, %cst_51 {dimension_numbers = #tpu.dot_dimension_numbers<[1], [0], [0], [1], [0, 0, 1, 1], [], []>} : vector<8x3xbf16>, vector<3x32xbf16>, vector<8x32xf32> -> vector<8x32xf32>
    %42 = arith.addf %36, %41 : vector<8x32xf32>
    %c5_52 = arith.constant 5 : index
    %c0_53 = arith.constant 0 : index
    %c0_54 = arith.constant 0 : index
    %c0_55 = arith.constant 0 : index
    %43 = vector.load %arg2[%c5_52, %c0_53, %c0_54, %c0_55] : memref<6x8x9x3xbf16, #tpu.memory_space<vmem>>, vector<1x1x8x3xbf16>
    %44 = vector.shape_cast %43 : vector<1x1x8x3xbf16> to vector<8x3xbf16>
    %c7 = arith.constant 7 : index
    %c0_56 = arith.constant 0 : index
    %c0_57 = arith.constant 0 : index
    %45 = vector.load %arg3[%c7, %c0_56, %c0_57] : memref<9x3x32xbf16, #tpu.memory_space<vmem>>, vector<1x3x32xbf16>
    %46 = vector.shape_cast %45 : vector<1x3x32xbf16> to vector<3x32xbf16>
    %cst_58 = arith.constant dense<0.000000e+00> : vector<8x32xf32>
    %47 = tpu.matmul %44, %46, %cst_58 {dimension_numbers = #tpu.dot_dimension_numbers<[1], [0], [0], [1], [0, 0, 1, 1], [], []>} : vector<8x3xbf16>, vector<3x32xbf16>, vector<8x32xf32> -> vector<8x32xf32>
    %48 = arith.addf %42, %47 : vector<8x32xf32>
    %c4_59 = arith.constant 4 : index
    %c0_60 = arith.constant 0 : index
    %c1_61 = arith.constant 1 : index
    %c0_62 = arith.constant 0 : index
    %49 = vector.load %arg2[%c4_59, %c0_60, %c1_61, %c0_62] : memref<6x8x9x3xbf16, #tpu.memory_space<vmem>>, vector<1x1x8x3xbf16>
    %50 = vector.shape_cast %49 : vector<1x1x8x3xbf16> to vector<8x3xbf16>
    %c8 = arith.constant 8 : index
    %c0_63 = arith.constant 0 : index
    %c0_64 = arith.constant 0 : index
    %51 = vector.load %arg3[%c8, %c0_63, %c0_64] : memref<9x3x32xbf16, #tpu.memory_space<vmem>>, vector<1x3x32xbf16>
    %52 = vector.shape_cast %51 : vector<1x3x32xbf16> to vector<3x32xbf16>
    %cst_65 = arith.constant dense<0.000000e+00> : vector<8x32xf32>
    %53 = tpu.matmul %50, %52, %cst_65 {dimension_numbers = #tpu.dot_dimension_numbers<[1], [0], [0], [1], [0, 0, 1, 1], [], []>} : vector<8x3xbf16>, vector<3x32xbf16>, vector<8x32xf32> -> vector<8x32xf32>
    %54 = arith.addf %48, %53 : vector<8x32xf32>
    %55 = vector.broadcast %0 : vector<1x32xf32> to vector<8x32xf32>
    %56 = arith.mulf %54, %55 : vector<8x32xf32>
    %57 = vector.broadcast %1 : vector<1x32xf32> to vector<8x32xf32>
    %58 = arith.addf %56, %57 : vector<8x32xf32>
    %cst_66 = arith.constant 3.000000e+01 : f32
    %59 = vector.broadcast %cst_66 : f32 to vector<8x32xf32>
    %60 = arith.minimumf %58, %59 : vector<8x32xf32>
    %61 = math.exp %60 : vector<8x32xf32>
    %cst_67 = arith.constant 2.000000e+00 : f32
    %62 = vector.broadcast %cst_67 : f32 to vector<8x32xf32>
    %63 = arith.addf %61, %62 : vector<8x32xf32>
    %64 = arith.mulf %61, %63 : vector<8x32xf32>
    %cst_68 = arith.constant 2.000000e+00 : f32
    %65 = vector.broadcast %cst_68 : f32 to vector<8x32xf32>
    %66 = arith.addf %64, %65 : vector<8x32xf32>
    %67 = tpu.reciprocal %66 {approx = true} : vector<8x32xf32> -> vector<8x32xf32>
    %cst_69 = arith.constant 2.000000e+00 : f32
    %68 = vector.broadcast %cst_69 : f32 to vector<8x32xf32>
    %69 = arith.mulf %68, %67 : vector<8x32xf32>
    %cst_70 = arith.constant 1.000000e+00 : f32
    %70 = vector.broadcast %cst_70 : f32 to vector<8x32xf32>
    %71 = arith.subf %70, %69 : vector<8x32xf32>
    %72 = arith.mulf %58, %71 : vector<8x32xf32>
    %73 = arith.truncf %72 : vector<8x32xf32> to vector<8x32xbf16>
    %c0_71 = arith.constant 0 : index
    %c0_72 = arith.constant 0 : index
    %c0_73 = arith.constant 0 : index
    %74 = vector.load %arg6[%c0_71, %c0_72, %c0_73] : memref<8x8x32xbf16, #tpu.memory_space<vmem>>, vector<1x8x32xbf16>
    %75 = vector.shape_cast %74 : vector<1x8x32xbf16> to vector<8x32xbf16>
    %76 = vector.shape_cast %73 : vector<8x32xbf16> to vector<1x8x32xbf16>
    tpu.vector_store %arg6[%c0_71, %c0_72, %c0_73], %76 {strides = array<i32>} : memref<8x8x32xbf16, #tpu.memory_space<vmem>>, vector<1x8x32xbf16>,
    %c0_74 = arith.constant 0 : index
    %c1_75 = arith.constant 1 : index
    %c0_76 = arith.constant 0 : index
    %c0_77 = arith.constant 0 : index
    %77 = vector.load %arg2[%c0_74, %c1_75, %c0_76, %c0_77] : memref<6x8x9x3xbf16, #tpu.memory_space<vmem>>, vector<1x1x8x3xbf16>
    %78 = vector.shape_cast %77 : vector<1x1x8x3xbf16> to vector<8x3xbf16>
    %c0_78 = arith.constant 0 : index
    %c0_79 = arith.constant 0 : index
    %c0_80 = arith.constant 0 : index
    %79 = vector.load %arg3[%c0_78, %c0_79, %c0_80] : memref<9x3x32xbf16, #tpu.memory_space<vmem>>, vector<1x3x32xbf16>
    %80 = vector.shape_cast %79 : vector<1x3x32xbf16> to vector<3x32xbf16>
    %cst_81 = arith.constant dense<0.000000e+00> : vector<8x32xf32>
    %81 = tpu.matmul %78, %80, %cst_81 {dimension_numbers = #tpu.dot_dimension_numbers<[1], [0], [0], [1], [0, 0, 1, 1], [], []>} : vector<8x3xbf16>, vector<3x32xbf16>, vector<8x32xf32> -> vector<8x32xf32>
    %c1_82 = arith.constant 1 : index
    %c1_83 = arith.constant 1 : index
    %c0_84 = arith.constant 0 : index
    %c0_85 = arith.constant 0 : index
    %82 = vector.load %arg2[%c1_82, %c1_83, %c0_84, %c0_85] : memref<6x8x9x3xbf16, #tpu.memory_space<vmem>>, vector<1x1x8x3xbf16>
    %83 = vector.shape_cast %82 : vector<1x1x8x3xbf16> to vector<8x3xbf16>
    %c1_86 = arith.constant 1 : index
    %c0_87 = arith.constant 0 : index
    %c0_88 = arith.constant 0 : index
    %84 = vector.load %arg3[%c1_86, %c0_87, %c0_88] : memref<9x3x32xbf16, #tpu.memory_space<vmem>>, vector<1x3x32xbf16>
    %85 = vector.shape_cast %84 : vector<1x3x32xbf16> to vector<3x32xbf16>
    %cst_89 = arith.constant dense<0.000000e+00> : vector<8x32xf32>
    %86 = tpu.matmul %83, %85, %cst_89 {dimension_numbers = #tpu.dot_dimension_numbers<[1], [0], [0], [1], [0, 0, 1, 1], [], []>} : vector<8x3xbf16>, vector<3x32xbf16>, vector<8x32xf32> -> vector<8x32xf32>
    %87 = arith.addf %81, %86 : vector<8x32xf32>
    %c0_90 = arith.constant 0 : index
    %c1_91 = arith.constant 1 : index
    %c1_92 = arith.constant 1 : index
    %c0_93 = arith.constant 0 : index
    %88 = vector.load %arg2[%c0_90, %c1_91, %c1_92, %c0_93] : memref<6x8x9x3xbf16, #tpu.memory_space<vmem>>, vector<1x1x8x3xbf16>
    %89 = vector.shape_cast %88 : vector<1x1x8x3xbf16> to vector<8x3xbf16>
    %c2_94 = arith.constant 2 : index
    %c0_95 = arith.constant 0 : index
    %c0_96 = arith.constant 0 : index
    %90 = vector.load %arg3[%c2_94, %c0_95, %c0_96] : memref<9x3x32xbf16, #tpu.memory_space<vmem>>, vector<1x3x32xbf16>
    %91 = vector.shape_cast %90 : vector<1x3x32xbf16> to vector<3x32xbf16>
    %cst_97 = arith.constant dense<0.000000e+00> : vector<8x32xf32>
    %92 = tpu.matmul %89, %91, %cst_97 {dimension_numbers = #tpu.dot_dimension_numbers<[1], [0], [0], [1], [0, 0, 1, 1], [], []>} : vector<8x3xbf16>, vector<3x32xbf16>, vector<8x32xf32> -> vector<8x32xf32>
    %93 = arith.addf %87, %92 : vector<8x32xf32>
    %c2_98 = arith.constant 2 : index
    %c1_99 = arith.constant 1 : index
    %c0_100 = arith.constant 0 : index
    %c0_101 = arith.constant 0 : index
    %94 = vector.load %arg2[%c2_98, %c1_99, %c0_100, %c0_101] : memref<6x8x9x3xbf16, #tpu.memory_space<vmem>>, vector<1x1x8x3xbf16>
    %95 = vector.shape_cast %94 : vector<1x1x8x3xbf16> to vector<8x3xbf16>
    %c3_102 = arith.constant 3 : index
    %c0_103 = arith.constant 0 : index
    %c0_104 = arith.constant 0 : index
    %96 = vector.load %arg3[%c3_102, %c0_103, %c0_104] : memref<9x3x32xbf16, #tpu.memory_space<vmem>>, vector<1x3x32xbf16>
    %97 = vector.shape_cast %96 : vector<1x3x32xbf16> to vector<3x32xbf16>
    %cst_105 = arith.constant dense<0.000000e+00> : vector<8x32xf32>
    %98 = tpu.matmul %95, %97, %cst_105 {dimension_numbers = #tpu.dot_dimension_numbers<[1], [0], [0], [1], [0, 0, 1, 1], [], []>} : vector<8x3xbf16>, vector<3x32xbf16>, vector<8x32xf32> -> vector<8x32xf32>
    %99 = arith.addf %93, %98 : vector<8x32xf32>
    %c3_106 = arith.constant 3 : index
    %c1_107 = arith.constant 1 : index
    %c0_108 = arith.constant 0 : index
    %c0_109 = arith.constant 0 : index
    %100 = vector.load %arg2[%c3_106, %c1_107, %c0_108, %c0_109] : memref<6x8x9x3xbf16, #tpu.memory_space<vmem>>, vector<1x1x8x3xbf16>
    %101 = vector.shape_cast %100 : vector<1x1x8x3xbf16> to vector<8x3xbf16>
    %c4_110 = arith.constant 4 : index
    %c0_111 = arith.constant 0 : index
    %c0_112 = arith.constant 0 : index
    %102 = vector.load %arg3[%c4_110, %c0_111, %c0_112] : memref<9x3x32xbf16, #tpu.memory_space<vmem>>, vector<1x3x32xbf16>
    %103 = vector.shape_cast %102 : vector<1x3x32xbf16> to vector<3x32xbf16>
    %cst_113 = arith.constant dense<0.000000e+00> : vector<8x32xf32>
    %104 = tpu.matmul %101, %103, %cst_113 {dimension_numbers = #tpu.dot_dimension_numbers<[1], [0], [0], [1], [0, 0, 1, 1], [], []>} : vector<8x3xbf16>, vector<3x32xbf16>, vector<8x32xf32> -> vector<8x32xf32>
    %105 = arith.addf %99, %104 : vector<8x32xf32>
    %c2_114 = arith.constant 2 : index
    %c1_115 = arith.constant 1 : index
    %c1_116 = arith.constant 1 : index
    %c0_117 = arith.constant 0 : index
    %106 = vector.load %arg2[%c2_114, %c1_115, %c1_116, %c0_117] : memref<6x8x9x3xbf16, #tpu.memory_space<vmem>>, vector<1x1x8x3xbf16>
    %107 = vector.shape_cast %106 : vector<1x1x8x3xbf16> to vector<8x3xbf16>
    %c5_118 = arith.constant 5 : index
    %c0_119 = arith.constant 0 : index
    %c0_120 = arith.constant 0 : index
    %108 = vector.load %arg3[%c5_118, %c0_119, %c0_120] : memref<9x3x32xbf16, #tpu.memory_space<vmem>>, vector<1x3x32xbf16>
    %109 = vector.shape_cast %108 : vector<1x3x32xbf16> to vector<3x32xbf16>
    %cst_121 = arith.constant dense<0.000000e+00> : vector<8x32xf32>
    %110 = tpu.matmul %107, %109, %cst_121 {dimension_numbers = #tpu.dot_dimension_numbers<[1], [0], [0], [1], [0, 0, 1, 1], [], []>} : vector<8x3xbf16>, vector<3x32xbf16>, vector<8x32xf32> -> vector<8x32xf32>
    %111 = arith.addf %105, %110 : vector<8x32xf32>
    %c4_122 = arith.constant 4 : index
    %c1_123 = arith.constant 1 : index
    %c0_124 = arith.constant 0 : index
    %c0_125 = arith.constant 0 : index
    %112 = vector.load %arg2[%c4_122, %c1_123, %c0_124, %c0_125] : memref<6x8x9x3xbf16, #tpu.memory_space<vmem>>, vector<1x1x8x3xbf16>
    %113 = vector.shape_cast %112 : vector<1x1x8x3xbf16> to vector<8x3xbf16>
    %c6_126 = arith.constant 6 : index
    %c0_127 = arith.constant 0 : index
    %c0_128 = arith.constant 0 : index
    %114 = vector.load %arg3[%c6_126, %c0_127, %c0_128] : memref<9x3x32xbf16, #tpu.memory_space<vmem>>, vector<1x3x32xbf16>
    %115 = vector.shape_cast %114 : vector<1x3x32xbf16> to vector<3x32xbf16>
    %cst_129 = arith.constant dense<0.000000e+00> : vector<8x32xf32>
    %116 = tpu.matmul %113, %115, %cst_129 {dimension_numbers = #tpu.dot_dimension_numbers<[1], [0], [0], [1], [0, 0, 1, 1], [], []>} : vector<8x3xbf16>, vector<3x32xbf16>, vector<8x32xf32> -> vector<8x32xf32>
    %117 = arith.addf %111, %116 : vector<8x32xf32>
    %c5_130 = arith.constant 5 : index
    %c1_131 = arith.constant 1 : index
    %c0_132 = arith.constant 0 : index
    %c0_133 = arith.constant 0 : index
    %118 = vector.load %arg2[%c5_130, %c1_131, %c0_132, %c0_133] : memref<6x8x9x3xbf16, #tpu.memory_space<vmem>>, vector<1x1x8x3xbf16>
    %119 = vector.shape_cast %118 : vector<1x1x8x3xbf16> to vector<8x3xbf16>
    %c7_134 = arith.constant 7 : index
    %c0_135 = arith.constant 0 : index
    %c0_136 = arith.constant 0 : index
    %120 = vector.load %arg3[%c7_134, %c0_135, %c0_136] : memref<9x3x32xbf16, #tpu.memory_space<vmem>>, vector<1x3x32xbf16>
    %121 = vector.shape_cast %120 : vector<1x3x32xbf16> to vector<3x32xbf16>
    %cst_137 = arith.constant dense<0.000000e+00> : vector<8x32xf32>
    %122 = tpu.matmul %119, %121, %cst_137 {dimension_numbers = #tpu.dot_dimension_numbers<[1], [0], [0], [1], [0, 0, 1, 1], [], []>} : vector<8x3xbf16>, vector<3x32xbf16>, vector<8x32xf32> -> vector<8x32xf32>
    %123 = arith.addf %117, %122 : vector<8x32xf32>
    %c4_138 = arith.constant 4 : index
    %c1_139 = arith.constant 1 : index
    %c1_140 = arith.constant 1 : index
    %c0_141 = arith.constant 0 : index
    %124 = vector.load %arg2[%c4_138, %c1_139, %c1_140, %c0_141] : memref<6x8x9x3xbf16, #tpu.memory_space<vmem>>, vector<1x1x8x3xbf16>
    %125 = vector.shape_cast %124 : vector<1x1x8x3xbf16> to vector<8x3xbf16>
    %c8_142 = arith.constant 8 : index
    %c0_143 = arith.constant 0 : index
    %c0_144 = arith.constant 0 : index
    %126 = vector.load %arg3[%c8_142, %c0_143, %c0_144] : memref<9x3x32xbf16, #tpu.memory_space<vmem>>, vector<1x3x32xbf16>
    %127 = vector.shape_cast %126 : vector<1x3x32xbf16> to vector<3x32xbf16>
    %cst_145 = arith.constant dense<0.000000e+00> : vector<8x32xf32>
    %128 = tpu.matmul %125, %127, %cst_145 {dimension_numbers = #tpu.dot_dimension_numbers<[1], [0], [0], [1], [0, 0, 1, 1], [], []>} : vector<8x3xbf16>, vector<3x32xbf16>, vector<8x32xf32> -> vector<8x32xf32>
    %129 = arith.addf %123, %128 : vector<8x32xf32>
    %130 = vector.broadcast %0 : vector<1x32xf32> to vector<8x32xf32>
    %131 = arith.mulf %129, %130 : vector<8x32xf32>
    %132 = vector.broadcast %1 : vector<1x32xf32> to vector<8x32xf32>
    %133 = arith.addf %131, %132 : vector<8x32xf32>
    %cst_146 = arith.constant 3.000000e+01 : f32
    %134 = vector.broadcast %cst_146 : f32 to vector<8x32xf32>
    %135 = arith.minimumf %133, %134 : vector<8x32xf32>
    %136 = math.exp %135 : vector<8x32xf32>
    %cst_147 = arith.constant 2.000000e+00 : f32
    %137 = vector.broadcast %cst_147 : f32 to vector<8x32xf32>
    %138 = arith.addf %136, %137 : vector<8x32xf32>
    %139 = arith.mulf %136, %138 : vector<8x32xf32>
    %cst_148 = arith.constant 2.000000e+00 : f32
    %140 = vector.broadcast %cst_148 : f32 to vector<8x32xf32>
    %141 = arith.addf %139, %140 : vector<8x32xf32>
    %142 = tpu.reciprocal %141 {approx = true} : vector<8x32xf32> -> vector<8x32xf32>
    %cst_149 = arith.constant 2.000000e+00 : f32
    %143 = vector.broadcast %cst_149 : f32 to vector<8x32xf32>
    %144 = arith.mulf %143, %142 : vector<8x32xf32>
    %cst_150 = arith.constant 1.000000e+00 : f32
    %145 = vector.broadcast %cst_150 : f32 to vector<8x32xf32>
    %146 = arith.subf %145, %144 : vector<8x32xf32>
    %147 = arith.mulf %133, %146 : vector<8x32xf32>
    %148 = arith.truncf %147 : vector<8x32xf32> to vector<8x32xbf16>
    %c1_151 = arith.constant 1 : index
    %c0_152 = arith.constant 0 : index
    %c0_153 = arith.constant 0 : index
    %149 = vector.load %arg6[%c1_151, %c0_152, %c0_153] : memref<8x8x32xbf16, #tpu.memory_space<vmem>>, vector<1x8x32xbf16>
    %150 = vector.shape_cast %149 : vector<1x8x32xbf16> to vector<8x32xbf16>
    %151 = vector.shape_cast %148 : vector<8x32xbf16> to vector<1x8x32xbf16>
    tpu.vector_store %arg6[%c1_151, %c0_152, %c0_153], %151 {strides = array<i32>} : memref<8x8x32xbf16, #tpu.memory_space<vmem>>, vector<1x8x32xbf16>,
    %c0_154 = arith.constant 0 : index
    %c2_155 = arith.constant 2 : index
    %c0_156 = arith.constant 0 : index
    %c0_157 = arith.constant 0 : index
    %152 = vector.load %arg2[%c0_154, %c2_155, %c0_156, %c0_157] : memref<6x8x9x3xbf16, #tpu.memory_space<vmem>>, vector<1x1x8x3xbf16>
    %153 = vector.shape_cast %152 : vector<1x1x8x3xbf16> to vector<8x3xbf16>
    %c0_158 = arith.constant 0 : index
    %c0_159 = arith.constant 0 : index
    %c0_160 = arith.constant 0 : index
    %154 = vector.load %arg3[%c0_158, %c0_159, %c0_160] : memref<9x3x32xbf16, #tpu.memory_space<vmem>>, vector<1x3x32xbf16>
    %155 = vector.shape_cast %154 : vector<1x3x32xbf16> to vector<3x32xbf16>
    %cst_161 = arith.constant dense<0.000000e+00> : vector<8x32xf32>
    %156 = tpu.matmul %153, %155, %cst_161 {dimension_numbers = #tpu.dot_dimension_numbers<[1], [0], [0], [1], [0, 0, 1, 1], [], []>} : vector<8x3xbf16>, vector<3x32xbf16>, vector<8x32xf32> -> vector<8x32xf32>
    %c1_162 = arith.constant 1 : index
    %c2_163 = arith.constant 2 : index
    %c0_164 = arith.constant 0 : index
    %c0_165 = arith.constant 0 : index
    %157 = vector.load %arg2[%c1_162, %c2_163, %c0_164, %c0_165] : memref<6x8x9x3xbf16, #tpu.memory_space<vmem>>, vector<1x1x8x3xbf16>
    %158 = vector.shape_cast %157 : vector<1x1x8x3xbf16> to vector<8x3xbf16>
    %c1_166 = arith.constant 1 : index
    %c0_167 = arith.constant 0 : index
    %c0_168 = arith.constant 0 : index
    %159 = vector.load %arg3[%c1_166, %c0_167, %c0_168] : memref<9x3x32xbf16, #tpu.memory_space<vmem>>, vector<1x3x32xbf16>
    %160 = vector.shape_cast %159 : vector<1x3x32xbf16> to vector<3x32xbf16>
    %cst_169 = arith.constant dense<0.000000e+00> : vector<8x32xf32>
    %161 = tpu.matmul %158, %160, %cst_169 {dimension_numbers = #tpu.dot_dimension_numbers<[1], [0], [0], [1], [0, 0, 1, 1], [], []>} : vector<8x3xbf16>, vector<3x32xbf16>, vector<8x32xf32> -> vector<8x32xf32>
    %162 = arith.addf %156, %161 : vector<8x32xf32>
    %c0_170 = arith.constant 0 : index
    %c2_171 = arith.constant 2 : index
    %c1_172 = arith.constant 1 : index
    %c0_173 = arith.constant 0 : index
    %163 = vector.load %arg2[%c0_170, %c2_171, %c1_172, %c0_173] : memref<6x8x9x3xbf16, #tpu.memory_space<vmem>>, vector<1x1x8x3xbf16>
    %164 = vector.shape_cast %163 : vector<1x1x8x3xbf16> to vector<8x3xbf16>
    %c2_174 = arith.constant 2 : index
    %c0_175 = arith.constant 0 : index
    %c0_176 = arith.constant 0 : index
    %165 = vector.load %arg3[%c2_174, %c0_175, %c0_176] : memref<9x3x32xbf16, #tpu.memory_space<vmem>>, vector<1x3x32xbf16>
    %166 = vector.shape_cast %165 : vector<1x3x32xbf16> to vector<3x32xbf16>
    %cst_177 = arith.constant dense<0.000000e+00> : vector<8x32xf32>
    %167 = tpu.matmul %164, %166, %cst_177 {dimension_numbers = #tpu.dot_dimension_numbers<[1], [0], [0], [1], [0, 0, 1, 1], [], []>} : vector<8x3xbf16>, vector<3x32xbf16>, vector<8x32xf32> -> vector<8x32xf32>
    %168 = arith.addf %162, %167 : vector<8x32xf32>
    %c2_178 = arith.constant 2 : index
    %c2_179 = arith.constant 2 : index
    %c0_180 = arith.constant 0 : index
    %c0_181 = arith.constant 0 : index
    %169 = vector.load %arg2[%c2_178, %c2_179, %c0_180, %c0_181] : memref<6x8x9x3xbf16, #tpu.memory_space<vmem>>, vector<1x1x8x3xbf16>
    %170 = vector.shape_cast %169 : vector<1x1x8x3xbf16> to vector<8x3xbf16>
    %c3_182 = arith.constant 3 : index
    %c0_183 = arith.constant 0 : index
    %c0_184 = arith.constant 0 : index
    %171 = vector.load %arg3[%c3_182, %c0_183, %c0_184] : memref<9x3x32xbf16, #tpu.memory_space<vmem>>, vector<1x3x32xbf16>
    %172 = vector.shape_cast %171 : vector<1x3x32xbf16> to vector<3x32xbf16>
    %cst_185 = arith.constant dense<0.000000e+00> : vector<8x32xf32>
    %173 = tpu.matmul %170, %172, %cst_185 {dimension_numbers = #tpu.dot_dimension_numbers<[1], [0], [0], [1], [0, 0, 1, 1], [], []>} : vector<8x3xbf16>, vector<3x32xbf16>, vector<8x32xf32> -> vector<8x32xf32>
    %174 = arith.addf %168, %173 : vector<8x32xf32>
    %c3_186 = arith.constant 3 : index
    %c2_187 = arith.constant 2 : index
    %c0_188 = arith.constant 0 : index
    %c0_189 = arith.constant 0 : index
    %175 = vector.load %arg2[%c3_186, %c2_187, %c0_188, %c0_189] : memref<6x8x9x3xbf16, #tpu.memory_space<vmem>>, vector<1x1x8x3xbf16>
    %176 = vector.shape_cast %175 : vector<1x1x8x3xbf16> to vector<8x3xbf16>
    %c4_190 = arith.constant 4 : index
    %c0_191 = arith.constant 0 : index
    %c0_192 = arith.constant 0 : index
    %177 = vector.load %arg3[%c4_190, %c0_191, %c0_192] : memref<9x3x32xbf16, #tpu.memory_space<vmem>>, vector<1x3x32xbf16>
    %178 = vector.shape_cast %177 : vector<1x3x32xbf16> to vector<3x32xbf16>
    %cst_193 = arith.constant dense<0.000000e+00> : vector<8x32xf32>
    %179 = tpu.matmul %176, %178, %cst_193 {dimension_numbers = #tpu.dot_dimension_numbers<[1], [0], [0], [1], [0, 0, 1, 1], [], []>} : vector<8x3xbf16>, vector<3x32xbf16>, vector<8x32xf32> -> vector<8x32xf32>
    %180 = arith.addf %174, %179 : vector<8x32xf32>
    %c2_194 = arith.constant 2 : index
    %c2_195 = arith.constant 2 : index
    %c1_196 = arith.constant 1 : index
    %c0_197 = arith.constant 0 : index
    %181 = vector.load %arg2[%c2_194, %c2_195, %c1_196, %c0_197] : memref<6x8x9x3xbf16, #tpu.memory_space<vmem>>, vector<1x1x8x3xbf16>
    %182 = vector.shape_cast %181 : vector<1x1x8x3xbf16> to vector<8x3xbf16>
    %c5_198 = arith.constant 5 : index
    %c0_199 = arith.constant 0 : index
    %c0_200 = arith.constant 0 : index
    %183 = vector.load %arg3[%c5_198, %c0_199, %c0_200] : memref<9x3x32xbf16, #tpu.memory_space<vmem>>, vector<1x3x32xbf16>
    %184 = vector.shape_cast %183 : vector<1x3x32xbf16> to vector<3x32xbf16>
    %cst_201 = arith.constant dense<0.000000e+00> : vector<8x32xf32>
    %185 = tpu.matmul %182, %184, %cst_201 {dimension_numbers = #tpu.dot_dimension_numbers<[1], [0], [0], [1], [0, 0, 1, 1], [], []>} : vector<8x3xbf16>, vector<3x32xbf16>, vector<8x32xf32> -> vector<8x32xf32>
    %186 = arith.addf %180, %185 : vector<8x32xf32>
    %c4_202 = arith.constant 4 : index
    %c2_203 = arith.constant 2 : index
    %c0_204 = arith.constant 0 : index
    %c0_205 = arith.constant 0 : index
    %187 = vector.load %arg2[%c4_202, %c2_203, %c0_204, %c0_205] : memref<6x8x9x3xbf16, #tpu.memory_space<vmem>>, vector<1x1x8x3xbf16>
    %188 = vector.shape_cast %187 : vector<1x1x8x3xbf16> to vector<8x3xbf16>
    %c6_206 = arith.constant 6 : index
    %c0_207 = arith.constant 0 : index
    %c0_208 = arith.constant 0 : index
    %189 = vector.load %arg3[%c6_206, %c0_207, %c0_208] : memref<9x3x32xbf16, #tpu.memory_space<vmem>>, vector<1x3x32xbf16>
    %190 = vector.shape_cast %189 : vector<1x3x32xbf16> to vector<3x32xbf16>
    %cst_209 = arith.constant dense<0.000000e+00> : vector<8x32xf32>
    %191 = tpu.matmul %188, %190, %cst_209 {dimension_numbers = #tpu.dot_dimension_numbers<[1], [0], [0], [1], [0, 0, 1, 1], [], []>} : vector<8x3xbf16>, vector<3x32xbf16>, vector<8x32xf32> -> vector<8x32xf32>
    %192 = arith.addf %186, %191 : vector<8x32xf32>
    %c5_210 = arith.constant 5 : index
    %c2_211 = arith.constant 2 : index
    %c0_212 = arith.constant 0 : index
    %c0_213 = arith.constant 0 : index
    %193 = vector.load %arg2[%c5_210, %c2_211, %c0_212, %c0_213] : memref<6x8x9x3xbf16, #tpu.memory_space<vmem>>, vector<1x1x8x3xbf16>
    %194 = vector.shape_cast %193 : vector<1x1x8x3xbf16> to vector<8x3xbf16>
    %c7_214 = arith.constant 7 : index
    %c0_215 = arith.constant 0 : index
    %c0_216 = arith.constant 0 : index
    %195 = vector.load %arg3[%c7_214, %c0_215, %c0_216] : memref<9x3x32xbf16, #tpu.memory_space<vmem>>, vector<1x3x32xbf16>
    %196 = vector.shape_cast %195 : vector<1x3x32xbf16> to vector<3x32xbf16>
    %cst_217 = arith.constant dense<0.000000e+00> : vector<8x32xf32>
    %197 = tpu.matmul %194, %196, %cst_217 {dimension_numbers = #tpu.dot_dimension_numbers<[1], [0], [0], [1], [0, 0, 1, 1], [], []>} : vector<8x3xbf16>, vector<3x32xbf16>, vector<8x32xf32> -> vector<8x32xf32>
    %198 = arith.addf %192, %197 : vector<8x32xf32>
    %c4_218 = arith.constant 4 : index
    %c2_219 = arith.constant 2 : index
    %c1_220 = arith.constant 1 : index
    %c0_221 = arith.constant 0 : index
    %199 = vector.load %arg2[%c4_218, %c2_219, %c1_220, %c0_221] : memref<6x8x9x3xbf16, #tpu.memory_space<vmem>>, vector<1x1x8x3xbf16>
    %200 = vector.shape_cast %199 : vector<1x1x8x3xbf16> to vector<8x3xbf16>
    %c8_222 = arith.constant 8 : index
    %c0_223 = arith.constant 0 : index
    %c0_224 = arith.constant 0 : index
    %201 = vector.load %arg3[%c8_222, %c0_223, %c0_224] : memref<9x3x32xbf16, #tpu.memory_space<vmem>>, vector<1x3x32xbf16>
    %202 = vector.shape_cast %201 : vector<1x3x32xbf16> to vector<3x32xbf16>
    %cst_225 = arith.constant dense<0.000000e+00> : vector<8x32xf32>
    %203 = tpu.matmul %200, %202, %cst_225 {dimension_numbers = #tpu.dot_dimension_numbers<[1], [0], [0], [1], [0, 0, 1, 1], [], []>} : vector<8x3xbf16>, vector<3x32xbf16>, vector<8x32xf32> -> vector<8x32xf32>
    %204 = arith.addf %198, %203 : vector<8x32xf32>
    %205 = vector.broadcast %0 : vector<1x32xf32> to vector<8x32xf32>
    %206 = arith.mulf %204, %205 : vector<8x32xf32>
    %207 = vector.broadcast %1 : vector<1x32xf32> to vector<8x32xf32>
    %208 = arith.addf %206, %207 : vector<8x32xf32>
    %cst_226 = arith.constant 3.000000e+01 : f32
    %209 = vector.broadcast %cst_226 : f32 to vector<8x32xf32>
    %210 = arith.minimumf %208, %209 : vector<8x32xf32>
    %211 = math.exp %210 : vector<8x32xf32>
    %cst_227 = arith.constant 2.000000e+00 : f32
    %212 = vector.broadcast %cst_227 : f32 to vector<8x32xf32>
    %213 = arith.addf %211, %212 : vector<8x32xf32>
    %214 = arith.mulf %211, %213 : vector<8x32xf32>
    %cst_228 = arith.constant 2.000000e+00 : f32
    %215 = vector.broadcast %cst_228 : f32 to vector<8x32xf32>
    %216 = arith.addf %214, %215 : vector<8x32xf32>
    %217 = tpu.reciprocal %216 {approx = true} : vector<8x32xf32> -> vector<8x32xf32>
    %cst_229 = arith.constant 2.000000e+00 : f32
    %218 = vector.broadcast %cst_229 : f32 to vector<8x32xf32>
    %219 = arith.mulf %218, %217 : vector<8x32xf32>
    %cst_230 = arith.constant 1.000000e+00 : f32
    %220 = vector.broadcast %cst_230 : f32 to vector<8x32xf32>
    %221 = arith.subf %220, %219 : vector<8x32xf32>
    %222 = arith.mulf %208, %221 : vector<8x32xf32>
    %223 = arith.truncf %222 : vector<8x32xf32> to vector<8x32xbf16>
    %c2_231 = arith.constant 2 : index
    %c0_232 = arith.constant 0 : index
    %c0_233 = arith.constant 0 : index
    %224 = vector.load %arg6[%c2_231, %c0_232, %c0_233] : memref<8x8x32xbf16, #tpu.memory_space<vmem>>, vector<1x8x32xbf16>
    %225 = vector.shape_cast %224 : vector<1x8x32xbf16> to vector<8x32xbf16>
    %226 = vector.shape_cast %223 : vector<8x32xbf16> to vector<1x8x32xbf16>
    tpu.vector_store %arg6[%c2_231, %c0_232, %c0_233], %226 {strides = array<i32>} : memref<8x8x32xbf16, #tpu.memory_space<vmem>>, vector<1x8x32xbf16>,
    %c0_234 = arith.constant 0 : index
    %c3_235 = arith.constant 3 : index
    %c0_236 = arith.constant 0 : index
    %c0_237 = arith.constant 0 : index
    %227 = vector.load %arg2[%c0_234, %c3_235, %c0_236, %c0_237] : memref<6x8x9x3xbf16, #tpu.memory_space<vmem>>, vector<1x1x8x3xbf16>
    %228 = vector.shape_cast %227 : vector<1x1x8x3xbf16> to vector<8x3xbf16>
    %c0_238 = arith.constant 0 : index
    %c0_239 = arith.constant 0 : index
    %c0_240 = arith.constant 0 : index
    %229 = vector.load %arg3[%c0_238, %c0_239, %c0_240] : memref<9x3x32xbf16, #tpu.memory_space<vmem>>, vector<1x3x32xbf16>
    %230 = vector.shape_cast %229 : vector<1x3x32xbf16> to vector<3x32xbf16>
    %cst_241 = arith.constant dense<0.000000e+00> : vector<8x32xf32>
    %231 = tpu.matmul %228, %230, %cst_241 {dimension_numbers = #tpu.dot_dimension_numbers<[1], [0], [0], [1], [0, 0, 1, 1], [], []>} : vector<8x3xbf16>, vector<3x32xbf16>, vector<8x32xf32> -> vector<8x32xf32>
    %c1_242 = arith.constant 1 : index
    %c3_243 = arith.constant 3 : index
    %c0_244 = arith.constant 0 : index
    %c0_245 = arith.constant 0 : index
    %232 = vector.load %arg2[%c1_242, %c3_243, %c0_244, %c0_245] : memref<6x8x9x3xbf16, #tpu.memory_space<vmem>>, vector<1x1x8x3xbf16>
    %233 = vector.shape_cast %232 : vector<1x1x8x3xbf16> to vector<8x3xbf16>
    %c1_246 = arith.constant 1 : index
    %c0_247 = arith.constant 0 : index
    %c0_248 = arith.constant 0 : index
    %234 = vector.load %arg3[%c1_246, %c0_247, %c0_248] : memref<9x3x32xbf16, #tpu.memory_space<vmem>>, vector<1x3x32xbf16>
    %235 = vector.shape_cast %234 : vector<1x3x32xbf16> to vector<3x32xbf16>
    %cst_249 = arith.constant dense<0.000000e+00> : vector<8x32xf32>
    %236 = tpu.matmul %233, %235, %cst_249 {dimension_numbers = #tpu.dot_dimension_numbers<[1], [0], [0], [1], [0, 0, 1, 1], [], []>} : vector<8x3xbf16>, vector<3x32xbf16>, vector<8x32xf32> -> vector<8x32xf32>
    %237 = arith.addf %231, %236 : vector<8x32xf32>
    %c0_250 = arith.constant 0 : index
    %c3_251 = arith.constant 3 : index
    %c1_252 = arith.constant 1 : index
    %c0_253 = arith.constant 0 : index
    %238 = vector.load %arg2[%c0_250, %c3_251, %c1_252, %c0_253] : memref<6x8x9x3xbf16, #tpu.memory_space<vmem>>, vector<1x1x8x3xbf16>
    %239 = vector.shape_cast %238 : vector<1x1x8x3xbf16> to vector<8x3xbf16>
    %c2_254 = arith.constant 2 : index
    %c0_255 = arith.constant 0 : index
    %c0_256 = arith.constant 0 : index
    %240 = vector.load %arg3[%c2_254, %c0_255, %c0_256] : memref<9x3x32xbf16, #tpu.memory_space<vmem>>, vector<1x3x32xbf16>
    %241 = vector.shape_cast %240 : vector<1x3x32xbf16> to vector<3x32xbf16>
    %cst_257 = arith.constant dense<0.000000e+00> : vector<8x32xf32>
    %242 = tpu.matmul %239, %241, %cst_257 {dimension_numbers = #tpu.dot_dimension_numbers<[1], [0], [0], [1], [0, 0, 1, 1], [], []>} : vector<8x3xbf16>, vector<3x32xbf16>, vector<8x32xf32> -> vector<8x32xf32>
    %243 = arith.addf %237, %242 : vector<8x32xf32>
    %c2_258 = arith.constant 2 : index
    %c3_259 = arith.constant 3 : index
    %c0_260 = arith.constant 0 : index
    %c0_261 = arith.constant 0 : index
    %244 = vector.load %arg2[%c2_258, %c3_259, %c0_260, %c0_261] : memref<6x8x9x3xbf16, #tpu.memory_space<vmem>>, vector<1x1x8x3xbf16>
    %245 = vector.shape_cast %244 : vector<1x1x8x3xbf16> to vector<8x3xbf16>
    %c3_262 = arith.constant 3 : index
    %c0_263 = arith.constant 0 : index
    %c0_264 = arith.constant 0 : index
    %246 = vector.load %arg3[%c3_262, %c0_263, %c0_264] : memref<9x3x32xbf16, #tpu.memory_space<vmem>>, vector<1x3x32xbf16>
    %247 = vector.shape_cast %246 : vector<1x3x32xbf16> to vector<3x32xbf16>
    %cst_265 = arith.constant dense<0.000000e+00> : vector<8x32xf32>
    %248 = tpu.matmul %245, %247, %cst_265 {dimension_numbers = #tpu.dot_dimension_numbers<[1], [0], [0], [1], [0, 0, 1, 1], [], []>} : vector<8x3xbf16>, vector<3x32xbf16>, vector<8x32xf32> -> vector<8x32xf32>
    %249 = arith.addf %243, %248 : vector<8x32xf32>
    %c3_266 = arith.constant 3 : index
    %c3_267 = arith.constant 3 : index
    %c0_268 = arith.constant 0 : index
    %c0_269 = arith.constant 0 : index
    %250 = vector.load %arg2[%c3_266, %c3_267, %c0_268, %c0_269] : memref<6x8x9x3xbf16, #tpu.memory_space<vmem>>, vector<1x1x8x3xbf16>
    %251 = vector.shape_cast %250 : vector<1x1x8x3xbf16> to vector<8x3xbf16>
    %c4_270 = arith.constant 4 : index
    %c0_271 = arith.constant 0 : index
    %c0_272 = arith.constant 0 : index
    %252 = vector.load %arg3[%c4_270, %c0_271, %c0_272] : memref<9x3x32xbf16, #tpu.memory_space<vmem>>, vector<1x3x32xbf16>
    %253 = vector.shape_cast %252 : vector<1x3x32xbf16> to vector<3x32xbf16>
    %cst_273 = arith.constant dense<0.000000e+00> : vector<8x32xf32>
    %254 = tpu.matmul %251, %253, %cst_273 {dimension_numbers = #tpu.dot_dimension_numbers<[1], [0], [0], [1], [0, 0, 1, 1], [], []>} : vector<8x3xbf16>, vector<3x32xbf16>, vector<8x32xf32> -> vector<8x32xf32>
    %255 = arith.addf %249, %254 : vector<8x32xf32>
    %c2_274 = arith.constant 2 : index
    %c3_275 = arith.constant 3 : index
    %c1_276 = arith.constant 1 : index
    %c0_277 = arith.constant 0 : index
    %256 = vector.load %arg2[%c2_274, %c3_275, %c1_276, %c0_277] : memref<6x8x9x3xbf16, #tpu.memory_space<vmem>>, vector<1x1x8x3xbf16>
    %257 = vector.shape_cast %256 : vector<1x1x8x3xbf16> to vector<8x3xbf16>
    %c5_278 = arith.constant 5 : index
    %c0_279 = arith.constant 0 : index
    %c0_280 = arith.constant 0 : index
    %258 = vector.load %arg3[%c5_278, %c0_279, %c0_280] : memref<9x3x32xbf16, #tpu.memory_space<vmem>>, vector<1x3x32xbf16>
    %259 = vector.shape_cast %258 : vector<1x3x32xbf16> to vector<3x32xbf16>
    %cst_281 = arith.constant dense<0.000000e+00> : vector<8x32xf32>
    %260 = tpu.matmul %257, %259, %cst_281 {dimension_numbers = #tpu.dot_dimension_numbers<[1], [0], [0], [1], [0, 0, 1, 1], [], []>} : vector<8x3xbf16>, vector<3x32xbf16>, vector<8x32xf32> -> vector<8x32xf32>
    %261 = arith.addf %255, %260 : vector<8x32xf32>
    %c4_282 = arith.constant 4 : index
    %c3_283 = arith.constant 3 : index
    %c0_284 = arith.constant 0 : index
    %c0_285 = arith.constant 0 : index
    %262 = vector.load %arg2[%c4_282, %c3_283, %c0_284, %c0_285] : memref<6x8x9x3xbf16, #tpu.memory_space<vmem>>, vector<1x1x8x3xbf16>
    %263 = vector.shape_cast %262 : vector<1x1x8x3xbf16> to vector<8x3xbf16>
    %c6_286 = arith.constant 6 : index
    %c0_287 = arith.constant 0 : index
    %c0_288 = arith.constant 0 : index
    %264 = vector.load %arg3[%c6_286, %c0_287, %c0_288] : memref<9x3x32xbf16, #tpu.memory_space<vmem>>, vector<1x3x32xbf16>
    %265 = vector.shape_cast %264 : vector<1x3x32xbf16> to vector<3x32xbf16>
    %cst_289 = arith.constant dense<0.000000e+00> : vector<8x32xf32>
    %266 = tpu.matmul %263, %265, %cst_289 {dimension_numbers = #tpu.dot_dimension_numbers<[1], [0], [0], [1], [0, 0, 1, 1], [], []>} : vector<8x3xbf16>, vector<3x32xbf16>, vector<8x32xf32> -> vector<8x32xf32>
    %267 = arith.addf %261, %266 : vector<8x32xf32>
    %c5_290 = arith.constant 5 : index
    %c3_291 = arith.constant 3 : index
    %c0_292 = arith.constant 0 : index
    %c0_293 = arith.constant 0 : index
    %268 = vector.load %arg2[%c5_290, %c3_291, %c0_292, %c0_293] : memref<6x8x9x3xbf16, #tpu.memory_space<vmem>>, vector<1x1x8x3xbf16>
    %269 = vector.shape_cast %268 : vector<1x1x8x3xbf16> to vector<8x3xbf16>
    %c7_294 = arith.constant 7 : index
    %c0_295 = arith.constant 0 : index
    %c0_296 = arith.constant 0 : index
    %270 = vector.load %arg3[%c7_294, %c0_295, %c0_296] : memref<9x3x32xbf16, #tpu.memory_space<vmem>>, vector<1x3x32xbf16>
    %271 = vector.shape_cast %270 : vector<1x3x32xbf16> to vector<3x32xbf16>
    %cst_297 = arith.constant dense<0.000000e+00> : vector<8x32xf32>
    %272 = tpu.matmul %269, %271, %cst_297 {dimension_numbers = #tpu.dot_dimension_numbers<[1], [0], [0], [1], [0, 0, 1, 1], [], []>} : vector<8x3xbf16>, vector<3x32xbf16>, vector<8x32xf32> -> vector<8x32xf32>
    %273 = arith.addf %267, %272 : vector<8x32xf32>
    %c4_298 = arith.constant 4 : index
    %c3_299 = arith.constant 3 : index
    %c1_300 = arith.constant 1 : index
    %c0_301 = arith.constant 0 : index
    %274 = vector.load %arg2[%c4_298, %c3_299, %c1_300, %c0_301] : memref<6x8x9x3xbf16, #tpu.memory_space<vmem>>, vector<1x1x8x3xbf16>
    %275 = vector.shape_cast %274 : vector<1x1x8x3xbf16> to vector<8x3xbf16>
    %c8_302 = arith.constant 8 : index
    %c0_303 = arith.constant 0 : index
    %c0_304 = arith.constant 0 : index
    %276 = vector.load %arg3[%c8_302, %c0_303, %c0_304] : memref<9x3x32xbf16, #tpu.memory_space<vmem>>, vector<1x3x32xbf16>
    %277 = vector.shape_cast %276 : vector<1x3x32xbf16> to vector<3x32xbf16>
    %cst_305 = arith.constant dense<0.000000e+00> : vector<8x32xf32>
    %278 = tpu.matmul %275, %277, %cst_305 {dimension_numbers = #tpu.dot_dimension_numbers<[1], [0], [0], [1], [0, 0, 1, 1], [], []>} : vector<8x3xbf16>, vector<3x32xbf16>, vector<8x32xf32> -> vector<8x32xf32>
    %279 = arith.addf %273, %278 : vector<8x32xf32>
    %280 = vector.broadcast %0 : vector<1x32xf32> to vector<8x32xf32>
    %281 = arith.mulf %279, %280 : vector<8x32xf32>
    %282 = vector.broadcast %1 : vector<1x32xf32> to vector<8x32xf32>
    %283 = arith.addf %281, %282 : vector<8x32xf32>
    %cst_306 = arith.constant 3.000000e+01 : f32
    %284 = vector.broadcast %cst_306 : f32 to vector<8x32xf32>
    %285 = arith.minimumf %283, %284 : vector<8x32xf32>
    %286 = math.exp %285 : vector<8x32xf32>
    %cst_307 = arith.constant 2.000000e+00 : f32
    %287 = vector.broadcast %cst_307 : f32 to vector<8x32xf32>
    %288 = arith.addf %286, %287 : vector<8x32xf32>
    %289 = arith.mulf %286, %288 : vector<8x32xf32>
    %cst_308 = arith.constant 2.000000e+00 : f32
    %290 = vector.broadcast %cst_308 : f32 to vector<8x32xf32>
    %291 = arith.addf %289, %290 : vector<8x32xf32>
    %292 = tpu.reciprocal %291 {approx = true} : vector<8x32xf32> -> vector<8x32xf32>
    %cst_309 = arith.constant 2.000000e+00 : f32
    %293 = vector.broadcast %cst_309 : f32 to vector<8x32xf32>
    %294 = arith.mulf %293, %292 : vector<8x32xf32>
    %cst_310 = arith.constant 1.000000e+00 : f32
    %295 = vector.broadcast %cst_310 : f32 to vector<8x32xf32>
    %296 = arith.subf %295, %294 : vector<8x32xf32>
    %297 = arith.mulf %283, %296 : vector<8x32xf32>
    %298 = arith.truncf %297 : vector<8x32xf32> to vector<8x32xbf16>
    %c3_311 = arith.constant 3 : index
    %c0_312 = arith.constant 0 : index
    %c0_313 = arith.constant 0 : index
    %299 = vector.load %arg6[%c3_311, %c0_312, %c0_313] : memref<8x8x32xbf16, #tpu.memory_space<vmem>>, vector<1x8x32xbf16>
    %300 = vector.shape_cast %299 : vector<1x8x32xbf16> to vector<8x32xbf16>
    %301 = vector.shape_cast %298 : vector<8x32xbf16> to vector<1x8x32xbf16>
    tpu.vector_store %arg6[%c3_311, %c0_312, %c0_313], %301 {strides = array<i32>} : memref<8x8x32xbf16, #tpu.memory_space<vmem>>, vector<1x8x32xbf16>,
    %c0_314 = arith.constant 0 : index
    %c4_315 = arith.constant 4 : index
    %c0_316 = arith.constant 0 : index
    %c0_317 = arith.constant 0 : index
    %302 = vector.load %arg2[%c0_314, %c4_315, %c0_316, %c0_317] : memref<6x8x9x3xbf16, #tpu.memory_space<vmem>>, vector<1x1x8x3xbf16>
    %303 = vector.shape_cast %302 : vector<1x1x8x3xbf16> to vector<8x3xbf16>
    %c0_318 = arith.constant 0 : index
    %c0_319 = arith.constant 0 : index
    %c0_320 = arith.constant 0 : index
    %304 = vector.load %arg3[%c0_318, %c0_319, %c0_320] : memref<9x3x32xbf16, #tpu.memory_space<vmem>>, vector<1x3x32xbf16>
    %305 = vector.shape_cast %304 : vector<1x3x32xbf16> to vector<3x32xbf16>
    %cst_321 = arith.constant dense<0.000000e+00> : vector<8x32xf32>
    %306 = tpu.matmul %303, %305, %cst_321 {dimension_numbers = #tpu.dot_dimension_numbers<[1], [0], [0], [1], [0, 0, 1, 1], [], []>} : vector<8x3xbf16>, vector<3x32xbf16>, vector<8x32xf32> -> vector<8x32xf32>
    %c1_322 = arith.constant 1 : index
    %c4_323 = arith.constant 4 : index
    %c0_324 = arith.constant 0 : index
    %c0_325 = arith.constant 0 : index
    %307 = vector.load %arg2[%c1_322, %c4_323, %c0_324, %c0_325] : memref<6x8x9x3xbf16, #tpu.memory_space<vmem>>, vector<1x1x8x3xbf16>
    %308 = vector.shape_cast %307 : vector<1x1x8x3xbf16> to vector<8x3xbf16>
    %c1_326 = arith.constant 1 : index
    %c0_327 = arith.constant 0 : index
    %c0_328 = arith.constant 0 : index
    %309 = vector.load %arg3[%c1_326, %c0_327, %c0_328] : memref<9x3x32xbf16, #tpu.memory_space<vmem>>, vector<1x3x32xbf16>
    %310 = vector.shape_cast %309 : vector<1x3x32xbf16> to vector<3x32xbf16>
    %cst_329 = arith.constant dense<0.000000e+00> : vector<8x32xf32>
    %311 = tpu.matmul %308, %310, %cst_329 {dimension_numbers = #tpu.dot_dimension_numbers<[1], [0], [0], [1], [0, 0, 1, 1], [], []>} : vector<8x3xbf16>, vector<3x32xbf16>, vector<8x32xf32> -> vector<8x32xf32>
    %312 = arith.addf %306, %311 : vector<8x32xf32>
    %c0_330 = arith.constant 0 : index
    %c4_331 = arith.constant 4 : index
    %c1_332 = arith.constant 1 : index
    %c0_333 = arith.constant 0 : index
    %313 = vector.load %arg2[%c0_330, %c4_331, %c1_332, %c0_333] : memref<6x8x9x3xbf16, #tpu.memory_space<vmem>>, vector<1x1x8x3xbf16>
    %314 = vector.shape_cast %313 : vector<1x1x8x3xbf16> to vector<8x3xbf16>
    %c2_334 = arith.constant 2 : index
    %c0_335 = arith.constant 0 : index
    %c0_336 = arith.constant 0 : index
    %315 = vector.load %arg3[%c2_334, %c0_335, %c0_336] : memref<9x3x32xbf16, #tpu.memory_space<vmem>>, vector<1x3x32xbf16>
    %316 = vector.shape_cast %315 : vector<1x3x32xbf16> to vector<3x32xbf16>
    %cst_337 = arith.constant dense<0.000000e+00> : vector<8x32xf32>
    %317 = tpu.matmul %314, %316, %cst_337 {dimension_numbers = #tpu.dot_dimension_numbers<[1], [0], [0], [1], [0, 0, 1, 1], [], []>} : vector<8x3xbf16>, vector<3x32xbf16>, vector<8x32xf32> -> vector<8x32xf32>
    %318 = arith.addf %312, %317 : vector<8x32xf32>
    %c2_338 = arith.constant 2 : index
    %c4_339 = arith.constant 4 : index
    %c0_340 = arith.constant 0 : index
    %c0_341 = arith.constant 0 : index
    %319 = vector.load %arg2[%c2_338, %c4_339, %c0_340, %c0_341] : memref<6x8x9x3xbf16, #tpu.memory_space<vmem>>, vector<1x1x8x3xbf16>
    %320 = vector.shape_cast %319 : vector<1x1x8x3xbf16> to vector<8x3xbf16>
    %c3_342 = arith.constant 3 : index
    %c0_343 = arith.constant 0 : index
    %c0_344 = arith.constant 0 : index
    %321 = vector.load %arg3[%c3_342, %c0_343, %c0_344] : memref<9x3x32xbf16, #tpu.memory_space<vmem>>, vector<1x3x32xbf16>
    %322 = vector.shape_cast %321 : vector<1x3x32xbf16> to vector<3x32xbf16>
    %cst_345 = arith.constant dense<0.000000e+00> : vector<8x32xf32>
    %323 = tpu.matmul %320, %322, %cst_345 {dimension_numbers = #tpu.dot_dimension_numbers<[1], [0], [0], [1], [0, 0, 1, 1], [], []>} : vector<8x3xbf16>, vector<3x32xbf16>, vector<8x32xf32> -> vector<8x32xf32>
    %324 = arith.addf %318, %323 : vector<8x32xf32>
    %c3_346 = arith.constant 3 : index
    %c4_347 = arith.constant 4 : index
    %c0_348 = arith.constant 0 : index
    %c0_349 = arith.constant 0 : index
    %325 = vector.load %arg2[%c3_346, %c4_347, %c0_348, %c0_349] : memref<6x8x9x3xbf16, #tpu.memory_space<vmem>>, vector<1x1x8x3xbf16>
    %326 = vector.shape_cast %325 : vector<1x1x8x3xbf16> to vector<8x3xbf16>
    %c4_350 = arith.constant 4 : index
    %c0_351 = arith.constant 0 : index
    %c0_352 = arith.constant 0 : index
    %327 = vector.load %arg3[%c4_350, %c0_351, %c0_352] : memref<9x3x32xbf16, #tpu.memory_space<vmem>>, vector<1x3x32xbf16>
    %328 = vector.shape_cast %327 : vector<1x3x32xbf16> to vector<3x32xbf16>
    %cst_353 = arith.constant dense<0.000000e+00> : vector<8x32xf32>
    %329 = tpu.matmul %326, %328, %cst_353 {dimension_numbers = #tpu.dot_dimension_numbers<[1], [0], [0], [1], [0, 0, 1, 1], [], []>} : vector<8x3xbf16>, vector<3x32xbf16>, vector<8x32xf32> -> vector<8x32xf32>
    %330 = arith.addf %324, %329 : vector<8x32xf32>
    %c2_354 = arith.constant 2 : index
    %c4_355 = arith.constant 4 : index
    %c1_356 = arith.constant 1 : index
    %c0_357 = arith.constant 0 : index
    %331 = vector.load %arg2[%c2_354, %c4_355, %c1_356, %c0_357] : memref<6x8x9x3xbf16, #tpu.memory_space<vmem>>, vector<1x1x8x3xbf16>
    %332 = vector.shape_cast %331 : vector<1x1x8x3xbf16> to vector<8x3xbf16>
    %c5_358 = arith.constant 5 : index
    %c0_359 = arith.constant 0 : index
    %c0_360 = arith.constant 0 : index
    %333 = vector.load %arg3[%c5_358, %c0_359, %c0_360] : memref<9x3x32xbf16, #tpu.memory_space<vmem>>, vector<1x3x32xbf16>
    %334 = vector.shape_cast %333 : vector<1x3x32xbf16> to vector<3x32xbf16>
    %cst_361 = arith.constant dense<0.000000e+00> : vector<8x32xf32>
    %335 = tpu.matmul %332, %334, %cst_361 {dimension_numbers = #tpu.dot_dimension_numbers<[1], [0], [0], [1], [0, 0, 1, 1], [], []>} : vector<8x3xbf16>, vector<3x32xbf16>, vector<8x32xf32> -> vector<8x32xf32>
    %336 = arith.addf %330, %335 : vector<8x32xf32>
    %c4_362 = arith.constant 4 : index
    %c4_363 = arith.constant 4 : index
    %c0_364 = arith.constant 0 : index
    %c0_365 = arith.constant 0 : index
    %337 = vector.load %arg2[%c4_362, %c4_363, %c0_364, %c0_365] : memref<6x8x9x3xbf16, #tpu.memory_space<vmem>>, vector<1x1x8x3xbf16>
    %338 = vector.shape_cast %337 : vector<1x1x8x3xbf16> to vector<8x3xbf16>
    %c6_366 = arith.constant 6 : index
    %c0_367 = arith.constant 0 : index
    %c0_368 = arith.constant 0 : index
    %339 = vector.load %arg3[%c6_366, %c0_367, %c0_368] : memref<9x3x32xbf16, #tpu.memory_space<vmem>>, vector<1x3x32xbf16>
    %340 = vector.shape_cast %339 : vector<1x3x32xbf16> to vector<3x32xbf16>
    %cst_369 = arith.constant dense<0.000000e+00> : vector<8x32xf32>
    %341 = tpu.matmul %338, %340, %cst_369 {dimension_numbers = #tpu.dot_dimension_numbers<[1], [0], [0], [1], [0, 0, 1, 1], [], []>} : vector<8x3xbf16>, vector<3x32xbf16>, vector<8x32xf32> -> vector<8x32xf32>
    %342 = arith.addf %336, %341 : vector<8x32xf32>
    %c5_370 = arith.constant 5 : index
    %c4_371 = arith.constant 4 : index
    %c0_372 = arith.constant 0 : index
    %c0_373 = arith.constant 0 : index
    %343 = vector.load %arg2[%c5_370, %c4_371, %c0_372, %c0_373] : memref<6x8x9x3xbf16, #tpu.memory_space<vmem>>, vector<1x1x8x3xbf16>
    %344 = vector.shape_cast %343 : vector<1x1x8x3xbf16> to vector<8x3xbf16>
    %c7_374 = arith.constant 7 : index
    %c0_375 = arith.constant 0 : index
    %c0_376 = arith.constant 0 : index
    %345 = vector.load %arg3[%c7_374, %c0_375, %c0_376] : memref<9x3x32xbf16, #tpu.memory_space<vmem>>, vector<1x3x32xbf16>
    %346 = vector.shape_cast %345 : vector<1x3x32xbf16> to vector<3x32xbf16>
    %cst_377 = arith.constant dense<0.000000e+00> : vector<8x32xf32>
    %347 = tpu.matmul %344, %346, %cst_377 {dimension_numbers = #tpu.dot_dimension_numbers<[1], [0], [0], [1], [0, 0, 1, 1], [], []>} : vector<8x3xbf16>, vector<3x32xbf16>, vector<8x32xf32> -> vector<8x32xf32>
    %348 = arith.addf %342, %347 : vector<8x32xf32>
    %c4_378 = arith.constant 4 : index
    %c4_379 = arith.constant 4 : index
    %c1_380 = arith.constant 1 : index
    %c0_381 = arith.constant 0 : index
    %349 = vector.load %arg2[%c4_378, %c4_379, %c1_380, %c0_381] : memref<6x8x9x3xbf16, #tpu.memory_space<vmem>>, vector<1x1x8x3xbf16>
    %350 = vector.shape_cast %349 : vector<1x1x8x3xbf16> to vector<8x3xbf16>
    %c8_382 = arith.constant 8 : index
    %c0_383 = arith.constant 0 : index
    %c0_384 = arith.constant 0 : index
    %351 = vector.load %arg3[%c8_382, %c0_383, %c0_384] : memref<9x3x32xbf16, #tpu.memory_space<vmem>>, vector<1x3x32xbf16>
    %352 = vector.shape_cast %351 : vector<1x3x32xbf16> to vector<3x32xbf16>
    %cst_385 = arith.constant dense<0.000000e+00> : vector<8x32xf32>
    %353 = tpu.matmul %350, %352, %cst_385 {dimension_numbers = #tpu.dot_dimension_numbers<[1], [0], [0], [1], [0, 0, 1, 1], [], []>} : vector<8x3xbf16>, vector<3x32xbf16>, vector<8x32xf32> -> vector<8x32xf32>
    %354 = arith.addf %348, %353 : vector<8x32xf32>
    %355 = vector.broadcast %0 : vector<1x32xf32> to vector<8x32xf32>
    %356 = arith.mulf %354, %355 : vector<8x32xf32>
    %357 = vector.broadcast %1 : vector<1x32xf32> to vector<8x32xf32>
    %358 = arith.addf %356, %357 : vector<8x32xf32>
    %cst_386 = arith.constant 3.000000e+01 : f32
    %359 = vector.broadcast %cst_386 : f32 to vector<8x32xf32>
    %360 = arith.minimumf %358, %359 : vector<8x32xf32>
    %361 = math.exp %360 : vector<8x32xf32>
    %cst_387 = arith.constant 2.000000e+00 : f32
    %362 = vector.broadcast %cst_387 : f32 to vector<8x32xf32>
    %363 = arith.addf %361, %362 : vector<8x32xf32>
    %364 = arith.mulf %361, %363 : vector<8x32xf32>
    %cst_388 = arith.constant 2.000000e+00 : f32
    %365 = vector.broadcast %cst_388 : f32 to vector<8x32xf32>
    %366 = arith.addf %364, %365 : vector<8x32xf32>
    %367 = tpu.reciprocal %366 {approx = true} : vector<8x32xf32> -> vector<8x32xf32>
    %cst_389 = arith.constant 2.000000e+00 : f32
    %368 = vector.broadcast %cst_389 : f32 to vector<8x32xf32>
    %369 = arith.mulf %368, %367 : vector<8x32xf32>
    %cst_390 = arith.constant 1.000000e+00 : f32
    %370 = vector.broadcast %cst_390 : f32 to vector<8x32xf32>
    %371 = arith.subf %370, %369 : vector<8x32xf32>
    %372 = arith.mulf %358, %371 : vector<8x32xf32>
    %373 = arith.truncf %372 : vector<8x32xf32> to vector<8x32xbf16>
    %c4_391 = arith.constant 4 : index
    %c0_392 = arith.constant 0 : index
    %c0_393 = arith.constant 0 : index
    %374 = vector.load %arg6[%c4_391, %c0_392, %c0_393] : memref<8x8x32xbf16, #tpu.memory_space<vmem>>, vector<1x8x32xbf16>
    %375 = vector.shape_cast %374 : vector<1x8x32xbf16> to vector<8x32xbf16>
    %376 = vector.shape_cast %373 : vector<8x32xbf16> to vector<1x8x32xbf16>
    tpu.vector_store %arg6[%c4_391, %c0_392, %c0_393], %376 {strides = array<i32>} : memref<8x8x32xbf16, #tpu.memory_space<vmem>>, vector<1x8x32xbf16>,
    %c0_394 = arith.constant 0 : index
    %c5_395 = arith.constant 5 : index
    %c0_396 = arith.constant 0 : index
    %c0_397 = arith.constant 0 : index
    %377 = vector.load %arg2[%c0_394, %c5_395, %c0_396, %c0_397] : memref<6x8x9x3xbf16, #tpu.memory_space<vmem>>, vector<1x1x8x3xbf16>
    %378 = vector.shape_cast %377 : vector<1x1x8x3xbf16> to vector<8x3xbf16>
    %c0_398 = arith.constant 0 : index
    %c0_399 = arith.constant 0 : index
    %c0_400 = arith.constant 0 : index
    %379 = vector.load %arg3[%c0_398, %c0_399, %c0_400] : memref<9x3x32xbf16, #tpu.memory_space<vmem>>, vector<1x3x32xbf16>
    %380 = vector.shape_cast %379 : vector<1x3x32xbf16> to vector<3x32xbf16>
    %cst_401 = arith.constant dense<0.000000e+00> : vector<8x32xf32>
    %381 = tpu.matmul %378, %380, %cst_401 {dimension_numbers = #tpu.dot_dimension_numbers<[1], [0], [0], [1], [0, 0, 1, 1], [], []>} : vector<8x3xbf16>, vector<3x32xbf16>, vector<8x32xf32> -> vector<8x32xf32>
    %c1_402 = arith.constant 1 : index
    %c5_403 = arith.constant 5 : index
    %c0_404 = arith.constant 0 : index
    %c0_405 = arith.constant 0 : index
    %382 = vector.load %arg2[%c1_402, %c5_403, %c0_404, %c0_405] : memref<6x8x9x3xbf16, #tpu.memory_space<vmem>>, vector<1x1x8x3xbf16>
    %383 = vector.shape_cast %382 : vector<1x1x8x3xbf16> to vector<8x3xbf16>
    %c1_406 = arith.constant 1 : index
    %c0_407 = arith.constant 0 : index
    %c0_408 = arith.constant 0 : index
    %384 = vector.load %arg3[%c1_406, %c0_407, %c0_408] : memref<9x3x32xbf16, #tpu.memory_space<vmem>>, vector<1x3x32xbf16>
    %385 = vector.shape_cast %384 : vector<1x3x32xbf16> to vector<3x32xbf16>
    %cst_409 = arith.constant dense<0.000000e+00> : vector<8x32xf32>
    %386 = tpu.matmul %383, %385, %cst_409 {dimension_numbers = #tpu.dot_dimension_numbers<[1], [0], [0], [1], [0, 0, 1, 1], [], []>} : vector<8x3xbf16>, vector<3x32xbf16>, vector<8x32xf32> -> vector<8x32xf32>
    %387 = arith.addf %381, %386 : vector<8x32xf32>
    %c0_410 = arith.constant 0 : index
    %c5_411 = arith.constant 5 : index
    %c1_412 = arith.constant 1 : index
    %c0_413 = arith.constant 0 : index
    %388 = vector.load %arg2[%c0_410, %c5_411, %c1_412, %c0_413] : memref<6x8x9x3xbf16, #tpu.memory_space<vmem>>, vector<1x1x8x3xbf16>
    %389 = vector.shape_cast %388 : vector<1x1x8x3xbf16> to vector<8x3xbf16>
    %c2_414 = arith.constant 2 : index
    %c0_415 = arith.constant 0 : index
    %c0_416 = arith.constant 0 : index
    %390 = vector.load %arg3[%c2_414, %c0_415, %c0_416] : memref<9x3x32xbf16, #tpu.memory_space<vmem>>, vector<1x3x32xbf16>
    %391 = vector.shape_cast %390 : vector<1x3x32xbf16> to vector<3x32xbf16>
    %cst_417 = arith.constant dense<0.000000e+00> : vector<8x32xf32>
    %392 = tpu.matmul %389, %391, %cst_417 {dimension_numbers = #tpu.dot_dimension_numbers<[1], [0], [0], [1], [0, 0, 1, 1], [], []>} : vector<8x3xbf16>, vector<3x32xbf16>, vector<8x32xf32> -> vector<8x32xf32>
    %393 = arith.addf %387, %392 : vector<8x32xf32>
    %c2_418 = arith.constant 2 : index
    %c5_419 = arith.constant 5 : index
    %c0_420 = arith.constant 0 : index
    %c0_421 = arith.constant 0 : index
    %394 = vector.load %arg2[%c2_418, %c5_419, %c0_420, %c0_421] : memref<6x8x9x3xbf16, #tpu.memory_space<vmem>>, vector<1x1x8x3xbf16>
    %395 = vector.shape_cast %394 : vector<1x1x8x3xbf16> to vector<8x3xbf16>
    %c3_422 = arith.constant 3 : index
    %c0_423 = arith.constant 0 : index
    %c0_424 = arith.constant 0 : index
    %396 = vector.load %arg3[%c3_422, %c0_423, %c0_424] : memref<9x3x32xbf16, #tpu.memory_space<vmem>>, vector<1x3x32xbf16>
    %397 = vector.shape_cast %396 : vector<1x3x32xbf16> to vector<3x32xbf16>
    %cst_425 = arith.constant dense<0.000000e+00> : vector<8x32xf32>
    %398 = tpu.matmul %395, %397, %cst_425 {dimension_numbers = #tpu.dot_dimension_numbers<[1], [0], [0], [1], [0, 0, 1, 1], [], []>} : vector<8x3xbf16>, vector<3x32xbf16>, vector<8x32xf32> -> vector<8x32xf32>
    %399 = arith.addf %393, %398 : vector<8x32xf32>
    %c3_426 = arith.constant 3 : index
    %c5_427 = arith.constant 5 : index
    %c0_428 = arith.constant 0 : index
    %c0_429 = arith.constant 0 : index
    %400 = vector.load %arg2[%c3_426, %c5_427, %c0_428, %c0_429] : memref<6x8x9x3xbf16, #tpu.memory_space<vmem>>, vector<1x1x8x3xbf16>
    %401 = vector.shape_cast %400 : vector<1x1x8x3xbf16> to vector<8x3xbf16>
    %c4_430 = arith.constant 4 : index
    %c0_431 = arith.constant 0 : index
    %c0_432 = arith.constant 0 : index
    %402 = vector.load %arg3[%c4_430, %c0_431, %c0_432] : memref<9x3x32xbf16, #tpu.memory_space<vmem>>, vector<1x3x32xbf16>
    %403 = vector.shape_cast %402 : vector<1x3x32xbf16> to vector<3x32xbf16>
    %cst_433 = arith.constant dense<0.000000e+00> : vector<8x32xf32>
    %404 = tpu.matmul %401, %403, %cst_433 {dimension_numbers = #tpu.dot_dimension_numbers<[1], [0], [0], [1], [0, 0, 1, 1], [], []>} : vector<8x3xbf16>, vector<3x32xbf16>, vector<8x32xf32> -> vector<8x32xf32>
    %405 = arith.addf %399, %404 : vector<8x32xf32>
    %c2_434 = arith.constant 2 : index
    %c5_435 = arith.constant 5 : index
    %c1_436 = arith.constant 1 : index
    %c0_437 = arith.constant 0 : index
    %406 = vector.load %arg2[%c2_434, %c5_435, %c1_436, %c0_437] : memref<6x8x9x3xbf16, #tpu.memory_space<vmem>>, vector<1x1x8x3xbf16>
    %407 = vector.shape_cast %406 : vector<1x1x8x3xbf16> to vector<8x3xbf16>
    %c5_438 = arith.constant 5 : index
    %c0_439 = arith.constant 0 : index
    %c0_440 = arith.constant 0 : index
    %408 = vector.load %arg3[%c5_438, %c0_439, %c0_440] : memref<9x3x32xbf16, #tpu.memory_space<vmem>>, vector<1x3x32xbf16>
    %409 = vector.shape_cast %408 : vector<1x3x32xbf16> to vector<3x32xbf16>
    %cst_441 = arith.constant dense<0.000000e+00> : vector<8x32xf32>
    %410 = tpu.matmul %407, %409, %cst_441 {dimension_numbers = #tpu.dot_dimension_numbers<[1], [0], [0], [1], [0, 0, 1, 1], [], []>} : vector<8x3xbf16>, vector<3x32xbf16>, vector<8x32xf32> -> vector<8x32xf32>
    %411 = arith.addf %405, %410 : vector<8x32xf32>
    %c4_442 = arith.constant 4 : index
    %c5_443 = arith.constant 5 : index
    %c0_444 = arith.constant 0 : index
    %c0_445 = arith.constant 0 : index
    %412 = vector.load %arg2[%c4_442, %c5_443, %c0_444, %c0_445] : memref<6x8x9x3xbf16, #tpu.memory_space<vmem>>, vector<1x1x8x3xbf16>
    %413 = vector.shape_cast %412 : vector<1x1x8x3xbf16> to vector<8x3xbf16>
    %c6_446 = arith.constant 6 : index
    %c0_447 = arith.constant 0 : index
    %c0_448 = arith.constant 0 : index
    %414 = vector.load %arg3[%c6_446, %c0_447, %c0_448] : memref<9x3x32xbf16, #tpu.memory_space<vmem>>, vector<1x3x32xbf16>
    %415 = vector.shape_cast %414 : vector<1x3x32xbf16> to vector<3x32xbf16>
    %cst_449 = arith.constant dense<0.000000e+00> : vector<8x32xf32>
    %416 = tpu.matmul %413, %415, %cst_449 {dimension_numbers = #tpu.dot_dimension_numbers<[1], [0], [0], [1], [0, 0, 1, 1], [], []>} : vector<8x3xbf16>, vector<3x32xbf16>, vector<8x32xf32> -> vector<8x32xf32>
    %417 = arith.addf %411, %416 : vector<8x32xf32>
    %c5_450 = arith.constant 5 : index
    %c5_451 = arith.constant 5 : index
    %c0_452 = arith.constant 0 : index
    %c0_453 = arith.constant 0 : index
    %418 = vector.load %arg2[%c5_450, %c5_451, %c0_452, %c0_453] : memref<6x8x9x3xbf16, #tpu.memory_space<vmem>>, vector<1x1x8x3xbf16>
    %419 = vector.shape_cast %418 : vector<1x1x8x3xbf16> to vector<8x3xbf16>
    %c7_454 = arith.constant 7 : index
    %c0_455 = arith.constant 0 : index
    %c0_456 = arith.constant 0 : index
    %420 = vector.load %arg3[%c7_454, %c0_455, %c0_456] : memref<9x3x32xbf16, #tpu.memory_space<vmem>>, vector<1x3x32xbf16>
    %421 = vector.shape_cast %420 : vector<1x3x32xbf16> to vector<3x32xbf16>
    %cst_457 = arith.constant dense<0.000000e+00> : vector<8x32xf32>
    %422 = tpu.matmul %419, %421, %cst_457 {dimension_numbers = #tpu.dot_dimension_numbers<[1], [0], [0], [1], [0, 0, 1, 1], [], []>} : vector<8x3xbf16>, vector<3x32xbf16>, vector<8x32xf32> -> vector<8x32xf32>
    %423 = arith.addf %417, %422 : vector<8x32xf32>
    %c4_458 = arith.constant 4 : index
    %c5_459 = arith.constant 5 : index
    %c1_460 = arith.constant 1 : index
    %c0_461 = arith.constant 0 : index
    %424 = vector.load %arg2[%c4_458, %c5_459, %c1_460, %c0_461] : memref<6x8x9x3xbf16, #tpu.memory_space<vmem>>, vector<1x1x8x3xbf16>
    %425 = vector.shape_cast %424 : vector<1x1x8x3xbf16> to vector<8x3xbf16>
    %c8_462 = arith.constant 8 : index
    %c0_463 = arith.constant 0 : index
    %c0_464 = arith.constant 0 : index
    %426 = vector.load %arg3[%c8_462, %c0_463, %c0_464] : memref<9x3x32xbf16, #tpu.memory_space<vmem>>, vector<1x3x32xbf16>
    %427 = vector.shape_cast %426 : vector<1x3x32xbf16> to vector<3x32xbf16>
    %cst_465 = arith.constant dense<0.000000e+00> : vector<8x32xf32>
    %428 = tpu.matmul %425, %427, %cst_465 {dimension_numbers = #tpu.dot_dimension_numbers<[1], [0], [0], [1], [0, 0, 1, 1], [], []>} : vector<8x3xbf16>, vector<3x32xbf16>, vector<8x32xf32> -> vector<8x32xf32>
    %429 = arith.addf %423, %428 : vector<8x32xf32>
    %430 = vector.broadcast %0 : vector<1x32xf32> to vector<8x32xf32>
    %431 = arith.mulf %429, %430 : vector<8x32xf32>
    %432 = vector.broadcast %1 : vector<1x32xf32> to vector<8x32xf32>
    %433 = arith.addf %431, %432 : vector<8x32xf32>
    %cst_466 = arith.constant 3.000000e+01 : f32
    %434 = vector.broadcast %cst_466 : f32 to vector<8x32xf32>
    %435 = arith.minimumf %433, %434 : vector<8x32xf32>
    %436 = math.exp %435 : vector<8x32xf32>
    %cst_467 = arith.constant 2.000000e+00 : f32
    %437 = vector.broadcast %cst_467 : f32 to vector<8x32xf32>
    %438 = arith.addf %436, %437 : vector<8x32xf32>
    %439 = arith.mulf %436, %438 : vector<8x32xf32>
    %cst_468 = arith.constant 2.000000e+00 : f32
    %440 = vector.broadcast %cst_468 : f32 to vector<8x32xf32>
    %441 = arith.addf %439, %440 : vector<8x32xf32>
    %442 = tpu.reciprocal %441 {approx = true} : vector<8x32xf32> -> vector<8x32xf32>
    %cst_469 = arith.constant 2.000000e+00 : f32
    %443 = vector.broadcast %cst_469 : f32 to vector<8x32xf32>
    %444 = arith.mulf %443, %442 : vector<8x32xf32>
    %cst_470 = arith.constant 1.000000e+00 : f32
    %445 = vector.broadcast %cst_470 : f32 to vector<8x32xf32>
    %446 = arith.subf %445, %444 : vector<8x32xf32>
    %447 = arith.mulf %433, %446 : vector<8x32xf32>
    %448 = arith.truncf %447 : vector<8x32xf32> to vector<8x32xbf16>
    %c5_471 = arith.constant 5 : index
    %c0_472 = arith.constant 0 : index
    %c0_473 = arith.constant 0 : index
    %449 = vector.load %arg6[%c5_471, %c0_472, %c0_473] : memref<8x8x32xbf16, #tpu.memory_space<vmem>>, vector<1x8x32xbf16>
    %450 = vector.shape_cast %449 : vector<1x8x32xbf16> to vector<8x32xbf16>
    %451 = vector.shape_cast %448 : vector<8x32xbf16> to vector<1x8x32xbf16>
    tpu.vector_store %arg6[%c5_471, %c0_472, %c0_473], %451 {strides = array<i32>} : memref<8x8x32xbf16, #tpu.memory_space<vmem>>, vector<1x8x32xbf16>,
    %c0_474 = arith.constant 0 : index
    %c6_475 = arith.constant 6 : index
    %c0_476 = arith.constant 0 : index
    %c0_477 = arith.constant 0 : index
    %452 = vector.load %arg2[%c0_474, %c6_475, %c0_476, %c0_477] : memref<6x8x9x3xbf16, #tpu.memory_space<vmem>>, vector<1x1x8x3xbf16>
    %453 = vector.shape_cast %452 : vector<1x1x8x3xbf16> to vector<8x3xbf16>
    %c0_478 = arith.constant 0 : index
    %c0_479 = arith.constant 0 : index
    %c0_480 = arith.constant 0 : index
    %454 = vector.load %arg3[%c0_478, %c0_479, %c0_480] : memref<9x3x32xbf16, #tpu.memory_space<vmem>>, vector<1x3x32xbf16>
    %455 = vector.shape_cast %454 : vector<1x3x32xbf16> to vector<3x32xbf16>
    %cst_481 = arith.constant dense<0.000000e+00> : vector<8x32xf32>
    %456 = tpu.matmul %453, %455, %cst_481 {dimension_numbers = #tpu.dot_dimension_numbers<[1], [0], [0], [1], [0, 0, 1, 1], [], []>} : vector<8x3xbf16>, vector<3x32xbf16>, vector<8x32xf32> -> vector<8x32xf32>
    %c1_482 = arith.constant 1 : index
    %c6_483 = arith.constant 6 : index
    %c0_484 = arith.constant 0 : index
    %c0_485 = arith.constant 0 : index
    %457 = vector.load %arg2[%c1_482, %c6_483, %c0_484, %c0_485] : memref<6x8x9x3xbf16, #tpu.memory_space<vmem>>, vector<1x1x8x3xbf16>
    %458 = vector.shape_cast %457 : vector<1x1x8x3xbf16> to vector<8x3xbf16>
    %c1_486 = arith.constant 1 : index
    %c0_487 = arith.constant 0 : index
    %c0_488 = arith.constant 0 : index
    %459 = vector.load %arg3[%c1_486, %c0_487, %c0_488] : memref<9x3x32xbf16, #tpu.memory_space<vmem>>, vector<1x3x32xbf16>
    %460 = vector.shape_cast %459 : vector<1x3x32xbf16> to vector<3x32xbf16>
    %cst_489 = arith.constant dense<0.000000e+00> : vector<8x32xf32>
    %461 = tpu.matmul %458, %460, %cst_489 {dimension_numbers = #tpu.dot_dimension_numbers<[1], [0], [0], [1], [0, 0, 1, 1], [], []>} : vector<8x3xbf16>, vector<3x32xbf16>, vector<8x32xf32> -> vector<8x32xf32>
    %462 = arith.addf %456, %461 : vector<8x32xf32>
    %c0_490 = arith.constant 0 : index
    %c6_491 = arith.constant 6 : index
    %c1_492 = arith.constant 1 : index
    %c0_493 = arith.constant 0 : index
    %463 = vector.load %arg2[%c0_490, %c6_491, %c1_492, %c0_493] : memref<6x8x9x3xbf16, #tpu.memory_space<vmem>>, vector<1x1x8x3xbf16>
    %464 = vector.shape_cast %463 : vector<1x1x8x3xbf16> to vector<8x3xbf16>
    %c2_494 = arith.constant 2 : index
    %c0_495 = arith.constant 0 : index
    %c0_496 = arith.constant 0 : index
    %465 = vector.load %arg3[%c2_494, %c0_495, %c0_496] : memref<9x3x32xbf16, #tpu.memory_space<vmem>>, vector<1x3x32xbf16>
    %466 = vector.shape_cast %465 : vector<1x3x32xbf16> to vector<3x32xbf16>
    %cst_497 = arith.constant dense<0.000000e+00> : vector<8x32xf32>
    %467 = tpu.matmul %464, %466, %cst_497 {dimension_numbers = #tpu.dot_dimension_numbers<[1], [0], [0], [1], [0, 0, 1, 1], [], []>} : vector<8x3xbf16>, vector<3x32xbf16>, vector<8x32xf32> -> vector<8x32xf32>
    %468 = arith.addf %462, %467 : vector<8x32xf32>
    %c2_498 = arith.constant 2 : index
    %c6_499 = arith.constant 6 : index
    %c0_500 = arith.constant 0 : index
    %c0_501 = arith.constant 0 : index
    %469 = vector.load %arg2[%c2_498, %c6_499, %c0_500, %c0_501] : memref<6x8x9x3xbf16, #tpu.memory_space<vmem>>, vector<1x1x8x3xbf16>
    %470 = vector.shape_cast %469 : vector<1x1x8x3xbf16> to vector<8x3xbf16>
    %c3_502 = arith.constant 3 : index
    %c0_503 = arith.constant 0 : index
    %c0_504 = arith.constant 0 : index
    %471 = vector.load %arg3[%c3_502, %c0_503, %c0_504] : memref<9x3x32xbf16, #tpu.memory_space<vmem>>, vector<1x3x32xbf16>
    %472 = vector.shape_cast %471 : vector<1x3x32xbf16> to vector<3x32xbf16>
    %cst_505 = arith.constant dense<0.000000e+00> : vector<8x32xf32>
    %473 = tpu.matmul %470, %472, %cst_505 {dimension_numbers = #tpu.dot_dimension_numbers<[1], [0], [0], [1], [0, 0, 1, 1], [], []>} : vector<8x3xbf16>, vector<3x32xbf16>, vector<8x32xf32> -> vector<8x32xf32>
    %474 = arith.addf %468, %473 : vector<8x32xf32>
    %c3_506 = arith.constant 3 : index
    %c6_507 = arith.constant 6 : index
    %c0_508 = arith.constant 0 : index
    %c0_509 = arith.constant 0 : index
    %475 = vector.load %arg2[%c3_506, %c6_507, %c0_508, %c0_509] : memref<6x8x9x3xbf16, #tpu.memory_space<vmem>>, vector<1x1x8x3xbf16>
    %476 = vector.shape_cast %475 : vector<1x1x8x3xbf16> to vector<8x3xbf16>
    %c4_510 = arith.constant 4 : index
    %c0_511 = arith.constant 0 : index
    %c0_512 = arith.constant 0 : index
    %477 = vector.load %arg3[%c4_510, %c0_511, %c0_512] : memref<9x3x32xbf16, #tpu.memory_space<vmem>>, vector<1x3x32xbf16>
    %478 = vector.shape_cast %477 : vector<1x3x32xbf16> to vector<3x32xbf16>
    %cst_513 = arith.constant dense<0.000000e+00> : vector<8x32xf32>
    %479 = tpu.matmul %476, %478, %cst_513 {dimension_numbers = #tpu.dot_dimension_numbers<[1], [0], [0], [1], [0, 0, 1, 1], [], []>} : vector<8x3xbf16>, vector<3x32xbf16>, vector<8x32xf32> -> vector<8x32xf32>
    %480 = arith.addf %474, %479 : vector<8x32xf32>
    %c2_514 = arith.constant 2 : index
    %c6_515 = arith.constant 6 : index
    %c1_516 = arith.constant 1 : index
    %c0_517 = arith.constant 0 : index
    %481 = vector.load %arg2[%c2_514, %c6_515, %c1_516, %c0_517] : memref<6x8x9x3xbf16, #tpu.memory_space<vmem>>, vector<1x1x8x3xbf16>
    %482 = vector.shape_cast %481 : vector<1x1x8x3xbf16> to vector<8x3xbf16>
    %c5_518 = arith.constant 5 : index
    %c0_519 = arith.constant 0 : index
    %c0_520 = arith.constant 0 : index
    %483 = vector.load %arg3[%c5_518, %c0_519, %c0_520] : memref<9x3x32xbf16, #tpu.memory_space<vmem>>, vector<1x3x32xbf16>
    %484 = vector.shape_cast %483 : vector<1x3x32xbf16> to vector<3x32xbf16>
    %cst_521 = arith.constant dense<0.000000e+00> : vector<8x32xf32>
    %485 = tpu.matmul %482, %484, %cst_521 {dimension_numbers = #tpu.dot_dimension_numbers<[1], [0], [0], [1], [0, 0, 1, 1], [], []>} : vector<8x3xbf16>, vector<3x32xbf16>, vector<8x32xf32> -> vector<8x32xf32>
    %486 = arith.addf %480, %485 : vector<8x32xf32>
    %c4_522 = arith.constant 4 : index
    %c6_523 = arith.constant 6 : index
    %c0_524 = arith.constant 0 : index
    %c0_525 = arith.constant 0 : index
    %487 = vector.load %arg2[%c4_522, %c6_523, %c0_524, %c0_525] : memref<6x8x9x3xbf16, #tpu.memory_space<vmem>>, vector<1x1x8x3xbf16>
    %488 = vector.shape_cast %487 : vector<1x1x8x3xbf16> to vector<8x3xbf16>
    %c6_526 = arith.constant 6 : index
    %c0_527 = arith.constant 0 : index
    %c0_528 = arith.constant 0 : index
    %489 = vector.load %arg3[%c6_526, %c0_527, %c0_528] : memref<9x3x32xbf16, #tpu.memory_space<vmem>>, vector<1x3x32xbf16>
    %490 = vector.shape_cast %489 : vector<1x3x32xbf16> to vector<3x32xbf16>
    %cst_529 = arith.constant dense<0.000000e+00> : vector<8x32xf32>
    %491 = tpu.matmul %488, %490, %cst_529 {dimension_numbers = #tpu.dot_dimension_numbers<[1], [0], [0], [1], [0, 0, 1, 1], [], []>} : vector<8x3xbf16>, vector<3x32xbf16>, vector<8x32xf32> -> vector<8x32xf32>
    %492 = arith.addf %486, %491 : vector<8x32xf32>
    %c5_530 = arith.constant 5 : index
    %c6_531 = arith.constant 6 : index
    %c0_532 = arith.constant 0 : index
    %c0_533 = arith.constant 0 : index
    %493 = vector.load %arg2[%c5_530, %c6_531, %c0_532, %c0_533] : memref<6x8x9x3xbf16, #tpu.memory_space<vmem>>, vector<1x1x8x3xbf16>
    %494 = vector.shape_cast %493 : vector<1x1x8x3xbf16> to vector<8x3xbf16>
    %c7_534 = arith.constant 7 : index
    %c0_535 = arith.constant 0 : index
    %c0_536 = arith.constant 0 : index
    %495 = vector.load %arg3[%c7_534, %c0_535, %c0_536] : memref<9x3x32xbf16, #tpu.memory_space<vmem>>, vector<1x3x32xbf16>
    %496 = vector.shape_cast %495 : vector<1x3x32xbf16> to vector<3x32xbf16>
    %cst_537 = arith.constant dense<0.000000e+00> : vector<8x32xf32>
    %497 = tpu.matmul %494, %496, %cst_537 {dimension_numbers = #tpu.dot_dimension_numbers<[1], [0], [0], [1], [0, 0, 1, 1], [], []>} : vector<8x3xbf16>, vector<3x32xbf16>, vector<8x32xf32> -> vector<8x32xf32>
    %498 = arith.addf %492, %497 : vector<8x32xf32>
    %c4_538 = arith.constant 4 : index
    %c6_539 = arith.constant 6 : index
    %c1_540 = arith.constant 1 : index
    %c0_541 = arith.constant 0 : index
    %499 = vector.load %arg2[%c4_538, %c6_539, %c1_540, %c0_541] : memref<6x8x9x3xbf16, #tpu.memory_space<vmem>>, vector<1x1x8x3xbf16>
    %500 = vector.shape_cast %499 : vector<1x1x8x3xbf16> to vector<8x3xbf16>
    %c8_542 = arith.constant 8 : index
    %c0_543 = arith.constant 0 : index
    %c0_544 = arith.constant 0 : index
    %501 = vector.load %arg3[%c8_542, %c0_543, %c0_544] : memref<9x3x32xbf16, #tpu.memory_space<vmem>>, vector<1x3x32xbf16>
    %502 = vector.shape_cast %501 : vector<1x3x32xbf16> to vector<3x32xbf16>
    %cst_545 = arith.constant dense<0.000000e+00> : vector<8x32xf32>
    %503 = tpu.matmul %500, %502, %cst_545 {dimension_numbers = #tpu.dot_dimension_numbers<[1], [0], [0], [1], [0, 0, 1, 1], [], []>} : vector<8x3xbf16>, vector<3x32xbf16>, vector<8x32xf32> -> vector<8x32xf32>
    %504 = arith.addf %498, %503 : vector<8x32xf32>
    %505 = vector.broadcast %0 : vector<1x32xf32> to vector<8x32xf32>
    %506 = arith.mulf %504, %505 : vector<8x32xf32>
    %507 = vector.broadcast %1 : vector<1x32xf32> to vector<8x32xf32>
    %508 = arith.addf %506, %507 : vector<8x32xf32>
    %cst_546 = arith.constant 3.000000e+01 : f32
    %509 = vector.broadcast %cst_546 : f32 to vector<8x32xf32>
    %510 = arith.minimumf %508, %509 : vector<8x32xf32>
    %511 = math.exp %510 : vector<8x32xf32>
    %cst_547 = arith.constant 2.000000e+00 : f32
    %512 = vector.broadcast %cst_547 : f32 to vector<8x32xf32>
    %513 = arith.addf %511, %512 : vector<8x32xf32>
    %514 = arith.mulf %511, %513 : vector<8x32xf32>
    %cst_548 = arith.constant 2.000000e+00 : f32
    %515 = vector.broadcast %cst_548 : f32 to vector<8x32xf32>
    %516 = arith.addf %514, %515 : vector<8x32xf32>
    %517 = tpu.reciprocal %516 {approx = true} : vector<8x32xf32> -> vector<8x32xf32>
    %cst_549 = arith.constant 2.000000e+00 : f32
    %518 = vector.broadcast %cst_549 : f32 to vector<8x32xf32>
    %519 = arith.mulf %518, %517 : vector<8x32xf32>
    %cst_550 = arith.constant 1.000000e+00 : f32
    %520 = vector.broadcast %cst_550 : f32 to vector<8x32xf32>
    %521 = arith.subf %520, %519 : vector<8x32xf32>
    %522 = arith.mulf %508, %521 : vector<8x32xf32>
    %523 = arith.truncf %522 : vector<8x32xf32> to vector<8x32xbf16>
    %c6_551 = arith.constant 6 : index
    %c0_552 = arith.constant 0 : index
    %c0_553 = arith.constant 0 : index
    %524 = vector.load %arg6[%c6_551, %c0_552, %c0_553] : memref<8x8x32xbf16, #tpu.memory_space<vmem>>, vector<1x8x32xbf16>
    %525 = vector.shape_cast %524 : vector<1x8x32xbf16> to vector<8x32xbf16>
    %526 = vector.shape_cast %523 : vector<8x32xbf16> to vector<1x8x32xbf16>
    tpu.vector_store %arg6[%c6_551, %c0_552, %c0_553], %526 {strides = array<i32>} : memref<8x8x32xbf16, #tpu.memory_space<vmem>>, vector<1x8x32xbf16>,
    %c0_554 = arith.constant 0 : index
    %c7_555 = arith.constant 7 : index
    %c0_556 = arith.constant 0 : index
    %c0_557 = arith.constant 0 : index
    %527 = vector.load %arg2[%c0_554, %c7_555, %c0_556, %c0_557] : memref<6x8x9x3xbf16, #tpu.memory_space<vmem>>, vector<1x1x8x3xbf16>
    %528 = vector.shape_cast %527 : vector<1x1x8x3xbf16> to vector<8x3xbf16>
    %c0_558 = arith.constant 0 : index
    %c0_559 = arith.constant 0 : index
    %c0_560 = arith.constant 0 : index
    %529 = vector.load %arg3[%c0_558, %c0_559, %c0_560] : memref<9x3x32xbf16, #tpu.memory_space<vmem>>, vector<1x3x32xbf16>
    %530 = vector.shape_cast %529 : vector<1x3x32xbf16> to vector<3x32xbf16>
    %cst_561 = arith.constant dense<0.000000e+00> : vector<8x32xf32>
    %531 = tpu.matmul %528, %530, %cst_561 {dimension_numbers = #tpu.dot_dimension_numbers<[1], [0], [0], [1], [0, 0, 1, 1], [], []>} : vector<8x3xbf16>, vector<3x32xbf16>, vector<8x32xf32> -> vector<8x32xf32>
    %c1_562 = arith.constant 1 : index
    %c7_563 = arith.constant 7 : index
    %c0_564 = arith.constant 0 : index
    %c0_565 = arith.constant 0 : index
    %532 = vector.load %arg2[%c1_562, %c7_563, %c0_564, %c0_565] : memref<6x8x9x3xbf16, #tpu.memory_space<vmem>>, vector<1x1x8x3xbf16>
    %533 = vector.shape_cast %532 : vector<1x1x8x3xbf16> to vector<8x3xbf16>
    %c1_566 = arith.constant 1 : index
    %c0_567 = arith.constant 0 : index
    %c0_568 = arith.constant 0 : index
    %534 = vector.load %arg3[%c1_566, %c0_567, %c0_568] : memref<9x3x32xbf16, #tpu.memory_space<vmem>>, vector<1x3x32xbf16>
    %535 = vector.shape_cast %534 : vector<1x3x32xbf16> to vector<3x32xbf16>
    %cst_569 = arith.constant dense<0.000000e+00> : vector<8x32xf32>
    %536 = tpu.matmul %533, %535, %cst_569 {dimension_numbers = #tpu.dot_dimension_numbers<[1], [0], [0], [1], [0, 0, 1, 1], [], []>} : vector<8x3xbf16>, vector<3x32xbf16>, vector<8x32xf32> -> vector<8x32xf32>
    %537 = arith.addf %531, %536 : vector<8x32xf32>
    %c0_570 = arith.constant 0 : index
    %c7_571 = arith.constant 7 : index
    %c1_572 = arith.constant 1 : index
    %c0_573 = arith.constant 0 : index
    %538 = vector.load %arg2[%c0_570, %c7_571, %c1_572, %c0_573] : memref<6x8x9x3xbf16, #tpu.memory_space<vmem>>, vector<1x1x8x3xbf16>
    %539 = vector.shape_cast %538 : vector<1x1x8x3xbf16> to vector<8x3xbf16>
    %c2_574 = arith.constant 2 : index
    %c0_575 = arith.constant 0 : index
    %c0_576 = arith.constant 0 : index
    %540 = vector.load %arg3[%c2_574, %c0_575, %c0_576] : memref<9x3x32xbf16, #tpu.memory_space<vmem>>, vector<1x3x32xbf16>
    %541 = vector.shape_cast %540 : vector<1x3x32xbf16> to vector<3x32xbf16>
    %cst_577 = arith.constant dense<0.000000e+00> : vector<8x32xf32>
    %542 = tpu.matmul %539, %541, %cst_577 {dimension_numbers = #tpu.dot_dimension_numbers<[1], [0], [0], [1], [0, 0, 1, 1], [], []>} : vector<8x3xbf16>, vector<3x32xbf16>, vector<8x32xf32> -> vector<8x32xf32>
    %543 = arith.addf %537, %542 : vector<8x32xf32>
    %c2_578 = arith.constant 2 : index
    %c7_579 = arith.constant 7 : index
    %c0_580 = arith.constant 0 : index
    %c0_581 = arith.constant 0 : index
    %544 = vector.load %arg2[%c2_578, %c7_579, %c0_580, %c0_581] : memref<6x8x9x3xbf16, #tpu.memory_space<vmem>>, vector<1x1x8x3xbf16>
    %545 = vector.shape_cast %544 : vector<1x1x8x3xbf16> to vector<8x3xbf16>
    %c3_582 = arith.constant 3 : index
    %c0_583 = arith.constant 0 : index
    %c0_584 = arith.constant 0 : index
    %546 = vector.load %arg3[%c3_582, %c0_583, %c0_584] : memref<9x3x32xbf16, #tpu.memory_space<vmem>>, vector<1x3x32xbf16>
    %547 = vector.shape_cast %546 : vector<1x3x32xbf16> to vector<3x32xbf16>
    %cst_585 = arith.constant dense<0.000000e+00> : vector<8x32xf32>
    %548 = tpu.matmul %545, %547, %cst_585 {dimension_numbers = #tpu.dot_dimension_numbers<[1], [0], [0], [1], [0, 0, 1, 1], [], []>} : vector<8x3xbf16>, vector<3x32xbf16>, vector<8x32xf32> -> vector<8x32xf32>
    %549 = arith.addf %543, %548 : vector<8x32xf32>
    %c3_586 = arith.constant 3 : index
    %c7_587 = arith.constant 7 : index
    %c0_588 = arith.constant 0 : index
    %c0_589 = arith.constant 0 : index
    %550 = vector.load %arg2[%c3_586, %c7_587, %c0_588, %c0_589] : memref<6x8x9x3xbf16, #tpu.memory_space<vmem>>, vector<1x1x8x3xbf16>
    %551 = vector.shape_cast %550 : vector<1x1x8x3xbf16> to vector<8x3xbf16>
    %c4_590 = arith.constant 4 : index
    %c0_591 = arith.constant 0 : index
    %c0_592 = arith.constant 0 : index
    %552 = vector.load %arg3[%c4_590, %c0_591, %c0_592] : memref<9x3x32xbf16, #tpu.memory_space<vmem>>, vector<1x3x32xbf16>
    %553 = vector.shape_cast %552 : vector<1x3x32xbf16> to vector<3x32xbf16>
    %cst_593 = arith.constant dense<0.000000e+00> : vector<8x32xf32>
    %554 = tpu.matmul %551, %553, %cst_593 {dimension_numbers = #tpu.dot_dimension_numbers<[1], [0], [0], [1], [0, 0, 1, 1], [], []>} : vector<8x3xbf16>, vector<3x32xbf16>, vector<8x32xf32> -> vector<8x32xf32>
    %555 = arith.addf %549, %554 : vector<8x32xf32>
    %c2_594 = arith.constant 2 : index
    %c7_595 = arith.constant 7 : index
    %c1_596 = arith.constant 1 : index
    %c0_597 = arith.constant 0 : index
    %556 = vector.load %arg2[%c2_594, %c7_595, %c1_596, %c0_597] : memref<6x8x9x3xbf16, #tpu.memory_space<vmem>>, vector<1x1x8x3xbf16>
    %557 = vector.shape_cast %556 : vector<1x1x8x3xbf16> to vector<8x3xbf16>
    %c5_598 = arith.constant 5 : index
    %c0_599 = arith.constant 0 : index
    %c0_600 = arith.constant 0 : index
    %558 = vector.load %arg3[%c5_598, %c0_599, %c0_600] : memref<9x3x32xbf16, #tpu.memory_space<vmem>>, vector<1x3x32xbf16>
    %559 = vector.shape_cast %558 : vector<1x3x32xbf16> to vector<3x32xbf16>
    %cst_601 = arith.constant dense<0.000000e+00> : vector<8x32xf32>
    %560 = tpu.matmul %557, %559, %cst_601 {dimension_numbers = #tpu.dot_dimension_numbers<[1], [0], [0], [1], [0, 0, 1, 1], [], []>} : vector<8x3xbf16>, vector<3x32xbf16>, vector<8x32xf32> -> vector<8x32xf32>
    %561 = arith.addf %555, %560 : vector<8x32xf32>
    %c4_602 = arith.constant 4 : index
    %c7_603 = arith.constant 7 : index
    %c0_604 = arith.constant 0 : index
    %c0_605 = arith.constant 0 : index
    %562 = vector.load %arg2[%c4_602, %c7_603, %c0_604, %c0_605] : memref<6x8x9x3xbf16, #tpu.memory_space<vmem>>, vector<1x1x8x3xbf16>
    %563 = vector.shape_cast %562 : vector<1x1x8x3xbf16> to vector<8x3xbf16>
    %c6_606 = arith.constant 6 : index
    %c0_607 = arith.constant 0 : index
    %c0_608 = arith.constant 0 : index
    %564 = vector.load %arg3[%c6_606, %c0_607, %c0_608] : memref<9x3x32xbf16, #tpu.memory_space<vmem>>, vector<1x3x32xbf16>
    %565 = vector.shape_cast %564 : vector<1x3x32xbf16> to vector<3x32xbf16>
    %cst_609 = arith.constant dense<0.000000e+00> : vector<8x32xf32>
    %566 = tpu.matmul %563, %565, %cst_609 {dimension_numbers = #tpu.dot_dimension_numbers<[1], [0], [0], [1], [0, 0, 1, 1], [], []>} : vector<8x3xbf16>, vector<3x32xbf16>, vector<8x32xf32> -> vector<8x32xf32>
    %567 = arith.addf %561, %566 : vector<8x32xf32>
    %c5_610 = arith.constant 5 : index
    %c7_611 = arith.constant 7 : index
    %c0_612 = arith.constant 0 : index
    %c0_613 = arith.constant 0 : index
    %568 = vector.load %arg2[%c5_610, %c7_611, %c0_612, %c0_613] : memref<6x8x9x3xbf16, #tpu.memory_space<vmem>>, vector<1x1x8x3xbf16>
    %569 = vector.shape_cast %568 : vector<1x1x8x3xbf16> to vector<8x3xbf16>
    %c7_614 = arith.constant 7 : index
    %c0_615 = arith.constant 0 : index
    %c0_616 = arith.constant 0 : index
    %570 = vector.load %arg3[%c7_614, %c0_615, %c0_616] : memref<9x3x32xbf16, #tpu.memory_space<vmem>>, vector<1x3x32xbf16>
    %571 = vector.shape_cast %570 : vector<1x3x32xbf16> to vector<3x32xbf16>
    %cst_617 = arith.constant dense<0.000000e+00> : vector<8x32xf32>
    %572 = tpu.matmul %569, %571, %cst_617 {dimension_numbers = #tpu.dot_dimension_numbers<[1], [0], [0], [1], [0, 0, 1, 1], [], []>} : vector<8x3xbf16>, vector<3x32xbf16>, vector<8x32xf32> -> vector<8x32xf32>
    %573 = arith.addf %567, %572 : vector<8x32xf32>
    %c4_618 = arith.constant 4 : index
    %c7_619 = arith.constant 7 : index
    %c1_620 = arith.constant 1 : index
    %c0_621 = arith.constant 0 : index
    %574 = vector.load %arg2[%c4_618, %c7_619, %c1_620, %c0_621] : memref<6x8x9x3xbf16, #tpu.memory_space<vmem>>, vector<1x1x8x3xbf16>
    %575 = vector.shape_cast %574 : vector<1x1x8x3xbf16> to vector<8x3xbf16>
    %c8_622 = arith.constant 8 : index
    %c0_623 = arith.constant 0 : index
    %c0_624 = arith.constant 0 : index
    %576 = vector.load %arg3[%c8_622, %c0_623, %c0_624] : memref<9x3x32xbf16, #tpu.memory_space<vmem>>, vector<1x3x32xbf16>
    %577 = vector.shape_cast %576 : vector<1x3x32xbf16> to vector<3x32xbf16>
    %cst_625 = arith.constant dense<0.000000e+00> : vector<8x32xf32>
    %578 = tpu.matmul %575, %577, %cst_625 {dimension_numbers = #tpu.dot_dimension_numbers<[1], [0], [0], [1], [0, 0, 1, 1], [], []>} : vector<8x3xbf16>, vector<3x32xbf16>, vector<8x32xf32> -> vector<8x32xf32>
    %579 = arith.addf %573, %578 : vector<8x32xf32>
    %580 = vector.broadcast %0 : vector<1x32xf32> to vector<8x32xf32>
    %581 = arith.mulf %579, %580 : vector<8x32xf32>
    %582 = vector.broadcast %1 : vector<1x32xf32> to vector<8x32xf32>
    %583 = arith.addf %581, %582 : vector<8x32xf32>
    %cst_626 = arith.constant 3.000000e+01 : f32
    %584 = vector.broadcast %cst_626 : f32 to vector<8x32xf32>
    %585 = arith.minimumf %583, %584 : vector<8x32xf32>
    %586 = math.exp %585 : vector<8x32xf32>
    %cst_627 = arith.constant 2.000000e+00 : f32
    %587 = vector.broadcast %cst_627 : f32 to vector<8x32xf32>
    %588 = arith.addf %586, %587 : vector<8x32xf32>
    %589 = arith.mulf %586, %588 : vector<8x32xf32>
    %cst_628 = arith.constant 2.000000e+00 : f32
    %590 = vector.broadcast %cst_628 : f32 to vector<8x32xf32>
    %591 = arith.addf %589, %590 : vector<8x32xf32>
    %592 = tpu.reciprocal %591 {approx = true} : vector<8x32xf32> -> vector<8x32xf32>
    %cst_629 = arith.constant 2.000000e+00 : f32
    %593 = vector.broadcast %cst_629 : f32 to vector<8x32xf32>
    %594 = arith.mulf %593, %592 : vector<8x32xf32>
    %cst_630 = arith.constant 1.000000e+00 : f32
    %595 = vector.broadcast %cst_630 : f32 to vector<8x32xf32>
    %596 = arith.subf %595, %594 : vector<8x32xf32>
    %597 = arith.mulf %583, %596 : vector<8x32xf32>
    %598 = arith.truncf %597 : vector<8x32xf32> to vector<8x32xbf16>
    %c7_631 = arith.constant 7 : index
    %c0_632 = arith.constant 0 : index
    %c0_633 = arith.constant 0 : index
    %599 = vector.load %arg6[%c7_631, %c0_632, %c0_633] : memref<8x8x32xbf16, #tpu.memory_space<vmem>>, vector<1x8x32xbf16>
    %600 = vector.shape_cast %599 : vector<1x8x32xbf16> to vector<8x32xbf16>
    %601 = vector.shape_cast %598 : vector<8x32xbf16> to vector<1x8x32xbf16>
    tpu.vector_store %arg6[%c7_631, %c0_632, %c0_633], %601 {strides = array<i32>} : memref<8x8x32xbf16, #tpu.memory_space<vmem>>, vector<1x8x32xbf16>,
    return
  }
  func.func @transform_0(%arg0: i32, %arg1: i32) -> (i32, i32, i32, i32) {
    %c0_i32 = arith.constant 0 : i32
    %c0_i32_0 = arith.constant 0 : i32
    %c0_i32_1 = arith.constant 0 : i32
    %c0_i32_2 = arith.constant 0 : i32
    return %c0_i32, %arg0, %c0_i32_0, %c0_i32_1 : i32, i32, i32, i32
  }
  func.func @transform_1(%arg0: i32, %arg1: i32) -> (i32, i32, i32) {
    %c0_i32 = arith.constant 0 : i32
    %c0_i32_0 = arith.constant 0 : i32
    %c0_i32_1 = arith.constant 0 : i32
    return %c0_i32, %c0_i32_0, %arg1 : i32, i32, i32
  }
  func.func @transform_2(%arg0: i32, %arg1: i32) -> (i32, i32) {
    %c0_i32 = arith.constant 0 : i32
    %c0_i32_0 = arith.constant 0 : i32
    return %c0_i32, %arg1 : i32, i32
  }
  func.func @transform_3(%arg0: i32, %arg1: i32) -> (i32, i32) {
    %c0_i32 = arith.constant 0 : i32
    %c0_i32_0 = arith.constant 0 : i32
    return %c0_i32, %arg1 : i32, i32
  }
  func.func @transform_4(%arg0: i32, %arg1: i32) -> (i32, i32, i32) {
    %c0_i32 = arith.constant 0 : i32
    %c0_i32_0 = arith.constant 0 : i32
    return %arg0, %c0_i32, %arg1 : i32, i32, i32
  }
}

</mosaic_0001>

<llo_original>
// kernel: conv2d_bn_act.1
$region0: #{conv2d_bn_act.1}
  #allocation0 [shape = 'u32[]', space=smem, size = 0x4, offset = 0x4, fixed_abs, tag = 'smem constant byte address 0x4 - core index']
  #allocation1 [shape = 'u32[144,128]{1,0:T(1,128)}', space=vmem, size = 0x12000, scoped, tag = 'internal scratch']
  %s0 = inlined_call_operand.vmem [shape: bf16[6,16,9,3], index: 0, kind: input, shape index: {}]
  %s1 = inlined_call_operand.vmem [shape: bf16[9,3,32], index: 1, kind: input, shape index: {}]
  %s2 = inlined_call_operand.vmem [shape: f32[1,32], index: 2, kind: input, shape index: {}]
  %s3 = inlined_call_operand.vmem [shape: f32[1,32], index: 3, kind: input, shape index: {}]
  %s4 = inlined_call_operand.hbm [shape: bf16[16,8,32], index: 4, kind: output, shape index: {}]
  %s5 = sld [smem:[#allocation0]]
  $region90: #{conv2d_bn_act.1} parent=0
    _
  %s7 = ssub.s32 1, %s5
  %s8 = scalar_select 0, %s7, %s5
  $region1: #{conv2d_bn_act.1} parent=0
    #allocation2 [shape = 'u8[393216]{0}', space=vmem, size = 0x60000, scoped, tag = 'input window, operand 0']
    #allocation3 [shape = 'u8[32768]{0}', space=vmem, size = 0x8000, scoped, tag = 'output window, operand 0']
    #allocation4 [shape = 's32[2]{0}', space=sflag, size = 0x8, scoped, tag = 'scoped memory for conv2d_bn_act.1']
    %9 = vsyncpa [#allocation4], 0
    %s10 = scalar_lea.sflag [#allocation4], 1
    %11 = vsyncpa %s10, 0
    loop: start=0, step=1, limit=4
    $region2: #{conv2d_bn_act.1} parent=1 // loop_pre_header
      _
    $region3: #{conv2d_bn_act.1} parent=1 // loop_header
      %s13 = sphi 0, %s17
      %p14 = scmp.ge.s32.totalorder %s13, 4
      %s20 = sphi 0, %s32
      %s21 = sphi 0, %s28
      %s22 = sphi 0, %s20
      %s23 = sphi 0, %s21
      %s24 = sphi 0, %s22
      %s25 = sphi 0, %s23
      %s35 = sphi 0, %s37
      %s38 = sphi 0, %s35
      %s39 = sphi 0, %s38
      %s55 = sphi 0, %s39
      %s61 = sphi 0, %s63
      %s64 = sphi 0, %s61
      %s65 = sphi 0, %s64
      %s81 = sphi 0, %s65
      %s87 = sphi 0, %s89
      %s90 = sphi 0, %s87
      %s91 = sphi 0, %s90
      %s107 = sphi 0, %s91
      %s113 = sphi 0, %s115
      %s116 = sphi 0, %s113
      %s117 = sphi 0, %s116
      %s133 = sphi 0, %s117
      %s141 = sphi 0, %s143
      %s144 = sphi 0, %s141
      %s145 = sphi 0, %s144
      %s161 = sphi 0, %s145
    $region4: #{conv2d_bn_act.1} parent=1 // loop_header_branch
      %16 = sbr.rel (%p14) target = $region8
    $region5: #{conv2d_bn_act.1} parent=1 // loop_body
      %s18 = ssub.s32 %s13, 1
      %s19 = ssub.s32 %s13, 2
      %s26 = sadd.s32 1, %s21
      %p27 = scmp.ge.s32.totalorder %s26, 1
      %s28 = scalar_select %p27, 0, %s26
      %s29 = sadd.s32 1, %s20
      %s30 = scalar_select %p27, %s29, %s20
      %p31 = scmp.ge.s32.totalorder %s30, 2
      %s32 = scalar_select %p31, 0, %s30
      %s33 = ssub.s32 %s20, %s32
      %p34 = scmp.eq.s32.totalorder %s33, 0
      %s36 = sadd.s32 %s35, 1
      %s37 = scalar_select %p34, %s35, %s36
      %p40 = pneg %p34
      %p41 = scmp.eq.s32.totalorder %s13, 1
      %p42 = por %p40, %p41
      %p43 = scmp.ne.s32.totalorder %s35, %s38
      %p44 = scmp.eq.s32.totalorder %s13, 0
      %p45 = por %p43, %p44
      %p46 = scmp.ne.s32.totalorder %s35, %s38
      %p47 = scmp.eq.s32.totalorder %s18, 1
      %p48 = por %p46, %p47
      %p49 = scmp.ne.s32.totalorder %s38, %s39
      %p50 = scmp.eq.s32.totalorder %s18, 0
      %p51 = por %p49, %p50
      %p52 = scmp.ne.s32.totalorder %s38, %s39
      %p53 = scmp.eq.s32.totalorder %s19, 1
      %p54 = por %p52, %p53
      %p56 = scmp.ne.s32.totalorder %s39, %s55
      %p57 = scmp.eq.s32.totalorder %s19, 0
      %p58 = por %p56, %p57
      %s59 = ssub.s32 %s21, %s28
      %p60 = scmp.eq.s32.totalorder %s59, 0
      %s62 = sadd.s32 %s61, 1
      %s63 = scalar_select %p60, %s61, %s62
      %p66 = pneg %p60
      %p67 = scmp.eq.s32.totalorder %s13, 1
      %p68 = por %p66, %p67
      %p69 = scmp.ne.s32.totalorder %s61, %s64
      %p70 = scmp.eq.s32.totalorder %s13, 0
      %p71 = por %p69, %p70
      %p72 = scmp.ne.s32.totalorder %s61, %s64
      %p73 = scmp.eq.s32.totalorder %s18, 1
      %p74 = por %p72, %p73
      %p75 = scmp.ne.s32.totalorder %s64, %s65
      %p76 = scmp.eq.s32.totalorder %s18, 0
      %p77 = por %p75, %p76
      %p78 = scmp.ne.s32.totalorder %s64, %s65
      %p79 = scmp.eq.s32.totalorder %s19, 1
      %p80 = por %p78, %p79
      %p82 = scmp.ne.s32.totalorder %s65, %s81
      %p83 = scmp.eq.s32.totalorder %s19, 0
      %p84 = por %p82, %p83
      %s85 = ssub.s32 %s21, %s28
      %p86 = scmp.eq.s32.totalorder %s85, 0
      %s88 = sadd.s32 %s87, 1
      %s89 = scalar_select %p86, %s87, %s88
      %p92 = pneg %p86
      %p93 = scmp.eq.s32.totalorder %s13, 1
      %p94 = por %p92, %p93
      %p95 = scmp.ne.s32.totalorder %s87, %s90
      %p96 = scmp.eq.s32.totalorder %s13, 0
      %p97 = por %p95, %p96
      %p98 = scmp.ne.s32.totalorder %s87, %s90
      %p99 = scmp.eq.s32.totalorder %s18, 1
      %p100 = por %p98, %p99
      %p101 = scmp.ne.s32.totalorder %s90, %s91
      %p102 = scmp.eq.s32.totalorder %s18, 0
      %p103 = por %p101, %p102
      %p104 = scmp.ne.s32.totalorder %s90, %s91
      %p105 = scmp.eq.s32.totalorder %s19, 1
      %p106 = por %p104, %p105
      %p108 = scmp.ne.s32.totalorder %s91, %s107
      %p109 = scmp.eq.s32.totalorder %s19, 0
      %p110 = por %p108, %p109
      %s111 = ssub.s32 %s21, %s28
      %p112 = scmp.eq.s32.totalorder %s111, 0
      %s114 = sadd.s32 %s113, 1
      %s115 = scalar_select %p112, %s113, %s114
      %p118 = pneg %p112
      %p119 = scmp.eq.s32.totalorder %s13, 1
      %p120 = por %p118, %p119
      %p121 = scmp.ne.s32.totalorder %s113, %s116
      %p122 = scmp.eq.s32.totalorder %s13, 0
      %p123 = por %p121, %p122
      %p124 = scmp.ne.s32.totalorder %s113, %s116
      %p125 = scmp.eq.s32.totalorder %s18, 1
      %p126 = por %p124, %p125
      %p127 = scmp.ne.s32.totalorder %s116, %s117
      %p128 = scmp.eq.s32.totalorder %s18, 0
      %p129 = por %p127, %p128
      %p130 = scmp.ne.s32.totalorder %s116, %s117
      %p131 = scmp.eq.s32.totalorder %s19, 1
      %p132 = por %p130, %p131
      %p134 = scmp.ne.s32.totalorder %s117, %s133
      %p135 = scmp.eq.s32.totalorder %s19, 0
      %p136 = por %p134, %p135
      %s137 = ssub.s32 %s20, %s32
      %s138 = ssub.s32 %s21, %s28
      %s139 = sor.u32 %s137, %s138
      %p140 = scmp.eq.s32.totalorder %s139, 0
      %s142 = sadd.s32 %s141, 1
      %s143 = scalar_select %p140, %s141, %s142
      %p146 = pneg %p140
      %p147 = scmp.eq.s32.totalorder %s13, 1
      %p148 = por %p146, %p147
      %p149 = scmp.ne.s32.totalorder %s141, %s144
      %p150 = scmp.eq.s32.totalorder %s13, 0
      %p151 = por %p149, %p150
      %p152 = scmp.ne.s32.totalorder %s141, %s144
      %p153 = scmp.eq.s32.totalorder %s18, 1
      %p154 = por %p152, %p153
      %p155 = scmp.ne.s32.totalorder %s144, %s145
      %p156 = scmp.eq.s32.totalorder %s18, 0
      %p157 = por %p155, %p156
      %p158 = scmp.ne.s32.totalorder %s144, %s145
      %p159 = scmp.eq.s32.totalorder %s19, 1
      %p160 = por %p158, %p159
      %p162 = scmp.ne.s32.totalorder %s145, %s161
      %p163 = scmp.eq.s32.totalorder %s19, 0
      %p164 = por %p162, %p163
      %p165 = scmp.le.s32.totalorder 1, %s13
      %p166 = scmp.lt.s32.totalorder %s13, 3
      %p167 = pnand %p165, %p166
      %p168 = pneg %p167
      // Predicated region
      $region9: #{conv2d_bn_act.1} parent=5 // pred_check
        _
      $region10: #{conv2d_bn_act.1} parent=5 // pred_check_branch
        %170 = sbr.rel (%p167) target = $region12
      $region11: #{conv2d_bn_act.1} parent=5 // pred_region
        %s171 = ssub.s32 %s13, 1
        // Predicated region
        $region13: #{conv2d_bn_act.1} parent=11 // pred_check
          %p172 = pneg %p77
        $region14: #{conv2d_bn_act.1} parent=11 // pred_check_branch
          %174 = sbr.rel (%p172) target = $region16
        $region15: #{conv2d_bn_act.1} parent=11 // pred_region
          %p175 = scmp.lt.s32.totalorder %s23, 0
          %s176 = scalar_select %p175, %s23, 0
          %s177 = smul.addr %s176, 2
          %s178 = scalar_lea.vmem %s1, %s177
        $region16: #{conv2d_bn_act.1} parent=11 // pred_fallthru
          _
        // Predicated region
        $region17: #{conv2d_bn_act.1} parent=11 // pred_check
          %p179 = pneg %p103
        $region18: #{conv2d_bn_act.1} parent=11 // pred_check_branch
          %181 = sbr.rel (%p179) target = $region20
        $region19: #{conv2d_bn_act.1} parent=11 // pred_region
          %p182 = scmp.lt.s32.totalorder %s23, 0
          %s183 = scalar_select %p182, %s23, 0
          %s184 = scalar_lea.vmem %s2, %s183
        $region20: #{conv2d_bn_act.1} parent=11 // pred_fallthru
          _
        // Predicated region
        $region21: #{conv2d_bn_act.1} parent=11 // pred_check
          %p185 = pneg %p129
        $region22: #{conv2d_bn_act.1} parent=11 // pred_check_branch
          %187 = sbr.rel (%p185) target = $region24
        $region23: #{conv2d_bn_act.1} parent=11 // pred_region
          %p188 = scmp.lt.s32.totalorder %s23, 0
          %s189 = scalar_select %p188, %s23, 0
          %s190 = scalar_lea.vmem %s3, %s189
        $region24: #{conv2d_bn_act.1} parent=11 // pred_fallthru
          _
      $region12: #{conv2d_bn_act.1} parent=5 // pred_fallthru
        _
      %p191 = scmp.lt.s32.totalorder %s13, 2
      // Predicated region
      $region25: #{conv2d_bn_act.1} parent=5 // pred_check
        %p192 = pneg %p191
      $region26: #{conv2d_bn_act.1} parent=5 // pred_check_branch
        %194 = sbr.rel (%p192) target = $region28
      $region27: #{conv2d_bn_act.1} parent=5 // pred_region
        // Predicated region
        $region29: #{conv2d_bn_act.1} parent=27 // pred_check
          %p195 = pneg %p45
        $region30: #{conv2d_bn_act.1} parent=27 // pred_check_branch
          %197 = sbr.rel (%p195) target = $region32
        $region31: #{conv2d_bn_act.1} parent=27 // pred_region
          %s198 = sand.u32 %s35, 1
          %s199 = sand.u32 %s35, 1
          %s200 = smul.addr %s199, 384
          %s201 = scalar_lea.vmem [#allocation2], %s200
          %s202 = smul.u32 8, %s20
          %s203 = smul.addr %s202, 2
          %s204 = smul.addr %s203, 4
          %s205 = scalar_lea.vmem %s0, %s204
          // Predicated region
          $region33: #{conv2d_bn_act.1} parent=31 // pred_check
            _
          $region34: #{conv2d_bn_act.1} parent=31 // pred_check_branch
            %207 = sbr.rel (0) target = $region36
          $region35: #{conv2d_bn_act.1} parent=31 // pred_region
            // Predicated region
            $region37: #{conv2d_bn_act.1} parent=35 // pred_check
              _
            $region38: #{conv2d_bn_act.1} parent=35 // pred_check_branch
              %209 = sbr.rel target = $region40
            $region39: #{conv2d_bn_act.1} parent=35 // pred_region
              // Predicated region
              $region52: #{conv2d_bn_act.1} parent=39 // pred_check
                _
              $region53: #{conv2d_bn_act.1} parent=39 // pred_check_branch
                %414 = sbr.rel (0) target = $region55
              $region54: #{conv2d_bn_act.1} parent=39 // pred_region
                loop: start=0, step=1, limit=1
                $region56: #{conv2d_bn_act.1} parent=54 // loop_pre_header
                  _
                $region57: #{conv2d_bn_act.1} parent=54 // loop_header
                  %s416 = sphi 0, %s420
                  %p417 = scmp.ge.s32.totalorder %s416, 1
                  %s421 = sphi %s205, %s205
                  %s422 = sphi %s201, %s201
                $region58: #{conv2d_bn_act.1} parent=54 // loop_header_branch
                  %419 = sbr.rel (%p417) target = $region62
                $region59: #{conv2d_bn_act.1} parent=54 // loop_body
                  _
                $region60: #{conv2d_bn_act.1} parent=54 // loop_footer
                  %s420 = sadd.s32 1, %s416
                $region61: #{conv2d_bn_act.1} parent=54 // loop_footer_branch
                  %415 = sbr.rel target = $region57
                $region62: #{conv2d_bn_act.1} parent=54 // loop_exit
                  _
                loop: start=0, step=1, limit=1
                $region63: #{conv2d_bn_act.1} parent=54 // loop_pre_header
                  _
                $region64: #{conv2d_bn_act.1} parent=54 // loop_header
                  %s425 = sphi 0, %s429
                  %p426 = scmp.ge.s32.totalorder %s425, 1
                  %s430 = sphi %s205, %s205
                  %s431 = sphi %s201, %s201
                $region65: #{conv2d_bn_act.1} parent=54 // loop_header_branch
                  %428 = sbr.rel (%p426) target = $region69
                $region66: #{conv2d_bn_act.1} parent=54 // loop_body
                  %v432 = vld [vmem:[%s430] sm:$0xf]
                  %433 = vst [vmem:[%s431] sm:$0xf] %v432
                  %v434 = vld [vmem:[%s430 + $0x4] sm:$0xf]
                  %435 = vst [vmem:[%s431 + $0x4] sm:$0xf] %v434
                  %v436 = vld [vmem:[%s430 + $0x8] sm:$0xf]
                  %437 = vst [vmem:[%s431 + $0x8] sm:$0xf] %v436
                  %v438 = vld [vmem:[%s430 + $0xc] sm:$0xf]
                  %439 = vst [vmem:[%s431 + $0xc] sm:$0xf] %v438
                  %v440 = vld [vmem:[%s430 + $0x10] sm:$0xf]
                  %441 = vst [vmem:[%s431 + $0x10] sm:$0xf] %v440
                  %v442 = vld [vmem:[%s430 + $0x14] sm:$0xf]
                  %443 = vst [vmem:[%s431 + $0x14] sm:$0xf] %v442
                  %v444 = vld [vmem:[%s430 + $0x18] sm:$0xf]
                  %445 = vst [vmem:[%s431 + $0x18] sm:$0xf] %v444
                  %v446 = vld [vmem:[%s430 + $0x1c] sm:$0xf]
                  %447 = vst [vmem:[%s431 + $0x1c] sm:$0xf] %v446
                  %v448 = vld [vmem:[%s430 + $0x20] sm:$0xf]
                  %449 = vst [vmem:[%s431 + $0x20] sm:$0xf] %v448
                  %v450 = vld [vmem:[%s430 + $0x24] sm:$0xf]
                  %451 = vst [vmem:[%s431 + $0x24] sm:$0xf] %v450
                  %v452 = vld [vmem:[%s430 + $0x28] sm:$0xf]
                  %453 = vst [vmem:[%s431 + $0x28] sm:$0xf] %v452
                  %v454 = vld [vmem:[%s430 + $0x2c] sm:$0xf]
                  %455 = vst [vmem:[%s431 + $0x2c] sm:$0xf] %v454
                  %v456 = vld [vmem:[%s430 + $0x30] sm:$0xf]
                  %457 = vst [vmem:[%s431 + $0x30] sm:$0xf] %v456
                  %v458 = vld [vmem:[%s430 + $0x34] sm:$0xf]
                  %459 = vst [vmem:[%s431 + $0x34] sm:$0xf] %v458
                  %v460 = vld [vmem:[%s430 + $0x38] sm:$0xf]
                  %461 = vst [vmem:[%s431 + $0x38] sm:$0xf] %v460
                  %v462 = vld [vmem:[%s430 + $0x3c] sm:$0xf]
                  %463 = vst [vmem:[%s431 + $0x3c] sm:$0xf] %v462
                  %v464 = vld [vmem:[%s430 + $0x80] sm:$0xf]
                  %465 = vst [vmem:[%s431 + $0x40] sm:$0xf] %v464
                  %v466 = vld [vmem:[%s430 + $0x84] sm:$0xf]
                  %467 = vst [vmem:[%s431 + $0x44] sm:$0xf] %v466
                  %v468 = vld [vmem:[%s430 + $0x88] sm:$0xf]
                  %469 = vst [vmem:[%s431 + $0x48] sm:$0xf] %v468
                  %v470 = vld [vmem:[%s430 + $0x8c] sm:$0xf]
                  %471 = vst [vmem:[%s431 + $0x4c] sm:$0xf] %v470
                  %v472 = vld [vmem:[%s430 + $0x90] sm:$0xf]
                  %473 = vst [vmem:[%s431 + $0x50] sm:$0xf] %v472
                  %v474 = vld [vmem:[%s430 + $0x94] sm:$0xf]
                  %475 = vst [vmem:[%s431 + $0x54] sm:$0xf] %v474
                  %v476 = vld [vmem:[%s430 + $0x98] sm:$0xf]
                  %477 = vst [vmem:[%s431 + $0x58] sm:$0xf] %v476
                  %v478 = vld [vmem:[%s430 + $0x9c] sm:$0xf]
                  %479 = vst [vmem:[%s431 + $0x5c] sm:$0xf] %v478
                  %v480 = vld [vmem:[%s430 + $0xa0] sm:$0xf]
                  %481 = vst [vmem:[%s431 + $0x60] sm:$0xf] %v480
                  %v482 = vld [vmem:[%s430 + $0xa4] sm:$0xf]
                  %483 = vst [vmem:[%s431 + $0x64] sm:$0xf] %v482
                  %v484 = vld [vmem:[%s430 + $0xa8] sm:$0xf]
                  %485 = vst [vmem:[%s431 + $0x68] sm:$0xf] %v484
                  %v486 = vld [vmem:[%s430 + $0xac] sm:$0xf]
                  %487 = vst [vmem:[%s431 + $0x6c] sm:$0xf] %v486
                  %v488 = vld [vmem:[%s430 + $0xb0] sm:$0xf]
                  %489 = vst [vmem:[%s431 + $0x70] sm:$0xf] %v488
                  %v490 = vld [vmem:[%s430 + $0xb4] sm:$0xf]
                  %491 = vst [vmem:[%s431 + $0x74] sm:$0xf] %v490
                  %v492 = vld [vmem:[%s430 + $0xb8] sm:$0xf]
                  %493 = vst [vmem:[%s431 + $0x78] sm:$0xf] %v492
                  %v494 = vld [vmem:[%s430 + $0xbc] sm:$0xf]
                  %495 = vst [vmem:[%s431 + $0x7c] sm:$0xf] %v494
                  %v496 = vld [vmem:[%s430 + $0x100] sm:$0xf]
                  %497 = vst [vmem:[%s431 + $0x80] sm:$0xf] %v496
                  %v498 = vld [vmem:[%s430 + $0x104] sm:$0xf]
                  %499 = vst [vmem:[%s431 + $0x84] sm:$0xf] %v498
                  %v500 = vld [vmem:[%s430 + $0x108] sm:$0xf]
                  %501 = vst [vmem:[%s431 + $0x88] sm:$0xf] %v500
                  %v502 = vld [vmem:[%s430 + $0x10c] sm:$0xf]
                  %503 = vst [vmem:[%s431 + $0x8c] sm:$0xf] %v502
                  %v504 = vld [vmem:[%s430 + $0x110] sm:$0xf]
                  %505 = vst [vmem:[%s431 + $0x90] sm:$0xf] %v504
                  %v506 = vld [vmem:[%s430 + $0x114] sm:$0xf]
                  %507 = vst [vmem:[%s431 + $0x94] sm:$0xf] %v506
                  %v508 = vld [vmem:[%s430 + $0x118] sm:$0xf]
                  %509 = vst [vmem:[%s431 + $0x98] sm:$0xf] %v508
                  %v510 = vld [vmem:[%s430 + $0x11c] sm:$0xf]
                  %511 = vst [vmem:[%s431 + $0x9c] sm:$0xf] %v510
                  %v512 = vld [vmem:[%s430 + $0x120] sm:$0xf]
                  %513 = vst [vmem:[%s431 + $0xa0] sm:$0xf] %v512
                  %v514 = vld [vmem:[%s430 + $0x124] sm:$0xf]
                  %515 = vst [vmem:[%s431 + $0xa4] sm:$0xf] %v514
                  %v516 = vld [vmem:[%s430 + $0x128] sm:$0xf]
                  %517 = vst [vmem:[%s431 + $0xa8] sm:$0xf] %v516
                  %v518 = vld [vmem:[%s430 + $0x12c] sm:$0xf]
                  %519 = vst [vmem:[%s431 + $0xac] sm:$0xf] %v518
                  %v520 = vld [vmem:[%s430 + $0x130] sm:$0xf]
                  %521 = vst [vmem:[%s431 + $0xb0] sm:$0xf] %v520
                  %v522 = vld [vmem:[%s430 + $0x134] sm:$0xf]
                  %523 = vst [vmem:[%s431 + $0xb4] sm:$0xf] %v522
                  %v524 = vld [vmem:[%s430 + $0x138] sm:$0xf]
                  %525 = vst [vmem:[%s431 + $0xb8] sm:$0xf] %v524
                  %v526 = vld [vmem:[%s430 + $0x13c] sm:$0xf]
                  %527 = vst [vmem:[%s431 + $0xbc] sm:$0xf] %v526
                  %v528 = vld [vmem:[%s430 + $0x180] sm:$0xf]
                  %529 = vst [vmem:[%s431 + $0xc0] sm:$0xf] %v528
                  %v530 = vld [vmem:[%s430 + $0x184] sm:$0xf]
                  %531 = vst [vmem:[%s431 + $0xc4] sm:$0xf] %v530
                  %v532 = vld [vmem:[%s430 + $0x188] sm:$0xf]
                  %533 = vst [vmem:[%s431 + $0xc8] sm:$0xf] %v532
                  %v534 = vld [vmem:[%s430 + $0x18c] sm:$0xf]
                  %535 = vst [vmem:[%s431 + $0xcc] sm:$0xf] %v534
                  %v536 = vld [vmem:[%s430 + $0x190] sm:$0xf]
                  %537 = vst [vmem:[%s431 + $0xd0] sm:$0xf] %v536
                  %v538 = vld [vmem:[%s430 + $0x194] sm:$0xf]
                  %539 = vst [vmem:[%s431 + $0xd4] sm:$0xf] %v538
                  %v540 = vld [vmem:[%s430 + $0x198] sm:$0xf]
                  %541 = vst [vmem:[%s431 + $0xd8] sm:$0xf] %v540
                  %v542 = vld [vmem:[%s430 + $0x19c] sm:$0xf]
                  %543 = vst [vmem:[%s431 + $0xdc] sm:$0xf] %v542
                  %v544 = vld [vmem:[%s430 + $0x1a0] sm:$0xf]
                  %545 = vst [vmem:[%s431 + $0xe0] sm:$0xf] %v544
                  %v546 = vld [vmem:[%s430 + $0x1a4] sm:$0xf]
                  %547 = vst [vmem:[%s431 + $0xe4] sm:$0xf] %v546
                  %v548 = vld [vmem:[%s430 + $0x1a8] sm:$0xf]
                  %549 = vst [vmem:[%s431 + $0xe8] sm:$0xf] %v548
                  %v550 = vld [vmem:[%s430 + $0x1ac] sm:$0xf]
                  %551 = vst [vmem:[%s431 + $0xec] sm:$0xf] %v550
                  %v552 = vld [vmem:[%s430 + $0x1b0] sm:$0xf]
                  %553 = vst [vmem:[%s431 + $0xf0] sm:$0xf] %v552
                  %v554 = vld [vmem:[%s430 + $0x1b4] sm:$0xf]
                  %555 = vst [vmem:[%s431 + $0xf4] sm:$0xf] %v554
                  %v556 = vld [vmem:[%s430 + $0x1b8] sm:$0xf]
                  %557 = vst [vmem:[%s431 + $0xf8] sm:$0xf] %v556
                  %v558 = vld [vmem:[%s430 + $0x1bc] sm:$0xf]
                  %559 = vst [vmem:[%s431 + $0xfc] sm:$0xf] %v558
                  %v560 = vld [vmem:[%s430 + $0x200] sm:$0xf]
                  %561 = vst [vmem:[%s431 + $0x100] sm:$0xf] %v560
                  %v562 = vld [vmem:[%s430 + $0x204] sm:$0xf]
                  %563 = vst [vmem:[%s431 + $0x104] sm:$0xf] %v562
                  %v564 = vld [vmem:[%s430 + $0x208] sm:$0xf]
                  %565 = vst [vmem:[%s431 + $0x108] sm:$0xf] %v564
                  %v566 = vld [vmem:[%s430 + $0x20c] sm:$0xf]
                  %567 = vst [vmem:[%s431 + $0x10c] sm:$0xf] %v566
                  %v568 = vld [vmem:[%s430 + $0x210] sm:$0xf]
                  %569 = vst [vmem:[%s431 + $0x110] sm:$0xf] %v568
                  %v570 = vld [vmem:[%s430 + $0x214] sm:$0xf]
                  %571 = vst [vmem:[%s431 + $0x114] sm:$0xf] %v570
                  %v572 = vld [vmem:[%s430 + $0x218] sm:$0xf]
                  %573 = vst [vmem:[%s431 + $0x118] sm:$0xf] %v572
                  %v574 = vld [vmem:[%s430 + $0x21c] sm:$0xf]
                  %575 = vst [vmem:[%s431 + $0x11c] sm:$0xf] %v574
                  %v576 = vld [vmem:[%s430 + $0x220] sm:$0xf]
                  %577 = vst [vmem:[%s431 + $0x120] sm:$0xf] %v576
                  %v578 = vld [vmem:[%s430 + $0x224] sm:$0xf]
                  %579 = vst [vmem:[%s431 + $0x124] sm:$0xf] %v578
                  %v580 = vld [vmem:[%s430 + $0x228] sm:$0xf]
                  %581 = vst [vmem:[%s431 + $0x128] sm:$0xf] %v580
                  %v582 = vld [vmem:[%s430 + $0x22c] sm:$0xf]
                  %583 = vst [vmem:[%s431 + $0x12c] sm:$0xf] %v582
                  %v584 = vld [vmem:[%s430 + $0x230] sm:$0xf]
                  %585 = vst [vmem:[%s431 + $0x130] sm:$0xf] %v584
                  %v586 = vld [vmem:[%s430 + $0x234] sm:$0xf]
                  %587 = vst [vmem:[%s431 + $0x134] sm:$0xf] %v586
                  %v588 = vld [vmem:[%s430 + $0x238] sm:$0xf]
                  %589 = vst [vmem:[%s431 + $0x138] sm:$0xf] %v588
                  %v590 = vld [vmem:[%s430 + $0x23c] sm:$0xf]
                  %591 = vst [vmem:[%s431 + $0x13c] sm:$0xf] %v590
                  %v592 = vld [vmem:[%s430 + $0x280] sm:$0xf]
                  %593 = vst [vmem:[%s431 + $0x140] sm:$0xf] %v592
                  %v594 = vld [vmem:[%s430 + $0x284] sm:$0xf]
                  %595 = vst [vmem:[%s431 + $0x144] sm:$0xf] %v594
                  %v596 = vld [vmem:[%s430 + $0x288] sm:$0xf]
                  %597 = vst [vmem:[%s431 + $0x148] sm:$0xf] %v596
                  %v598 = vld [vmem:[%s430 + $0x28c] sm:$0xf]
                  %599 = vst [vmem:[%s431 + $0x14c] sm:$0xf] %v598
                  %v600 = vld [vmem:[%s430 + $0x290] sm:$0xf]
                  %601 = vst [vmem:[%s431 + $0x150] sm:$0xf] %v600
                  %v602 = vld [vmem:[%s430 + $0x294] sm:$0xf]
                  %603 = vst [vmem:[%s431 + $0x154] sm:$0xf] %v602
                  %v604 = vld [vmem:[%s430 + $0x298] sm:$0xf]
                  %605 = vst [vmem:[%s431 + $0x158] sm:$0xf] %v604
                  %v606 = vld [vmem:[%s430 + $0x29c] sm:$0xf]
                  %607 = vst [vmem:[%s431 + $0x15c] sm:$0xf] %v606
                  %v608 = vld [vmem:[%s430 + $0x2a0] sm:$0xf]
                  %609 = vst [vmem:[%s431 + $0x160] sm:$0xf] %v608
                  %v610 = vld [vmem:[%s430 + $0x2a4] sm:$0xf]
                  %611 = vst [vmem:[%s431 + $0x164] sm:$0xf] %v610
                  %v612 = vld [vmem:[%s430 + $0x2a8] sm:$0xf]
                  %613 = vst [vmem:[%s431 + $0x168] sm:$0xf] %v612
                  %v614 = vld [vmem:[%s430 + $0x2ac] sm:$0xf]
                  %615 = vst [vmem:[%s431 + $0x16c] sm:$0xf] %v614
                  %v616 = vld [vmem:[%s430 + $0x2b0] sm:$0xf]
                  %617 = vst [vmem:[%s431 + $0x170] sm:$0xf] %v616
                  %v618 = vld [vmem:[%s430 + $0x2b4] sm:$0xf]
                  %619 = vst [vmem:[%s431 + $0x174] sm:$0xf] %v618
                  %v620 = vld [vmem:[%s430 + $0x2b8] sm:$0xf]
                  %621 = vst [vmem:[%s431 + $0x178] sm:$0xf] %v620
                  %v622 = vld [vmem:[%s430 + $0x2bc] sm:$0xf]
                  %623 = vst [vmem:[%s431 + $0x17c] sm:$0xf] %v622
                $region67: #{conv2d_bn_act.1} parent=54 // loop_footer
                  %s429 = sadd.s32 1, %s425
                $region68: #{conv2d_bn_act.1} parent=54 // loop_footer_branch
                  %424 = sbr.rel target = $region64
                $region69: #{conv2d_bn_act.1} parent=54 // loop_exit
                  _
              $region55: #{conv2d_bn_act.1} parent=39 // pred_fallthru
                _
            $region40: #{conv2d_bn_act.1} parent=35 // pred_fallthru
              _
            // Predicated region
            $region41: #{conv2d_bn_act.1} parent=35 // pred_check
              _
            $region42: #{conv2d_bn_act.1} parent=35 // pred_check_branch
              %211 = sbr.rel (0) target = $region44
            $region43: #{conv2d_bn_act.1} parent=35 // pred_region
              loop: start=0, step=1, limit=1
              $region45: #{conv2d_bn_act.1} parent=43 // loop_pre_header
                _
              $region46: #{conv2d_bn_act.1} parent=43 // loop_header
                %s214 = sphi 0, %s218
                %p215 = scmp.ge.s32.totalorder %s214, 1
                %s219 = sphi %s205, %s205
                %s220 = sphi %s201, %s201
              $region47: #{conv2d_bn_act.1} parent=43 // loop_header_branch
                %217 = sbr.rel (%p215) target = $region51
              $region48: #{conv2d_bn_act.1} parent=43 // loop_body
                %v221 = vld [vmem:[%s219] sm:$0xf]
                %222 = vst [vmem:[%s220] sm:$0xf] %v221
                %v223 = vld [vmem:[%s219 + $0x4] sm:$0xf]
                %224 = vst [vmem:[%s220 + $0x4] sm:$0xf] %v223
                %v225 = vld [vmem:[%s219 + $0x8] sm:$0xf]
                %226 = vst [vmem:[%s220 + $0x8] sm:$0xf] %v225
                %v227 = vld [vmem:[%s219 + $0xc] sm:$0xf]
                %228 = vst [vmem:[%s220 + $0xc] sm:$0xf] %v227
                %v229 = vld [vmem:[%s219 + $0x10] sm:$0xf]
                %230 = vst [vmem:[%s220 + $0x10] sm:$0xf] %v229
                %v231 = vld [vmem:[%s219 + $0x14] sm:$0xf]
                %232 = vst [vmem:[%s220 + $0x14] sm:$0xf] %v231
                %v233 = vld [vmem:[%s219 + $0x18] sm:$0xf]
                %234 = vst [vmem:[%s220 + $0x18] sm:$0xf] %v233
                %v235 = vld [vmem:[%s219 + $0x1c] sm:$0xf]
                %236 = vst [vmem:[%s220 + $0x1c] sm:$0xf] %v235
                %v237 = vld [vmem:[%s219 + $0x20] sm:$0xf]
                %238 = vst [vmem:[%s220 + $0x20] sm:$0xf] %v237
                %v239 = vld [vmem:[%s219 + $0x24] sm:$0xf]
                %240 = vst [vmem:[%s220 + $0x24] sm:$0xf] %v239
                %v241 = vld [vmem:[%s219 + $0x28] sm:$0xf]
                %242 = vst [vmem:[%s220 + $0x28] sm:$0xf] %v241
                %v243 = vld [vmem:[%s219 + $0x2c] sm:$0xf]
                %244 = vst [vmem:[%s220 + $0x2c] sm:$0xf] %v243
                %v245 = vld [vmem:[%s219 + $0x30] sm:$0xf]
                %246 = vst [vmem:[%s220 + $0x30] sm:$0xf] %v245
                %v247 = vld [vmem:[%s219 + $0x34] sm:$0xf]
                %248 = vst [vmem:[%s220 + $0x34] sm:$0xf] %v247
                %v249 = vld [vmem:[%s219 + $0x38] sm:$0xf]
                %250 = vst [vmem:[%s220 + $0x38] sm:$0xf] %v249
                %v251 = vld [vmem:[%s219 + $0x3c] sm:$0xf]
                %252 = vst [vmem:[%s220 + $0x3c] sm:$0xf] %v251
                %v253 = vld [vmem:[%s219 + $0x80] sm:$0xf]
                %254 = vst [vmem:[%s220 + $0x40] sm:$0xf] %v253
                %v255 = vld [vmem:[%s219 + $0x84] sm:$0xf]
                %256 = vst [vmem:[%s220 + $0x44] sm:$0xf] %v255
                %v257 = vld [vmem:[%s219 + $0x88] sm:$0xf]
                %258 = vst [vmem:[%s220 + $0x48] sm:$0xf] %v257
                %v259 = vld [vmem:[%s219 + $0x8c] sm:$0xf]
                %260 = vst [vmem:[%s220 + $0x4c] sm:$0xf] %v259
                %v261 = vld [vmem:[%s219 + $0x90] sm:$0xf]
                %262 = vst [vmem:[%s220 + $0x50] sm:$0xf] %v261
                %v263 = vld [vmem:[%s219 + $0x94] sm:$0xf]
                %264 = vst [vmem:[%s220 + $0x54] sm:$0xf] %v263
                %v265 = vld [vmem:[%s219 + $0x98] sm:$0xf]
                %266 = vst [vmem:[%s220 + $0x58] sm:$0xf] %v265
                %v267 = vld [vmem:[%s219 + $0x9c] sm:$0xf]
                %268 = vst [vmem:[%s220 + $0x5c] sm:$0xf] %v267
                %v269 = vld [vmem:[%s219 + $0xa0] sm:$0xf]
                %270 = vst [vmem:[%s220 + $0x60] sm:$0xf] %v269
                %v271 = vld [vmem:[%s219 + $0xa4] sm:$0xf]
                %272 = vst [vmem:[%s220 + $0x64] sm:$0xf] %v271
                %v273 = vld [vmem:[%s219 + $0xa8] sm:$0xf]
                %274 = vst [vmem:[%s220 + $0x68] sm:$0xf] %v273
                %v275 = vld [vmem:[%s219 + $0xac] sm:$0xf]
                %276 = vst [vmem:[%s220 + $0x6c] sm:$0xf] %v275
                %v277 = vld [vmem:[%s219 + $0xb0] sm:$0xf]
                %278 = vst [vmem:[%s220 + $0x70] sm:$0xf] %v277
                %v279 = vld [vmem:[%s219 + $0xb4] sm:$0xf]
                %280 = vst [vmem:[%s220 + $0x74] sm:$0xf] %v279
                %v281 = vld [vmem:[%s219 + $0xb8] sm:$0xf]
                %282 = vst [vmem:[%s220 + $0x78] sm:$0xf] %v281
                %v283 = vld [vmem:[%s219 + $0xbc] sm:$0xf]
                %284 = vst [vmem:[%s220 + $0x7c] sm:$0xf] %v283
                %v285 = vld [vmem:[%s219 + $0x100] sm:$0xf]
                %286 = vst [vmem:[%s220 + $0x80] sm:$0xf] %v285
                %v287 = vld [vmem:[%s219 + $0x104] sm:$0xf]
                %288 = vst [vmem:[%s220 + $0x84] sm:$0xf] %v287
                %v289 = vld [vmem:[%s219 + $0x108] sm:$0xf]
                %290 = vst [vmem:[%s220 + $0x88] sm:$0xf] %v289
                %v291 = vld [vmem:[%s219 + $0x10c] sm:$0xf]
                %292 = vst [vmem:[%s220 + $0x8c] sm:$0xf] %v291
                %v293 = vld [vmem:[%s219 + $0x110] sm:$0xf]
                %294 = vst [vmem:[%s220 + $0x90] sm:$0xf] %v293
                %v295 = vld [vmem:[%s219 + $0x114] sm:$0xf]
                %296 = vst [vmem:[%s220 + $0x94] sm:$0xf] %v295
                %v297 = vld [vmem:[%s219 + $0x118] sm:$0xf]
                %298 = vst [vmem:[%s220 + $0x98] sm:$0xf] %v297
                %v299 = vld [vmem:[%s219 + $0x11c] sm:$0xf]
                %300 = vst [vmem:[%s220 + $0x9c] sm:$0xf] %v299
                %v301 = vld [vmem:[%s219 + $0x120] sm:$0xf]
                %302 = vst [vmem:[%s220 + $0xa0] sm:$0xf] %v301
                %v303 = vld [vmem:[%s219 + $0x124] sm:$0xf]
                %304 = vst [vmem:[%s220 + $0xa4] sm:$0xf] %v303
                %v305 = vld [vmem:[%s219 + $0x128] sm:$0xf]
                %306 = vst [vmem:[%s220 + $0xa8] sm:$0xf] %v305
                %v307 = vld [vmem:[%s219 + $0x12c] sm:$0xf]
                %308 = vst [vmem:[%s220 + $0xac] sm:$0xf] %v307
                %v309 = vld [vmem:[%s219 + $0x130] sm:$0xf]
                %310 = vst [vmem:[%s220 + $0xb0] sm:$0xf] %v309
                %v311 = vld [vmem:[%s219 + $0x134] sm:$0xf]
                %312 = vst [vmem:[%s220 + $0xb4] sm:$0xf] %v311
                %v313 = vld [vmem:[%s219 + $0x138] sm:$0xf]
                %314 = vst [vmem:[%s220 + $0xb8] sm:$0xf] %v313
                %v315 = vld [vmem:[%s219 + $0x13c] sm:$0xf]
                %316 = vst [vmem:[%s220 + $0xbc] sm:$0xf] %v315
                %v317 = vld [vmem:[%s219 + $0x180] sm:$0xf]
                %318 = vst [vmem:[%s220 + $0xc0] sm:$0xf] %v317
                %v319 = vld [vmem:[%s219 + $0x184] sm:$0xf]
                %320 = vst [vmem:[%s220 + $0xc4] sm:$0xf] %v319
                %v321 = vld [vmem:[%s219 + $0x188] sm:$0xf]
                %322 = vst [vmem:[%s220 + $0xc8] sm:$0xf] %v321
                %v323 = vld [vmem:[%s219 + $0x18c] sm:$0xf]
                %324 = vst [vmem:[%s220 + $0xcc] sm:$0xf] %v323
                %v325 = vld [vmem:[%s219 + $0x190] sm:$0xf]
                %326 = vst [vmem:[%s220 + $0xd0] sm:$0xf] %v325
                %v327 = vld [vmem:[%s219 + $0x194] sm:$0xf]
                %328 = vst [vmem:[%s220 + $0xd4] sm:$0xf] %v327
                %v329 = vld [vmem:[%s219 + $0x198] sm:$0xf]
                %330 = vst [vmem:[%s220 + $0xd8] sm:$0xf] %v329
                %v331 = vld [vmem:[%s219 + $0x19c] sm:$0xf]
                %332 = vst [vmem:[%s220 + $0xdc] sm:$0xf] %v331
                %v333 = vld [vmem:[%s219 + $0x1a0] sm:$0xf]
                %334 = vst [vmem:[%s220 + $0xe0] sm:$0xf] %v333
                %v335 = vld [vmem:[%s219 + $0x1a4] sm:$0xf]
                %336 = vst [vmem:[%s220 + $0xe4] sm:$0xf] %v335
                %v337 = vld [vmem:[%s219 + $0x1a8] sm:$0xf]
                %338 = vst [vmem:[%s220 + $0xe8] sm:$0xf] %v337
                %v339 = vld [vmem:[%s219 + $0x1ac] sm:$0xf]
                %340 = vst [vmem:[%s220 + $0xec] sm:$0xf] %v339
                %v341 = vld [vmem:[%s219 + $0x1b0] sm:$0xf]
                %342 = vst [vmem:[%s220 + $0xf0] sm:$0xf] %v341
                %v343 = vld [vmem:[%s219 + $0x1b4] sm:$0xf]
                %344 = vst [vmem:[%s220 + $0xf4] sm:$0xf] %v343
                %v345 = vld [vmem:[%s219 + $0x1b8] sm:$0xf]
                %346 = vst [vmem:[%s220 + $0xf8] sm:$0xf] %v345
                %v347 = vld [vmem:[%s219 + $0x1bc] sm:$0xf]
                %348 = vst [vmem:[%s220 + $0xfc] sm:$0xf] %v347
                %v349 = vld [vmem:[%s219 + $0x200] sm:$0xf]
                %350 = vst [vmem:[%s220 + $0x100] sm:$0xf] %v349
                %v351 = vld [vmem:[%s219 + $0x204] sm:$0xf]
                %352 = vst [vmem:[%s220 + $0x104] sm:$0xf] %v351
                %v353 = vld [vmem:[%s219 + $0x208] sm:$0xf]
                %354 = vst [vmem:[%s220 + $0x108] sm:$0xf] %v353
                %v355 = vld [vmem:[%s219 + $0x20c] sm:$0xf]
                %356 = vst [vmem:[%s220 + $0x10c] sm:$0xf] %v355
                %v357 = vld [vmem:[%s219 + $0x210] sm:$0xf]
                %358 = vst [vmem:[%s220 + $0x110] sm:$0xf] %v357
                %v359 = vld [vmem:[%s219 + $0x214] sm:$0xf]
                %360 = vst [vmem:[%s220 + $0x114] sm:$0xf] %v359
                %v361 = vld [vmem:[%s219 + $0x218] sm:$0xf]
                %362 = vst [vmem:[%s220 + $0x118] sm:$0xf] %v361
                %v363 = vld [vmem:[%s219 + $0x21c] sm:$0xf]
                %364 = vst [vmem:[%s220 + $0x11c] sm:$0xf] %v363
                %v365 = vld [vmem:[%s219 + $0x220] sm:$0xf]
                %366 = vst [vmem:[%s220 + $0x120] sm:$0xf] %v365
                %v367 = vld [vmem:[%s219 + $0x224] sm:$0xf]
                %368 = vst [vmem:[%s220 + $0x124] sm:$0xf] %v367
                %v369 = vld [vmem:[%s219 + $0x228] sm:$0xf]
                %370 = vst [vmem:[%s220 + $0x128] sm:$0xf] %v369
                %v371 = vld [vmem:[%s219 + $0x22c] sm:$0xf]
                %372 = vst [vmem:[%s220 + $0x12c] sm:$0xf] %v371
                %v373 = vld [vmem:[%s219 + $0x230] sm:$0xf]
                %374 = vst [vmem:[%s220 + $0x130] sm:$0xf] %v373
                %v375 = vld [vmem:[%s219 + $0x234] sm:$0xf]
                %376 = vst [vmem:[%s220 + $0x134] sm:$0xf] %v375
                %v377 = vld [vmem:[%s219 + $0x238] sm:$0xf]
                %378 = vst [vmem:[%s220 + $0x138] sm:$0xf] %v377
                %v379 = vld [vmem:[%s219 + $0x23c] sm:$0xf]
                %380 = vst [vmem:[%s220 + $0x13c] sm:$0xf] %v379
                %v381 = vld [vmem:[%s219 + $0x280] sm:$0xf]
                %382 = vst [vmem:[%s220 + $0x140] sm:$0xf] %v381
                %v383 = vld [vmem:[%s219 + $0x284] sm:$0xf]
                %384 = vst [vmem:[%s220 + $0x144] sm:$0xf] %v383
                %v385 = vld [vmem:[%s219 + $0x288] sm:$0xf]
                %386 = vst [vmem:[%s220 + $0x148] sm:$0xf] %v385
                %v387 = vld [vmem:[%s219 + $0x28c] sm:$0xf]
                %388 = vst [vmem:[%s220 + $0x14c] sm:$0xf] %v387
                %v389 = vld [vmem:[%s219 + $0x290] sm:$0xf]
                %390 = vst [vmem:[%s220 + $0x150] sm:$0xf] %v389
                %v391 = vld [vmem:[%s219 + $0x294] sm:$0xf]
                %392 = vst [vmem:[%s220 + $0x154] sm:$0xf] %v391
                %v393 = vld [vmem:[%s219 + $0x298] sm:$0xf]
                %394 = vst [vmem:[%s220 + $0x158] sm:$0xf] %v393
                %v395 = vld [vmem:[%s219 + $0x29c] sm:$0xf]
                %396 = vst [vmem:[%s220 + $0x15c] sm:$0xf] %v395
                %v397 = vld [vmem:[%s219 + $0x2a0] sm:$0xf]
                %398 = vst [vmem:[%s220 + $0x160] sm:$0xf] %v397
                %v399 = vld [vmem:[%s219 + $0x2a4] sm:$0xf]
                %400 = vst [vmem:[%s220 + $0x164] sm:$0xf] %v399
                %v401 = vld [vmem:[%s219 + $0x2a8] sm:$0xf]
                %402 = vst [vmem:[%s220 + $0x168] sm:$0xf] %v401
                %v403 = vld [vmem:[%s219 + $0x2ac] sm:$0xf]
                %404 = vst [vmem:[%s220 + $0x16c] sm:$0xf] %v403
                %v405 = vld [vmem:[%s219 + $0x2b0] sm:$0xf]
                %406 = vst [vmem:[%s220 + $0x170] sm:$0xf] %v405
                %v407 = vld [vmem:[%s219 + $0x2b4] sm:$0xf]
                %408 = vst [vmem:[%s220 + $0x174] sm:$0xf] %v407
                %v409 = vld [vmem:[%s219 + $0x2b8] sm:$0xf]
                %410 = vst [vmem:[%s220 + $0x178] sm:$0xf] %v409
                %v411 = vld [vmem:[%s219 + $0x2bc] sm:$0xf]
                %412 = vst [vmem:[%s220 + $0x17c] sm:$0xf] %v411
              $region49: #{conv2d_bn_act.1} parent=43 // loop_footer
                %s218 = sadd.s32 1, %s214
              $region50: #{conv2d_bn_act.1} parent=43 // loop_footer_branch
                %213 = sbr.rel target = $region46
              $region51: #{conv2d_bn_act.1} parent=43 // loop_exit
                _
            $region44: #{conv2d_bn_act.1} parent=35 // pred_fallthru
              _
          $region36: #{conv2d_bn_act.1} parent=31 // pred_fallthru
            _
          %624 = vnop
        $region32: #{conv2d_bn_act.1} parent=27 // pred_fallthru
          _
      $region28: #{conv2d_bn_act.1} parent=5 // pred_fallthru
        _
      %p625 = scmp.le.s32.totalorder 1, %s13
      %p626 = scmp.lt.s32.totalorder %s13, 3
      %p627 = pnand %p625, %p626
      %p628 = pneg %p627
      // Predicated region
      $region70: #{conv2d_bn_act.1} parent=5 // pred_check
        _
      $region71: #{conv2d_bn_act.1} parent=5 // pred_check_branch
        %630 = sbr.rel (%p627) target = $region73
      $region72: #{conv2d_bn_act.1} parent=5 // pred_region
        %s631 = ssub.s32 %s13, 1
        %s632 = sand.u32 %s38, 1
        %s633 = sand.u32 %s38, 1
        %s634 = smul.addr %s633, 384
        %s635 = scalar_lea.vmem [#allocation2], %s634
        // Predicated region
        $region74: #{conv2d_bn_act.1} parent=72 // pred_check
          %p636 = pneg %p51
        $region75: #{conv2d_bn_act.1} parent=72 // pred_check_branch
          %638 = sbr.rel (%p636) target = $region77
        $region76: #{conv2d_bn_act.1} parent=72 // pred_region
          _
        $region77: #{conv2d_bn_act.1} parent=72 // pred_fallthru
          _
        %s639 = sand.u32 %s38, 1
        %s640 = sand.u32 %s38, 1
        %s641 = smul.addr %s640, 384
        %s642 = scalar_lea.vmem [#allocation2], %s641
        %p643 = pneg %p51
        %p644 = pneg %p48
        %p645 = scmp.lt.s32.totalorder %s23, 0
        %s646 = scalar_select %p645, %s23, 0
        %s647 = smul.addr %s646, 2
        %s648 = scalar_lea.vmem %s1, %s647
        %p649 = pneg %p77
        %p650 = pneg %p74
        %p651 = scmp.lt.s32.totalorder %s23, 0
        %s652 = scalar_select %p651, %s23, 0
        %s653 = scalar_lea.vmem %s2, %s652
        %p654 = pneg %p103
        %p655 = pneg %p100
        %p656 = scmp.lt.s32.totalorder %s23, 0
        %s657 = scalar_select %p656, %s23, 0
        %s658 = scalar_lea.vmem %s3, %s657
        %p659 = pneg %p129
        %p660 = pneg %p126
        %p661 = pneg %p157
        %p662 = pneg %p154
        %s663 = sand.u32 %s144, 1
        %s664 = scalar_lea.sflag [#allocation4], %s663
        %s665 = sand.u32 %s144, 1
        %s666 = smul.addr %s665, 32
        %s667 = scalar_lea.vmem [#allocation3], %s666
        %s668 = smul.u32 8, %s22
        %p669 = scmp.lt.s32.totalorder %s23, 0
        %s670 = scalar_select %p669, %s23, 0
        %s671 = smul.addr %s670, 2
        %s672 = scalar_lea.vmem %s1, %s671
        %p673 = scmp.lt.s32.totalorder %s23, 0
        %s674 = scalar_select %p673, %s23, 0
        %s675 = scalar_lea.vmem %s2, %s674
        %p676 = scmp.lt.s32.totalorder %s23, 0
        %s677 = scalar_select %p676, %s23, 0
        %s678 = scalar_lea.vmem %s3, %s677
        %s679 = smul.u32 8, %s22
        %v681 = vld [vmem:[%s675] sm:$0x1]
        %v682 = vld [vmem:[%s678] sm:$0x1]
        %v683 = vld [vmem:[%s635] sm:$0xf]
        %v684 = vld [vmem:[%s672] sm:$0x3]
        %s685 = scalar_lea.vmem %s635, 64 [#allocation2]
        %v686 = vld [vmem:[%s685] sm:$0xf]
        %s687 = scalar_lea.vmem %s672, 2
        %v688 = vld [vmem:[%s687] sm:$0x3]
        %vm689 = vcmask 23552
        %v691 = vsel %vm689, %v686, 0
        %vm693 = vcmask 1040384
        %vm694 = vcmask 1041408
        %v695 = vsel %vm693, 4294967295, 65535
        %v696 = vsel %vm694, %v695, 0
        %v698 = vand.u32 %v688, %v696
        %700 = vmatprep.subr.bf16.mxu0 0
        %701 = vmatpush1.bf16.msra.mxu0 %v698
        %702 = vmatprep.subr.bf16.mxu0 0
        %703 = vmatpush1.bf16.msra.mxu0 0
        %704 = vmatprep.subr.bf16.mxu0 0
        %705 = vmatpush1.bf16.msra.mxu0 0
        %706 = vmatprep.subr.bf16.mxu0 0
        %707 = vmatpush1.bf16.msra.mxu0 0
        %708 = vmatprep.subr.bf16.mxu0 0
        %709 = vmatpush1.bf16.msra.mxu0 0
        %710 = vmatprep.subr.bf16.mxu0 0
        %711 = vmatpush1.bf16.msra.mxu0 0
        %712 = vmatprep.subr.bf16.mxu0 0
        %713 = vmatpush1.bf16.msra.mxu0 0
        %714 = vmatprep.subr.bf16.mxu0 0
        %715 = vmatpush1.bf16.msra.mxu0 0
        %716 = vmatprep.subr.bf16.mxu0 0
        %717 = vmatpush1.bf16.msra.mxu0 0
        %718 = vmatprep.subr.bf16.mxu0 0
        %719 = vmatpush1.bf16.msra.mxu0 0
        %720 = vmatprep.subr.bf16.mxu0 0
        %721 = vmatpush1.bf16.msra.mxu0 0
        %722 = vmatprep.subr.bf16.mxu0 0
        %723 = vmatpush1.bf16.msra.mxu0 0
        %724 = vmatprep.subr.bf16.mxu0 0
        %725 = vmatpush1.bf16.msra.mxu0 0
        %726 = vmatprep.subr.bf16.mxu0 0
        %727 = vmatpush1.bf16.msra.mxu0 0
        %728 = vmatprep.subr.bf16.mxu0 0
        %729 = vmatpush1.bf16.msra.mxu0 0
        %730 = vmatprep.subr.bf16.mxu0 0
        %731 = vmatpush1.bf16.msra.mxu0 0
        %732 = vmatprep.mubr.bf16.mxu0 0
        %733 = vmatmul.mubr.bf16.gmra.mrb[0].mxu0 %v691
        %v734 = vpop.f32.mrb[0].mxu0
        %v735 = vadd.f32 0.0, %v734
        %v736 = vpop.f32.mrb[0].mxu0
        %v737 = vpop.f32.mrb[0].mxu0
        %v738 = vpop.f32.mrb[0].mxu0
        %739 = vdwg.mxu0
        %v741 = vsel %vm689, %v683, 0
        %v744 = vand.u32 %v684, %v696
        %746 = vmatprep.subr.bf16.mxu0 0
        %747 = vmatpush1.bf16.msra.mxu0 %v744
        %748 = vmatprep.subr.bf16.mxu0 0
        %749 = vmatpush1.bf16.msra.mxu0 0
        %750 = vmatprep.subr.bf16.mxu0 0
        %751 = vmatpush1.bf16.msra.mxu0 0
        %752 = vmatprep.subr.bf16.mxu0 0
        %753 = vmatpush1.bf16.msra.mxu0 0
        %754 = vmatprep.subr.bf16.mxu0 0
        %755 = vmatpush1.bf16.msra.mxu0 0
        %756 = vmatprep.subr.bf16.mxu0 0
        %757 = vmatpush1.bf16.msra.mxu0 0
        %758 = vmatprep.subr.bf16.mxu0 0
        %759 = vmatpush1.bf16.msra.mxu0 0
        %760 = vmatprep.subr.bf16.mxu0 0
        %761 = vmatpush1.bf16.msra.mxu0 0
        %762 = vmatprep.subr.bf16.mxu0 0
        %763 = vmatpush1.bf16.msra.mxu0 0
        %764 = vmatprep.subr.bf16.mxu0 0
        %765 = vmatpush1.bf16.msra.mxu0 0
        %766 = vmatprep.subr.bf16.mxu0 0
        %767 = vmatpush1.bf16.msra.mxu0 0
        %768 = vmatprep.subr.bf16.mxu0 0
        %769 = vmatpush1.bf16.msra.mxu0 0
        %770 = vmatprep.subr.bf16.mxu0 0
        %771 = vmatpush1.bf16.msra.mxu0 0
        %772 = vmatprep.subr.bf16.mxu0 0
        %773 = vmatpush1.bf16.msra.mxu0 0
        %774 = vmatprep.subr.bf16.mxu0 0
        %775 = vmatpush1.bf16.msra.mxu0 0
        %776 = vmatprep.subr.bf16.mxu0 0
        %777 = vmatpush1.bf16.msra.mxu0 0
        %778 = vmatprep.mubr.bf16.mxu0 0
        %779 = vmatmul.mubr.bf16.gmra.mrb[0].mxu0 %v741
        %v780 = vpop.f32.mrb[0].mxu0
        %v781 = vadd.f32 %v735, %v780
        %v782 = vpop.f32.mrb[0].mxu0
        %v783 = vpop.f32.mrb[0].mxu0
        %v784 = vpop.f32.mrb[0].mxu0
        %785 = vdwg.mxu0
        %v786 = vld [vmem:[%s635] sm:$0xf]
        %v787 = vld [vmem:[%s635 + $0x4] sm:$0x1]
        %s788 = scalar_lea.vmem %s672, 4
        %v789 = vld [vmem:[%s788] sm:$0x3]
        %v792 = vunpack.c.l.b16 %v786
        %v793 = vunpack.c.l.b16 %v787
        %v794 = vpack.c.b16 %v793, %v792
        %v796 = vshrl.u32 %v794, 16
        %v798 = vshll.u32 %v794, 16
        %v800 = vrot.slane %v798, 1
        %v801 = vor.u32 %v796, %v800
        %v803 = vsel %vm689, %v801, 0
        %v806 = vand.u32 %v789, %v696
        %808 = vmatprep.subr.bf16.mxu0 0
        %809 = vmatpush1.bf16.msra.mxu0 %v806
        %810 = vmatprep.subr.bf16.mxu0 0
        %811 = vmatpush1.bf16.msra.mxu0 0
        %812 = vmatprep.subr.bf16.mxu0 0
        %813 = vmatpush1.bf16.msra.mxu0 0
        %814 = vmatprep.subr.bf16.mxu0 0
        %815 = vmatpush1.bf16.msra.mxu0 0
        %816 = vmatprep.subr.bf16.mxu0 0
        %817 = vmatpush1.bf16.msra.mxu0 0
        %818 = vmatprep.subr.bf16.mxu0 0
        %819 = vmatpush1.bf16.msra.mxu0 0
        %820 = vmatprep.subr.bf16.mxu0 0
        %821 = vmatpush1.bf16.msra.mxu0 0
        %822 = vmatprep.subr.bf16.mxu0 0
        %823 = vmatpush1.bf16.msra.mxu0 0
        %824 = vmatprep.subr.bf16.mxu0 0
        %825 = vmatpush1.bf16.msra.mxu0 0
        %826 = vmatprep.subr.bf16.mxu0 0
        %827 = vmatpush1.bf16.msra.mxu0 0
        %828 = vmatprep.subr.bf16.mxu0 0
        %829 = vmatpush1.bf16.msra.mxu0 0
        %830 = vmatprep.subr.bf16.mxu0 0
        %831 = vmatpush1.bf16.msra.mxu0 0
        %832 = vmatprep.subr.bf16.mxu0 0
        %833 = vmatpush1.bf16.msra.mxu0 0
        %834 = vmatprep.subr.bf16.mxu0 0
        %835 = vmatpush1.bf16.msra.mxu0 0
        %836 = vmatprep.subr.bf16.mxu0 0
        %837 = vmatpush1.bf16.msra.mxu0 0
        %838 = vmatprep.subr.bf16.mxu0 0
        %839 = vmatpush1.bf16.msra.mxu0 0
        %840 = vmatprep.mubr.bf16.mxu0 0
        %841 = vmatmul.mubr.bf16.gmra.mrb[0].mxu0 %v803
        %v842 = vpop.f32.mrb[0].mxu0
        %v843 = vadd.f32 0.0, %v842
        %v844 = vpop.f32.mrb[0].mxu0
        %v845 = vpop.f32.mrb[0].mxu0
        %v846 = vpop.f32.mrb[0].mxu0
        %847 = vdwg.mxu0
        %v848 = vadd.f32 %v781, %v843
        %s849 = scalar_lea.vmem %s635, 128 [#allocation2]
        %v850 = vld [vmem:[%s849] sm:$0xf]
        %s851 = scalar_lea.vmem %s672, 6
        %v852 = vld [vmem:[%s851] sm:$0x3]
        %v854 = vsel %vm689, %v850, 0
        %v857 = vand.u32 %v852, %v696
        %859 = vmatprep.subr.bf16.mxu0 0
        %860 = vmatpush1.bf16.msra.mxu0 %v857
        %861 = vmatprep.subr.bf16.mxu0 0
        %862 = vmatpush1.bf16.msra.mxu0 0
        %863 = vmatprep.subr.bf16.mxu0 0
        %864 = vmatpush1.bf16.msra.mxu0 0
        %865 = vmatprep.subr.bf16.mxu0 0
        %866 = vmatpush1.bf16.msra.mxu0 0
        %867 = vmatprep.subr.bf16.mxu0 0
        %868 = vmatpush1.bf16.msra.mxu0 0
        %869 = vmatprep.subr.bf16.mxu0 0
        %870 = vmatpush1.bf16.msra.mxu0 0
        %871 = vmatprep.subr.bf16.mxu0 0
        %872 = vmatpush1.bf16.msra.mxu0 0
        %873 = vmatprep.subr.bf16.mxu0 0
        %874 = vmatpush1.bf16.msra.mxu0 0
        %875 = vmatprep.subr.bf16.mxu0 0
        %876 = vmatpush1.bf16.msra.mxu0 0
        %877 = vmatprep.subr.bf16.mxu0 0
        %878 = vmatpush1.bf16.msra.mxu0 0
        %879 = vmatprep.subr.bf16.mxu0 0
        %880 = vmatpush1.bf16.msra.mxu0 0
        %881 = vmatprep.subr.bf16.mxu0 0
        %882 = vmatpush1.bf16.msra.mxu0 0
        %883 = vmatprep.subr.bf16.mxu0 0
        %884 = vmatpush1.bf16.msra.mxu0 0
        %885 = vmatprep.subr.bf16.mxu0 0
        %886 = vmatpush1.bf16.msra.mxu0 0
        %887 = vmatprep.subr.bf16.mxu0 0
        %888 = vmatpush1.bf16.msra.mxu0 0
        %889 = vmatprep.subr.bf16.mxu0 0
        %890 = vmatpush1.bf16.msra.mxu0 0
        %891 = vmatprep.mubr.bf16.mxu0 0
        %892 = vmatmul.mubr.bf16.gmra.mrb[0].mxu0 %v854
        %v893 = vpop.f32.mrb[0].mxu0
        %v894 = vadd.f32 0.0, %v893
        %v895 = vpop.f32.mrb[0].mxu0
        %v896 = vpop.f32.mrb[0].mxu0
        %v897 = vpop.f32.mrb[0].mxu0
        %898 = vdwg.mxu0
        %v899 = vadd.f32 %v848, %v894
        %s900 = scalar_lea.vmem %s635, 192 [#allocation2]
        %v901 = vld [vmem:[%s900] sm:$0xf]
        %s902 = scalar_lea.vmem %s672, 8
        %v903 = vld [vmem:[%s902] sm:$0x3]
        %v905 = vsel %vm689, %v901, 0
        %v908 = vand.u32 %v903, %v696
        %910 = vmatprep.subr.bf16.mxu0 0
        %911 = vmatpush1.bf16.msra.mxu0 %v908
        %912 = vmatprep.subr.bf16.mxu0 0
        %913 = vmatpush1.bf16.msra.mxu0 0
        %914 = vmatprep.subr.bf16.mxu0 0
        %915 = vmatpush1.bf16.msra.mxu0 0
        %916 = vmatprep.subr.bf16.mxu0 0
        %917 = vmatpush1.bf16.msra.mxu0 0
        %918 = vmatprep.subr.bf16.mxu0 0
        %919 = vmatpush1.bf16.msra.mxu0 0
        %920 = vmatprep.subr.bf16.mxu0 0
        %921 = vmatpush1.bf16.msra.mxu0 0
        %922 = vmatprep.subr.bf16.mxu0 0
        %923 = vmatpush1.bf16.msra.mxu0 0
        %924 = vmatprep.subr.bf16.mxu0 0
        %925 = vmatpush1.bf16.msra.mxu0 0
        %926 = vmatprep.subr.bf16.mxu0 0
        %927 = vmatpush1.bf16.msra.mxu0 0
        %928 = vmatprep.subr.bf16.mxu0 0
        %929 = vmatpush1.bf16.msra.mxu0 0
        %930 = vmatprep.subr.bf16.mxu0 0
        %931 = vmatpush1.bf16.msra.mxu0 0
        %932 = vmatprep.subr.bf16.mxu0 0
        %933 = vmatpush1.bf16.msra.mxu0 0
        %934 = vmatprep.subr.bf16.mxu0 0
        %935 = vmatpush1.bf16.msra.mxu0 0
        %936 = vmatprep.subr.bf16.mxu0 0
        %937 = vmatpush1.bf16.msra.mxu0 0
        %938 = vmatprep.subr.bf16.mxu0 0
        %939 = vmatpush1.bf16.msra.mxu0 0
        %940 = vmatprep.subr.bf16.mxu0 0
        %941 = vmatpush1.bf16.msra.mxu0 0
        %942 = vmatprep.mubr.bf16.mxu0 0
        %943 = vmatmul.mubr.bf16.gmra.mrb[0].mxu0 %v905
        %v944 = vpop.f32.mrb[0].mxu0
        %v945 = vadd.f32 0.0, %v944
        %v946 = vpop.f32.mrb[0].mxu0
        %v947 = vpop.f32.mrb[0].mxu0
        %v948 = vpop.f32.mrb[0].mxu0
        %949 = vdwg.mxu0
        %v950 = vadd.f32 %v899, %v945
        %v951 = vld [vmem:[%s849] sm:$0xf]
        %v952 = vld [vmem:[%s849 + $0x4] sm:$0x1]
        %s953 = scalar_lea.vmem %s672, 10
        %v954 = vld [vmem:[%s953] sm:$0x3]
        %v957 = vunpack.c.l.b16 %v951
        %v958 = vunpack.c.l.b16 %v952
        %v959 = vpack.c.b16 %v958, %v957
        %v961 = vshrl.u32 %v959, 16
        %v963 = vshll.u32 %v959, 16
        %v965 = vrot.slane %v963, 1
        %v966 = vor.u32 %v961, %v965
        %v968 = vsel %vm689, %v966, 0
        %v971 = vand.u32 %v954, %v696
        %973 = vmatprep.subr.bf16.mxu0 0
        %974 = vmatpush1.bf16.msra.mxu0 %v971
        %975 = vmatprep.subr.bf16.mxu0 0
        %976 = vmatpush1.bf16.msra.mxu0 0
        %977 = vmatprep.subr.bf16.mxu0 0
        %978 = vmatpush1.bf16.msra.mxu0 0
        %979 = vmatprep.subr.bf16.mxu0 0
        %980 = vmatpush1.bf16.msra.mxu0 0
        %981 = vmatprep.subr.bf16.mxu0 0
        %982 = vmatpush1.bf16.msra.mxu0 0
        %983 = vmatprep.subr.bf16.mxu0 0
        %984 = vmatpush1.bf16.msra.mxu0 0
        %985 = vmatprep.subr.bf16.mxu0 0
        %986 = vmatpush1.bf16.msra.mxu0 0
        %987 = vmatprep.subr.bf16.mxu0 0
        %988 = vmatpush1.bf16.msra.mxu0 0
        %989 = vmatprep.subr.bf16.mxu0 0
        %990 = vmatpush1.bf16.msra.mxu0 0
        %991 = vmatprep.subr.bf16.mxu0 0
        %992 = vmatpush1.bf16.msra.mxu0 0
        %993 = vmatprep.subr.bf16.mxu0 0
        %994 = vmatpush1.bf16.msra.mxu0 0
        %995 = vmatprep.subr.bf16.mxu0 0
        %996 = vmatpush1.bf16.msra.mxu0 0
        %997 = vmatprep.subr.bf16.mxu0 0
        %998 = vmatpush1.bf16.msra.mxu0 0
        %999 = vmatprep.subr.bf16.mxu0 0
        %1000 = vmatpush1.bf16.msra.mxu0 0
        %1001 = vmatprep.subr.bf16.mxu0 0
        %1002 = vmatpush1.bf16.msra.mxu0 0
        %1003 = vmatprep.subr.bf16.mxu0 0
        %1004 = vmatpush1.bf16.msra.mxu0 0
        %1005 = vmatprep.mubr.bf16.mxu0 0
        %1006 = vmatmul.mubr.bf16.gmra.mrb[0].mxu0 %v968
        %v1007 = vpop.f32.mrb[0].mxu0
        %v1008 = vadd.f32 0.0, %v1007
        %v1009 = vpop.f32.mrb[0].mxu0
        %v1010 = vpop.f32.mrb[0].mxu0
        %v1011 = vpop.f32.mrb[0].mxu0
        %1012 = vdwg.mxu0
        %v1013 = vadd.f32 %v950, %v1008
        %s1014 = scalar_lea.vmem %s635, 256 [#allocation2]
        %v1015 = vld [vmem:[%s1014] sm:$0xf]
        %s1016 = scalar_lea.vmem %s672, 12
        %v1017 = vld [vmem:[%s1016] sm:$0x3]
        %v1019 = vsel %vm689, %v1015, 0
        %v1022 = vand.u32 %v1017, %v696
        %1024 = vmatprep.subr.bf16.mxu0 0
        %1025 = vmatpush1.bf16.msra.mxu0 %v1022
        %1026 = vmatprep.subr.bf16.mxu0 0
        %1027 = vmatpush1.bf16.msra.mxu0 0
        %1028 = vmatprep.subr.bf16.mxu0 0
        %1029 = vmatpush1.bf16.msra.mxu0 0
        %1030 = vmatprep.subr.bf16.mxu0 0
        %1031 = vmatpush1.bf16.msra.mxu0 0
        %1032 = vmatprep.subr.bf16.mxu0 0
        %1033 = vmatpush1.bf16.msra.mxu0 0
        %1034 = vmatprep.subr.bf16.mxu0 0
        %1035 = vmatpush1.bf16.msra.mxu0 0
        %1036 = vmatprep.subr.bf16.mxu0 0
        %1037 = vmatpush1.bf16.msra.mxu0 0
        %1038 = vmatprep.subr.bf16.mxu0 0
        %1039 = vmatpush1.bf16.msra.mxu0 0
        %1040 = vmatprep.subr.bf16.mxu0 0
        %1041 = vmatpush1.bf16.msra.mxu0 0
        %1042 = vmatprep.subr.bf16.mxu0 0
        %1043 = vmatpush1.bf16.msra.mxu0 0
        %1044 = vmatprep.subr.bf16.mxu0 0
        %1045 = vmatpush1.bf16.msra.mxu0 0
        %1046 = vmatprep.subr.bf16.mxu0 0
        %1047 = vmatpush1.bf16.msra.mxu0 0
        %1048 = vmatprep.subr.bf16.mxu0 0
        %1049 = vmatpush1.bf16.msra.mxu0 0
        %1050 = vmatprep.subr.bf16.mxu0 0
        %1051 = vmatpush1.bf16.msra.mxu0 0
        %1052 = vmatprep.subr.bf16.mxu0 0
        %1053 = vmatpush1.bf16.msra.mxu0 0
        %1054 = vmatprep.subr.bf16.mxu0 0
        %1055 = vmatpush1.bf16.msra.mxu0 0
        %1056 = vmatprep.mubr.bf16.mxu0 0
        %1057 = vmatmul.mubr.bf16.gmra.mrb[0].mxu0 %v1019
        %v1058 = vpop.f32.mrb[0].mxu0
        %v1059 = vadd.f32 0.0, %v1058
        %v1060 = vpop.f32.mrb[0].mxu0
        %v1061 = vpop.f32.mrb[0].mxu0
        %v1062 = vpop.f32.mrb[0].mxu0
        %1063 = vdwg.mxu0
        %v1064 = vadd.f32 %v1013, %v1059
        %s1065 = scalar_lea.vmem %s635, 320 [#allocation2]
        %v1066 = vld [vmem:[%s1065] sm:$0xf]
        %s1067 = scalar_lea.vmem %s672, 14
        %v1068 = vld [vmem:[%s1067] sm:$0x3]
        %v1070 = vsel %vm689, %v1066, 0
        %v1073 = vand.u32 %v1068, %v696
        %1075 = vmatprep.subr.bf16.mxu0 0
        %1076 = vmatpush1.bf16.msra.mxu0 %v1073
        %1077 = vmatprep.subr.bf16.mxu0 0
        %1078 = vmatpush1.bf16.msra.mxu0 0
        %1079 = vmatprep.subr.bf16.mxu0 0
        %1080 = vmatpush1.bf16.msra.mxu0 0
        %1081 = vmatprep.subr.bf16.mxu0 0
        %1082 = vmatpush1.bf16.msra.mxu0 0
        %1083 = vmatprep.subr.bf16.mxu0 0
        %1084 = vmatpush1.bf16.msra.mxu0 0
        %1085 = vmatprep.subr.bf16.mxu0 0
        %1086 = vmatpush1.bf16.msra.mxu0 0
        %1087 = vmatprep.subr.bf16.mxu0 0
        %1088 = vmatpush1.bf16.msra.mxu0 0
        %1089 = vmatprep.subr.bf16.mxu0 0
        %1090 = vmatpush1.bf16.msra.mxu0 0
        %1091 = vmatprep.subr.bf16.mxu0 0
        %1092 = vmatpush1.bf16.msra.mxu0 0
        %1093 = vmatprep.subr.bf16.mxu0 0
        %1094 = vmatpush1.bf16.msra.mxu0 0
        %1095 = vmatprep.subr.bf16.mxu0 0
        %1096 = vmatpush1.bf16.msra.mxu0 0
        %1097 = vmatprep.subr.bf16.mxu0 0
        %1098 = vmatpush1.bf16.msra.mxu0 0
        %1099 = vmatprep.subr.bf16.mxu0 0
        %1100 = vmatpush1.bf16.msra.mxu0 0
        %1101 = vmatprep.subr.bf16.mxu0 0
        %1102 = vmatpush1.bf16.msra.mxu0 0
        %1103 = vmatprep.subr.bf16.mxu0 0
        %1104 = vmatpush1.bf16.msra.mxu0 0
        %1105 = vmatprep.subr.bf16.mxu0 0
        %1106 = vmatpush1.bf16.msra.mxu0 0
        %1107 = vmatprep.mubr.bf16.mxu0 0
        %1108 = vmatmul.mubr.bf16.gmra.mrb[0].mxu0 %v1070
        %v1109 = vpop.f32.mrb[0].mxu0
        %v1110 = vadd.f32 0.0, %v1109
        %v1111 = vpop.f32.mrb[0].mxu0
        %v1112 = vpop.f32.mrb[0].mxu0
        %v1113 = vpop.f32.mrb[0].mxu0
        %1114 = vdwg.mxu0
        %v1115 = vadd.f32 %v1064, %v1110
        %v1116 = vld [vmem:[%s1014] sm:$0xf]
        %v1117 = vld [vmem:[%s1014 + $0x4] sm:$0x1]
        %s1118 = scalar_lea.vmem %s672, 16
        %v1119 = vld [vmem:[%s1118] sm:$0x3]
        %v1122 = vunpack.c.l.b16 %v1116
        %v1123 = vunpack.c.l.b16 %v1117
        %v1124 = vpack.c.b16 %v1123, %v1122
        %v1126 = vshrl.u32 %v1124, 16
        %v1128 = vshll.u32 %v1124, 16
        %v1130 = vrot.slane %v1128, 1
        %v1131 = vor.u32 %v1126, %v1130
        %v1133 = vsel %vm689, %v1131, 0
        %v1136 = vand.u32 %v1119, %v696
        %1138 = vmatprep.subr.bf16.mxu0 0
        %1139 = vmatpush1.bf16.msra.mxu0 %v1136
        %1140 = vmatprep.subr.bf16.mxu0 0
        %1141 = vmatpush1.bf16.msra.mxu0 0
        %1142 = vmatprep.subr.bf16.mxu0 0
        %1143 = vmatpush1.bf16.msra.mxu0 0
        %1144 = vmatprep.subr.bf16.mxu0 0
        %1145 = vmatpush1.bf16.msra.mxu0 0
        %1146 = vmatprep.subr.bf16.mxu0 0
        %1147 = vmatpush1.bf16.msra.mxu0 0
        %1148 = vmatprep.subr.bf16.mxu0 0
        %1149 = vmatpush1.bf16.msra.mxu0 0
        %1150 = vmatprep.subr.bf16.mxu0 0
        %1151 = vmatpush1.bf16.msra.mxu0 0
        %1152 = vmatprep.subr.bf16.mxu0 0
        %1153 = vmatpush1.bf16.msra.mxu0 0
        %1154 = vmatprep.subr.bf16.mxu0 0
        %1155 = vmatpush1.bf16.msra.mxu0 0
        %1156 = vmatprep.subr.bf16.mxu0 0
        %1157 = vmatpush1.bf16.msra.mxu0 0
        %1158 = vmatprep.subr.bf16.mxu0 0
        %1159 = vmatpush1.bf16.msra.mxu0 0
        %1160 = vmatprep.subr.bf16.mxu0 0
        %1161 = vmatpush1.bf16.msra.mxu0 0
        %1162 = vmatprep.subr.bf16.mxu0 0
        %1163 = vmatpush1.bf16.msra.mxu0 0
        %1164 = vmatprep.subr.bf16.mxu0 0
        %1165 = vmatpush1.bf16.msra.mxu0 0
        %1166 = vmatprep.subr.bf16.mxu0 0
        %1167 = vmatpush1.bf16.msra.mxu0 0
        %1168 = vmatprep.subr.bf16.mxu0 0
        %1169 = vmatpush1.bf16.msra.mxu0 0
        %1170 = vmatprep.mubr.bf16.mxu0 0
        %1171 = vmatmul.mubr.bf16.gmra.mrb[0].mxu0 %v1133
        %v1172 = vpop.f32.mrb[0].mxu0
        %v1173 = vadd.f32 0.0, %v1172
        %v1174 = vpop.f32.mrb[0].mxu0
        %v1175 = vpop.f32.mrb[0].mxu0
        %v1176 = vpop.f32.mrb[0].mxu0
        %1177 = vdwg.mxu0
        %v1178 = vadd.f32 %v1115, %v1173
        %v1180 = vlaneseq
        %v1181 = vshrl.u32 %v1180, 7
        %v1182 = vsub.s32 0, %v1181
        %v1183 = vrot.slane %v681, %v1182
        %v1185 = vmul.f32 %v1178, %v1183
        %v1187 = vlaneseq
        %v1188 = vshrl.u32 %v1187, 7
        %v1189 = vsub.s32 0, %v1188
        %v1190 = vrot.slane %v682, %v1189
        %v1192 = vadd.f32 %v1185, %v1190
        %v1193 = vmin.f32 %v1192, 30.0
        %v1194 = vmul.f32 %v1193, 1.442695
        %v1195 = vpow.pop %v1194
        %v1196 = vadd.f32 %v1195, 2.0
        %v1197 = vmul.f32 %v1195, %v1196
        %v1198 = vadd.f32 %v1197, 2.0
        %v1199 = vrcp.pop %v1198
        %v1200 = vmul.f32 %v1199, 2.0
        %v1201 = vsub.f32 1.0, %v1200
        %v1202 = vmul.f32 %v1192, %v1201
        %v1203 = vpack.c.bf16 %v1202, %v1202
        %vm1204 = vcmask 257024
        %1205 = vst.msk [vmem:[%s667] sm:$0xf] %vm1204, %v1203
        %s1206 = scalar_lea.vmem %s635, 8 [#allocation2]
        %v1207 = vld [vmem:[%s1206] sm:$0xf]
        %v1208 = vld [vmem:[%s672] sm:$0x3]
        %s1209 = scalar_lea.vmem %s635, 72 [#allocation2]
        %v1210 = vld [vmem:[%s1209] sm:$0xf]
        %v1211 = vld [vmem:[%s687] sm:$0x3]
        %v1213 = vsel %vm689, %v1210, 0
        %v1216 = vand.u32 %v1211, %v696
        %1218 = vmatprep.subr.bf16.mxu0 0
        %1219 = vmatpush1.bf16.msra.mxu0 %v1216
        %1220 = vmatprep.subr.bf16.mxu0 0
        %1221 = vmatpush1.bf16.msra.mxu0 0
        %1222 = vmatprep.subr.bf16.mxu0 0
        %1223 = vmatpush1.bf16.msra.mxu0 0
        %1224 = vmatprep.subr.bf16.mxu0 0
        %1225 = vmatpush1.bf16.msra.mxu0 0
        %1226 = vmatprep.subr.bf16.mxu0 0
        %1227 = vmatpush1.bf16.msra.mxu0 0
        %1228 = vmatprep.subr.bf16.mxu0 0
        %1229 = vmatpush1.bf16.msra.mxu0 0
        %1230 = vmatprep.subr.bf16.mxu0 0
        %1231 = vmatpush1.bf16.msra.mxu0 0
        %1232 = vmatprep.subr.bf16.mxu0 0
        %1233 = vmatpush1.bf16.msra.mxu0 0
        %1234 = vmatprep.subr.bf16.mxu0 0
        %1235 = vmatpush1.bf16.msra.mxu0 0
        %1236 = vmatprep.subr.bf16.mxu0 0
        %1237 = vmatpush1.bf16.msra.mxu0 0
        %1238 = vmatprep.subr.bf16.mxu0 0
        %1239 = vmatpush1.bf16.msra.mxu0 0
        %1240 = vmatprep.subr.bf16.mxu0 0
        %1241 = vmatpush1.bf16.msra.mxu0 0
        %1242 = vmatprep.subr.bf16.mxu0 0
        %1243 = vmatpush1.bf16.msra.mxu0 0
        %1244 = vmatprep.subr.bf16.mxu0 0
        %1245 = vmatpush1.bf16.msra.mxu0 0
        %1246 = vmatprep.subr.bf16.mxu0 0
        %1247 = vmatpush1.bf16.msra.mxu0 0
        %1248 = vmatprep.subr.bf16.mxu0 0
        %1249 = vmatpush1.bf16.msra.mxu0 0
        %1250 = vmatprep.mubr.bf16.mxu0 0
        %1251 = vmatmul.mubr.bf16.gmra.mrb[0].mxu0 %v1213
        %v1252 = vpop.f32.mrb[0].mxu0
        %v1253 = vadd.f32 0.0, %v1252
        %v1254 = vpop.f32.mrb[0].mxu0
        %v1255 = vpop.f32.mrb[0].mxu0
        %v1256 = vpop.f32.mrb[0].mxu0
        %1257 = vdwg.mxu0
        %v1259 = vsel %vm689, %v1207, 0
        %v1262 = vand.u32 %v1208, %v696
        %1264 = vmatprep.subr.bf16.mxu0 0
        %1265 = vmatpush1.bf16.msra.mxu0 %v1262
        %1266 = vmatprep.subr.bf16.mxu0 0
        %1267 = vmatpush1.bf16.msra.mxu0 0
        %1268 = vmatprep.subr.bf16.mxu0 0
        %1269 = vmatpush1.bf16.msra.mxu0 0
        %1270 = vmatprep.subr.bf16.mxu0 0
        %1271 = vmatpush1.bf16.msra.mxu0 0
        %1272 = vmatprep.subr.bf16.mxu0 0
        %1273 = vmatpush1.bf16.msra.mxu0 0
        %1274 = vmatprep.subr.bf16.mxu0 0
        %1275 = vmatpush1.bf16.msra.mxu0 0
        %1276 = vmatprep.subr.bf16.mxu0 0
        %1277 = vmatpush1.bf16.msra.mxu0 0
        %1278 = vmatprep.subr.bf16.mxu0 0
        %1279 = vmatpush1.bf16.msra.mxu0 0
        %1280 = vmatprep.subr.bf16.mxu0 0
        %1281 = vmatpush1.bf16.msra.mxu0 0
        %1282 = vmatprep.subr.bf16.mxu0 0
        %1283 = vmatpush1.bf16.msra.mxu0 0
        %1284 = vmatprep.subr.bf16.mxu0 0
        %1285 = vmatpush1.bf16.msra.mxu0 0
        %1286 = vmatprep.subr.bf16.mxu0 0
        %1287 = vmatpush1.bf16.msra.mxu0 0
        %1288 = vmatprep.subr.bf16.mxu0 0
        %1289 = vmatpush1.bf16.msra.mxu0 0
        %1290 = vmatprep.subr.bf16.mxu0 0
        %1291 = vmatpush1.bf16.msra.mxu0 0
        %1292 = vmatprep.subr.bf16.mxu0 0
        %1293 = vmatpush1.bf16.msra.mxu0 0
        %1294 = vmatprep.subr.bf16.mxu0 0
        %1295 = vmatpush1.bf16.msra.mxu0 0
        %1296 = vmatprep.mubr.bf16.mxu0 0
        %1297 = vmatmul.mubr.bf16.gmra.mrb[0].mxu0 %v1259
        %v1298 = vpop.f32.mrb[0].mxu0
        %v1299 = vadd.f32 %v1253, %v1298
        %v1300 = vpop.f32.mrb[0].mxu0
        %v1301 = vpop.f32.mrb[0].mxu0
        %v1302 = vpop.f32.mrb[0].mxu0
        %1303 = vdwg.mxu0
        %v1304 = vld [vmem:[%s1206] sm:$0xf]
        %v1305 = vld [vmem:[%s1206 + $0x4] sm:$0x1]
        %v1306 = vld [vmem:[%s788] sm:$0x3]
        %v1309 = vunpack.c.l.b16 %v1304
        %v1310 = vunpack.c.l.b16 %v1305
        %v1311 = vpack.c.b16 %v1310, %v1309
        %v1313 = vshrl.u32 %v1311, 16
        %v1315 = vshll.u32 %v1311, 16
        %v1317 = vrot.slane %v1315, 1
        %v1318 = vor.u32 %v1313, %v1317
        %v1320 = vsel %vm689, %v1318, 0
        %v1323 = vand.u32 %v1306, %v696
        %1325 = vmatprep.subr.bf16.mxu0 0
        %1326 = vmatpush1.bf16.msra.mxu0 %v1323
        %1327 = vmatprep.subr.bf16.mxu0 0
        %1328 = vmatpush1.bf16.msra.mxu0 0
        %1329 = vmatprep.subr.bf16.mxu0 0
        %1330 = vmatpush1.bf16.msra.mxu0 0
        %1331 = vmatprep.subr.bf16.mxu0 0
        %1332 = vmatpush1.bf16.msra.mxu0 0
        %1333 = vmatprep.subr.bf16.mxu0 0
        %1334 = vmatpush1.bf16.msra.mxu0 0
        %1335 = vmatprep.subr.bf16.mxu0 0
        %1336 = vmatpush1.bf16.msra.mxu0 0
        %1337 = vmatprep.subr.bf16.mxu0 0
        %1338 = vmatpush1.bf16.msra.mxu0 0
        %1339 = vmatprep.subr.bf16.mxu0 0
        %1340 = vmatpush1.bf16.msra.mxu0 0
        %1341 = vmatprep.subr.bf16.mxu0 0
        %1342 = vmatpush1.bf16.msra.mxu0 0
        %1343 = vmatprep.subr.bf16.mxu0 0
        %1344 = vmatpush1.bf16.msra.mxu0 0
        %1345 = vmatprep.subr.bf16.mxu0 0
        %1346 = vmatpush1.bf16.msra.mxu0 0
        %1347 = vmatprep.subr.bf16.mxu0 0
        %1348 = vmatpush1.bf16.msra.mxu0 0
        %1349 = vmatprep.subr.bf16.mxu0 0
        %1350 = vmatpush1.bf16.msra.mxu0 0
        %1351 = vmatprep.subr.bf16.mxu0 0
        %1352 = vmatpush1.bf16.msra.mxu0 0
        %1353 = vmatprep.subr.bf16.mxu0 0
        %1354 = vmatpush1.bf16.msra.mxu0 0
        %1355 = vmatprep.subr.bf16.mxu0 0
        %1356 = vmatpush1.bf16.msra.mxu0 0
        %1357 = vmatprep.mubr.bf16.mxu0 0
        %1358 = vmatmul.mubr.bf16.gmra.mrb[0].mxu0 %v1320
        %v1359 = vpop.f32.mrb[0].mxu0
        %v1360 = vadd.f32 0.0, %v1359
        %v1361 = vpop.f32.mrb[0].mxu0
        %v1362 = vpop.f32.mrb[0].mxu0
        %v1363 = vpop.f32.mrb[0].mxu0
        %1364 = vdwg.mxu0
        %v1365 = vadd.f32 %v1299, %v1360
        %s1366 = scalar_lea.vmem %s635, 136 [#allocation2]
        %v1367 = vld [vmem:[%s1366] sm:$0xf]
        %v1368 = vld [vmem:[%s851] sm:$0x3]
        %v1370 = vsel %vm689, %v1367, 0
        %v1373 = vand.u32 %v1368, %v696
        %1375 = vmatprep.subr.bf16.mxu0 0
        %1376 = vmatpush1.bf16.msra.mxu0 %v1373
        %1377 = vmatprep.subr.bf16.mxu0 0
        %1378 = vmatpush1.bf16.msra.mxu0 0
        %1379 = vmatprep.subr.bf16.mxu0 0
        %1380 = vmatpush1.bf16.msra.mxu0 0
        %1381 = vmatprep.subr.bf16.mxu0 0
        %1382 = vmatpush1.bf16.msra.mxu0 0
        %1383 = vmatprep.subr.bf16.mxu0 0
        %1384 = vmatpush1.bf16.msra.mxu0 0
        %1385 = vmatprep.subr.bf16.mxu0 0
        %1386 = vmatpush1.bf16.msra.mxu0 0
        %1387 = vmatprep.subr.bf16.mxu0 0
        %1388 = vmatpush1.bf16.msra.mxu0 0
        %1389 = vmatprep.subr.bf16.mxu0 0
        %1390 = vmatpush1.bf16.msra.mxu0 0
        %1391 = vmatprep.subr.bf16.mxu0 0
        %1392 = vmatpush1.bf16.msra.mxu0 0
        %1393 = vmatprep.subr.bf16.mxu0 0
        %1394 = vmatpush1.bf16.msra.mxu0 0
        %1395 = vmatprep.subr.bf16.mxu0 0
        %1396 = vmatpush1.bf16.msra.mxu0 0
        %1397 = vmatprep.subr.bf16.mxu0 0
        %1398 = vmatpush1.bf16.msra.mxu0 0
        %1399 = vmatprep.subr.bf16.mxu0 0
        %1400 = vmatpush1.bf16.msra.mxu0 0
        %1401 = vmatprep.subr.bf16.mxu0 0
        %1402 = vmatpush1.bf16.msra.mxu0 0
        %1403 = vmatprep.subr.bf16.mxu0 0
        %1404 = vmatpush1.bf16.msra.mxu0 0
        %1405 = vmatprep.subr.bf16.mxu0 0
        %1406 = vmatpush1.bf16.msra.mxu0 0
        %1407 = vmatprep.mubr.bf16.mxu0 0
        %1408 = vmatmul.mubr.bf16.gmra.mrb[0].mxu0 %v1370
        %v1409 = vpop.f32.mrb[0].mxu0
        %v1410 = vadd.f32 0.0, %v1409
        %v1411 = vpop.f32.mrb[0].mxu0
        %v1412 = vpop.f32.mrb[0].mxu0
        %v1413 = vpop.f32.mrb[0].mxu0
        %1414 = vdwg.mxu0
        %v1415 = vadd.f32 %v1365, %v1410
        %s1416 = scalar_lea.vmem %s635, 200 [#allocation2]
        %v1417 = vld [vmem:[%s1416] sm:$0xf]
        %v1418 = vld [vmem:[%s902] sm:$0x3]
        %v1420 = vsel %vm689, %v1417, 0
        %v1423 = vand.u32 %v1418, %v696
        %1425 = vmatprep.subr.bf16.mxu0 0
        %1426 = vmatpush1.bf16.msra.mxu0 %v1423
        %1427 = vmatprep.subr.bf16.mxu0 0
        %1428 = vmatpush1.bf16.msra.mxu0 0
        %1429 = vmatprep.subr.bf16.mxu0 0
        %1430 = vmatpush1.bf16.msra.mxu0 0
        %1431 = vmatprep.subr.bf16.mxu0 0
        %1432 = vmatpush1.bf16.msra.mxu0 0
        %1433 = vmatprep.subr.bf16.mxu0 0
        %1434 = vmatpush1.bf16.msra.mxu0 0
        %1435 = vmatprep.subr.bf16.mxu0 0
        %1436 = vmatpush1.bf16.msra.mxu0 0
        %1437 = vmatprep.subr.bf16.mxu0 0
        %1438 = vmatpush1.bf16.msra.mxu0 0
        %1439 = vmatprep.subr.bf16.mxu0 0
        %1440 = vmatpush1.bf16.msra.mxu0 0
        %1441 = vmatprep.subr.bf16.mxu0 0
        %1442 = vmatpush1.bf16.msra.mxu0 0
        %1443 = vmatprep.subr.bf16.mxu0 0
        %1444 = vmatpush1.bf16.msra.mxu0 0
        %1445 = vmatprep.subr.bf16.mxu0 0
        %1446 = vmatpush1.bf16.msra.mxu0 0
        %1447 = vmatprep.subr.bf16.mxu0 0
        %1448 = vmatpush1.bf16.msra.mxu0 0
        %1449 = vmatprep.subr.bf16.mxu0 0
        %1450 = vmatpush1.bf16.msra.mxu0 0
        %1451 = vmatprep.subr.bf16.mxu0 0
        %1452 = vmatpush1.bf16.msra.mxu0 0
        %1453 = vmatprep.subr.bf16.mxu0 0
        %1454 = vmatpush1.bf16.msra.mxu0 0
        %1455 = vmatprep.subr.bf16.mxu0 0
        %1456 = vmatpush1.bf16.msra.mxu0 0
        %1457 = vmatprep.mubr.bf16.mxu0 0
        %1458 = vmatmul.mubr.bf16.gmra.mrb[0].mxu0 %v1420
        %v1459 = vpop.f32.mrb[0].mxu0
        %v1460 = vadd.f32 0.0, %v1459
        %v1461 = vpop.f32.mrb[0].mxu0
        %v1462 = vpop.f32.mrb[0].mxu0
        %v1463 = vpop.f32.mrb[0].mxu0
        %1464 = vdwg.mxu0
        %v1465 = vadd.f32 %v1415, %v1460
        %v1466 = vld [vmem:[%s1366] sm:$0xf]
        %v1467 = vld [vmem:[%s1366 + $0x4] sm:$0x1]
        %v1468 = vld [vmem:[%s953] sm:$0x3]
        %v1471 = vunpack.c.l.b16 %v1466
        %v1472 = vunpack.c.l.b16 %v1467
        %v1473 = vpack.c.b16 %v1472, %v1471
        %v1475 = vshrl.u32 %v1473, 16
        %v1477 = vshll.u32 %v1473, 16
        %v1479 = vrot.slane %v1477, 1
        %v1480 = vor.u32 %v1475, %v1479
        %v1482 = vsel %vm689, %v1480, 0
        %v1485 = vand.u32 %v1468, %v696
        %1487 = vmatprep.subr.bf16.mxu0 0
        %1488 = vmatpush1.bf16.msra.mxu0 %v1485
        %1489 = vmatprep.subr.bf16.mxu0 0
        %1490 = vmatpush1.bf16.msra.mxu0 0
        %1491 = vmatprep.subr.bf16.mxu0 0
        %1492 = vmatpush1.bf16.msra.mxu0 0
        %1493 = vmatprep.subr.bf16.mxu0 0
        %1494 = vmatpush1.bf16.msra.mxu0 0
        %1495 = vmatprep.subr.bf16.mxu0 0
        %1496 = vmatpush1.bf16.msra.mxu0 0
        %1497 = vmatprep.subr.bf16.mxu0 0
        %1498 = vmatpush1.bf16.msra.mxu0 0
        %1499 = vmatprep.subr.bf16.mxu0 0
        %1500 = vmatpush1.bf16.msra.mxu0 0
        %1501 = vmatprep.subr.bf16.mxu0 0
        %1502 = vmatpush1.bf16.msra.mxu0 0
        %1503 = vmatprep.subr.bf16.mxu0 0
        %1504 = vmatpush1.bf16.msra.mxu0 0
        %1505 = vmatprep.subr.bf16.mxu0 0
        %1506 = vmatpush1.bf16.msra.mxu0 0
        %1507 = vmatprep.subr.bf16.mxu0 0
        %1508 = vmatpush1.bf16.msra.mxu0 0
        %1509 = vmatprep.subr.bf16.mxu0 0
        %1510 = vmatpush1.bf16.msra.mxu0 0
        %1511 = vmatprep.subr.bf16.mxu0 0
        %1512 = vmatpush1.bf16.msra.mxu0 0
        %1513 = vmatprep.subr.bf16.mxu0 0
        %1514 = vmatpush1.bf16.msra.mxu0 0
        %1515 = vmatprep.subr.bf16.mxu0 0
        %1516 = vmatpush1.bf16.msra.mxu0 0
        %1517 = vmatprep.subr.bf16.mxu0 0
        %1518 = vmatpush1.bf16.msra.mxu0 0
        %1519 = vmatprep.mubr.bf16.mxu0 0
        %1520 = vmatmul.mubr.bf16.gmra.mrb[0].mxu0 %v1482
        %v1521 = vpop.f32.mrb[0].mxu0
        %v1522 = vadd.f32 0.0, %v1521
        %v1523 = vpop.f32.mrb[0].mxu0
        %v1524 = vpop.f32.mrb[0].mxu0
        %v1525 = vpop.f32.mrb[0].mxu0
        %1526 = vdwg.mxu0
        %v1527 = vadd.f32 %v1465, %v1522
        %s1528 = scalar_lea.vmem %s635, 264 [#allocation2]
        %v1529 = vld [vmem:[%s1528] sm:$0xf]
        %v1530 = vld [vmem:[%s1016] sm:$0x3]
        %v1532 = vsel %vm689, %v1529, 0
        %v1535 = vand.u32 %v1530, %v696
        %1537 = vmatprep.subr.bf16.mxu0 0
        %1538 = vmatpush1.bf16.msra.mxu0 %v1535
        %1539 = vmatprep.subr.bf16.mxu0 0
        %1540 = vmatpush1.bf16.msra.mxu0 0
        %1541 = vmatprep.subr.bf16.mxu0 0
        %1542 = vmatpush1.bf16.msra.mxu0 0
        %1543 = vmatprep.subr.bf16.mxu0 0
        %1544 = vmatpush1.bf16.msra.mxu0 0
        %1545 = vmatprep.subr.bf16.mxu0 0
        %1546 = vmatpush1.bf16.msra.mxu0 0
        %1547 = vmatprep.subr.bf16.mxu0 0
        %1548 = vmatpush1.bf16.msra.mxu0 0
        %1549 = vmatprep.subr.bf16.mxu0 0
        %1550 = vmatpush1.bf16.msra.mxu0 0
        %1551 = vmatprep.subr.bf16.mxu0 0
        %1552 = vmatpush1.bf16.msra.mxu0 0
        %1553 = vmatprep.subr.bf16.mxu0 0
        %1554 = vmatpush1.bf16.msra.mxu0 0
        %1555 = vmatprep.subr.bf16.mxu0 0
        %1556 = vmatpush1.bf16.msra.mxu0 0
        %1557 = vmatprep.subr.bf16.mxu0 0
        %1558 = vmatpush1.bf16.msra.mxu0 0
        %1559 = vmatprep.subr.bf16.mxu0 0
        %1560 = vmatpush1.bf16.msra.mxu0 0
        %1561 = vmatprep.subr.bf16.mxu0 0
        %1562 = vmatpush1.bf16.msra.mxu0 0
        %1563 = vmatprep.subr.bf16.mxu0 0
        %1564 = vmatpush1.bf16.msra.mxu0 0
        %1565 = vmatprep.subr.bf16.mxu0 0
        %1566 = vmatpush1.bf16.msra.mxu0 0
        %1567 = vmatprep.subr.bf16.mxu0 0
        %1568 = vmatpush1.bf16.msra.mxu0 0
        %1569 = vmatprep.mubr.bf16.mxu0 0
        %1570 = vmatmul.mubr.bf16.gmra.mrb[0].mxu0 %v1532
        %v1571 = vpop.f32.mrb[0].mxu0
        %v1572 = vadd.f32 0.0, %v1571
        %v1573 = vpop.f32.mrb[0].mxu0
        %v1574 = vpop.f32.mrb[0].mxu0
        %v1575 = vpop.f32.mrb[0].mxu0
        %1576 = vdwg.mxu0
        %v1577 = vadd.f32 %v1527, %v1572
        %s1578 = scalar_lea.vmem %s635, 328 [#allocation2]
        %v1579 = vld [vmem:[%s1578] sm:$0xf]
        %v1580 = vld [vmem:[%s1067] sm:$0x3]
        %v1582 = vsel %vm689, %v1579, 0
        %v1585 = vand.u32 %v1580, %v696
        %1587 = vmatprep.subr.bf16.mxu0 0
        %1588 = vmatpush1.bf16.msra.mxu0 %v1585
        %1589 = vmatprep.subr.bf16.mxu0 0
        %1590 = vmatpush1.bf16.msra.mxu0 0
        %1591 = vmatprep.subr.bf16.mxu0 0
        %1592 = vmatpush1.bf16.msra.mxu0 0
        %1593 = vmatprep.subr.bf16.mxu0 0
        %1594 = vmatpush1.bf16.msra.mxu0 0
        %1595 = vmatprep.subr.bf16.mxu0 0
        %1596 = vmatpush1.bf16.msra.mxu0 0
        %1597 = vmatprep.subr.bf16.mxu0 0
        %1598 = vmatpush1.bf16.msra.mxu0 0
        %1599 = vmatprep.subr.bf16.mxu0 0
        %1600 = vmatpush1.bf16.msra.mxu0 0
        %1601 = vmatprep.subr.bf16.mxu0 0
        %1602 = vmatpush1.bf16.msra.mxu0 0
        %1603 = vmatprep.subr.bf16.mxu0 0
        %1604 = vmatpush1.bf16.msra.mxu0 0
        %1605 = vmatprep.subr.bf16.mxu0 0
        %1606 = vmatpush1.bf16.msra.mxu0 0
        %1607 = vmatprep.subr.bf16.mxu0 0
        %1608 = vmatpush1.bf16.msra.mxu0 0
        %1609 = vmatprep.subr.bf16.mxu0 0
        %1610 = vmatpush1.bf16.msra.mxu0 0
        %1611 = vmatprep.subr.bf16.mxu0 0
        %1612 = vmatpush1.bf16.msra.mxu0 0
        %1613 = vmatprep.subr.bf16.mxu0 0
        %1614 = vmatpush1.bf16.msra.mxu0 0
        %1615 = vmatprep.subr.bf16.mxu0 0
        %1616 = vmatpush1.bf16.msra.mxu0 0
        %1617 = vmatprep.subr.bf16.mxu0 0
        %1618 = vmatpush1.bf16.msra.mxu0 0
        %1619 = vmatprep.mubr.bf16.mxu0 0
        %1620 = vmatmul.mubr.bf16.gmra.mrb[0].mxu0 %v1582
        %v1621 = vpop.f32.mrb[0].mxu0
        %v1622 = vadd.f32 0.0, %v1621
        %v1623 = vpop.f32.mrb[0].mxu0
        %v1624 = vpop.f32.mrb[0].mxu0
        %v1625 = vpop.f32.mrb[0].mxu0
        %1626 = vdwg.mxu0
        %v1627 = vadd.f32 %v1577, %v1622
        %v1628 = vld [vmem:[%s1528] sm:$0xf]
        %v1629 = vld [vmem:[%s1528 + $0x4] sm:$0x1]
        %v1630 = vld [vmem:[%s1118] sm:$0x3]
        %v1633 = vunpack.c.l.b16 %v1628
        %v1634 = vunpack.c.l.b16 %v1629
        %v1635 = vpack.c.b16 %v1634, %v1633
        %v1637 = vshrl.u32 %v1635, 16
        %v1639 = vshll.u32 %v1635, 16
        %v1641 = vrot.slane %v1639, 1
        %v1642 = vor.u32 %v1637, %v1641
        %v1644 = vsel %vm689, %v1642, 0
        %v1647 = vand.u32 %v1630, %v696
        %1649 = vmatprep.subr.bf16.mxu0 0
        %1650 = vmatpush1.bf16.msra.mxu0 %v1647
        %1651 = vmatprep.subr.bf16.mxu0 0
        %1652 = vmatpush1.bf16.msra.mxu0 0
        %1653 = vmatprep.subr.bf16.mxu0 0
        %1654 = vmatpush1.bf16.msra.mxu0 0
        %1655 = vmatprep.subr.bf16.mxu0 0
        %1656 = vmatpush1.bf16.msra.mxu0 0
        %1657 = vmatprep.subr.bf16.mxu0 0
        %1658 = vmatpush1.bf16.msra.mxu0 0
        %1659 = vmatprep.subr.bf16.mxu0 0
        %1660 = vmatpush1.bf16.msra.mxu0 0
        %1661 = vmatprep.subr.bf16.mxu0 0
        %1662 = vmatpush1.bf16.msra.mxu0 0
        %1663 = vmatprep.subr.bf16.mxu0 0
        %1664 = vmatpush1.bf16.msra.mxu0 0
        %1665 = vmatprep.subr.bf16.mxu0 0
        %1666 = vmatpush1.bf16.msra.mxu0 0
        %1667 = vmatprep.subr.bf16.mxu0 0
        %1668 = vmatpush1.bf16.msra.mxu0 0
        %1669 = vmatprep.subr.bf16.mxu0 0
        %1670 = vmatpush1.bf16.msra.mxu0 0
        %1671 = vmatprep.subr.bf16.mxu0 0
        %1672 = vmatpush1.bf16.msra.mxu0 0
        %1673 = vmatprep.subr.bf16.mxu0 0
        %1674 = vmatpush1.bf16.msra.mxu0 0
        %1675 = vmatprep.subr.bf16.mxu0 0
        %1676 = vmatpush1.bf16.msra.mxu0 0
        %1677 = vmatprep.subr.bf16.mxu0 0
        %1678 = vmatpush1.bf16.msra.mxu0 0
        %1679 = vmatprep.subr.bf16.mxu0 0
        %1680 = vmatpush1.bf16.msra.mxu0 0
        %1681 = vmatprep.mubr.bf16.mxu0 0
        %1682 = vmatmul.mubr.bf16.gmra.mrb[0].mxu0 %v1644
        %v1683 = vpop.f32.mrb[0].mxu0
        %v1684 = vadd.f32 0.0, %v1683
        %v1685 = vpop.f32.mrb[0].mxu0
        %v1686 = vpop.f32.mrb[0].mxu0
        %v1687 = vpop.f32.mrb[0].mxu0
        %1688 = vdwg.mxu0
        %v1689 = vadd.f32 %v1627, %v1684
        %v1690 = vmul.f32 %v1689, %v1183
        %v1691 = vadd.f32 %v1690, %v1190
        %v1692 = vmin.f32 %v1691, 30.0
        %v1693 = vmul.f32 %v1692, 1.442695
        %v1694 = vpow.pop %v1693
        %v1695 = vadd.f32 %v1694, 2.0
        %v1696 = vmul.f32 %v1694, %v1695
        %v1697 = vadd.f32 %v1696, 2.0
        %v1698 = vrcp.pop %v1697
        %v1699 = vmul.f32 %v1698, 2.0
        %v1700 = vsub.f32 1.0, %v1699
        %v1701 = vmul.f32 %v1691, %v1700
        %v1702 = vpack.c.bf16 %v1701, %v1701
        %s1703 = scalar_lea.vmem %s667, 4 [#allocation3]
        %1704 = vst.msk [vmem:[%s1703] sm:$0xf] %vm1204, %v1702
        %s1705 = scalar_lea.vmem %s635, 16 [#allocation2]
        %v1706 = vld [vmem:[%s1705] sm:$0xf]
        %v1707 = vld [vmem:[%s672] sm:$0x3]
        %s1708 = scalar_lea.vmem %s635, 80 [#allocation2]
        %v1709 = vld [vmem:[%s1708] sm:$0xf]
        %v1710 = vld [vmem:[%s687] sm:$0x3]
        %v1712 = vsel %vm689, %v1709, 0
        %v1715 = vand.u32 %v1710, %v696
        %1717 = vmatprep.subr.bf16.mxu0 0
        %1718 = vmatpush1.bf16.msra.mxu0 %v1715
        %1719 = vmatprep.subr.bf16.mxu0 0
        %1720 = vmatpush1.bf16.msra.mxu0 0
        %1721 = vmatprep.subr.bf16.mxu0 0
        %1722 = vmatpush1.bf16.msra.mxu0 0
        %1723 = vmatprep.subr.bf16.mxu0 0
        %1724 = vmatpush1.bf16.msra.mxu0 0
        %1725 = vmatprep.subr.bf16.mxu0 0
        %1726 = vmatpush1.bf16.msra.mxu0 0
        %1727 = vmatprep.subr.bf16.mxu0 0
        %1728 = vmatpush1.bf16.msra.mxu0 0
        %1729 = vmatprep.subr.bf16.mxu0 0
        %1730 = vmatpush1.bf16.msra.mxu0 0
        %1731 = vmatprep.subr.bf16.mxu0 0
        %1732 = vmatpush1.bf16.msra.mxu0 0
        %1733 = vmatprep.subr.bf16.mxu0 0
        %1734 = vmatpush1.bf16.msra.mxu0 0
        %1735 = vmatprep.subr.bf16.mxu0 0
        %1736 = vmatpush1.bf16.msra.mxu0 0
        %1737 = vmatprep.subr.bf16.mxu0 0
        %1738 = vmatpush1.bf16.msra.mxu0 0
        %1739 = vmatprep.subr.bf16.mxu0 0
        %1740 = vmatpush1.bf16.msra.mxu0 0
        %1741 = vmatprep.subr.bf16.mxu0 0
        %1742 = vmatpush1.bf16.msra.mxu0 0
        %1743 = vmatprep.subr.bf16.mxu0 0
        %1744 = vmatpush1.bf16.msra.mxu0 0
        %1745 = vmatprep.subr.bf16.mxu0 0
        %1746 = vmatpush1.bf16.msra.mxu0 0
        %1747 = vmatprep.subr.bf16.mxu0 0
        %1748 = vmatpush1.bf16.msra.mxu0 0
        %1749 = vmatprep.mubr.bf16.mxu0 0
        %1750 = vmatmul.mubr.bf16.gmra.mrb[0].mxu0 %v1712
        %v1751 = vpop.f32.mrb[0].mxu0
        %v1752 = vadd.f32 0.0, %v1751
        %v1753 = vpop.f32.mrb[0].mxu0
        %v1754 = vpop.f32.mrb[0].mxu0
        %v1755 = vpop.f32.mrb[0].mxu0
        %1756 = vdwg.mxu0
        %v1758 = vsel %vm689, %v1706, 0
        %v1761 = vand.u32 %v1707, %v696
        %1763 = vmatprep.subr.bf16.mxu0 0
        %1764 = vmatpush1.bf16.msra.mxu0 %v1761
        %1765 = vmatprep.subr.bf16.mxu0 0
        %1766 = vmatpush1.bf16.msra.mxu0 0
        %1767 = vmatprep.subr.bf16.mxu0 0
        %1768 = vmatpush1.bf16.msra.mxu0 0
        %1769 = vmatprep.subr.bf16.mxu0 0
        %1770 = vmatpush1.bf16.msra.mxu0 0
        %1771 = vmatprep.subr.bf16.mxu0 0
        %1772 = vmatpush1.bf16.msra.mxu0 0
        %1773 = vmatprep.subr.bf16.mxu0 0
        %1774 = vmatpush1.bf16.msra.mxu0 0
        %1775 = vmatprep.subr.bf16.mxu0 0
        %1776 = vmatpush1.bf16.msra.mxu0 0
        %1777 = vmatprep.subr.bf16.mxu0 0
        %1778 = vmatpush1.bf16.msra.mxu0 0
        %1779 = vmatprep.subr.bf16.mxu0 0
        %1780 = vmatpush1.bf16.msra.mxu0 0
        %1781 = vmatprep.subr.bf16.mxu0 0
        %1782 = vmatpush1.bf16.msra.mxu0 0
        %1783 = vmatprep.subr.bf16.mxu0 0
        %1784 = vmatpush1.bf16.msra.mxu0 0
        %1785 = vmatprep.subr.bf16.mxu0 0
        %1786 = vmatpush1.bf16.msra.mxu0 0
        %1787 = vmatprep.subr.bf16.mxu0 0
        %1788 = vmatpush1.bf16.msra.mxu0 0
        %1789 = vmatprep.subr.bf16.mxu0 0
        %1790 = vmatpush1.bf16.msra.mxu0 0
        %1791 = vmatprep.subr.bf16.mxu0 0
        %1792 = vmatpush1.bf16.msra.mxu0 0
        %1793 = vmatprep.subr.bf16.mxu0 0
        %1794 = vmatpush1.bf16.msra.mxu0 0
        %1795 = vmatprep.mubr.bf16.mxu0 0
        %1796 = vmatmul.mubr.bf16.gmra.mrb[0].mxu0 %v1758
        %v1797 = vpop.f32.mrb[0].mxu0
        %v1798 = vadd.f32 %v1752, %v1797
        %v1799 = vpop.f32.mrb[0].mxu0
        %v1800 = vpop.f32.mrb[0].mxu0
        %v1801 = vpop.f32.mrb[0].mxu0
        %1802 = vdwg.mxu0
        %v1803 = vld [vmem:[%s1705] sm:$0xf]
        %v1804 = vld [vmem:[%s1705 + $0x4] sm:$0x1]
        %v1805 = vld [vmem:[%s788] sm:$0x3]
        %v1808 = vunpack.c.l.b16 %v1803
        %v1809 = vunpack.c.l.b16 %v1804
        %v1810 = vpack.c.b16 %v1809, %v1808
        %v1812 = vshrl.u32 %v1810, 16
        %v1814 = vshll.u32 %v1810, 16
        %v1816 = vrot.slane %v1814, 1
        %v1817 = vor.u32 %v1812, %v1816
        %v1819 = vsel %vm689, %v1817, 0
        %v1822 = vand.u32 %v1805, %v696
        %1824 = vmatprep.subr.bf16.mxu0 0
        %1825 = vmatpush1.bf16.msra.mxu0 %v1822
        %1826 = vmatprep.subr.bf16.mxu0 0
        %1827 = vmatpush1.bf16.msra.mxu0 0
        %1828 = vmatprep.subr.bf16.mxu0 0
        %1829 = vmatpush1.bf16.msra.mxu0 0
        %1830 = vmatprep.subr.bf16.mxu0 0
        %1831 = vmatpush1.bf16.msra.mxu0 0
        %1832 = vmatprep.subr.bf16.mxu0 0
        %1833 = vmatpush1.bf16.msra.mxu0 0
        %1834 = vmatprep.subr.bf16.mxu0 0
        %1835 = vmatpush1.bf16.msra.mxu0 0
        %1836 = vmatprep.subr.bf16.mxu0 0
        %1837 = vmatpush1.bf16.msra.mxu0 0
        %1838 = vmatprep.subr.bf16.mxu0 0
        %1839 = vmatpush1.bf16.msra.mxu0 0
        %1840 = vmatprep.subr.bf16.mxu0 0
        %1841 = vmatpush1.bf16.msra.mxu0 0
        %1842 = vmatprep.subr.bf16.mxu0 0
        %1843 = vmatpush1.bf16.msra.mxu0 0
        %1844 = vmatprep.subr.bf16.mxu0 0
        %1845 = vmatpush1.bf16.msra.mxu0 0
        %1846 = vmatprep.subr.bf16.mxu0 0
        %1847 = vmatpush1.bf16.msra.mxu0 0
        %1848 = vmatprep.subr.bf16.mxu0 0
        %1849 = vmatpush1.bf16.msra.mxu0 0
        %1850 = vmatprep.subr.bf16.mxu0 0
        %1851 = vmatpush1.bf16.msra.mxu0 0
        %1852 = vmatprep.subr.bf16.mxu0 0
        %1853 = vmatpush1.bf16.msra.mxu0 0
        %1854 = vmatprep.subr.bf16.mxu0 0
        %1855 = vmatpush1.bf16.msra.mxu0 0
        %1856 = vmatprep.mubr.bf16.mxu0 0
        %1857 = vmatmul.mubr.bf16.gmra.mrb[0].mxu0 %v1819
        %v1858 = vpop.f32.mrb[0].mxu0
        %v1859 = vadd.f32 0.0, %v1858
        %v1860 = vpop.f32.mrb[0].mxu0
        %v1861 = vpop.f32.mrb[0].mxu0
        %v1862 = vpop.f32.mrb[0].mxu0
        %1863 = vdwg.mxu0
        %v1864 = vadd.f32 %v1798, %v1859
        %s1865 = scalar_lea.vmem %s635, 144 [#allocation2]
        %v1866 = vld [vmem:[%s1865] sm:$0xf]
        %v1867 = vld [vmem:[%s851] sm:$0x3]
        %v1869 = vsel %vm689, %v1866, 0
        %v1872 = vand.u32 %v1867, %v696
        %1874 = vmatprep.subr.bf16.mxu0 0
        %1875 = vmatpush1.bf16.msra.mxu0 %v1872
        %1876 = vmatprep.subr.bf16.mxu0 0
        %1877 = vmatpush1.bf16.msra.mxu0 0
        %1878 = vmatprep.subr.bf16.mxu0 0
        %1879 = vmatpush1.bf16.msra.mxu0 0
        %1880 = vmatprep.subr.bf16.mxu0 0
        %1881 = vmatpush1.bf16.msra.mxu0 0
        %1882 = vmatprep.subr.bf16.mxu0 0
        %1883 = vmatpush1.bf16.msra.mxu0 0
        %1884 = vmatprep.subr.bf16.mxu0 0
        %1885 = vmatpush1.bf16.msra.mxu0 0
        %1886 = vmatprep.subr.bf16.mxu0 0
        %1887 = vmatpush1.bf16.msra.mxu0 0
        %1888 = vmatprep.subr.bf16.mxu0 0
        %1889 = vmatpush1.bf16.msra.mxu0 0
        %1890 = vmatprep.subr.bf16.mxu0 0
        %1891 = vmatpush1.bf16.msra.mxu0 0
        %1892 = vmatprep.subr.bf16.mxu0 0
        %1893 = vmatpush1.bf16.msra.mxu0 0
        %1894 = vmatprep.subr.bf16.mxu0 0
        %1895 = vmatpush1.bf16.msra.mxu0 0
        %1896 = vmatprep.subr.bf16.mxu0 0
        %1897 = vmatpush1.bf16.msra.mxu0 0
        %1898 = vmatprep.subr.bf16.mxu0 0
        %1899 = vmatpush1.bf16.msra.mxu0 0
        %1900 = vmatprep.subr.bf16.mxu0 0
        %1901 = vmatpush1.bf16.msra.mxu0 0
        %1902 = vmatprep.subr.bf16.mxu0 0
        %1903 = vmatpush1.bf16.msra.mxu0 0
        %1904 = vmatprep.subr.bf16.mxu0 0
        %1905 = vmatpush1.bf16.msra.mxu0 0
        %1906 = vmatprep.mubr.bf16.mxu0 0
        %1907 = vmatmul.mubr.bf16.gmra.mrb[0].mxu0 %v1869
        %v1908 = vpop.f32.mrb[0].mxu0
        %v1909 = vadd.f32 0.0, %v1908
        %v1910 = vpop.f32.mrb[0].mxu0
        %v1911 = vpop.f32.mrb[0].mxu0
        %v1912 = vpop.f32.mrb[0].mxu0
        %1913 = vdwg.mxu0
        %v1914 = vadd.f32 %v1864, %v1909
        %s1915 = scalar_lea.vmem %s635, 208 [#allocation2]
        %v1916 = vld [vmem:[%s1915] sm:$0xf]
        %v1917 = vld [vmem:[%s902] sm:$0x3]
        %v1919 = vsel %vm689, %v1916, 0
        %v1922 = vand.u32 %v1917, %v696
        %1924 = vmatprep.subr.bf16.mxu0 0
        %1925 = vmatpush1.bf16.msra.mxu0 %v1922
        %1926 = vmatprep.subr.bf16.mxu0 0
        %1927 = vmatpush1.bf16.msra.mxu0 0
        %1928 = vmatprep.subr.bf16.mxu0 0
        %1929 = vmatpush1.bf16.msra.mxu0 0
        %1930 = vmatprep.subr.bf16.mxu0 0
        %1931 = vmatpush1.bf16.msra.mxu0 0
        %1932 = vmatprep.subr.bf16.mxu0 0
        %1933 = vmatpush1.bf16.msra.mxu0 0
        %1934 = vmatprep.subr.bf16.mxu0 0
        %1935 = vmatpush1.bf16.msra.mxu0 0
        %1936 = vmatprep.subr.bf16.mxu0 0
        %1937 = vmatpush1.bf16.msra.mxu0 0
        %1938 = vmatprep.subr.bf16.mxu0 0
        %1939 = vmatpush1.bf16.msra.mxu0 0
        %1940 = vmatprep.subr.bf16.mxu0 0
        %1941 = vmatpush1.bf16.msra.mxu0 0
        %1942 = vmatprep.subr.bf16.mxu0 0
        %1943 = vmatpush1.bf16.msra.mxu0 0
        %1944 = vmatprep.subr.bf16.mxu0 0
        %1945 = vmatpush1.bf16.msra.mxu0 0
        %1946 = vmatprep.subr.bf16.mxu0 0
        %1947 = vmatpush1.bf16.msra.mxu0 0
        %1948 = vmatprep.subr.bf16.mxu0 0
        %1949 = vmatpush1.bf16.msra.mxu0 0
        %1950 = vmatprep.subr.bf16.mxu0 0
        %1951 = vmatpush1.bf16.msra.mxu0 0
        %1952 = vmatprep.subr.bf16.mxu0 0
        %1953 = vmatpush1.bf16.msra.mxu0 0
        %1954 = vmatprep.subr.bf16.mxu0 0
        %1955 = vmatpush1.bf16.msra.mxu0 0
        %1956 = vmatprep.mubr.bf16.mxu0 0
        %1957 = vmatmul.mubr.bf16.gmra.mrb[0].mxu0 %v1919
        %v1958 = vpop.f32.mrb[0].mxu0
        %v1959 = vadd.f32 0.0, %v1958
        %v1960 = vpop.f32.mrb[0].mxu0
        %v1961 = vpop.f32.mrb[0].mxu0
        %v1962 = vpop.f32.mrb[0].mxu0
        %1963 = vdwg.mxu0
        %v1964 = vadd.f32 %v1914, %v1959
        %v1965 = vld [vmem:[%s1865] sm:$0xf]
        %v1966 = vld [vmem:[%s1865 + $0x4] sm:$0x1]
        %v1967 = vld [vmem:[%s953] sm:$0x3]
        %v1970 = vunpack.c.l.b16 %v1965
        %v1971 = vunpack.c.l.b16 %v1966
        %v1972 = vpack.c.b16 %v1971, %v1970
        %v1974 = vshrl.u32 %v1972, 16
        %v1976 = vshll.u32 %v1972, 16
        %v1978 = vrot.slane %v1976, 1
        %v1979 = vor.u32 %v1974, %v1978
        %v1981 = vsel %vm689, %v1979, 0
        %v1984 = vand.u32 %v1967, %v696
        %1986 = vmatprep.subr.bf16.mxu0 0
        %1987 = vmatpush1.bf16.msra.mxu0 %v1984
        %1988 = vmatprep.subr.bf16.mxu0 0
        %1989 = vmatpush1.bf16.msra.mxu0 0
        %1990 = vmatprep.subr.bf16.mxu0 0
        %1991 = vmatpush1.bf16.msra.mxu0 0
        %1992 = vmatprep.subr.bf16.mxu0 0
        %1993 = vmatpush1.bf16.msra.mxu0 0
        %1994 = vmatprep.subr.bf16.mxu0 0
        %1995 = vmatpush1.bf16.msra.mxu0 0
        %1996 = vmatprep.subr.bf16.mxu0 0
        %1997 = vmatpush1.bf16.msra.mxu0 0
        %1998 = vmatprep.subr.bf16.mxu0 0
        %1999 = vmatpush1.bf16.msra.mxu0 0
        %2000 = vmatprep.subr.bf16.mxu0 0
        %2001 = vmatpush1.bf16.msra.mxu0 0
        %2002 = vmatprep.subr.bf16.mxu0 0
        %2003 = vmatpush1.bf16.msra.mxu0 0
        %2004 = vmatprep.subr.bf16.mxu0 0
        %2005 = vmatpush1.bf16.msra.mxu0 0
        %2006 = vmatprep.subr.bf16.mxu0 0
        %2007 = vmatpush1.bf16.msra.mxu0 0
        %2008 = vmatprep.subr.bf16.mxu0 0
        %2009 = vmatpush1.bf16.msra.mxu0 0
        %2010 = vmatprep.subr.bf16.mxu0 0
        %2011 = vmatpush1.bf16.msra.mxu0 0
        %2012 = vmatprep.subr.bf16.mxu0 0
        %2013 = vmatpush1.bf16.msra.mxu0 0
        %2014 = vmatprep.subr.bf16.mxu0 0
        %2015 = vmatpush1.bf16.msra.mxu0 0
        %2016 = vmatprep.subr.bf16.mxu0 0
        %2017 = vmatpush1.bf16.msra.mxu0 0
        %2018 = vmatprep.mubr.bf16.mxu0 0
        %2019 = vmatmul.mubr.bf16.gmra.mrb[0].mxu0 %v1981
        %v2020 = vpop.f32.mrb[0].mxu0
        %v2021 = vadd.f32 0.0, %v2020
        %v2022 = vpop.f32.mrb[0].mxu0
        %v2023 = vpop.f32.mrb[0].mxu0
        %v2024 = vpop.f32.mrb[0].mxu0
        %2025 = vdwg.mxu0
        %v2026 = vadd.f32 %v1964, %v2021
        %s2027 = scalar_lea.vmem %s635, 272 [#allocation2]
        %v2028 = vld [vmem:[%s2027] sm:$0xf]
        %v2029 = vld [vmem:[%s1016] sm:$0x3]
        %v2031 = vsel %vm689, %v2028, 0
        %v2034 = vand.u32 %v2029, %v696
        %2036 = vmatprep.subr.bf16.mxu0 0
        %2037 = vmatpush1.bf16.msra.mxu0 %v2034
        %2038 = vmatprep.subr.bf16.mxu0 0
        %2039 = vmatpush1.bf16.msra.mxu0 0
        %2040 = vmatprep.subr.bf16.mxu0 0
        %2041 = vmatpush1.bf16.msra.mxu0 0
        %2042 = vmatprep.subr.bf16.mxu0 0
        %2043 = vmatpush1.bf16.msra.mxu0 0
        %2044 = vmatprep.subr.bf16.mxu0 0
        %2045 = vmatpush1.bf16.msra.mxu0 0
        %2046 = vmatprep.subr.bf16.mxu0 0
        %2047 = vmatpush1.bf16.msra.mxu0 0
        %2048 = vmatprep.subr.bf16.mxu0 0
        %2049 = vmatpush1.bf16.msra.mxu0 0
        %2050 = vmatprep.subr.bf16.mxu0 0
        %2051 = vmatpush1.bf16.msra.mxu0 0
        %2052 = vmatprep.subr.bf16.mxu0 0
        %2053 = vmatpush1.bf16.msra.mxu0 0
        %2054 = vmatprep.subr.bf16.mxu0 0
        %2055 = vmatpush1.bf16.msra.mxu0 0
        %2056 = vmatprep.subr.bf16.mxu0 0
        %2057 = vmatpush1.bf16.msra.mxu0 0
        %2058 = vmatprep.subr.bf16.mxu0 0
        %2059 = vmatpush1.bf16.msra.mxu0 0
        %2060 = vmatprep.subr.bf16.mxu0 0
        %2061 = vmatpush1.bf16.msra.mxu0 0
        %2062 = vmatprep.subr.bf16.mxu0 0
        %2063 = vmatpush1.bf16.msra.mxu0 0
        %2064 = vmatprep.subr.bf16.mxu0 0
        %2065 = vmatpush1.bf16.msra.mxu0 0
        %2066 = vmatprep.subr.bf16.mxu0 0
        %2067 = vmatpush1.bf16.msra.mxu0 0
        %2068 = vmatprep.mubr.bf16.mxu0 0
        %2069 = vmatmul.mubr.bf16.gmra.mrb[0].mxu0 %v2031
        %v2070 = vpop.f32.mrb[0].mxu0
        %v2071 = vadd.f32 0.0, %v2070
        %v2072 = vpop.f32.mrb[0].mxu0
        %v2073 = vpop.f32.mrb[0].mxu0
        %v2074 = vpop.f32.mrb[0].mxu0
        %2075 = vdwg.mxu0
        %v2076 = vadd.f32 %v2026, %v2071
        %s2077 = scalar_lea.vmem %s635, 336 [#allocation2]
        %v2078 = vld [vmem:[%s2077] sm:$0xf]
        %v2079 = vld [vmem:[%s1067] sm:$0x3]
        %v2081 = vsel %vm689, %v2078, 0
        %v2084 = vand.u32 %v2079, %v696
        %2086 = vmatprep.subr.bf16.mxu0 0
        %2087 = vmatpush1.bf16.msra.mxu0 %v2084
        %2088 = vmatprep.subr.bf16.mxu0 0
        %2089 = vmatpush1.bf16.msra.mxu0 0
        %2090 = vmatprep.subr.bf16.mxu0 0
        %2091 = vmatpush1.bf16.msra.mxu0 0
        %2092 = vmatprep.subr.bf16.mxu0 0
        %2093 = vmatpush1.bf16.msra.mxu0 0
        %2094 = vmatprep.subr.bf16.mxu0 0
        %2095 = vmatpush1.bf16.msra.mxu0 0
        %2096 = vmatprep.subr.bf16.mxu0 0
        %2097 = vmatpush1.bf16.msra.mxu0 0
        %2098 = vmatprep.subr.bf16.mxu0 0
        %2099 = vmatpush1.bf16.msra.mxu0 0
        %2100 = vmatprep.subr.bf16.mxu0 0
        %2101 = vmatpush1.bf16.msra.mxu0 0
        %2102 = vmatprep.subr.bf16.mxu0 0
        %2103 = vmatpush1.bf16.msra.mxu0 0
        %2104 = vmatprep.subr.bf16.mxu0 0
        %2105 = vmatpush1.bf16.msra.mxu0 0
        %2106 = vmatprep.subr.bf16.mxu0 0
        %2107 = vmatpush1.bf16.msra.mxu0 0
        %2108 = vmatprep.subr.bf16.mxu0 0
        %2109 = vmatpush1.bf16.msra.mxu0 0
        %2110 = vmatprep.subr.bf16.mxu0 0
        %2111 = vmatpush1.bf16.msra.mxu0 0
        %2112 = vmatprep.subr.bf16.mxu0 0
        %2113 = vmatpush1.bf16.msra.mxu0 0
        %2114 = vmatprep.subr.bf16.mxu0 0
        %2115 = vmatpush1.bf16.msra.mxu0 0
        %2116 = vmatprep.subr.bf16.mxu0 0
        %2117 = vmatpush1.bf16.msra.mxu0 0
        %2118 = vmatprep.mubr.bf16.mxu0 0
        %2119 = vmatmul.mubr.bf16.gmra.mrb[0].mxu0 %v2081
        %v2120 = vpop.f32.mrb[0].mxu0
        %v2121 = vadd.f32 0.0, %v2120
        %v2122 = vpop.f32.mrb[0].mxu0
        %v2123 = vpop.f32.mrb[0].mxu0
        %v2124 = vpop.f32.mrb[0].mxu0
        %2125 = vdwg.mxu0
        %v2126 = vadd.f32 %v2076, %v2121
        %v2127 = vld [vmem:[%s2027] sm:$0xf]
        %v2128 = vld [vmem:[%s2027 + $0x4] sm:$0x1]
        %v2129 = vld [vmem:[%s1118] sm:$0x3]
        %v2132 = vunpack.c.l.b16 %v2127
        %v2133 = vunpack.c.l.b16 %v2128
        %v2134 = vpack.c.b16 %v2133, %v2132
        %v2136 = vshrl.u32 %v2134, 16
        %v2138 = vshll.u32 %v2134, 16
        %v2140 = vrot.slane %v2138, 1
        %v2141 = vor.u32 %v2136, %v2140
        %v2143 = vsel %vm689, %v2141, 0
        %v2146 = vand.u32 %v2129, %v696
        %2148 = vmatprep.subr.bf16.mxu0 0
        %2149 = vmatpush1.bf16.msra.mxu0 %v2146
        %2150 = vmatprep.subr.bf16.mxu0 0
        %2151 = vmatpush1.bf16.msra.mxu0 0
        %2152 = vmatprep.subr.bf16.mxu0 0
        %2153 = vmatpush1.bf16.msra.mxu0 0
        %2154 = vmatprep.subr.bf16.mxu0 0
        %2155 = vmatpush1.bf16.msra.mxu0 0
        %2156 = vmatprep.subr.bf16.mxu0 0
        %2157 = vmatpush1.bf16.msra.mxu0 0
        %2158 = vmatprep.subr.bf16.mxu0 0
        %2159 = vmatpush1.bf16.msra.mxu0 0
        %2160 = vmatprep.subr.bf16.mxu0 0
        %2161 = vmatpush1.bf16.msra.mxu0 0
        %2162 = vmatprep.subr.bf16.mxu0 0
        %2163 = vmatpush1.bf16.msra.mxu0 0
        %2164 = vmatprep.subr.bf16.mxu0 0
        %2165 = vmatpush1.bf16.msra.mxu0 0
        %2166 = vmatprep.subr.bf16.mxu0 0
        %2167 = vmatpush1.bf16.msra.mxu0 0
        %2168 = vmatprep.subr.bf16.mxu0 0
        %2169 = vmatpush1.bf16.msra.mxu0 0
        %2170 = vmatprep.subr.bf16.mxu0 0
        %2171 = vmatpush1.bf16.msra.mxu0 0
        %2172 = vmatprep.subr.bf16.mxu0 0
        %2173 = vmatpush1.bf16.msra.mxu0 0
        %2174 = vmatprep.subr.bf16.mxu0 0
        %2175 = vmatpush1.bf16.msra.mxu0 0
        %2176 = vmatprep.subr.bf16.mxu0 0
        %2177 = vmatpush1.bf16.msra.mxu0 0
        %2178 = vmatprep.subr.bf16.mxu0 0
        %2179 = vmatpush1.bf16.msra.mxu0 0
        %2180 = vmatprep.mubr.bf16.mxu0 0
        %2181 = vmatmul.mubr.bf16.gmra.mrb[0].mxu0 %v2143
        %v2182 = vpop.f32.mrb[0].mxu0
        %v2183 = vadd.f32 0.0, %v2182
        %v2184 = vpop.f32.mrb[0].mxu0
        %v2185 = vpop.f32.mrb[0].mxu0
        %v2186 = vpop.f32.mrb[0].mxu0
        %2187 = vdwg.mxu0
        %v2188 = vadd.f32 %v2126, %v2183
        %v2189 = vmul.f32 %v2188, %v1183
        %v2190 = vadd.f32 %v2189, %v1190
        %v2191 = vmin.f32 %v2190, 30.0
        %v2192 = vmul.f32 %v2191, 1.442695
        %v2193 = vpow.pop %v2192
        %v2194 = vadd.f32 %v2193, 2.0
        %v2195 = vmul.f32 %v2193, %v2194
        %v2196 = vadd.f32 %v2195, 2.0
        %v2197 = vrcp.pop %v2196
        %v2198 = vmul.f32 %v2197, 2.0
        %v2199 = vsub.f32 1.0, %v2198
        %v2200 = vmul.f32 %v2190, %v2199
        %v2201 = vpack.c.bf16 %v2200, %v2200
        %s2202 = scalar_lea.vmem %s667, 8 [#allocation3]
        %2203 = vst.msk [vmem:[%s2202] sm:$0xf] %vm1204, %v2201
        %s2204 = scalar_lea.vmem %s635, 24 [#allocation2]
        %v2205 = vld [vmem:[%s2204] sm:$0xf]
        %v2206 = vld [vmem:[%s672] sm:$0x3]
        %s2207 = scalar_lea.vmem %s635, 88 [#allocation2]
        %v2208 = vld [vmem:[%s2207] sm:$0xf]
        %v2209 = vld [vmem:[%s687] sm:$0x3]
        %v2211 = vsel %vm689, %v2208, 0
        %v2214 = vand.u32 %v2209, %v696
        %2216 = vmatprep.subr.bf16.mxu0 0
        %2217 = vmatpush1.bf16.msra.mxu0 %v2214
        %2218 = vmatprep.subr.bf16.mxu0 0
        %2219 = vmatpush1.bf16.msra.mxu0 0
        %2220 = vmatprep.subr.bf16.mxu0 0
        %2221 = vmatpush1.bf16.msra.mxu0 0
        %2222 = vmatprep.subr.bf16.mxu0 0
        %2223 = vmatpush1.bf16.msra.mxu0 0
        %2224 = vmatprep.subr.bf16.mxu0 0
        %2225 = vmatpush1.bf16.msra.mxu0 0
        %2226 = vmatprep.subr.bf16.mxu0 0
        %2227 = vmatpush1.bf16.msra.mxu0 0
        %2228 = vmatprep.subr.bf16.mxu0 0
        %2229 = vmatpush1.bf16.msra.mxu0 0
        %2230 = vmatprep.subr.bf16.mxu0 0
        %2231 = vmatpush1.bf16.msra.mxu0 0
        %2232 = vmatprep.subr.bf16.mxu0 0
        %2233 = vmatpush1.bf16.msra.mxu0 0
        %2234 = vmatprep.subr.bf16.mxu0 0
        %2235 = vmatpush1.bf16.msra.mxu0 0
        %2236 = vmatprep.subr.bf16.mxu0 0
        %2237 = vmatpush1.bf16.msra.mxu0 0
        %2238 = vmatprep.subr.bf16.mxu0 0
        %2239 = vmatpush1.bf16.msra.mxu0 0
        %2240 = vmatprep.subr.bf16.mxu0 0
        %2241 = vmatpush1.bf16.msra.mxu0 0
        %2242 = vmatprep.subr.bf16.mxu0 0
        %2243 = vmatpush1.bf16.msra.mxu0 0
        %2244 = vmatprep.subr.bf16.mxu0 0
        %2245 = vmatpush1.bf16.msra.mxu0 0
        %2246 = vmatprep.subr.bf16.mxu0 0
        %2247 = vmatpush1.bf16.msra.mxu0 0
        %2248 = vmatprep.mubr.bf16.mxu0 0
        %2249 = vmatmul.mubr.bf16.gmra.mrb[0].mxu0 %v2211
        %v2250 = vpop.f32.mrb[0].mxu0
        %v2251 = vadd.f32 0.0, %v2250
        %v2252 = vpop.f32.mrb[0].mxu0
        %v2253 = vpop.f32.mrb[0].mxu0
        %v2254 = vpop.f32.mrb[0].mxu0
        %2255 = vdwg.mxu0
        %v2257 = vsel %vm689, %v2205, 0
        %v2260 = vand.u32 %v2206, %v696
        %2262 = vmatprep.subr.bf16.mxu0 0
        %2263 = vmatpush1.bf16.msra.mxu0 %v2260
        %2264 = vmatprep.subr.bf16.mxu0 0
        %2265 = vmatpush1.bf16.msra.mxu0 0
        %2266 = vmatprep.subr.bf16.mxu0 0
        %2267 = vmatpush1.bf16.msra.mxu0 0
        %2268 = vmatprep.subr.bf16.mxu0 0
        %2269 = vmatpush1.bf16.msra.mxu0 0
        %2270 = vmatprep.subr.bf16.mxu0 0
        %2271 = vmatpush1.bf16.msra.mxu0 0
        %2272 = vmatprep.subr.bf16.mxu0 0
        %2273 = vmatpush1.bf16.msra.mxu0 0
        %2274 = vmatprep.subr.bf16.mxu0 0
        %2275 = vmatpush1.bf16.msra.mxu0 0
        %2276 = vmatprep.subr.bf16.mxu0 0
        %2277 = vmatpush1.bf16.msra.mxu0 0
        %2278 = vmatprep.subr.bf16.mxu0 0
        %2279 = vmatpush1.bf16.msra.mxu0 0
        %2280 = vmatprep.subr.bf16.mxu0 0
        %2281 = vmatpush1.bf16.msra.mxu0 0
        %2282 = vmatprep.subr.bf16.mxu0 0
        %2283 = vmatpush1.bf16.msra.mxu0 0
        %2284 = vmatprep.subr.bf16.mxu0 0
        %2285 = vmatpush1.bf16.msra.mxu0 0
        %2286 = vmatprep.subr.bf16.mxu0 0
        %2287 = vmatpush1.bf16.msra.mxu0 0
        %2288 = vmatprep.subr.bf16.mxu0 0
        %2289 = vmatpush1.bf16.msra.mxu0 0
        %2290 = vmatprep.subr.bf16.mxu0 0
        %2291 = vmatpush1.bf16.msra.mxu0 0
        %2292 = vmatprep.subr.bf16.mxu0 0
        %2293 = vmatpush1.bf16.msra.mxu0 0
        %2294 = vmatprep.mubr.bf16.mxu0 0
        %2295 = vmatmul.mubr.bf16.gmra.mrb[0].mxu0 %v2257
        %v2296 = vpop.f32.mrb[0].mxu0
        %v2297 = vadd.f32 %v2251, %v2296
        %v2298 = vpop.f32.mrb[0].mxu0
        %v2299 = vpop.f32.mrb[0].mxu0
        %v2300 = vpop.f32.mrb[0].mxu0
        %2301 = vdwg.mxu0
        %v2302 = vld [vmem:[%s2204] sm:$0xf]
        %v2303 = vld [vmem:[%s2204 + $0x4] sm:$0x1]
        %v2304 = vld [vmem:[%s788] sm:$0x3]
        %v2307 = vunpack.c.l.b16 %v2302
        %v2308 = vunpack.c.l.b16 %v2303
        %v2309 = vpack.c.b16 %v2308, %v2307
        %v2311 = vshrl.u32 %v2309, 16
        %v2313 = vshll.u32 %v2309, 16
        %v2315 = vrot.slane %v2313, 1
        %v2316 = vor.u32 %v2311, %v2315
        %v2318 = vsel %vm689, %v2316, 0
        %v2321 = vand.u32 %v2304, %v696
        %2323 = vmatprep.subr.bf16.mxu0 0
        %2324 = vmatpush1.bf16.msra.mxu0 %v2321
        %2325 = vmatprep.subr.bf16.mxu0 0
        %2326 = vmatpush1.bf16.msra.mxu0 0
        %2327 = vmatprep.subr.bf16.mxu0 0
        %2328 = vmatpush1.bf16.msra.mxu0 0
        %2329 = vmatprep.subr.bf16.mxu0 0
        %2330 = vmatpush1.bf16.msra.mxu0 0
        %2331 = vmatprep.subr.bf16.mxu0 0
        %2332 = vmatpush1.bf16.msra.mxu0 0
        %2333 = vmatprep.subr.bf16.mxu0 0
        %2334 = vmatpush1.bf16.msra.mxu0 0
        %2335 = vmatprep.subr.bf16.mxu0 0
        %2336 = vmatpush1.bf16.msra.mxu0 0
        %2337 = vmatprep.subr.bf16.mxu0 0
        %2338 = vmatpush1.bf16.msra.mxu0 0
        %2339 = vmatprep.subr.bf16.mxu0 0
        %2340 = vmatpush1.bf16.msra.mxu0 0
        %2341 = vmatprep.subr.bf16.mxu0 0
        %2342 = vmatpush1.bf16.msra.mxu0 0
        %2343 = vmatprep.subr.bf16.mxu0 0
        %2344 = vmatpush1.bf16.msra.mxu0 0
        %2345 = vmatprep.subr.bf16.mxu0 0
        %2346 = vmatpush1.bf16.msra.mxu0 0
        %2347 = vmatprep.subr.bf16.mxu0 0
        %2348 = vmatpush1.bf16.msra.mxu0 0
        %2349 = vmatprep.subr.bf16.mxu0 0
        %2350 = vmatpush1.bf16.msra.mxu0 0
        %2351 = vmatprep.subr.bf16.mxu0 0
        %2352 = vmatpush1.bf16.msra.mxu0 0
        %2353 = vmatprep.subr.bf16.mxu0 0
        %2354 = vmatpush1.bf16.msra.mxu0 0
        %2355 = vmatprep.mubr.bf16.mxu0 0
        %2356 = vmatmul.mubr.bf16.gmra.mrb[0].mxu0 %v2318
        %v2357 = vpop.f32.mrb[0].mxu0
        %v2358 = vadd.f32 0.0, %v2357
        %v2359 = vpop.f32.mrb[0].mxu0
        %v2360 = vpop.f32.mrb[0].mxu0
        %v2361 = vpop.f32.mrb[0].mxu0
        %2362 = vdwg.mxu0
        %v2363 = vadd.f32 %v2297, %v2358
        %s2364 = scalar_lea.vmem %s635, 152 [#allocation2]
        %v2365 = vld [vmem:[%s2364] sm:$0xf]
        %v2366 = vld [vmem:[%s851] sm:$0x3]
        %v2368 = vsel %vm689, %v2365, 0
        %v2371 = vand.u32 %v2366, %v696
        %2373 = vmatprep.subr.bf16.mxu0 0
        %2374 = vmatpush1.bf16.msra.mxu0 %v2371
        %2375 = vmatprep.subr.bf16.mxu0 0
        %2376 = vmatpush1.bf16.msra.mxu0 0
        %2377 = vmatprep.subr.bf16.mxu0 0
        %2378 = vmatpush1.bf16.msra.mxu0 0
        %2379 = vmatprep.subr.bf16.mxu0 0
        %2380 = vmatpush1.bf16.msra.mxu0 0
        %2381 = vmatprep.subr.bf16.mxu0 0
        %2382 = vmatpush1.bf16.msra.mxu0 0
        %2383 = vmatprep.subr.bf16.mxu0 0
        %2384 = vmatpush1.bf16.msra.mxu0 0
        %2385 = vmatprep.subr.bf16.mxu0 0
        %2386 = vmatpush1.bf16.msra.mxu0 0
        %2387 = vmatprep.subr.bf16.mxu0 0
        %2388 = vmatpush1.bf16.msra.mxu0 0
        %2389 = vmatprep.subr.bf16.mxu0 0
        %2390 = vmatpush1.bf16.msra.mxu0 0
        %2391 = vmatprep.subr.bf16.mxu0 0
        %2392 = vmatpush1.bf16.msra.mxu0 0
        %2393 = vmatprep.subr.bf16.mxu0 0
        %2394 = vmatpush1.bf16.msra.mxu0 0
        %2395 = vmatprep.subr.bf16.mxu0 0
        %2396 = vmatpush1.bf16.msra.mxu0 0
        %2397 = vmatprep.subr.bf16.mxu0 0
        %2398 = vmatpush1.bf16.msra.mxu0 0
        %2399 = vmatprep.subr.bf16.mxu0 0
        %2400 = vmatpush1.bf16.msra.mxu0 0
        %2401 = vmatprep.subr.bf16.mxu0 0
        %2402 = vmatpush1.bf16.msra.mxu0 0
        %2403 = vmatprep.subr.bf16.mxu0 0
        %2404 = vmatpush1.bf16.msra.mxu0 0
        %2405 = vmatprep.mubr.bf16.mxu0 0
        %2406 = vmatmul.mubr.bf16.gmra.mrb[0].mxu0 %v2368
        %v2407 = vpop.f32.mrb[0].mxu0
        %v2408 = vadd.f32 0.0, %v2407
        %v2409 = vpop.f32.mrb[0].mxu0
        %v2410 = vpop.f32.mrb[0].mxu0
        %v2411 = vpop.f32.mrb[0].mxu0
        %2412 = vdwg.mxu0
        %v2413 = vadd.f32 %v2363, %v2408
        %s2414 = scalar_lea.vmem %s635, 216 [#allocation2]
        %v2415 = vld [vmem:[%s2414] sm:$0xf]
        %v2416 = vld [vmem:[%s902] sm:$0x3]
        %v2418 = vsel %vm689, %v2415, 0
        %v2421 = vand.u32 %v2416, %v696
        %2423 = vmatprep.subr.bf16.mxu0 0
        %2424 = vmatpush1.bf16.msra.mxu0 %v2421
        %2425 = vmatprep.subr.bf16.mxu0 0
        %2426 = vmatpush1.bf16.msra.mxu0 0
        %2427 = vmatprep.subr.bf16.mxu0 0
        %2428 = vmatpush1.bf16.msra.mxu0 0
        %2429 = vmatprep.subr.bf16.mxu0 0
        %2430 = vmatpush1.bf16.msra.mxu0 0
        %2431 = vmatprep.subr.bf16.mxu0 0
        %2432 = vmatpush1.bf16.msra.mxu0 0
        %2433 = vmatprep.subr.bf16.mxu0 0
        %2434 = vmatpush1.bf16.msra.mxu0 0
        %2435 = vmatprep.subr.bf16.mxu0 0
        %2436 = vmatpush1.bf16.msra.mxu0 0
        %2437 = vmatprep.subr.bf16.mxu0 0
        %2438 = vmatpush1.bf16.msra.mxu0 0
        %2439 = vmatprep.subr.bf16.mxu0 0
        %2440 = vmatpush1.bf16.msra.mxu0 0
        %2441 = vmatprep.subr.bf16.mxu0 0
        %2442 = vmatpush1.bf16.msra.mxu0 0
        %2443 = vmatprep.subr.bf16.mxu0 0
        %2444 = vmatpush1.bf16.msra.mxu0 0
        %2445 = vmatprep.subr.bf16.mxu0 0
        %2446 = vmatpush1.bf16.msra.mxu0 0
        %2447 = vmatprep.subr.bf16.mxu0 0
        %2448 = vmatpush1.bf16.msra.mxu0 0
        %2449 = vmatprep.subr.bf16.mxu0 0
        %2450 = vmatpush1.bf16.msra.mxu0 0
        %2451 = vmatprep.subr.bf16.mxu0 0
        %2452 = vmatpush1.bf16.msra.mxu0 0
        %2453 = vmatprep.subr.bf16.mxu0 0
        %2454 = vmatpush1.bf16.msra.mxu0 0
        %2455 = vmatprep.mubr.bf16.mxu0 0
        %2456 = vmatmul.mubr.bf16.gmra.mrb[0].mxu0 %v2418
        %v2457 = vpop.f32.mrb[0].mxu0
        %v2458 = vadd.f32 0.0, %v2457
        %v2459 = vpop.f32.mrb[0].mxu0
        %v2460 = vpop.f32.mrb[0].mxu0
        %v2461 = vpop.f32.mrb[0].mxu0
        %2462 = vdwg.mxu0
        %v2463 = vadd.f32 %v2413, %v2458
        %v2464 = vld [vmem:[%s2364] sm:$0xf]
        %v2465 = vld [vmem:[%s2364 + $0x4] sm:$0x1]
        %v2466 = vld [vmem:[%s953] sm:$0x3]
        %v2469 = vunpack.c.l.b16 %v2464
        %v2470 = vunpack.c.l.b16 %v2465
        %v2471 = vpack.c.b16 %v2470, %v2469
        %v2473 = vshrl.u32 %v2471, 16
        %v2475 = vshll.u32 %v2471, 16
        %v2477 = vrot.slane %v2475, 1
        %v2478 = vor.u32 %v2473, %v2477
        %v2480 = vsel %vm689, %v2478, 0
        %v2483 = vand.u32 %v2466, %v696
        %2485 = vmatprep.subr.bf16.mxu0 0
        %2486 = vmatpush1.bf16.msra.mxu0 %v2483
        %2487 = vmatprep.subr.bf16.mxu0 0
        %2488 = vmatpush1.bf16.msra.mxu0 0
        %2489 = vmatprep.subr.bf16.mxu0 0
        %2490 = vmatpush1.bf16.msra.mxu0 0
        %2491 = vmatprep.subr.bf16.mxu0 0
        %2492 = vmatpush1.bf16.msra.mxu0 0
        %2493 = vmatprep.subr.bf16.mxu0 0
        %2494 = vmatpush1.bf16.msra.mxu0 0
        %2495 = vmatprep.subr.bf16.mxu0 0
        %2496 = vmatpush1.bf16.msra.mxu0 0
        %2497 = vmatprep.subr.bf16.mxu0 0
        %2498 = vmatpush1.bf16.msra.mxu0 0
        %2499 = vmatprep.subr.bf16.mxu0 0
        %2500 = vmatpush1.bf16.msra.mxu0 0
        %2501 = vmatprep.subr.bf16.mxu0 0
        %2502 = vmatpush1.bf16.msra.mxu0 0
        %2503 = vmatprep.subr.bf16.mxu0 0
        %2504 = vmatpush1.bf16.msra.mxu0 0
        %2505 = vmatprep.subr.bf16.mxu0 0
        %2506 = vmatpush1.bf16.msra.mxu0 0
        %2507 = vmatprep.subr.bf16.mxu0 0
        %2508 = vmatpush1.bf16.msra.mxu0 0
        %2509 = vmatprep.subr.bf16.mxu0 0
        %2510 = vmatpush1.bf16.msra.mxu0 0
        %2511 = vmatprep.subr.bf16.mxu0 0
        %2512 = vmatpush1.bf16.msra.mxu0 0
        %2513 = vmatprep.subr.bf16.mxu0 0
        %2514 = vmatpush1.bf16.msra.mxu0 0
        %2515 = vmatprep.subr.bf16.mxu0 0
        %2516 = vmatpush1.bf16.msra.mxu0 0
        %2517 = vmatprep.mubr.bf16.mxu0 0
        %2518 = vmatmul.mubr.bf16.gmra.mrb[0].mxu0 %v2480
        %v2519 = vpop.f32.mrb[0].mxu0
        %v2520 = vadd.f32 0.0, %v2519
        %v2521 = vpop.f32.mrb[0].mxu0
        %v2522 = vpop.f32.mrb[0].mxu0
        %v2523 = vpop.f32.mrb[0].mxu0
        %2524 = vdwg.mxu0
        %v2525 = vadd.f32 %v2463, %v2520
        %s2526 = scalar_lea.vmem %s635, 280 [#allocation2]
        %v2527 = vld [vmem:[%s2526] sm:$0xf]
        %v2528 = vld [vmem:[%s1016] sm:$0x3]
        %v2530 = vsel %vm689, %v2527, 0
        %v2533 = vand.u32 %v2528, %v696
        %2535 = vmatprep.subr.bf16.mxu0 0
        %2536 = vmatpush1.bf16.msra.mxu0 %v2533
        %2537 = vmatprep.subr.bf16.mxu0 0
        %2538 = vmatpush1.bf16.msra.mxu0 0
        %2539 = vmatprep.subr.bf16.mxu0 0
        %2540 = vmatpush1.bf16.msra.mxu0 0
        %2541 = vmatprep.subr.bf16.mxu0 0
        %2542 = vmatpush1.bf16.msra.mxu0 0
        %2543 = vmatprep.subr.bf16.mxu0 0
        %2544 = vmatpush1.bf16.msra.mxu0 0
        %2545 = vmatprep.subr.bf16.mxu0 0
        %2546 = vmatpush1.bf16.msra.mxu0 0
        %2547 = vmatprep.subr.bf16.mxu0 0
        %2548 = vmatpush1.bf16.msra.mxu0 0
        %2549 = vmatprep.subr.bf16.mxu0 0
        %2550 = vmatpush1.bf16.msra.mxu0 0
        %2551 = vmatprep.subr.bf16.mxu0 0
        %2552 = vmatpush1.bf16.msra.mxu0 0
        %2553 = vmatprep.subr.bf16.mxu0 0
        %2554 = vmatpush1.bf16.msra.mxu0 0
        %2555 = vmatprep.subr.bf16.mxu0 0
        %2556 = vmatpush1.bf16.msra.mxu0 0
        %2557 = vmatprep.subr.bf16.mxu0 0
        %2558 = vmatpush1.bf16.msra.mxu0 0
        %2559 = vmatprep.subr.bf16.mxu0 0
        %2560 = vmatpush1.bf16.msra.mxu0 0
        %2561 = vmatprep.subr.bf16.mxu0 0
        %2562 = vmatpush1.bf16.msra.mxu0 0
        %2563 = vmatprep.subr.bf16.mxu0 0
        %2564 = vmatpush1.bf16.msra.mxu0 0
        %2565 = vmatprep.subr.bf16.mxu0 0
        %2566 = vmatpush1.bf16.msra.mxu0 0
        %2567 = vmatprep.mubr.bf16.mxu0 0
        %2568 = vmatmul.mubr.bf16.gmra.mrb[0].mxu0 %v2530
        %v2569 = vpop.f32.mrb[0].mxu0
        %v2570 = vadd.f32 0.0, %v2569
        %v2571 = vpop.f32.mrb[0].mxu0
        %v2572 = vpop.f32.mrb[0].mxu0
        %v2573 = vpop.f32.mrb[0].mxu0
        %2574 = vdwg.mxu0
        %v2575 = vadd.f32 %v2525, %v2570
        %s2576 = scalar_lea.vmem %s635, 344 [#allocation2]
        %v2577 = vld [vmem:[%s2576] sm:$0xf]
        %v2578 = vld [vmem:[%s1067] sm:$0x3]
        %v2580 = vsel %vm689, %v2577, 0
        %v2583 = vand.u32 %v2578, %v696
        %2585 = vmatprep.subr.bf16.mxu0 0
        %2586 = vmatpush1.bf16.msra.mxu0 %v2583
        %2587 = vmatprep.subr.bf16.mxu0 0
        %2588 = vmatpush1.bf16.msra.mxu0 0
        %2589 = vmatprep.subr.bf16.mxu0 0
        %2590 = vmatpush1.bf16.msra.mxu0 0
        %2591 = vmatprep.subr.bf16.mxu0 0
        %2592 = vmatpush1.bf16.msra.mxu0 0
        %2593 = vmatprep.subr.bf16.mxu0 0
        %2594 = vmatpush1.bf16.msra.mxu0 0
        %2595 = vmatprep.subr.bf16.mxu0 0
        %2596 = vmatpush1.bf16.msra.mxu0 0
        %2597 = vmatprep.subr.bf16.mxu0 0
        %2598 = vmatpush1.bf16.msra.mxu0 0
        %2599 = vmatprep.subr.bf16.mxu0 0
        %2600 = vmatpush1.bf16.msra.mxu0 0
        %2601 = vmatprep.subr.bf16.mxu0 0
        %2602 = vmatpush1.bf16.msra.mxu0 0
        %2603 = vmatprep.subr.bf16.mxu0 0
        %2604 = vmatpush1.bf16.msra.mxu0 0
        %2605 = vmatprep.subr.bf16.mxu0 0
        %2606 = vmatpush1.bf16.msra.mxu0 0
        %2607 = vmatprep.subr.bf16.mxu0 0
        %2608 = vmatpush1.bf16.msra.mxu0 0
        %2609 = vmatprep.subr.bf16.mxu0 0
        %2610 = vmatpush1.bf16.msra.mxu0 0
        %2611 = vmatprep.subr.bf16.mxu0 0
        %2612 = vmatpush1.bf16.msra.mxu0 0
        %2613 = vmatprep.subr.bf16.mxu0 0
        %2614 = vmatpush1.bf16.msra.mxu0 0
        %2615 = vmatprep.subr.bf16.mxu0 0
        %2616 = vmatpush1.bf16.msra.mxu0 0
        %2617 = vmatprep.mubr.bf16.mxu0 0
        %2618 = vmatmul.mubr.bf16.gmra.mrb[0].mxu0 %v2580
        %v2619 = vpop.f32.mrb[0].mxu0
        %v2620 = vadd.f32 0.0, %v2619
        %v2621 = vpop.f32.mrb[0].mxu0
        %v2622 = vpop.f32.mrb[0].mxu0
        %v2623 = vpop.f32.mrb[0].mxu0
        %2624 = vdwg.mxu0
        %v2625 = vadd.f32 %v2575, %v2620
        %v2626 = vld [vmem:[%s2526] sm:$0xf]
        %v2627 = vld [vmem:[%s2526 + $0x4] sm:$0x1]
        %v2628 = vld [vmem:[%s1118] sm:$0x3]
        %v2631 = vunpack.c.l.b16 %v2626
        %v2632 = vunpack.c.l.b16 %v2627
        %v2633 = vpack.c.b16 %v2632, %v2631
        %v2635 = vshrl.u32 %v2633, 16
        %v2637 = vshll.u32 %v2633, 16
        %v2639 = vrot.slane %v2637, 1
        %v2640 = vor.u32 %v2635, %v2639
        %v2642 = vsel %vm689, %v2640, 0
        %v2645 = vand.u32 %v2628, %v696
        %2647 = vmatprep.subr.bf16.mxu0 0
        %2648 = vmatpush1.bf16.msra.mxu0 %v2645
        %2649 = vmatprep.subr.bf16.mxu0 0
        %2650 = vmatpush1.bf16.msra.mxu0 0
        %2651 = vmatprep.subr.bf16.mxu0 0
        %2652 = vmatpush1.bf16.msra.mxu0 0
        %2653 = vmatprep.subr.bf16.mxu0 0
        %2654 = vmatpush1.bf16.msra.mxu0 0
        %2655 = vmatprep.subr.bf16.mxu0 0
        %2656 = vmatpush1.bf16.msra.mxu0 0
        %2657 = vmatprep.subr.bf16.mxu0 0
        %2658 = vmatpush1.bf16.msra.mxu0 0
        %2659 = vmatprep.subr.bf16.mxu0 0
        %2660 = vmatpush1.bf16.msra.mxu0 0
        %2661 = vmatprep.subr.bf16.mxu0 0
        %2662 = vmatpush1.bf16.msra.mxu0 0
        %2663 = vmatprep.subr.bf16.mxu0 0
        %2664 = vmatpush1.bf16.msra.mxu0 0
        %2665 = vmatprep.subr.bf16.mxu0 0
        %2666 = vmatpush1.bf16.msra.mxu0 0
        %2667 = vmatprep.subr.bf16.mxu0 0
        %2668 = vmatpush1.bf16.msra.mxu0 0
        %2669 = vmatprep.subr.bf16.mxu0 0
        %2670 = vmatpush1.bf16.msra.mxu0 0
        %2671 = vmatprep.subr.bf16.mxu0 0
        %2672 = vmatpush1.bf16.msra.mxu0 0
        %2673 = vmatprep.subr.bf16.mxu0 0
        %2674 = vmatpush1.bf16.msra.mxu0 0
        %2675 = vmatprep.subr.bf16.mxu0 0
        %2676 = vmatpush1.bf16.msra.mxu0 0
        %2677 = vmatprep.subr.bf16.mxu0 0
        %2678 = vmatpush1.bf16.msra.mxu0 0
        %2679 = vmatprep.mubr.bf16.mxu0 0
        %2680 = vmatmul.mubr.bf16.gmra.mrb[0].mxu0 %v2642
        %v2681 = vpop.f32.mrb[0].mxu0
        %v2682 = vadd.f32 0.0, %v2681
        %v2683 = vpop.f32.mrb[0].mxu0
        %v2684 = vpop.f32.mrb[0].mxu0
        %v2685 = vpop.f32.mrb[0].mxu0
        %2686 = vdwg.mxu0
        %v2687 = vadd.f32 %v2625, %v2682
        %v2688 = vmul.f32 %v2687, %v1183
        %v2689 = vadd.f32 %v2688, %v1190
        %v2690 = vmin.f32 %v2689, 30.0
        %v2691 = vmul.f32 %v2690, 1.442695
        %v2692 = vpow.pop %v2691
        %v2693 = vadd.f32 %v2692, 2.0
        %v2694 = vmul.f32 %v2692, %v2693
        %v2695 = vadd.f32 %v2694, 2.0
        %v2696 = vrcp.pop %v2695
        %v2697 = vmul.f32 %v2696, 2.0
        %v2698 = vsub.f32 1.0, %v2697
        %v2699 = vmul.f32 %v2689, %v2698
        %v2700 = vpack.c.bf16 %v2699, %v2699
        %s2701 = scalar_lea.vmem %s667, 12 [#allocation3]
        %2702 = vst.msk [vmem:[%s2701] sm:$0xf] %vm1204, %v2700
        %s2703 = scalar_lea.vmem %s635, 32 [#allocation2]
        %v2704 = vld [vmem:[%s2703] sm:$0xf]
        %v2705 = vld [vmem:[%s672] sm:$0x3]
        %s2706 = scalar_lea.vmem %s635, 96 [#allocation2]
        %v2707 = vld [vmem:[%s2706] sm:$0xf]
        %v2708 = vld [vmem:[%s687] sm:$0x3]
        %v2710 = vsel %vm689, %v2707, 0
        %v2713 = vand.u32 %v2708, %v696
        %2715 = vmatprep.subr.bf16.mxu0 0
        %2716 = vmatpush1.bf16.msra.mxu0 %v2713
        %2717 = vmatprep.subr.bf16.mxu0 0
        %2718 = vmatpush1.bf16.msra.mxu0 0
        %2719 = vmatprep.subr.bf16.mxu0 0
        %2720 = vmatpush1.bf16.msra.mxu0 0
        %2721 = vmatprep.subr.bf16.mxu0 0
        %2722 = vmatpush1.bf16.msra.mxu0 0
        %2723 = vmatprep.subr.bf16.mxu0 0
        %2724 = vmatpush1.bf16.msra.mxu0 0
        %2725 = vmatprep.subr.bf16.mxu0 0
        %2726 = vmatpush1.bf16.msra.mxu0 0
        %2727 = vmatprep.subr.bf16.mxu0 0
        %2728 = vmatpush1.bf16.msra.mxu0 0
        %2729 = vmatprep.subr.bf16.mxu0 0
        %2730 = vmatpush1.bf16.msra.mxu0 0
        %2731 = vmatprep.subr.bf16.mxu0 0
        %2732 = vmatpush1.bf16.msra.mxu0 0
        %2733 = vmatprep.subr.bf16.mxu0 0
        %2734 = vmatpush1.bf16.msra.mxu0 0
        %2735 = vmatprep.subr.bf16.mxu0 0
        %2736 = vmatpush1.bf16.msra.mxu0 0
        %2737 = vmatprep.subr.bf16.mxu0 0
        %2738 = vmatpush1.bf16.msra.mxu0 0
        %2739 = vmatprep.subr.bf16.mxu0 0
        %2740 = vmatpush1.bf16.msra.mxu0 0
        %2741 = vmatprep.subr.bf16.mxu0 0
        %2742 = vmatpush1.bf16.msra.mxu0 0
        %2743 = vmatprep.subr.bf16.mxu0 0
        %2744 = vmatpush1.bf16.msra.mxu0 0
        %2745 = vmatprep.subr.bf16.mxu0 0
        %2746 = vmatpush1.bf16.msra.mxu0 0
        %2747 = vmatprep.mubr.bf16.mxu0 0
        %2748 = vmatmul.mubr.bf16.gmra.mrb[0].mxu0 %v2710
        %v2749 = vpop.f32.mrb[0].mxu0
        %v2750 = vadd.f32 0.0, %v2749
        %v2751 = vpop.f32.mrb[0].mxu0
        %v2752 = vpop.f32.mrb[0].mxu0
        %v2753 = vpop.f32.mrb[0].mxu0
        %2754 = vdwg.mxu0
        %v2756 = vsel %vm689, %v2704, 0
        %v2759 = vand.u32 %v2705, %v696
        %2761 = vmatprep.subr.bf16.mxu0 0
        %2762 = vmatpush1.bf16.msra.mxu0 %v2759
        %2763 = vmatprep.subr.bf16.mxu0 0
        %2764 = vmatpush1.bf16.msra.mxu0 0
        %2765 = vmatprep.subr.bf16.mxu0 0
        %2766 = vmatpush1.bf16.msra.mxu0 0
        %2767 = vmatprep.subr.bf16.mxu0 0
        %2768 = vmatpush1.bf16.msra.mxu0 0
        %2769 = vmatprep.subr.bf16.mxu0 0
        %2770 = vmatpush1.bf16.msra.mxu0 0
        %2771 = vmatprep.subr.bf16.mxu0 0
        %2772 = vmatpush1.bf16.msra.mxu0 0
        %2773 = vmatprep.subr.bf16.mxu0 0
        %2774 = vmatpush1.bf16.msra.mxu0 0
        %2775 = vmatprep.subr.bf16.mxu0 0
        %2776 = vmatpush1.bf16.msra.mxu0 0
        %2777 = vmatprep.subr.bf16.mxu0 0
        %2778 = vmatpush1.bf16.msra.mxu0 0
        %2779 = vmatprep.subr.bf16.mxu0 0
        %2780 = vmatpush1.bf16.msra.mxu0 0
        %2781 = vmatprep.subr.bf16.mxu0 0
        %2782 = vmatpush1.bf16.msra.mxu0 0
        %2783 = vmatprep.subr.bf16.mxu0 0
        %2784 = vmatpush1.bf16.msra.mxu0 0
        %2785 = vmatprep.subr.bf16.mxu0 0
        %2786 = vmatpush1.bf16.msra.mxu0 0
        %2787 = vmatprep.subr.bf16.mxu0 0
        %2788 = vmatpush1.bf16.msra.mxu0 0
        %2789 = vmatprep.subr.bf16.mxu0 0
        %2790 = vmatpush1.bf16.msra.mxu0 0
        %2791 = vmatprep.subr.bf16.mxu0 0
        %2792 = vmatpush1.bf16.msra.mxu0 0
        %2793 = vmatprep.mubr.bf16.mxu0 0
        %2794 = vmatmul.mubr.bf16.gmra.mrb[0].mxu0 %v2756
        %v2795 = vpop.f32.mrb[0].mxu0
        %v2796 = vadd.f32 %v2750, %v2795
        %v2797 = vpop.f32.mrb[0].mxu0
        %v2798 = vpop.f32.mrb[0].mxu0
        %v2799 = vpop.f32.mrb[0].mxu0
        %2800 = vdwg.mxu0
        %v2801 = vld [vmem:[%s2703] sm:$0xf]
        %v2802 = vld [vmem:[%s2703 + $0x4] sm:$0x1]
        %v2803 = vld [vmem:[%s788] sm:$0x3]
        %v2806 = vunpack.c.l.b16 %v2801
        %v2807 = vunpack.c.l.b16 %v2802
        %v2808 = vpack.c.b16 %v2807, %v2806
        %v2810 = vshrl.u32 %v2808, 16
        %v2812 = vshll.u32 %v2808, 16
        %v2814 = vrot.slane %v2812, 1
        %v2815 = vor.u32 %v2810, %v2814
        %v2817 = vsel %vm689, %v2815, 0
        %v2820 = vand.u32 %v2803, %v696
        %2822 = vmatprep.subr.bf16.mxu0 0
        %2823 = vmatpush1.bf16.msra.mxu0 %v2820
        %2824 = vmatprep.subr.bf16.mxu0 0
        %2825 = vmatpush1.bf16.msra.mxu0 0
        %2826 = vmatprep.subr.bf16.mxu0 0
        %2827 = vmatpush1.bf16.msra.mxu0 0
        %2828 = vmatprep.subr.bf16.mxu0 0
        %2829 = vmatpush1.bf16.msra.mxu0 0
        %2830 = vmatprep.subr.bf16.mxu0 0
        %2831 = vmatpush1.bf16.msra.mxu0 0
        %2832 = vmatprep.subr.bf16.mxu0 0
        %2833 = vmatpush1.bf16.msra.mxu0 0
        %2834 = vmatprep.subr.bf16.mxu0 0
        %2835 = vmatpush1.bf16.msra.mxu0 0
        %2836 = vmatprep.subr.bf16.mxu0 0
        %2837 = vmatpush1.bf16.msra.mxu0 0
        %2838 = vmatprep.subr.bf16.mxu0 0
        %2839 = vmatpush1.bf16.msra.mxu0 0
        %2840 = vmatprep.subr.bf16.mxu0 0
        %2841 = vmatpush1.bf16.msra.mxu0 0
        %2842 = vmatprep.subr.bf16.mxu0 0
        %2843 = vmatpush1.bf16.msra.mxu0 0
        %2844 = vmatprep.subr.bf16.mxu0 0
        %2845 = vmatpush1.bf16.msra.mxu0 0
        %2846 = vmatprep.subr.bf16.mxu0 0
        %2847 = vmatpush1.bf16.msra.mxu0 0
        %2848 = vmatprep.subr.bf16.mxu0 0
        %2849 = vmatpush1.bf16.msra.mxu0 0
        %2850 = vmatprep.subr.bf16.mxu0 0
        %2851 = vmatpush1.bf16.msra.mxu0 0
        %2852 = vmatprep.subr.bf16.mxu0 0
        %2853 = vmatpush1.bf16.msra.mxu0 0
        %2854 = vmatprep.mubr.bf16.mxu0 0
        %2855 = vmatmul.mubr.bf16.gmra.mrb[0].mxu0 %v2817
        %v2856 = vpop.f32.mrb[0].mxu0
        %v2857 = vadd.f32 0.0, %v2856
        %v2858 = vpop.f32.mrb[0].mxu0
        %v2859 = vpop.f32.mrb[0].mxu0
        %v2860 = vpop.f32.mrb[0].mxu0
        %2861 = vdwg.mxu0
        %v2862 = vadd.f32 %v2796, %v2857
        %s2863 = scalar_lea.vmem %s635, 160 [#allocation2]
        %v2864 = vld [vmem:[%s2863] sm:$0xf]
        %v2865 = vld [vmem:[%s851] sm:$0x3]
        %v2867 = vsel %vm689, %v2864, 0
        %v2870 = vand.u32 %v2865, %v696
        %2872 = vmatprep.subr.bf16.mxu0 0
        %2873 = vmatpush1.bf16.msra.mxu0 %v2870
        %2874 = vmatprep.subr.bf16.mxu0 0
        %2875 = vmatpush1.bf16.msra.mxu0 0
        %2876 = vmatprep.subr.bf16.mxu0 0
        %2877 = vmatpush1.bf16.msra.mxu0 0
        %2878 = vmatprep.subr.bf16.mxu0 0
        %2879 = vmatpush1.bf16.msra.mxu0 0
        %2880 = vmatprep.subr.bf16.mxu0 0
        %2881 = vmatpush1.bf16.msra.mxu0 0
        %2882 = vmatprep.subr.bf16.mxu0 0
        %2883 = vmatpush1.bf16.msra.mxu0 0
        %2884 = vmatprep.subr.bf16.mxu0 0
        %2885 = vmatpush1.bf16.msra.mxu0 0
        %2886 = vmatprep.subr.bf16.mxu0 0
        %2887 = vmatpush1.bf16.msra.mxu0 0
        %2888 = vmatprep.subr.bf16.mxu0 0
        %2889 = vmatpush1.bf16.msra.mxu0 0
        %2890 = vmatprep.subr.bf16.mxu0 0
        %2891 = vmatpush1.bf16.msra.mxu0 0
        %2892 = vmatprep.subr.bf16.mxu0 0
        %2893 = vmatpush1.bf16.msra.mxu0 0
        %2894 = vmatprep.subr.bf16.mxu0 0
        %2895 = vmatpush1.bf16.msra.mxu0 0
        %2896 = vmatprep.subr.bf16.mxu0 0
        %2897 = vmatpush1.bf16.msra.mxu0 0
        %2898 = vmatprep.subr.bf16.mxu0 0
        %2899 = vmatpush1.bf16.msra.mxu0 0
        %2900 = vmatprep.subr.bf16.mxu0 0
        %2901 = vmatpush1.bf16.msra.mxu0 0
        %2902 = vmatprep.subr.bf16.mxu0 0
        %2903 = vmatpush1.bf16.msra.mxu0 0
        %2904 = vmatprep.mubr.bf16.mxu0 0
        %2905 = vmatmul.mubr.bf16.gmra.mrb[0].mxu0 %v2867
        %v2906 = vpop.f32.mrb[0].mxu0
        %v2907 = vadd.f32 0.0, %v2906
        %v2908 = vpop.f32.mrb[0].mxu0
        %v2909 = vpop.f32.mrb[0].mxu0
        %v2910 = vpop.f32.mrb[0].mxu0
        %2911 = vdwg.mxu0
        %v2912 = vadd.f32 %v2862, %v2907
        %s2913 = scalar_lea.vmem %s635, 224 [#allocation2]
        %v2914 = vld [vmem:[%s2913] sm:$0xf]
        %v2915 = vld [vmem:[%s902] sm:$0x3]
        %v2917 = vsel %vm689, %v2914, 0
        %v2920 = vand.u32 %v2915, %v696
        %2922 = vmatprep.subr.bf16.mxu0 0
        %2923 = vmatpush1.bf16.msra.mxu0 %v2920
        %2924 = vmatprep.subr.bf16.mxu0 0
        %2925 = vmatpush1.bf16.msra.mxu0 0
        %2926 = vmatprep.subr.bf16.mxu0 0
        %2927 = vmatpush1.bf16.msra.mxu0 0
        %2928 = vmatprep.subr.bf16.mxu0 0
        %2929 = vmatpush1.bf16.msra.mxu0 0
        %2930 = vmatprep.subr.bf16.mxu0 0
        %2931 = vmatpush1.bf16.msra.mxu0 0
        %2932 = vmatprep.subr.bf16.mxu0 0
        %2933 = vmatpush1.bf16.msra.mxu0 0
        %2934 = vmatprep.subr.bf16.mxu0 0
        %2935 = vmatpush1.bf16.msra.mxu0 0
        %2936 = vmatprep.subr.bf16.mxu0 0
        %2937 = vmatpush1.bf16.msra.mxu0 0
        %2938 = vmatprep.subr.bf16.mxu0 0
        %2939 = vmatpush1.bf16.msra.mxu0 0
        %2940 = vmatprep.subr.bf16.mxu0 0
        %2941 = vmatpush1.bf16.msra.mxu0 0
        %2942 = vmatprep.subr.bf16.mxu0 0
        %2943 = vmatpush1.bf16.msra.mxu0 0
        %2944 = vmatprep.subr.bf16.mxu0 0
        %2945 = vmatpush1.bf16.msra.mxu0 0
        %2946 = vmatprep.subr.bf16.mxu0 0
        %2947 = vmatpush1.bf16.msra.mxu0 0
        %2948 = vmatprep.subr.bf16.mxu0 0
        %2949 = vmatpush1.bf16.msra.mxu0 0
        %2950 = vmatprep.subr.bf16.mxu0 0
        %2951 = vmatpush1.bf16.msra.mxu0 0
        %2952 = vmatprep.subr.bf16.mxu0 0
        %2953 = vmatpush1.bf16.msra.mxu0 0
        %2954 = vmatprep.mubr.bf16.mxu0 0
        %2955 = vmatmul.mubr.bf16.gmra.mrb[0].mxu0 %v2917
        %v2956 = vpop.f32.mrb[0].mxu0
        %v2957 = vadd.f32 0.0, %v2956
        %v2958 = vpop.f32.mrb[0].mxu0
        %v2959 = vpop.f32.mrb[0].mxu0
        %v2960 = vpop.f32.mrb[0].mxu0
        %2961 = vdwg.mxu0
        %v2962 = vadd.f32 %v2912, %v2957
        %v2963 = vld [vmem:[%s2863] sm:$0xf]
        %v2964 = vld [vmem:[%s2863 + $0x4] sm:$0x1]
        %v2965 = vld [vmem:[%s953] sm:$0x3]
        %v2968 = vunpack.c.l.b16 %v2963
        %v2969 = vunpack.c.l.b16 %v2964
        %v2970 = vpack.c.b16 %v2969, %v2968
        %v2972 = vshrl.u32 %v2970, 16
        %v2974 = vshll.u32 %v2970, 16
        %v2976 = vrot.slane %v2974, 1
        %v2977 = vor.u32 %v2972, %v2976
        %v2979 = vsel %vm689, %v2977, 0
        %v2982 = vand.u32 %v2965, %v696
        %2984 = vmatprep.subr.bf16.mxu0 0
        %2985 = vmatpush1.bf16.msra.mxu0 %v2982
        %2986 = vmatprep.subr.bf16.mxu0 0
        %2987 = vmatpush1.bf16.msra.mxu0 0
        %2988 = vmatprep.subr.bf16.mxu0 0
        %2989 = vmatpush1.bf16.msra.mxu0 0
        %2990 = vmatprep.subr.bf16.mxu0 0
        %2991 = vmatpush1.bf16.msra.mxu0 0
        %2992 = vmatprep.subr.bf16.mxu0 0
        %2993 = vmatpush1.bf16.msra.mxu0 0
        %2994 = vmatprep.subr.bf16.mxu0 0
        %2995 = vmatpush1.bf16.msra.mxu0 0
        %2996 = vmatprep.subr.bf16.mxu0 0
        %2997 = vmatpush1.bf16.msra.mxu0 0
        %2998 = vmatprep.subr.bf16.mxu0 0
        %2999 = vmatpush1.bf16.msra.mxu0 0
        %3000 = vmatprep.subr.bf16.mxu0 0
        %3001 = vmatpush1.bf16.msra.mxu0 0
        %3002 = vmatprep.subr.bf16.mxu0 0
        %3003 = vmatpush1.bf16.msra.mxu0 0
        %3004 = vmatprep.subr.bf16.mxu0 0
        %3005 = vmatpush1.bf16.msra.mxu0 0
        %3006 = vmatprep.subr.bf16.mxu0 0
        %3007 = vmatpush1.bf16.msra.mxu0 0
        %3008 = vmatprep.subr.bf16.mxu0 0
        %3009 = vmatpush1.bf16.msra.mxu0 0
        %3010 = vmatprep.subr.bf16.mxu0 0
        %3011 = vmatpush1.bf16.msra.mxu0 0
        %3012 = vmatprep.subr.bf16.mxu0 0
        %3013 = vmatpush1.bf16.msra.mxu0 0
        %3014 = vmatprep.subr.bf16.mxu0 0
        %3015 = vmatpush1.bf16.msra.mxu0 0
        %3016 = vmatprep.mubr.bf16.mxu0 0
        %3017 = vmatmul.mubr.bf16.gmra.mrb[0].mxu0 %v2979
        %v3018 = vpop.f32.mrb[0].mxu0
        %v3019 = vadd.f32 0.0, %v3018
        %v3020 = vpop.f32.mrb[0].mxu0
        %v3021 = vpop.f32.mrb[0].mxu0
        %v3022 = vpop.f32.mrb[0].mxu0
        %3023 = vdwg.mxu0
        %v3024 = vadd.f32 %v2962, %v3019
        %s3025 = scalar_lea.vmem %s635, 288 [#allocation2]
        %v3026 = vld [vmem:[%s3025] sm:$0xf]
        %v3027 = vld [vmem:[%s1016] sm:$0x3]
        %v3029 = vsel %vm689, %v3026, 0
        %v3032 = vand.u32 %v3027, %v696
        %3034 = vmatprep.subr.bf16.mxu0 0
        %3035 = vmatpush1.bf16.msra.mxu0 %v3032
        %3036 = vmatprep.subr.bf16.mxu0 0
        %3037 = vmatpush1.bf16.msra.mxu0 0
        %3038 = vmatprep.subr.bf16.mxu0 0
        %3039 = vmatpush1.bf16.msra.mxu0 0
        %3040 = vmatprep.subr.bf16.mxu0 0
        %3041 = vmatpush1.bf16.msra.mxu0 0
        %3042 = vmatprep.subr.bf16.mxu0 0
        %3043 = vmatpush1.bf16.msra.mxu0 0
        %3044 = vmatprep.subr.bf16.mxu0 0
        %3045 = vmatpush1.bf16.msra.mxu0 0
        %3046 = vmatprep.subr.bf16.mxu0 0
        %3047 = vmatpush1.bf16.msra.mxu0 0
        %3048 = vmatprep.subr.bf16.mxu0 0
        %3049 = vmatpush1.bf16.msra.mxu0 0
        %3050 = vmatprep.subr.bf16.mxu0 0
        %3051 = vmatpush1.bf16.msra.mxu0 0
        %3052 = vmatprep.subr.bf16.mxu0 0
        %3053 = vmatpush1.bf16.msra.mxu0 0
        %3054 = vmatprep.subr.bf16.mxu0 0
        %3055 = vmatpush1.bf16.msra.mxu0 0
        %3056 = vmatprep.subr.bf16.mxu0 0
        %3057 = vmatpush1.bf16.msra.mxu0 0
        %3058 = vmatprep.subr.bf16.mxu0 0
        %3059 = vmatpush1.bf16.msra.mxu0 0
        %3060 = vmatprep.subr.bf16.mxu0 0
        %3061 = vmatpush1.bf16.msra.mxu0 0
        %3062 = vmatprep.subr.bf16.mxu0 0
        %3063 = vmatpush1.bf16.msra.mxu0 0
        %3064 = vmatprep.subr.bf16.mxu0 0
        %3065 = vmatpush1.bf16.msra.mxu0 0
        %3066 = vmatprep.mubr.bf16.mxu0 0
        %3067 = vmatmul.mubr.bf16.gmra.mrb[0].mxu0 %v3029
        %v3068 = vpop.f32.mrb[0].mxu0
        %v3069 = vadd.f32 0.0, %v3068
        %v3070 = vpop.f32.mrb[0].mxu0
        %v3071 = vpop.f32.mrb[0].mxu0
        %v3072 = vpop.f32.mrb[0].mxu0
        %3073 = vdwg.mxu0
        %v3074 = vadd.f32 %v3024, %v3069
        %s3075 = scalar_lea.vmem %s635, 352 [#allocation2]
        %v3076 = vld [vmem:[%s3075] sm:$0xf]
        %v3077 = vld [vmem:[%s1067] sm:$0x3]
        %v3079 = vsel %vm689, %v3076, 0
        %v3082 = vand.u32 %v3077, %v696
        %3084 = vmatprep.subr.bf16.mxu0 0
        %3085 = vmatpush1.bf16.msra.mxu0 %v3082
        %3086 = vmatprep.subr.bf16.mxu0 0
        %3087 = vmatpush1.bf16.msra.mxu0 0
        %3088 = vmatprep.subr.bf16.mxu0 0
        %3089 = vmatpush1.bf16.msra.mxu0 0
        %3090 = vmatprep.subr.bf16.mxu0 0
        %3091 = vmatpush1.bf16.msra.mxu0 0
        %3092 = vmatprep.subr.bf16.mxu0 0
        %3093 = vmatpush1.bf16.msra.mxu0 0
        %3094 = vmatprep.subr.bf16.mxu0 0
        %3095 = vmatpush1.bf16.msra.mxu0 0
        %3096 = vmatprep.subr.bf16.mxu0 0
        %3097 = vmatpush1.bf16.msra.mxu0 0
        %3098 = vmatprep.subr.bf16.mxu0 0
        %3099 = vmatpush1.bf16.msra.mxu0 0
        %3100 = vmatprep.subr.bf16.mxu0 0
        %3101 = vmatpush1.bf16.msra.mxu0 0
        %3102 = vmatprep.subr.bf16.mxu0 0
        %3103 = vmatpush1.bf16.msra.mxu0 0
        %3104 = vmatprep.subr.bf16.mxu0 0
        %3105 = vmatpush1.bf16.msra.mxu0 0
        %3106 = vmatprep.subr.bf16.mxu0 0
        %3107 = vmatpush1.bf16.msra.mxu0 0
        %3108 = vmatprep.subr.bf16.mxu0 0
        %3109 = vmatpush1.bf16.msra.mxu0 0
        %3110 = vmatprep.subr.bf16.mxu0 0
        %3111 = vmatpush1.bf16.msra.mxu0 0
        %3112 = vmatprep.subr.bf16.mxu0 0
        %3113 = vmatpush1.bf16.msra.mxu0 0
        %3114 = vmatprep.subr.bf16.mxu0 0
        %3115 = vmatpush1.bf16.msra.mxu0 0
        %3116 = vmatprep.mubr.bf16.mxu0 0
        %3117 = vmatmul.mubr.bf16.gmra.mrb[0].mxu0 %v3079
        %v3118 = vpop.f32.mrb[0].mxu0
        %v3119 = vadd.f32 0.0, %v3118
        %v3120 = vpop.f32.mrb[0].mxu0
        %v3121 = vpop.f32.mrb[0].mxu0
        %v3122 = vpop.f32.mrb[0].mxu0
        %3123 = vdwg.mxu0
        %v3124 = vadd.f32 %v3074, %v3119
        %v3125 = vld [vmem:[%s3025] sm:$0xf]
        %v3126 = vld [vmem:[%s3025 + $0x4] sm:$0x1]
        %v3127 = vld [vmem:[%s1118] sm:$0x3]
        %v3130 = vunpack.c.l.b16 %v3125
        %v3131 = vunpack.c.l.b16 %v3126
        %v3132 = vpack.c.b16 %v3131, %v3130
        %v3134 = vshrl.u32 %v3132, 16
        %v3136 = vshll.u32 %v3132, 16
        %v3138 = vrot.slane %v3136, 1
        %v3139 = vor.u32 %v3134, %v3138
        %v3141 = vsel %vm689, %v3139, 0
        %v3144 = vand.u32 %v3127, %v696
        %3146 = vmatprep.subr.bf16.mxu0 0
        %3147 = vmatpush1.bf16.msra.mxu0 %v3144
        %3148 = vmatprep.subr.bf16.mxu0 0
        %3149 = vmatpush1.bf16.msra.mxu0 0
        %3150 = vmatprep.subr.bf16.mxu0 0
        %3151 = vmatpush1.bf16.msra.mxu0 0
        %3152 = vmatprep.subr.bf16.mxu0 0
        %3153 = vmatpush1.bf16.msra.mxu0 0
        %3154 = vmatprep.subr.bf16.mxu0 0
        %3155 = vmatpush1.bf16.msra.mxu0 0
        %3156 = vmatprep.subr.bf16.mxu0 0
        %3157 = vmatpush1.bf16.msra.mxu0 0
        %3158 = vmatprep.subr.bf16.mxu0 0
        %3159 = vmatpush1.bf16.msra.mxu0 0
        %3160 = vmatprep.subr.bf16.mxu0 0
        %3161 = vmatpush1.bf16.msra.mxu0 0
        %3162 = vmatprep.subr.bf16.mxu0 0
        %3163 = vmatpush1.bf16.msra.mxu0 0
        %3164 = vmatprep.subr.bf16.mxu0 0
        %3165 = vmatpush1.bf16.msra.mxu0 0
        %3166 = vmatprep.subr.bf16.mxu0 0
        %3167 = vmatpush1.bf16.msra.mxu0 0
        %3168 = vmatprep.subr.bf16.mxu0 0
        %3169 = vmatpush1.bf16.msra.mxu0 0
        %3170 = vmatprep.subr.bf16.mxu0 0
        %3171 = vmatpush1.bf16.msra.mxu0 0
        %3172 = vmatprep.subr.bf16.mxu0 0
        %3173 = vmatpush1.bf16.msra.mxu0 0
        %3174 = vmatprep.subr.bf16.mxu0 0
        %3175 = vmatpush1.bf16.msra.mxu0 0
        %3176 = vmatprep.subr.bf16.mxu0 0
        %3177 = vmatpush1.bf16.msra.mxu0 0
        %3178 = vmatprep.mubr.bf16.mxu0 0
        %3179 = vmatmul.mubr.bf16.gmra.mrb[0].mxu0 %v3141
        %v3180 = vpop.f32.mrb[0].mxu0
        %v3181 = vadd.f32 0.0, %v3180
        %v3182 = vpop.f32.mrb[0].mxu0
        %v3183 = vpop.f32.mrb[0].mxu0
        %v3184 = vpop.f32.mrb[0].mxu0
        %3185 = vdwg.mxu0
        %v3186 = vadd.f32 %v3124, %v3181
        %v3187 = vmul.f32 %v3186, %v1183
        %v3188 = vadd.f32 %v3187, %v1190
        %v3189 = vmin.f32 %v3188, 30.0
        %v3190 = vmul.f32 %v3189, 1.442695
        %v3191 = vpow.pop %v3190
        %v3192 = vadd.f32 %v3191, 2.0
        %v3193 = vmul.f32 %v3191, %v3192
        %v3194 = vadd.f32 %v3193, 2.0
        %v3195 = vrcp.pop %v3194
        %v3196 = vmul.f32 %v3195, 2.0
        %v3197 = vsub.f32 1.0, %v3196
        %v3198 = vmul.f32 %v3188, %v3197
        %v3199 = vpack.c.bf16 %v3198, %v3198
        %s3200 = scalar_lea.vmem %s667, 16 [#allocation3]
        %3201 = vst.msk [vmem:[%s3200] sm:$0xf] %vm1204, %v3199
        %s3202 = scalar_lea.vmem %s635, 40 [#allocation2]
        %v3203 = vld [vmem:[%s3202] sm:$0xf]
        %v3204 = vld [vmem:[%s672] sm:$0x3]
        %s3205 = scalar_lea.vmem %s635, 104 [#allocation2]
        %v3206 = vld [vmem:[%s3205] sm:$0xf]
        %v3207 = vld [vmem:[%s687] sm:$0x3]
        %v3209 = vsel %vm689, %v3206, 0
        %v3212 = vand.u32 %v3207, %v696
        %3214 = vmatprep.subr.bf16.mxu0 0
        %3215 = vmatpush1.bf16.msra.mxu0 %v3212
        %3216 = vmatprep.subr.bf16.mxu0 0
        %3217 = vmatpush1.bf16.msra.mxu0 0
        %3218 = vmatprep.subr.bf16.mxu0 0
        %3219 = vmatpush1.bf16.msra.mxu0 0
        %3220 = vmatprep.subr.bf16.mxu0 0
        %3221 = vmatpush1.bf16.msra.mxu0 0
        %3222 = vmatprep.subr.bf16.mxu0 0
        %3223 = vmatpush1.bf16.msra.mxu0 0
        %3224 = vmatprep.subr.bf16.mxu0 0
        %3225 = vmatpush1.bf16.msra.mxu0 0
        %3226 = vmatprep.subr.bf16.mxu0 0
        %3227 = vmatpush1.bf16.msra.mxu0 0
        %3228 = vmatprep.subr.bf16.mxu0 0
        %3229 = vmatpush1.bf16.msra.mxu0 0
        %3230 = vmatprep.subr.bf16.mxu0 0
        %3231 = vmatpush1.bf16.msra.mxu0 0
        %3232 = vmatprep.subr.bf16.mxu0 0
        %3233 = vmatpush1.bf16.msra.mxu0 0
        %3234 = vmatprep.subr.bf16.mxu0 0
        %3235 = vmatpush1.bf16.msra.mxu0 0
        %3236 = vmatprep.subr.bf16.mxu0 0
        %3237 = vmatpush1.bf16.msra.mxu0 0
        %3238 = vmatprep.subr.bf16.mxu0 0
        %3239 = vmatpush1.bf16.msra.mxu0 0
        %3240 = vmatprep.subr.bf16.mxu0 0
        %3241 = vmatpush1.bf16.msra.mxu0 0
        %3242 = vmatprep.subr.bf16.mxu0 0
        %3243 = vmatpush1.bf16.msra.mxu0 0
        %3244 = vmatprep.subr.bf16.mxu0 0
        %3245 = vmatpush1.bf16.msra.mxu0 0
        %3246 = vmatprep.mubr.bf16.mxu0 0
        %3247 = vmatmul.mubr.bf16.gmra.mrb[0].mxu0 %v3209
        %v3248 = vpop.f32.mrb[0].mxu0
        %v3249 = vadd.f32 0.0, %v3248
        %v3250 = vpop.f32.mrb[0].mxu0
        %v3251 = vpop.f32.mrb[0].mxu0
        %v3252 = vpop.f32.mrb[0].mxu0
        %3253 = vdwg.mxu0
        %v3255 = vsel %vm689, %v3203, 0
        %v3258 = vand.u32 %v3204, %v696
        %3260 = vmatprep.subr.bf16.mxu0 0
        %3261 = vmatpush1.bf16.msra.mxu0 %v3258
        %3262 = vmatprep.subr.bf16.mxu0 0
        %3263 = vmatpush1.bf16.msra.mxu0 0
        %3264 = vmatprep.subr.bf16.mxu0 0
        %3265 = vmatpush1.bf16.msra.mxu0 0
        %3266 = vmatprep.subr.bf16.mxu0 0
        %3267 = vmatpush1.bf16.msra.mxu0 0
        %3268 = vmatprep.subr.bf16.mxu0 0
        %3269 = vmatpush1.bf16.msra.mxu0 0
        %3270 = vmatprep.subr.bf16.mxu0 0
        %3271 = vmatpush1.bf16.msra.mxu0 0
        %3272 = vmatprep.subr.bf16.mxu0 0
        %3273 = vmatpush1.bf16.msra.mxu0 0
        %3274 = vmatprep.subr.bf16.mxu0 0
        %3275 = vmatpush1.bf16.msra.mxu0 0
        %3276 = vmatprep.subr.bf16.mxu0 0
        %3277 = vmatpush1.bf16.msra.mxu0 0
        %3278 = vmatprep.subr.bf16.mxu0 0
        %3279 = vmatpush1.bf16.msra.mxu0 0
        %3280 = vmatprep.subr.bf16.mxu0 0
        %3281 = vmatpush1.bf16.msra.mxu0 0
        %3282 = vmatprep.subr.bf16.mxu0 0
        %3283 = vmatpush1.bf16.msra.mxu0 0
        %3284 = vmatprep.subr.bf16.mxu0 0
        %3285 = vmatpush1.bf16.msra.mxu0 0
        %3286 = vmatprep.subr.bf16.mxu0 0
        %3287 = vmatpush1.bf16.msra.mxu0 0
        %3288 = vmatprep.subr.bf16.mxu0 0
        %3289 = vmatpush1.bf16.msra.mxu0 0
        %3290 = vmatprep.subr.bf16.mxu0 0
        %3291 = vmatpush1.bf16.msra.mxu0 0
        %3292 = vmatprep.mubr.bf16.mxu0 0
        %3293 = vmatmul.mubr.bf16.gmra.mrb[0].mxu0 %v3255
        %v3294 = vpop.f32.mrb[0].mxu0
        %v3295 = vadd.f32 %v3249, %v3294
        %v3296 = vpop.f32.mrb[0].mxu0
        %v3297 = vpop.f32.mrb[0].mxu0
        %v3298 = vpop.f32.mrb[0].mxu0
        %3299 = vdwg.mxu0
        %v3300 = vld [vmem:[%s3202] sm:$0xf]
        %v3301 = vld [vmem:[%s3202 + $0x4] sm:$0x1]
        %v3302 = vld [vmem:[%s788] sm:$0x3]
        %v3305 = vunpack.c.l.b16 %v3300
        %v3306 = vunpack.c.l.b16 %v3301
        %v3307 = vpack.c.b16 %v3306, %v3305
        %v3309 = vshrl.u32 %v3307, 16
        %v3311 = vshll.u32 %v3307, 16
        %v3313 = vrot.slane %v3311, 1
        %v3314 = vor.u32 %v3309, %v3313
        %v3316 = vsel %vm689, %v3314, 0
        %v3319 = vand.u32 %v3302, %v696
        %3321 = vmatprep.subr.bf16.mxu0 0
        %3322 = vmatpush1.bf16.msra.mxu0 %v3319
        %3323 = vmatprep.subr.bf16.mxu0 0
        %3324 = vmatpush1.bf16.msra.mxu0 0
        %3325 = vmatprep.subr.bf16.mxu0 0
        %3326 = vmatpush1.bf16.msra.mxu0 0
        %3327 = vmatprep.subr.bf16.mxu0 0
        %3328 = vmatpush1.bf16.msra.mxu0 0
        %3329 = vmatprep.subr.bf16.mxu0 0
        %3330 = vmatpush1.bf16.msra.mxu0 0
        %3331 = vmatprep.subr.bf16.mxu0 0
        %3332 = vmatpush1.bf16.msra.mxu0 0
        %3333 = vmatprep.subr.bf16.mxu0 0
        %3334 = vmatpush1.bf16.msra.mxu0 0
        %3335 = vmatprep.subr.bf16.mxu0 0
        %3336 = vmatpush1.bf16.msra.mxu0 0
        %3337 = vmatprep.subr.bf16.mxu0 0
        %3338 = vmatpush1.bf16.msra.mxu0 0
        %3339 = vmatprep.subr.bf16.mxu0 0
        %3340 = vmatpush1.bf16.msra.mxu0 0
        %3341 = vmatprep.subr.bf16.mxu0 0
        %3342 = vmatpush1.bf16.msra.mxu0 0
        %3343 = vmatprep.subr.bf16.mxu0 0
        %3344 = vmatpush1.bf16.msra.mxu0 0
        %3345 = vmatprep.subr.bf16.mxu0 0
        %3346 = vmatpush1.bf16.msra.mxu0 0
        %3347 = vmatprep.subr.bf16.mxu0 0
        %3348 = vmatpush1.bf16.msra.mxu0 0
        %3349 = vmatprep.subr.bf16.mxu0 0
        %3350 = vmatpush1.bf16.msra.mxu0 0
        %3351 = vmatprep.subr.bf16.mxu0 0
        %3352 = vmatpush1.bf16.msra.mxu0 0
        %3353 = vmatprep.mubr.bf16.mxu0 0
        %3354 = vmatmul.mubr.bf16.gmra.mrb[0].mxu0 %v3316
        %v3355 = vpop.f32.mrb[0].mxu0
        %v3356 = vadd.f32 0.0, %v3355
        %v3357 = vpop.f32.mrb[0].mxu0
        %v3358 = vpop.f32.mrb[0].mxu0
        %v3359 = vpop.f32.mrb[0].mxu0
        %3360 = vdwg.mxu0
        %v3361 = vadd.f32 %v3295, %v3356
        %s3362 = scalar_lea.vmem %s635, 168 [#allocation2]
        %v3363 = vld [vmem:[%s3362] sm:$0xf]
        %v3364 = vld [vmem:[%s851] sm:$0x3]
        %v3366 = vsel %vm689, %v3363, 0
        %v3369 = vand.u32 %v3364, %v696
        %3371 = vmatprep.subr.bf16.mxu0 0
        %3372 = vmatpush1.bf16.msra.mxu0 %v3369
        %3373 = vmatprep.subr.bf16.mxu0 0
        %3374 = vmatpush1.bf16.msra.mxu0 0
        %3375 = vmatprep.subr.bf16.mxu0 0
        %3376 = vmatpush1.bf16.msra.mxu0 0
        %3377 = vmatprep.subr.bf16.mxu0 0
        %3378 = vmatpush1.bf16.msra.mxu0 0
        %3379 = vmatprep.subr.bf16.mxu0 0
        %3380 = vmatpush1.bf16.msra.mxu0 0
        %3381 = vmatprep.subr.bf16.mxu0 0
        %3382 = vmatpush1.bf16.msra.mxu0 0
        %3383 = vmatprep.subr.bf16.mxu0 0
        %3384 = vmatpush1.bf16.msra.mxu0 0
        %3385 = vmatprep.subr.bf16.mxu0 0
        %3386 = vmatpush1.bf16.msra.mxu0 0
        %3387 = vmatprep.subr.bf16.mxu0 0
        %3388 = vmatpush1.bf16.msra.mxu0 0
        %3389 = vmatprep.subr.bf16.mxu0 0
        %3390 = vmatpush1.bf16.msra.mxu0 0
        %3391 = vmatprep.subr.bf16.mxu0 0
        %3392 = vmatpush1.bf16.msra.mxu0 0
        %3393 = vmatprep.subr.bf16.mxu0 0
        %3394 = vmatpush1.bf16.msra.mxu0 0
        %3395 = vmatprep.subr.bf16.mxu0 0
        %3396 = vmatpush1.bf16.msra.mxu0 0
        %3397 = vmatprep.subr.bf16.mxu0 0
        %3398 = vmatpush1.bf16.msra.mxu0 0
        %3399 = vmatprep.subr.bf16.mxu0 0
        %3400 = vmatpush1.bf16.msra.mxu0 0
        %3401 = vmatprep.subr.bf16.mxu0 0
        %3402 = vmatpush1.bf16.msra.mxu0 0
        %3403 = vmatprep.mubr.bf16.mxu0 0
        %3404 = vmatmul.mubr.bf16.gmra.mrb[0].mxu0 %v3366
        %v3405 = vpop.f32.mrb[0].mxu0
        %v3406 = vadd.f32 0.0, %v3405
        %v3407 = vpop.f32.mrb[0].mxu0
        %v3408 = vpop.f32.mrb[0].mxu0
        %v3409 = vpop.f32.mrb[0].mxu0
        %3410 = vdwg.mxu0
        %v3411 = vadd.f32 %v3361, %v3406
        %s3412 = scalar_lea.vmem %s635, 232 [#allocation2]
        %v3413 = vld [vmem:[%s3412] sm:$0xf]
        %v3414 = vld [vmem:[%s902] sm:$0x3]
        %v3416 = vsel %vm689, %v3413, 0
        %v3419 = vand.u32 %v3414, %v696
        %3421 = vmatprep.subr.bf16.mxu0 0
        %3422 = vmatpush1.bf16.msra.mxu0 %v3419
        %3423 = vmatprep.subr.bf16.mxu0 0
        %3424 = vmatpush1.bf16.msra.mxu0 0
        %3425 = vmatprep.subr.bf16.mxu0 0
        %3426 = vmatpush1.bf16.msra.mxu0 0
        %3427 = vmatprep.subr.bf16.mxu0 0
        %3428 = vmatpush1.bf16.msra.mxu0 0
        %3429 = vmatprep.subr.bf16.mxu0 0
        %3430 = vmatpush1.bf16.msra.mxu0 0
        %3431 = vmatprep.subr.bf16.mxu0 0
        %3432 = vmatpush1.bf16.msra.mxu0 0
        %3433 = vmatprep.subr.bf16.mxu0 0
        %3434 = vmatpush1.bf16.msra.mxu0 0
        %3435 = vmatprep.subr.bf16.mxu0 0
        %3436 = vmatpush1.bf16.msra.mxu0 0
        %3437 = vmatprep.subr.bf16.mxu0 0
        %3438 = vmatpush1.bf16.msra.mxu0 0
        %3439 = vmatprep.subr.bf16.mxu0 0
        %3440 = vmatpush1.bf16.msra.mxu0 0
        %3441 = vmatprep.subr.bf16.mxu0 0
        %3442 = vmatpush1.bf16.msra.mxu0 0
        %3443 = vmatprep.subr.bf16.mxu0 0
        %3444 = vmatpush1.bf16.msra.mxu0 0
        %3445 = vmatprep.subr.bf16.mxu0 0
        %3446 = vmatpush1.bf16.msra.mxu0 0
        %3447 = vmatprep.subr.bf16.mxu0 0
        %3448 = vmatpush1.bf16.msra.mxu0 0
        %3449 = vmatprep.subr.bf16.mxu0 0
        %3450 = vmatpush1.bf16.msra.mxu0 0
        %3451 = vmatprep.subr.bf16.mxu0 0
        %3452 = vmatpush1.bf16.msra.mxu0 0
        %3453 = vmatprep.mubr.bf16.mxu0 0
        %3454 = vmatmul.mubr.bf16.gmra.mrb[0].mxu0 %v3416
        %v3455 = vpop.f32.mrb[0].mxu0
        %v3456 = vadd.f32 0.0, %v3455
        %v3457 = vpop.f32.mrb[0].mxu0
        %v3458 = vpop.f32.mrb[0].mxu0
        %v3459 = vpop.f32.mrb[0].mxu0
        %3460 = vdwg.mxu0
        %v3461 = vadd.f32 %v3411, %v3456
        %v3462 = vld [vmem:[%s3362] sm:$0xf]
        %v3463 = vld [vmem:[%s3362 + $0x4] sm:$0x1]
        %v3464 = vld [vmem:[%s953] sm:$0x3]
        %v3467 = vunpack.c.l.b16 %v3462
        %v3468 = vunpack.c.l.b16 %v3463
        %v3469 = vpack.c.b16 %v3468, %v3467
        %v3471 = vshrl.u32 %v3469, 16
        %v3473 = vshll.u32 %v3469, 16
        %v3475 = vrot.slane %v3473, 1
        %v3476 = vor.u32 %v3471, %v3475
        %v3478 = vsel %vm689, %v3476, 0
        %v3481 = vand.u32 %v3464, %v696
        %3483 = vmatprep.subr.bf16.mxu0 0
        %3484 = vmatpush1.bf16.msra.mxu0 %v3481
        %3485 = vmatprep.subr.bf16.mxu0 0
        %3486 = vmatpush1.bf16.msra.mxu0 0
        %3487 = vmatprep.subr.bf16.mxu0 0
        %3488 = vmatpush1.bf16.msra.mxu0 0
        %3489 = vmatprep.subr.bf16.mxu0 0
        %3490 = vmatpush1.bf16.msra.mxu0 0
        %3491 = vmatprep.subr.bf16.mxu0 0
        %3492 = vmatpush1.bf16.msra.mxu0 0
        %3493 = vmatprep.subr.bf16.mxu0 0
        %3494 = vmatpush1.bf16.msra.mxu0 0
        %3495 = vmatprep.subr.bf16.mxu0 0
        %3496 = vmatpush1.bf16.msra.mxu0 0
        %3497 = vmatprep.subr.bf16.mxu0 0
        %3498 = vmatpush1.bf16.msra.mxu0 0
        %3499 = vmatprep.subr.bf16.mxu0 0
        %3500 = vmatpush1.bf16.msra.mxu0 0
        %3501 = vmatprep.subr.bf16.mxu0 0
        %3502 = vmatpush1.bf16.msra.mxu0 0
        %3503 = vmatprep.subr.bf16.mxu0 0
        %3504 = vmatpush1.bf16.msra.mxu0 0
        %3505 = vmatprep.subr.bf16.mxu0 0
        %3506 = vmatpush1.bf16.msra.mxu0 0
        %3507 = vmatprep.subr.bf16.mxu0 0
        %3508 = vmatpush1.bf16.msra.mxu0 0
        %3509 = vmatprep.subr.bf16.mxu0 0
        %3510 = vmatpush1.bf16.msra.mxu0 0
        %3511 = vmatprep.subr.bf16.mxu0 0
        %3512 = vmatpush1.bf16.msra.mxu0 0
        %3513 = vmatprep.subr.bf16.mxu0 0
        %3514 = vmatpush1.bf16.msra.mxu0 0
        %3515 = vmatprep.mubr.bf16.mxu0 0
        %3516 = vmatmul.mubr.bf16.gmra.mrb[0].mxu0 %v3478
        %v3517 = vpop.f32.mrb[0].mxu0
        %v3518 = vadd.f32 0.0, %v3517
        %v3519 = vpop.f32.mrb[0].mxu0
        %v3520 = vpop.f32.mrb[0].mxu0
        %v3521 = vpop.f32.mrb[0].mxu0
        %3522 = vdwg.mxu0
        %v3523 = vadd.f32 %v3461, %v3518
        %s3524 = scalar_lea.vmem %s635, 296 [#allocation2]
        %v3525 = vld [vmem:[%s3524] sm:$0xf]
        %v3526 = vld [vmem:[%s1016] sm:$0x3]
        %v3528 = vsel %vm689, %v3525, 0
        %v3531 = vand.u32 %v3526, %v696
        %3533 = vmatprep.subr.bf16.mxu0 0
        %3534 = vmatpush1.bf16.msra.mxu0 %v3531
        %3535 = vmatprep.subr.bf16.mxu0 0
        %3536 = vmatpush1.bf16.msra.mxu0 0
        %3537 = vmatprep.subr.bf16.mxu0 0
        %3538 = vmatpush1.bf16.msra.mxu0 0
        %3539 = vmatprep.subr.bf16.mxu0 0
        %3540 = vmatpush1.bf16.msra.mxu0 0
        %3541 = vmatprep.subr.bf16.mxu0 0
        %3542 = vmatpush1.bf16.msra.mxu0 0
        %3543 = vmatprep.subr.bf16.mxu0 0
        %3544 = vmatpush1.bf16.msra.mxu0 0
        %3545 = vmatprep.subr.bf16.mxu0 0
        %3546 = vmatpush1.bf16.msra.mxu0 0
        %3547 = vmatprep.subr.bf16.mxu0 0
        %3548 = vmatpush1.bf16.msra.mxu0 0
        %3549 = vmatprep.subr.bf16.mxu0 0
        %3550 = vmatpush1.bf16.msra.mxu0 0
        %3551 = vmatprep.subr.bf16.mxu0 0
        %3552 = vmatpush1.bf16.msra.mxu0 0
        %3553 = vmatprep.subr.bf16.mxu0 0
        %3554 = vmatpush1.bf16.msra.mxu0 0
        %3555 = vmatprep.subr.bf16.mxu0 0
        %3556 = vmatpush1.bf16.msra.mxu0 0
        %3557 = vmatprep.subr.bf16.mxu0 0
        %3558 = vmatpush1.bf16.msra.mxu0 0
        %3559 = vmatprep.subr.bf16.mxu0 0
        %3560 = vmatpush1.bf16.msra.mxu0 0
        %3561 = vmatprep.subr.bf16.mxu0 0
        %3562 = vmatpush1.bf16.msra.mxu0 0
        %3563 = vmatprep.subr.bf16.mxu0 0
        %3564 = vmatpush1.bf16.msra.mxu0 0
        %3565 = vmatprep.mubr.bf16.mxu0 0
        %3566 = vmatmul.mubr.bf16.gmra.mrb[0].mxu0 %v3528
        %v3567 = vpop.f32.mrb[0].mxu0
        %v3568 = vadd.f32 0.0, %v3567
        %v3569 = vpop.f32.mrb[0].mxu0
        %v3570 = vpop.f32.mrb[0].mxu0
        %v3571 = vpop.f32.mrb[0].mxu0
        %3572 = vdwg.mxu0
        %v3573 = vadd.f32 %v3523, %v3568
        %s3574 = scalar_lea.vmem %s635, 360 [#allocation2]
        %v3575 = vld [vmem:[%s3574] sm:$0xf]
        %v3576 = vld [vmem:[%s1067] sm:$0x3]
        %v3578 = vsel %vm689, %v3575, 0
        %v3581 = vand.u32 %v3576, %v696
        %3583 = vmatprep.subr.bf16.mxu0 0
        %3584 = vmatpush1.bf16.msra.mxu0 %v3581
        %3585 = vmatprep.subr.bf16.mxu0 0
        %3586 = vmatpush1.bf16.msra.mxu0 0
        %3587 = vmatprep.subr.bf16.mxu0 0
        %3588 = vmatpush1.bf16.msra.mxu0 0
        %3589 = vmatprep.subr.bf16.mxu0 0
        %3590 = vmatpush1.bf16.msra.mxu0 0
        %3591 = vmatprep.subr.bf16.mxu0 0
        %3592 = vmatpush1.bf16.msra.mxu0 0
        %3593 = vmatprep.subr.bf16.mxu0 0
        %3594 = vmatpush1.bf16.msra.mxu0 0
        %3595 = vmatprep.subr.bf16.mxu0 0
        %3596 = vmatpush1.bf16.msra.mxu0 0
        %3597 = vmatprep.subr.bf16.mxu0 0
        %3598 = vmatpush1.bf16.msra.mxu0 0
        %3599 = vmatprep.subr.bf16.mxu0 0
        %3600 = vmatpush1.bf16.msra.mxu0 0
        %3601 = vmatprep.subr.bf16.mxu0 0
        %3602 = vmatpush1.bf16.msra.mxu0 0
        %3603 = vmatprep.subr.bf16.mxu0 0
        %3604 = vmatpush1.bf16.msra.mxu0 0
        %3605 = vmatprep.subr.bf16.mxu0 0
        %3606 = vmatpush1.bf16.msra.mxu0 0
        %3607 = vmatprep.subr.bf16.mxu0 0
        %3608 = vmatpush1.bf16.msra.mxu0 0
        %3609 = vmatprep.subr.bf16.mxu0 0
        %3610 = vmatpush1.bf16.msra.mxu0 0
        %3611 = vmatprep.subr.bf16.mxu0 0
        %3612 = vmatpush1.bf16.msra.mxu0 0
        %3613 = vmatprep.subr.bf16.mxu0 0
        %3614 = vmatpush1.bf16.msra.mxu0 0
        %3615 = vmatprep.mubr.bf16.mxu0 0
        %3616 = vmatmul.mubr.bf16.gmra.mrb[0].mxu0 %v3578
        %v3617 = vpop.f32.mrb[0].mxu0
        %v3618 = vadd.f32 0.0, %v3617
        %v3619 = vpop.f32.mrb[0].mxu0
        %v3620 = vpop.f32.mrb[0].mxu0
        %v3621 = vpop.f32.mrb[0].mxu0
        %3622 = vdwg.mxu0
        %v3623 = vadd.f32 %v3573, %v3618
        %v3624 = vld [vmem:[%s3524] sm:$0xf]
        %v3625 = vld [vmem:[%s3524 + $0x4] sm:$0x1]
        %v3626 = vld [vmem:[%s1118] sm:$0x3]
        %v3629 = vunpack.c.l.b16 %v3624
        %v3630 = vunpack.c.l.b16 %v3625
        %v3631 = vpack.c.b16 %v3630, %v3629
        %v3633 = vshrl.u32 %v3631, 16
        %v3635 = vshll.u32 %v3631, 16
        %v3637 = vrot.slane %v3635, 1
        %v3638 = vor.u32 %v3633, %v3637
        %v3640 = vsel %vm689, %v3638, 0
        %v3643 = vand.u32 %v3626, %v696
        %3645 = vmatprep.subr.bf16.mxu0 0
        %3646 = vmatpush1.bf16.msra.mxu0 %v3643
        %3647 = vmatprep.subr.bf16.mxu0 0
        %3648 = vmatpush1.bf16.msra.mxu0 0
        %3649 = vmatprep.subr.bf16.mxu0 0
        %3650 = vmatpush1.bf16.msra.mxu0 0
        %3651 = vmatprep.subr.bf16.mxu0 0
        %3652 = vmatpush1.bf16.msra.mxu0 0
        %3653 = vmatprep.subr.bf16.mxu0 0
        %3654 = vmatpush1.bf16.msra.mxu0 0
        %3655 = vmatprep.subr.bf16.mxu0 0
        %3656 = vmatpush1.bf16.msra.mxu0 0
        %3657 = vmatprep.subr.bf16.mxu0 0
        %3658 = vmatpush1.bf16.msra.mxu0 0
        %3659 = vmatprep.subr.bf16.mxu0 0
        %3660 = vmatpush1.bf16.msra.mxu0 0
        %3661 = vmatprep.subr.bf16.mxu0 0
        %3662 = vmatpush1.bf16.msra.mxu0 0
        %3663 = vmatprep.subr.bf16.mxu0 0
        %3664 = vmatpush1.bf16.msra.mxu0 0
        %3665 = vmatprep.subr.bf16.mxu0 0
        %3666 = vmatpush1.bf16.msra.mxu0 0
        %3667 = vmatprep.subr.bf16.mxu0 0
        %3668 = vmatpush1.bf16.msra.mxu0 0
        %3669 = vmatprep.subr.bf16.mxu0 0
        %3670 = vmatpush1.bf16.msra.mxu0 0
        %3671 = vmatprep.subr.bf16.mxu0 0
        %3672 = vmatpush1.bf16.msra.mxu0 0
        %3673 = vmatprep.subr.bf16.mxu0 0
        %3674 = vmatpush1.bf16.msra.mxu0 0
        %3675 = vmatprep.subr.bf16.mxu0 0
        %3676 = vmatpush1.bf16.msra.mxu0 0
        %3677 = vmatprep.mubr.bf16.mxu0 0
        %3678 = vmatmul.mubr.bf16.gmra.mrb[0].mxu0 %v3640
        %v3679 = vpop.f32.mrb[0].mxu0
        %v3680 = vadd.f32 0.0, %v3679
        %v3681 = vpop.f32.mrb[0].mxu0
        %v3682 = vpop.f32.mrb[0].mxu0
        %v3683 = vpop.f32.mrb[0].mxu0
        %3684 = vdwg.mxu0
        %v3685 = vadd.f32 %v3623, %v3680
        %v3686 = vmul.f32 %v3685, %v1183
        %v3687 = vadd.f32 %v3686, %v1190
        %v3688 = vmin.f32 %v3687, 30.0
        %v3689 = vmul.f32 %v3688, 1.442695
        %v3690 = vpow.pop %v3689
        %v3691 = vadd.f32 %v3690, 2.0
        %v3692 = vmul.f32 %v3690, %v3691
        %v3693 = vadd.f32 %v3692, 2.0
        %v3694 = vrcp.pop %v3693
        %v3695 = vmul.f32 %v3694, 2.0
        %v3696 = vsub.f32 1.0, %v3695
        %v3697 = vmul.f32 %v3687, %v3696
        %v3698 = vpack.c.bf16 %v3697, %v3697
        %s3699 = scalar_lea.vmem %s667, 20 [#allocation3]
        %3700 = vst.msk [vmem:[%s3699] sm:$0xf] %vm1204, %v3698
        %s3701 = scalar_lea.vmem %s635, 48 [#allocation2]
        %v3702 = vld [vmem:[%s3701] sm:$0xf]
        %v3703 = vld [vmem:[%s672] sm:$0x3]
        %s3704 = scalar_lea.vmem %s635, 112 [#allocation2]
        %v3705 = vld [vmem:[%s3704] sm:$0xf]
        %v3706 = vld [vmem:[%s687] sm:$0x3]
        %v3708 = vsel %vm689, %v3705, 0
        %v3711 = vand.u32 %v3706, %v696
        %3713 = vmatprep.subr.bf16.mxu0 0
        %3714 = vmatpush1.bf16.msra.mxu0 %v3711
        %3715 = vmatprep.subr.bf16.mxu0 0
        %3716 = vmatpush1.bf16.msra.mxu0 0
        %3717 = vmatprep.subr.bf16.mxu0 0
        %3718 = vmatpush1.bf16.msra.mxu0 0
        %3719 = vmatprep.subr.bf16.mxu0 0
        %3720 = vmatpush1.bf16.msra.mxu0 0
        %3721 = vmatprep.subr.bf16.mxu0 0
        %3722 = vmatpush1.bf16.msra.mxu0 0
        %3723 = vmatprep.subr.bf16.mxu0 0
        %3724 = vmatpush1.bf16.msra.mxu0 0
        %3725 = vmatprep.subr.bf16.mxu0 0
        %3726 = vmatpush1.bf16.msra.mxu0 0
        %3727 = vmatprep.subr.bf16.mxu0 0
        %3728 = vmatpush1.bf16.msra.mxu0 0
        %3729 = vmatprep.subr.bf16.mxu0 0
        %3730 = vmatpush1.bf16.msra.mxu0 0
        %3731 = vmatprep.subr.bf16.mxu0 0
        %3732 = vmatpush1.bf16.msra.mxu0 0
        %3733 = vmatprep.subr.bf16.mxu0 0
        %3734 = vmatpush1.bf16.msra.mxu0 0
        %3735 = vmatprep.subr.bf16.mxu0 0
        %3736 = vmatpush1.bf16.msra.mxu0 0
        %3737 = vmatprep.subr.bf16.mxu0 0
        %3738 = vmatpush1.bf16.msra.mxu0 0
        %3739 = vmatprep.subr.bf16.mxu0 0
        %3740 = vmatpush1.bf16.msra.mxu0 0
        %3741 = vmatprep.subr.bf16.mxu0 0
        %3742 = vmatpush1.bf16.msra.mxu0 0
        %3743 = vmatprep.subr.bf16.mxu0 0
        %3744 = vmatpush1.bf16.msra.mxu0 0
        %3745 = vmatprep.mubr.bf16.mxu0 0
        %3746 = vmatmul.mubr.bf16.gmra.mrb[0].mxu0 %v3708
        %v3747 = vpop.f32.mrb[0].mxu0
        %v3748 = vadd.f32 0.0, %v3747
        %v3749 = vpop.f32.mrb[0].mxu0
        %v3750 = vpop.f32.mrb[0].mxu0
        %v3751 = vpop.f32.mrb[0].mxu0
        %3752 = vdwg.mxu0
        %v3754 = vsel %vm689, %v3702, 0
        %v3757 = vand.u32 %v3703, %v696
        %3759 = vmatprep.subr.bf16.mxu0 0
        %3760 = vmatpush1.bf16.msra.mxu0 %v3757
        %3761 = vmatprep.subr.bf16.mxu0 0
        %3762 = vmatpush1.bf16.msra.mxu0 0
        %3763 = vmatprep.subr.bf16.mxu0 0
        %3764 = vmatpush1.bf16.msra.mxu0 0
        %3765 = vmatprep.subr.bf16.mxu0 0
        %3766 = vmatpush1.bf16.msra.mxu0 0
        %3767 = vmatprep.subr.bf16.mxu0 0
        %3768 = vmatpush1.bf16.msra.mxu0 0
        %3769 = vmatprep.subr.bf16.mxu0 0
        %3770 = vmatpush1.bf16.msra.mxu0 0
        %3771 = vmatprep.subr.bf16.mxu0 0
        %3772 = vmatpush1.bf16.msra.mxu0 0
        %3773 = vmatprep.subr.bf16.mxu0 0
        %3774 = vmatpush1.bf16.msra.mxu0 0
        %3775 = vmatprep.subr.bf16.mxu0 0
        %3776 = vmatpush1.bf16.msra.mxu0 0
        %3777 = vmatprep.subr.bf16.mxu0 0
        %3778 = vmatpush1.bf16.msra.mxu0 0
        %3779 = vmatprep.subr.bf16.mxu0 0
        %3780 = vmatpush1.bf16.msra.mxu0 0
        %3781 = vmatprep.subr.bf16.mxu0 0
        %3782 = vmatpush1.bf16.msra.mxu0 0
        %3783 = vmatprep.subr.bf16.mxu0 0
        %3784 = vmatpush1.bf16.msra.mxu0 0
        %3785 = vmatprep.subr.bf16.mxu0 0
        %3786 = vmatpush1.bf16.msra.mxu0 0
        %3787 = vmatprep.subr.bf16.mxu0 0
        %3788 = vmatpush1.bf16.msra.mxu0 0
        %3789 = vmatprep.subr.bf16.mxu0 0
        %3790 = vmatpush1.bf16.msra.mxu0 0
        %3791 = vmatprep.mubr.bf16.mxu0 0
        %3792 = vmatmul.mubr.bf16.gmra.mrb[0].mxu0 %v3754
        %v3793 = vpop.f32.mrb[0].mxu0
        %v3794 = vadd.f32 %v3748, %v3793
        %v3795 = vpop.f32.mrb[0].mxu0
        %v3796 = vpop.f32.mrb[0].mxu0
        %v3797 = vpop.f32.mrb[0].mxu0
        %3798 = vdwg.mxu0
        %v3799 = vld [vmem:[%s3701] sm:$0xf]
        %v3800 = vld [vmem:[%s3701 + $0x4] sm:$0x1]
        %v3801 = vld [vmem:[%s788] sm:$0x3]
        %v3804 = vunpack.c.l.b16 %v3799
        %v3805 = vunpack.c.l.b16 %v3800
        %v3806 = vpack.c.b16 %v3805, %v3804
        %v3808 = vshrl.u32 %v3806, 16
        %v3810 = vshll.u32 %v3806, 16
        %v3812 = vrot.slane %v3810, 1
        %v3813 = vor.u32 %v3808, %v3812
        %v3815 = vsel %vm689, %v3813, 0
        %v3818 = vand.u32 %v3801, %v696
        %3820 = vmatprep.subr.bf16.mxu0 0
        %3821 = vmatpush1.bf16.msra.mxu0 %v3818
        %3822 = vmatprep.subr.bf16.mxu0 0
        %3823 = vmatpush1.bf16.msra.mxu0 0
        %3824 = vmatprep.subr.bf16.mxu0 0
        %3825 = vmatpush1.bf16.msra.mxu0 0
        %3826 = vmatprep.subr.bf16.mxu0 0
        %3827 = vmatpush1.bf16.msra.mxu0 0
        %3828 = vmatprep.subr.bf16.mxu0 0
        %3829 = vmatpush1.bf16.msra.mxu0 0
        %3830 = vmatprep.subr.bf16.mxu0 0
        %3831 = vmatpush1.bf16.msra.mxu0 0
        %3832 = vmatprep.subr.bf16.mxu0 0
        %3833 = vmatpush1.bf16.msra.mxu0 0
        %3834 = vmatprep.subr.bf16.mxu0 0
        %3835 = vmatpush1.bf16.msra.mxu0 0
        %3836 = vmatprep.subr.bf16.mxu0 0
        %3837 = vmatpush1.bf16.msra.mxu0 0
        %3838 = vmatprep.subr.bf16.mxu0 0
        %3839 = vmatpush1.bf16.msra.mxu0 0
        %3840 = vmatprep.subr.bf16.mxu0 0
        %3841 = vmatpush1.bf16.msra.mxu0 0
        %3842 = vmatprep.subr.bf16.mxu0 0
        %3843 = vmatpush1.bf16.msra.mxu0 0
        %3844 = vmatprep.subr.bf16.mxu0 0
        %3845 = vmatpush1.bf16.msra.mxu0 0
        %3846 = vmatprep.subr.bf16.mxu0 0
        %3847 = vmatpush1.bf16.msra.mxu0 0
        %3848 = vmatprep.subr.bf16.mxu0 0
        %3849 = vmatpush1.bf16.msra.mxu0 0
        %3850 = vmatprep.subr.bf16.mxu0 0
        %3851 = vmatpush1.bf16.msra.mxu0 0
        %3852 = vmatprep.mubr.bf16.mxu0 0
        %3853 = vmatmul.mubr.bf16.gmra.mrb[0].mxu0 %v3815
        %v3854 = vpop.f32.mrb[0].mxu0
        %v3855 = vadd.f32 0.0, %v3854
        %v3856 = vpop.f32.mrb[0].mxu0
        %v3857 = vpop.f32.mrb[0].mxu0
        %v3858 = vpop.f32.mrb[0].mxu0
        %3859 = vdwg.mxu0
        %v3860 = vadd.f32 %v3794, %v3855
        %s3861 = scalar_lea.vmem %s635, 176 [#allocation2]
        %v3862 = vld [vmem:[%s3861] sm:$0xf]
        %v3863 = vld [vmem:[%s851] sm:$0x3]
        %v3865 = vsel %vm689, %v3862, 0
        %v3868 = vand.u32 %v3863, %v696
        %3870 = vmatprep.subr.bf16.mxu0 0
        %3871 = vmatpush1.bf16.msra.mxu0 %v3868
        %3872 = vmatprep.subr.bf16.mxu0 0
        %3873 = vmatpush1.bf16.msra.mxu0 0
        %3874 = vmatprep.subr.bf16.mxu0 0
        %3875 = vmatpush1.bf16.msra.mxu0 0
        %3876 = vmatprep.subr.bf16.mxu0 0
        %3877 = vmatpush1.bf16.msra.mxu0 0
        %3878 = vmatprep.subr.bf16.mxu0 0
        %3879 = vmatpush1.bf16.msra.mxu0 0
        %3880 = vmatprep.subr.bf16.mxu0 0
        %3881 = vmatpush1.bf16.msra.mxu0 0
        %3882 = vmatprep.subr.bf16.mxu0 0
        %3883 = vmatpush1.bf16.msra.mxu0 0
        %3884 = vmatprep.subr.bf16.mxu0 0
        %3885 = vmatpush1.bf16.msra.mxu0 0
        %3886 = vmatprep.subr.bf16.mxu0 0
        %3887 = vmatpush1.bf16.msra.mxu0 0
        %3888 = vmatprep.subr.bf16.mxu0 0
        %3889 = vmatpush1.bf16.msra.mxu0 0
        %3890 = vmatprep.subr.bf16.mxu0 0
        %3891 = vmatpush1.bf16.msra.mxu0 0
        %3892 = vmatprep.subr.bf16.mxu0 0
        %3893 = vmatpush1.bf16.msra.mxu0 0
        %3894 = vmatprep.subr.bf16.mxu0 0
        %3895 = vmatpush1.bf16.msra.mxu0 0
        %3896 = vmatprep.subr.bf16.mxu0 0
        %3897 = vmatpush1.bf16.msra.mxu0 0
        %3898 = vmatprep.subr.bf16.mxu0 0
        %3899 = vmatpush1.bf16.msra.mxu0 0
        %3900 = vmatprep.subr.bf16.mxu0 0
        %3901 = vmatpush1.bf16.msra.mxu0 0
        %3902 = vmatprep.mubr.bf16.mxu0 0
        %3903 = vmatmul.mubr.bf16.gmra.mrb[0].mxu0 %v3865
        %v3904 = vpop.f32.mrb[0].mxu0
        %v3905 = vadd.f32 0.0, %v3904
        %v3906 = vpop.f32.mrb[0].mxu0
        %v3907 = vpop.f32.mrb[0].mxu0
        %v3908 = vpop.f32.mrb[0].mxu0
        %3909 = vdwg.mxu0
        %v3910 = vadd.f32 %v3860, %v3905
        %s3911 = scalar_lea.vmem %s635, 240 [#allocation2]
        %v3912 = vld [vmem:[%s3911] sm:$0xf]
        %v3913 = vld [vmem:[%s902] sm:$0x3]
        %v3915 = vsel %vm689, %v3912, 0
        %v3918 = vand.u32 %v3913, %v696
        %3920 = vmatprep.subr.bf16.mxu0 0
        %3921 = vmatpush1.bf16.msra.mxu0 %v3918
        %3922 = vmatprep.subr.bf16.mxu0 0
        %3923 = vmatpush1.bf16.msra.mxu0 0
        %3924 = vmatprep.subr.bf16.mxu0 0
        %3925 = vmatpush1.bf16.msra.mxu0 0
        %3926 = vmatprep.subr.bf16.mxu0 0
        %3927 = vmatpush1.bf16.msra.mxu0 0
        %3928 = vmatprep.subr.bf16.mxu0 0
        %3929 = vmatpush1.bf16.msra.mxu0 0
        %3930 = vmatprep.subr.bf16.mxu0 0
        %3931 = vmatpush1.bf16.msra.mxu0 0
        %3932 = vmatprep.subr.bf16.mxu0 0
        %3933 = vmatpush1.bf16.msra.mxu0 0
        %3934 = vmatprep.subr.bf16.mxu0 0
        %3935 = vmatpush1.bf16.msra.mxu0 0
        %3936 = vmatprep.subr.bf16.mxu0 0
        %3937 = vmatpush1.bf16.msra.mxu0 0
        %3938 = vmatprep.subr.bf16.mxu0 0
        %3939 = vmatpush1.bf16.msra.mxu0 0
        %3940 = vmatprep.subr.bf16.mxu0 0
        %3941 = vmatpush1.bf16.msra.mxu0 0
        %3942 = vmatprep.subr.bf16.mxu0 0
        %3943 = vmatpush1.bf16.msra.mxu0 0
        %3944 = vmatprep.subr.bf16.mxu0 0
        %3945 = vmatpush1.bf16.msra.mxu0 0
        %3946 = vmatprep.subr.bf16.mxu0 0
        %3947 = vmatpush1.bf16.msra.mxu0 0
        %3948 = vmatprep.subr.bf16.mxu0 0
        %3949 = vmatpush1.bf16.msra.mxu0 0
        %3950 = vmatprep.subr.bf16.mxu0 0
        %3951 = vmatpush1.bf16.msra.mxu0 0
        %3952 = vmatprep.mubr.bf16.mxu0 0
        %3953 = vmatmul.mubr.bf16.gmra.mrb[0].mxu0 %v3915
        %v3954 = vpop.f32.mrb[0].mxu0
        %v3955 = vadd.f32 0.0, %v3954
        %v3956 = vpop.f32.mrb[0].mxu0
        %v3957 = vpop.f32.mrb[0].mxu0
        %v3958 = vpop.f32.mrb[0].mxu0
        %3959 = vdwg.mxu0
        %v3960 = vadd.f32 %v3910, %v3955
        %v3961 = vld [vmem:[%s3861] sm:$0xf]
        %v3962 = vld [vmem:[%s3861 + $0x4] sm:$0x1]
        %v3963 = vld [vmem:[%s953] sm:$0x3]
        %v3966 = vunpack.c.l.b16 %v3961
        %v3967 = vunpack.c.l.b16 %v3962
        %v3968 = vpack.c.b16 %v3967, %v3966
        %v3970 = vshrl.u32 %v3968, 16
        %v3972 = vshll.u32 %v3968, 16
        %v3974 = vrot.slane %v3972, 1
        %v3975 = vor.u32 %v3970, %v3974
        %v3977 = vsel %vm689, %v3975, 0
        %v3980 = vand.u32 %v3963, %v696
        %3982 = vmatprep.subr.bf16.mxu0 0
        %3983 = vmatpush1.bf16.msra.mxu0 %v3980
        %3984 = vmatprep.subr.bf16.mxu0 0
        %3985 = vmatpush1.bf16.msra.mxu0 0
        %3986 = vmatprep.subr.bf16.mxu0 0
        %3987 = vmatpush1.bf16.msra.mxu0 0
        %3988 = vmatprep.subr.bf16.mxu0 0
        %3989 = vmatpush1.bf16.msra.mxu0 0
        %3990 = vmatprep.subr.bf16.mxu0 0
        %3991 = vmatpush1.bf16.msra.mxu0 0
        %3992 = vmatprep.subr.bf16.mxu0 0
        %3993 = vmatpush1.bf16.msra.mxu0 0
        %3994 = vmatprep.subr.bf16.mxu0 0
        %3995 = vmatpush1.bf16.msra.mxu0 0
        %3996 = vmatprep.subr.bf16.mxu0 0
        %3997 = vmatpush1.bf16.msra.mxu0 0
        %3998 = vmatprep.subr.bf16.mxu0 0
        %3999 = vmatpush1.bf16.msra.mxu0 0
        %4000 = vmatprep.subr.bf16.mxu0 0
        %4001 = vmatpush1.bf16.msra.mxu0 0
        %4002 = vmatprep.subr.bf16.mxu0 0
        %4003 = vmatpush1.bf16.msra.mxu0 0
        %4004 = vmatprep.subr.bf16.mxu0 0
        %4005 = vmatpush1.bf16.msra.mxu0 0
        %4006 = vmatprep.subr.bf16.mxu0 0
        %4007 = vmatpush1.bf16.msra.mxu0 0
        %4008 = vmatprep.subr.bf16.mxu0 0
        %4009 = vmatpush1.bf16.msra.mxu0 0
        %4010 = vmatprep.subr.bf16.mxu0 0
        %4011 = vmatpush1.bf16.msra.mxu0 0
        %4012 = vmatprep.subr.bf16.mxu0 0
        %4013 = vmatpush1.bf16.msra.mxu0 0
        %4014 = vmatprep.mubr.bf16.mxu0 0
        %4015 = vmatmul.mubr.bf16.gmra.mrb[0].mxu0 %v3977
        %v4016 = vpop.f32.mrb[0].mxu0
        %v4017 = vadd.f32 0.0, %v4016
        %v4018 = vpop.f32.mrb[0].mxu0
        %v4019 = vpop.f32.mrb[0].mxu0
        %v4020 = vpop.f32.mrb[0].mxu0
        %4021 = vdwg.mxu0
        %v4022 = vadd.f32 %v3960, %v4017
        %s4023 = scalar_lea.vmem %s635, 304 [#allocation2]
        %v4024 = vld [vmem:[%s4023] sm:$0xf]
        %v4025 = vld [vmem:[%s1016] sm:$0x3]
        %v4027 = vsel %vm689, %v4024, 0
        %v4030 = vand.u32 %v4025, %v696
        %4032 = vmatprep.subr.bf16.mxu0 0
        %4033 = vmatpush1.bf16.msra.mxu0 %v4030
        %4034 = vmatprep.subr.bf16.mxu0 0
        %4035 = vmatpush1.bf16.msra.mxu0 0
        %4036 = vmatprep.subr.bf16.mxu0 0
        %4037 = vmatpush1.bf16.msra.mxu0 0
        %4038 = vmatprep.subr.bf16.mxu0 0
        %4039 = vmatpush1.bf16.msra.mxu0 0
        %4040 = vmatprep.subr.bf16.mxu0 0
        %4041 = vmatpush1.bf16.msra.mxu0 0
        %4042 = vmatprep.subr.bf16.mxu0 0
        %4043 = vmatpush1.bf16.msra.mxu0 0
        %4044 = vmatprep.subr.bf16.mxu0 0
        %4045 = vmatpush1.bf16.msra.mxu0 0
        %4046 = vmatprep.subr.bf16.mxu0 0
        %4047 = vmatpush1.bf16.msra.mxu0 0
        %4048 = vmatprep.subr.bf16.mxu0 0
        %4049 = vmatpush1.bf16.msra.mxu0 0
        %4050 = vmatprep.subr.bf16.mxu0 0
        %4051 = vmatpush1.bf16.msra.mxu0 0
        %4052 = vmatprep.subr.bf16.mxu0 0
        %4053 = vmatpush1.bf16.msra.mxu0 0
        %4054 = vmatprep.subr.bf16.mxu0 0
        %4055 = vmatpush1.bf16.msra.mxu0 0
        %4056 = vmatprep.subr.bf16.mxu0 0
        %4057 = vmatpush1.bf16.msra.mxu0 0
        %4058 = vmatprep.subr.bf16.mxu0 0
        %4059 = vmatpush1.bf16.msra.mxu0 0
        %4060 = vmatprep.subr.bf16.mxu0 0
        %4061 = vmatpush1.bf16.msra.mxu0 0
        %4062 = vmatprep.subr.bf16.mxu0 0
        %4063 = vmatpush1.bf16.msra.mxu0 0
        %4064 = vmatprep.mubr.bf16.mxu0 0
        %4065 = vmatmul.mubr.bf16.gmra.mrb[0].mxu0 %v4027
        %v4066 = vpop.f32.mrb[0].mxu0
        %v4067 = vadd.f32 0.0, %v4066
        %v4068 = vpop.f32.mrb[0].mxu0
        %v4069 = vpop.f32.mrb[0].mxu0
        %v4070 = vpop.f32.mrb[0].mxu0
        %4071 = vdwg.mxu0
        %v4072 = vadd.f32 %v4022, %v4067
        %s4073 = scalar_lea.vmem %s635, 368 [#allocation2]
        %v4074 = vld [vmem:[%s4073] sm:$0xf]
        %v4075 = vld [vmem:[%s1067] sm:$0x3]
        %v4077 = vsel %vm689, %v4074, 0
        %v4080 = vand.u32 %v4075, %v696
        %4082 = vmatprep.subr.bf16.mxu0 0
        %4083 = vmatpush1.bf16.msra.mxu0 %v4080
        %4084 = vmatprep.subr.bf16.mxu0 0
        %4085 = vmatpush1.bf16.msra.mxu0 0
        %4086 = vmatprep.subr.bf16.mxu0 0
        %4087 = vmatpush1.bf16.msra.mxu0 0
        %4088 = vmatprep.subr.bf16.mxu0 0
        %4089 = vmatpush1.bf16.msra.mxu0 0
        %4090 = vmatprep.subr.bf16.mxu0 0
        %4091 = vmatpush1.bf16.msra.mxu0 0
        %4092 = vmatprep.subr.bf16.mxu0 0
        %4093 = vmatpush1.bf16.msra.mxu0 0
        %4094 = vmatprep.subr.bf16.mxu0 0
        %4095 = vmatpush1.bf16.msra.mxu0 0
        %4096 = vmatprep.subr.bf16.mxu0 0
        %4097 = vmatpush1.bf16.msra.mxu0 0
        %4098 = vmatprep.subr.bf16.mxu0 0
        %4099 = vmatpush1.bf16.msra.mxu0 0
        %4100 = vmatprep.subr.bf16.mxu0 0
        %4101 = vmatpush1.bf16.msra.mxu0 0
        %4102 = vmatprep.subr.bf16.mxu0 0
        %4103 = vmatpush1.bf16.msra.mxu0 0
        %4104 = vmatprep.subr.bf16.mxu0 0
        %4105 = vmatpush1.bf16.msra.mxu0 0
        %4106 = vmatprep.subr.bf16.mxu0 0
        %4107 = vmatpush1.bf16.msra.mxu0 0
        %4108 = vmatprep.subr.bf16.mxu0 0
        %4109 = vmatpush1.bf16.msra.mxu0 0
        %4110 = vmatprep.subr.bf16.mxu0 0
        %4111 = vmatpush1.bf16.msra.mxu0 0
        %4112 = vmatprep.subr.bf16.mxu0 0
        %4113 = vmatpush1.bf16.msra.mxu0 0
        %4114 = vmatprep.mubr.bf16.mxu0 0
        %4115 = vmatmul.mubr.bf16.gmra.mrb[0].mxu0 %v4077
        %v4116 = vpop.f32.mrb[0].mxu0
        %v4117 = vadd.f32 0.0, %v4116
        %v4118 = vpop.f32.mrb[0].mxu0
        %v4119 = vpop.f32.mrb[0].mxu0
        %v4120 = vpop.f32.mrb[0].mxu0
        %4121 = vdwg.mxu0
        %v4122 = vadd.f32 %v4072, %v4117
        %v4123 = vld [vmem:[%s4023] sm:$0xf]
        %v4124 = vld [vmem:[%s4023 + $0x4] sm:$0x1]
        %v4125 = vld [vmem:[%s1118] sm:$0x3]
        %v4128 = vunpack.c.l.b16 %v4123
        %v4129 = vunpack.c.l.b16 %v4124
        %v4130 = vpack.c.b16 %v4129, %v4128
        %v4132 = vshrl.u32 %v4130, 16
        %v4134 = vshll.u32 %v4130, 16
        %v4136 = vrot.slane %v4134, 1
        %v4137 = vor.u32 %v4132, %v4136
        %v4139 = vsel %vm689, %v4137, 0
        %v4142 = vand.u32 %v4125, %v696
        %4144 = vmatprep.subr.bf16.mxu0 0
        %4145 = vmatpush1.bf16.msra.mxu0 %v4142
        %4146 = vmatprep.subr.bf16.mxu0 0
        %4147 = vmatpush1.bf16.msra.mxu0 0
        %4148 = vmatprep.subr.bf16.mxu0 0
        %4149 = vmatpush1.bf16.msra.mxu0 0
        %4150 = vmatprep.subr.bf16.mxu0 0
        %4151 = vmatpush1.bf16.msra.mxu0 0
        %4152 = vmatprep.subr.bf16.mxu0 0
        %4153 = vmatpush1.bf16.msra.mxu0 0
        %4154 = vmatprep.subr.bf16.mxu0 0
        %4155 = vmatpush1.bf16.msra.mxu0 0
        %4156 = vmatprep.subr.bf16.mxu0 0
        %4157 = vmatpush1.bf16.msra.mxu0 0
        %4158 = vmatprep.subr.bf16.mxu0 0
        %4159 = vmatpush1.bf16.msra.mxu0 0
        %4160 = vmatprep.subr.bf16.mxu0 0
        %4161 = vmatpush1.bf16.msra.mxu0 0
        %4162 = vmatprep.subr.bf16.mxu0 0
        %4163 = vmatpush1.bf16.msra.mxu0 0
        %4164 = vmatprep.subr.bf16.mxu0 0
        %4165 = vmatpush1.bf16.msra.mxu0 0
        %4166 = vmatprep.subr.bf16.mxu0 0
        %4167 = vmatpush1.bf16.msra.mxu0 0
        %4168 = vmatprep.subr.bf16.mxu0 0
        %4169 = vmatpush1.bf16.msra.mxu0 0
        %4170 = vmatprep.subr.bf16.mxu0 0
        %4171 = vmatpush1.bf16.msra.mxu0 0
        %4172 = vmatprep.subr.bf16.mxu0 0
        %4173 = vmatpush1.bf16.msra.mxu0 0
        %4174 = vmatprep.subr.bf16.mxu0 0
        %4175 = vmatpush1.bf16.msra.mxu0 0
        %4176 = vmatprep.mubr.bf16.mxu0 0
        %4177 = vmatmul.mubr.bf16.gmra.mrb[0].mxu0 %v4139
        %v4178 = vpop.f32.mrb[0].mxu0
        %v4179 = vadd.f32 0.0, %v4178
        %v4180 = vpop.f32.mrb[0].mxu0
        %v4181 = vpop.f32.mrb[0].mxu0
        %v4182 = vpop.f32.mrb[0].mxu0
        %4183 = vdwg.mxu0
        %v4184 = vadd.f32 %v4122, %v4179
        %v4185 = vmul.f32 %v4184, %v1183
        %v4186 = vadd.f32 %v4185, %v1190
        %v4187 = vmin.f32 %v4186, 30.0
        %v4188 = vmul.f32 %v4187, 1.442695
        %v4189 = vpow.pop %v4188
        %v4190 = vadd.f32 %v4189, 2.0
        %v4191 = vmul.f32 %v4189, %v4190
        %v4192 = vadd.f32 %v4191, 2.0
        %v4193 = vrcp.pop %v4192
        %v4194 = vmul.f32 %v4193, 2.0
        %v4195 = vsub.f32 1.0, %v4194
        %v4196 = vmul.f32 %v4186, %v4195
        %v4197 = vpack.c.bf16 %v4196, %v4196
        %s4198 = scalar_lea.vmem %s667, 24 [#allocation3]
        %4199 = vst.msk [vmem:[%s4198] sm:$0xf] %vm1204, %v4197
        %s4200 = scalar_lea.vmem %s635, 56 [#allocation2]
        %v4201 = vld [vmem:[%s4200] sm:$0xf]
        %v4202 = vld [vmem:[%s672] sm:$0x3]
        %s4203 = scalar_lea.vmem %s635, 120 [#allocation2]
        %v4204 = vld [vmem:[%s4203] sm:$0xf]
        %v4205 = vld [vmem:[%s687] sm:$0x3]
        %v4207 = vsel %vm689, %v4204, 0
        %v4210 = vand.u32 %v4205, %v696
        %4212 = vmatprep.subr.bf16.mxu0 0
        %4213 = vmatpush1.bf16.msra.mxu0 %v4210
        %4214 = vmatprep.subr.bf16.mxu0 0
        %4215 = vmatpush1.bf16.msra.mxu0 0
        %4216 = vmatprep.subr.bf16.mxu0 0
        %4217 = vmatpush1.bf16.msra.mxu0 0
        %4218 = vmatprep.subr.bf16.mxu0 0
        %4219 = vmatpush1.bf16.msra.mxu0 0
        %4220 = vmatprep.subr.bf16.mxu0 0
        %4221 = vmatpush1.bf16.msra.mxu0 0
        %4222 = vmatprep.subr.bf16.mxu0 0
        %4223 = vmatpush1.bf16.msra.mxu0 0
        %4224 = vmatprep.subr.bf16.mxu0 0
        %4225 = vmatpush1.bf16.msra.mxu0 0
        %4226 = vmatprep.subr.bf16.mxu0 0
        %4227 = vmatpush1.bf16.msra.mxu0 0
        %4228 = vmatprep.subr.bf16.mxu0 0
        %4229 = vmatpush1.bf16.msra.mxu0 0
        %4230 = vmatprep.subr.bf16.mxu0 0
        %4231 = vmatpush1.bf16.msra.mxu0 0
        %4232 = vmatprep.subr.bf16.mxu0 0
        %4233 = vmatpush1.bf16.msra.mxu0 0
        %4234 = vmatprep.subr.bf16.mxu0 0
        %4235 = vmatpush1.bf16.msra.mxu0 0
        %4236 = vmatprep.subr.bf16.mxu0 0
        %4237 = vmatpush1.bf16.msra.mxu0 0
        %4238 = vmatprep.subr.bf16.mxu0 0
        %4239 = vmatpush1.bf16.msra.mxu0 0
        %4240 = vmatprep.subr.bf16.mxu0 0
        %4241 = vmatpush1.bf16.msra.mxu0 0
        %4242 = vmatprep.subr.bf16.mxu0 0
        %4243 = vmatpush1.bf16.msra.mxu0 0
        %4244 = vmatprep.mubr.bf16.mxu0 0
        %4245 = vmatmul.mubr.bf16.gmra.mrb[0].mxu0 %v4207
        %v4246 = vpop.f32.mrb[0].mxu0
        %v4247 = vadd.f32 0.0, %v4246
        %v4248 = vpop.f32.mrb[0].mxu0
        %v4249 = vpop.f32.mrb[0].mxu0
        %v4250 = vpop.f32.mrb[0].mxu0
        %4251 = vdwg.mxu0
        %v4253 = vsel %vm689, %v4201, 0
        %v4256 = vand.u32 %v4202, %v696
        %4258 = vmatprep.subr.bf16.mxu0 0
        %4259 = vmatpush1.bf16.msra.mxu0 %v4256
        %4260 = vmatprep.subr.bf16.mxu0 0
        %4261 = vmatpush1.bf16.msra.mxu0 0
        %4262 = vmatprep.subr.bf16.mxu0 0
        %4263 = vmatpush1.bf16.msra.mxu0 0
        %4264 = vmatprep.subr.bf16.mxu0 0
        %4265 = vmatpush1.bf16.msra.mxu0 0
        %4266 = vmatprep.subr.bf16.mxu0 0
        %4267 = vmatpush1.bf16.msra.mxu0 0
        %4268 = vmatprep.subr.bf16.mxu0 0
        %4269 = vmatpush1.bf16.msra.mxu0 0
        %4270 = vmatprep.subr.bf16.mxu0 0
        %4271 = vmatpush1.bf16.msra.mxu0 0
        %4272 = vmatprep.subr.bf16.mxu0 0
        %4273 = vmatpush1.bf16.msra.mxu0 0
        %4274 = vmatprep.subr.bf16.mxu0 0
        %4275 = vmatpush1.bf16.msra.mxu0 0
        %4276 = vmatprep.subr.bf16.mxu0 0
        %4277 = vmatpush1.bf16.msra.mxu0 0
        %4278 = vmatprep.subr.bf16.mxu0 0
        %4279 = vmatpush1.bf16.msra.mxu0 0
        %4280 = vmatprep.subr.bf16.mxu0 0
        %4281 = vmatpush1.bf16.msra.mxu0 0
        %4282 = vmatprep.subr.bf16.mxu0 0
        %4283 = vmatpush1.bf16.msra.mxu0 0
        %4284 = vmatprep.subr.bf16.mxu0 0
        %4285 = vmatpush1.bf16.msra.mxu0 0
        %4286 = vmatprep.subr.bf16.mxu0 0
        %4287 = vmatpush1.bf16.msra.mxu0 0
        %4288 = vmatprep.subr.bf16.mxu0 0
        %4289 = vmatpush1.bf16.msra.mxu0 0
        %4290 = vmatprep.mubr.bf16.mxu0 0
        %4291 = vmatmul.mubr.bf16.gmra.mrb[0].mxu0 %v4253
        %v4292 = vpop.f32.mrb[0].mxu0
        %v4293 = vadd.f32 %v4247, %v4292
        %v4294 = vpop.f32.mrb[0].mxu0
        %v4295 = vpop.f32.mrb[0].mxu0
        %v4296 = vpop.f32.mrb[0].mxu0
        %4297 = vdwg.mxu0
        %v4298 = vld [vmem:[%s4200] sm:$0xf]
        %v4299 = vld [vmem:[%s4200 + $0x4] sm:$0x1]
        %v4300 = vld [vmem:[%s788] sm:$0x3]
        %v4303 = vunpack.c.l.b16 %v4298
        %v4304 = vunpack.c.l.b16 %v4299
        %v4305 = vpack.c.b16 %v4304, %v4303
        %v4307 = vshrl.u32 %v4305, 16
        %v4309 = vshll.u32 %v4305, 16
        %v4311 = vrot.slane %v4309, 1
        %v4312 = vor.u32 %v4307, %v4311
        %v4314 = vsel %vm689, %v4312, 0
        %v4317 = vand.u32 %v4300, %v696
        %4319 = vmatprep.subr.bf16.mxu0 0
        %4320 = vmatpush1.bf16.msra.mxu0 %v4317
        %4321 = vmatprep.subr.bf16.mxu0 0
        %4322 = vmatpush1.bf16.msra.mxu0 0
        %4323 = vmatprep.subr.bf16.mxu0 0
        %4324 = vmatpush1.bf16.msra.mxu0 0
        %4325 = vmatprep.subr.bf16.mxu0 0
        %4326 = vmatpush1.bf16.msra.mxu0 0
        %4327 = vmatprep.subr.bf16.mxu0 0
        %4328 = vmatpush1.bf16.msra.mxu0 0
        %4329 = vmatprep.subr.bf16.mxu0 0
        %4330 = vmatpush1.bf16.msra.mxu0 0
        %4331 = vmatprep.subr.bf16.mxu0 0
        %4332 = vmatpush1.bf16.msra.mxu0 0
        %4333 = vmatprep.subr.bf16.mxu0 0
        %4334 = vmatpush1.bf16.msra.mxu0 0
        %4335 = vmatprep.subr.bf16.mxu0 0
        %4336 = vmatpush1.bf16.msra.mxu0 0
        %4337 = vmatprep.subr.bf16.mxu0 0
        %4338 = vmatpush1.bf16.msra.mxu0 0
        %4339 = vmatprep.subr.bf16.mxu0 0
        %4340 = vmatpush1.bf16.msra.mxu0 0
        %4341 = vmatprep.subr.bf16.mxu0 0
        %4342 = vmatpush1.bf16.msra.mxu0 0
        %4343 = vmatprep.subr.bf16.mxu0 0
        %4344 = vmatpush1.bf16.msra.mxu0 0
        %4345 = vmatprep.subr.bf16.mxu0 0
        %4346 = vmatpush1.bf16.msra.mxu0 0
        %4347 = vmatprep.subr.bf16.mxu0 0
        %4348 = vmatpush1.bf16.msra.mxu0 0
        %4349 = vmatprep.subr.bf16.mxu0 0
        %4350 = vmatpush1.bf16.msra.mxu0 0
        %4351 = vmatprep.mubr.bf16.mxu0 0
        %4352 = vmatmul.mubr.bf16.gmra.mrb[0].mxu0 %v4314
        %v4353 = vpop.f32.mrb[0].mxu0
        %v4354 = vadd.f32 0.0, %v4353
        %v4355 = vpop.f32.mrb[0].mxu0
        %v4356 = vpop.f32.mrb[0].mxu0
        %v4357 = vpop.f32.mrb[0].mxu0
        %4358 = vdwg.mxu0
        %v4359 = vadd.f32 %v4293, %v4354
        %s4360 = scalar_lea.vmem %s635, 184 [#allocation2]
        %v4361 = vld [vmem:[%s4360] sm:$0xf]
        %v4362 = vld [vmem:[%s851] sm:$0x3]
        %v4364 = vsel %vm689, %v4361, 0
        %v4367 = vand.u32 %v4362, %v696
        %4369 = vmatprep.subr.bf16.mxu0 0
        %4370 = vmatpush1.bf16.msra.mxu0 %v4367
        %4371 = vmatprep.subr.bf16.mxu0 0
        %4372 = vmatpush1.bf16.msra.mxu0 0
        %4373 = vmatprep.subr.bf16.mxu0 0
        %4374 = vmatpush1.bf16.msra.mxu0 0
        %4375 = vmatprep.subr.bf16.mxu0 0
        %4376 = vmatpush1.bf16.msra.mxu0 0
        %4377 = vmatprep.subr.bf16.mxu0 0
        %4378 = vmatpush1.bf16.msra.mxu0 0
        %4379 = vmatprep.subr.bf16.mxu0 0
        %4380 = vmatpush1.bf16.msra.mxu0 0
        %4381 = vmatprep.subr.bf16.mxu0 0
        %4382 = vmatpush1.bf16.msra.mxu0 0
        %4383 = vmatprep.subr.bf16.mxu0 0
        %4384 = vmatpush1.bf16.msra.mxu0 0
        %4385 = vmatprep.subr.bf16.mxu0 0
        %4386 = vmatpush1.bf16.msra.mxu0 0
        %4387 = vmatprep.subr.bf16.mxu0 0
        %4388 = vmatpush1.bf16.msra.mxu0 0
        %4389 = vmatprep.subr.bf16.mxu0 0
        %4390 = vmatpush1.bf16.msra.mxu0 0
        %4391 = vmatprep.subr.bf16.mxu0 0
        %4392 = vmatpush1.bf16.msra.mxu0 0
        %4393 = vmatprep.subr.bf16.mxu0 0
        %4394 = vmatpush1.bf16.msra.mxu0 0
        %4395 = vmatprep.subr.bf16.mxu0 0
        %4396 = vmatpush1.bf16.msra.mxu0 0
        %4397 = vmatprep.subr.bf16.mxu0 0
        %4398 = vmatpush1.bf16.msra.mxu0 0
        %4399 = vmatprep.subr.bf16.mxu0 0
        %4400 = vmatpush1.bf16.msra.mxu0 0
        %4401 = vmatprep.mubr.bf16.mxu0 0
        %4402 = vmatmul.mubr.bf16.gmra.mrb[0].mxu0 %v4364
        %v4403 = vpop.f32.mrb[0].mxu0
        %v4404 = vadd.f32 0.0, %v4403
        %v4405 = vpop.f32.mrb[0].mxu0
        %v4406 = vpop.f32.mrb[0].mxu0
        %v4407 = vpop.f32.mrb[0].mxu0
        %4408 = vdwg.mxu0
        %v4409 = vadd.f32 %v4359, %v4404
        %s4410 = scalar_lea.vmem %s635, 248 [#allocation2]
        %v4411 = vld [vmem:[%s4410] sm:$0xf]
        %v4412 = vld [vmem:[%s902] sm:$0x3]
        %v4414 = vsel %vm689, %v4411, 0
        %v4417 = vand.u32 %v4412, %v696
        %4419 = vmatprep.subr.bf16.mxu0 0
        %4420 = vmatpush1.bf16.msra.mxu0 %v4417
        %4421 = vmatprep.subr.bf16.mxu0 0
        %4422 = vmatpush1.bf16.msra.mxu0 0
        %4423 = vmatprep.subr.bf16.mxu0 0
        %4424 = vmatpush1.bf16.msra.mxu0 0
        %4425 = vmatprep.subr.bf16.mxu0 0
        %4426 = vmatpush1.bf16.msra.mxu0 0
        %4427 = vmatprep.subr.bf16.mxu0 0
        %4428 = vmatpush1.bf16.msra.mxu0 0
        %4429 = vmatprep.subr.bf16.mxu0 0
        %4430 = vmatpush1.bf16.msra.mxu0 0
        %4431 = vmatprep.subr.bf16.mxu0 0
        %4432 = vmatpush1.bf16.msra.mxu0 0
        %4433 = vmatprep.subr.bf16.mxu0 0
        %4434 = vmatpush1.bf16.msra.mxu0 0
        %4435 = vmatprep.subr.bf16.mxu0 0
        %4436 = vmatpush1.bf16.msra.mxu0 0
        %4437 = vmatprep.subr.bf16.mxu0 0
        %4438 = vmatpush1.bf16.msra.mxu0 0
        %4439 = vmatprep.subr.bf16.mxu0 0
        %4440 = vmatpush1.bf16.msra.mxu0 0
        %4441 = vmatprep.subr.bf16.mxu0 0
        %4442 = vmatpush1.bf16.msra.mxu0 0
        %4443 = vmatprep.subr.bf16.mxu0 0
        %4444 = vmatpush1.bf16.msra.mxu0 0
        %4445 = vmatprep.subr.bf16.mxu0 0
        %4446 = vmatpush1.bf16.msra.mxu0 0
        %4447 = vmatprep.subr.bf16.mxu0 0
        %4448 = vmatpush1.bf16.msra.mxu0 0
        %4449 = vmatprep.subr.bf16.mxu0 0
        %4450 = vmatpush1.bf16.msra.mxu0 0
        %4451 = vmatprep.mubr.bf16.mxu0 0
        %4452 = vmatmul.mubr.bf16.gmra.mrb[0].mxu0 %v4414
        %v4453 = vpop.f32.mrb[0].mxu0
        %v4454 = vadd.f32 0.0, %v4453
        %v4455 = vpop.f32.mrb[0].mxu0
        %v4456 = vpop.f32.mrb[0].mxu0
        %v4457 = vpop.f32.mrb[0].mxu0
        %4458 = vdwg.mxu0
        %v4459 = vadd.f32 %v4409, %v4454
        %v4460 = vld [vmem:[%s4360] sm:$0xf]
        %v4461 = vld [vmem:[%s4360 + $0x4] sm:$0x1]
        %v4462 = vld [vmem:[%s953] sm:$0x3]
        %v4465 = vunpack.c.l.b16 %v4460
        %v4466 = vunpack.c.l.b16 %v4461
        %v4467 = vpack.c.b16 %v4466, %v4465
        %v4469 = vshrl.u32 %v4467, 16
        %v4471 = vshll.u32 %v4467, 16
        %v4473 = vrot.slane %v4471, 1
        %v4474 = vor.u32 %v4469, %v4473
        %v4476 = vsel %vm689, %v4474, 0
        %v4479 = vand.u32 %v4462, %v696
        %4481 = vmatprep.subr.bf16.mxu0 0
        %4482 = vmatpush1.bf16.msra.mxu0 %v4479
        %4483 = vmatprep.subr.bf16.mxu0 0
        %4484 = vmatpush1.bf16.msra.mxu0 0
        %4485 = vmatprep.subr.bf16.mxu0 0
        %4486 = vmatpush1.bf16.msra.mxu0 0
        %4487 = vmatprep.subr.bf16.mxu0 0
        %4488 = vmatpush1.bf16.msra.mxu0 0
        %4489 = vmatprep.subr.bf16.mxu0 0
        %4490 = vmatpush1.bf16.msra.mxu0 0
        %4491 = vmatprep.subr.bf16.mxu0 0
        %4492 = vmatpush1.bf16.msra.mxu0 0
        %4493 = vmatprep.subr.bf16.mxu0 0
        %4494 = vmatpush1.bf16.msra.mxu0 0
        %4495 = vmatprep.subr.bf16.mxu0 0
        %4496 = vmatpush1.bf16.msra.mxu0 0
        %4497 = vmatprep.subr.bf16.mxu0 0
        %4498 = vmatpush1.bf16.msra.mxu0 0
        %4499 = vmatprep.subr.bf16.mxu0 0
        %4500 = vmatpush1.bf16.msra.mxu0 0
        %4501 = vmatprep.subr.bf16.mxu0 0
        %4502 = vmatpush1.bf16.msra.mxu0 0
        %4503 = vmatprep.subr.bf16.mxu0 0
        %4504 = vmatpush1.bf16.msra.mxu0 0
        %4505 = vmatprep.subr.bf16.mxu0 0
        %4506 = vmatpush1.bf16.msra.mxu0 0
        %4507 = vmatprep.subr.bf16.mxu0 0
        %4508 = vmatpush1.bf16.msra.mxu0 0
        %4509 = vmatprep.subr.bf16.mxu0 0
        %4510 = vmatpush1.bf16.msra.mxu0 0
        %4511 = vmatprep.subr.bf16.mxu0 0
        %4512 = vmatpush1.bf16.msra.mxu0 0
        %4513 = vmatprep.mubr.bf16.mxu0 0
        %4514 = vmatmul.mubr.bf16.gmra.mrb[0].mxu0 %v4476
        %v4515 = vpop.f32.mrb[0].mxu0
        %v4516 = vadd.f32 0.0, %v4515
        %v4517 = vpop.f32.mrb[0].mxu0
        %v4518 = vpop.f32.mrb[0].mxu0
        %v4519 = vpop.f32.mrb[0].mxu0
        %4520 = vdwg.mxu0
        %v4521 = vadd.f32 %v4459, %v4516
        %s4522 = scalar_lea.vmem %s635, 312 [#allocation2]
        %v4523 = vld [vmem:[%s4522] sm:$0xf]
        %v4524 = vld [vmem:[%s1016] sm:$0x3]
        %v4526 = vsel %vm689, %v4523, 0
        %v4529 = vand.u32 %v4524, %v696
        %4531 = vmatprep.subr.bf16.mxu0 0
        %4532 = vmatpush1.bf16.msra.mxu0 %v4529
        %4533 = vmatprep.subr.bf16.mxu0 0
        %4534 = vmatpush1.bf16.msra.mxu0 0
        %4535 = vmatprep.subr.bf16.mxu0 0
        %4536 = vmatpush1.bf16.msra.mxu0 0
        %4537 = vmatprep.subr.bf16.mxu0 0
        %4538 = vmatpush1.bf16.msra.mxu0 0
        %4539 = vmatprep.subr.bf16.mxu0 0
        %4540 = vmatpush1.bf16.msra.mxu0 0
        %4541 = vmatprep.subr.bf16.mxu0 0
        %4542 = vmatpush1.bf16.msra.mxu0 0
        %4543 = vmatprep.subr.bf16.mxu0 0
        %4544 = vmatpush1.bf16.msra.mxu0 0
        %4545 = vmatprep.subr.bf16.mxu0 0
        %4546 = vmatpush1.bf16.msra.mxu0 0
        %4547 = vmatprep.subr.bf16.mxu0 0
        %4548 = vmatpush1.bf16.msra.mxu0 0
        %4549 = vmatprep.subr.bf16.mxu0 0
        %4550 = vmatpush1.bf16.msra.mxu0 0
        %4551 = vmatprep.subr.bf16.mxu0 0
        %4552 = vmatpush1.bf16.msra.mxu0 0
        %4553 = vmatprep.subr.bf16.mxu0 0
        %4554 = vmatpush1.bf16.msra.mxu0 0
        %4555 = vmatprep.subr.bf16.mxu0 0
        %4556 = vmatpush1.bf16.msra.mxu0 0
        %4557 = vmatprep.subr.bf16.mxu0 0
        %4558 = vmatpush1.bf16.msra.mxu0 0
        %4559 = vmatprep.subr.bf16.mxu0 0
        %4560 = vmatpush1.bf16.msra.mxu0 0
        %4561 = vmatprep.subr.bf16.mxu0 0
        %4562 = vmatpush1.bf16.msra.mxu0 0
        %4563 = vmatprep.mubr.bf16.mxu0 0
        %4564 = vmatmul.mubr.bf16.gmra.mrb[0].mxu0 %v4526
        %v4565 = vpop.f32.mrb[0].mxu0
        %v4566 = vadd.f32 0.0, %v4565
        %v4567 = vpop.f32.mrb[0].mxu0
        %v4568 = vpop.f32.mrb[0].mxu0
        %v4569 = vpop.f32.mrb[0].mxu0
        %4570 = vdwg.mxu0
        %v4571 = vadd.f32 %v4521, %v4566
        %s4572 = scalar_lea.vmem %s635, 376 [#allocation2]
        %v4573 = vld [vmem:[%s4572] sm:$0xf]
        %v4574 = vld [vmem:[%s1067] sm:$0x3]
        %v4576 = vsel %vm689, %v4573, 0
        %v4579 = vand.u32 %v4574, %v696
        %4581 = vmatprep.subr.bf16.mxu0 0
        %4582 = vmatpush1.bf16.msra.mxu0 %v4579
        %4583 = vmatprep.subr.bf16.mxu0 0
        %4584 = vmatpush1.bf16.msra.mxu0 0
        %4585 = vmatprep.subr.bf16.mxu0 0
        %4586 = vmatpush1.bf16.msra.mxu0 0
        %4587 = vmatprep.subr.bf16.mxu0 0
        %4588 = vmatpush1.bf16.msra.mxu0 0
        %4589 = vmatprep.subr.bf16.mxu0 0
        %4590 = vmatpush1.bf16.msra.mxu0 0
        %4591 = vmatprep.subr.bf16.mxu0 0
        %4592 = vmatpush1.bf16.msra.mxu0 0
        %4593 = vmatprep.subr.bf16.mxu0 0
        %4594 = vmatpush1.bf16.msra.mxu0 0
        %4595 = vmatprep.subr.bf16.mxu0 0
        %4596 = vmatpush1.bf16.msra.mxu0 0
        %4597 = vmatprep.subr.bf16.mxu0 0
        %4598 = vmatpush1.bf16.msra.mxu0 0
        %4599 = vmatprep.subr.bf16.mxu0 0
        %4600 = vmatpush1.bf16.msra.mxu0 0
        %4601 = vmatprep.subr.bf16.mxu0 0
        %4602 = vmatpush1.bf16.msra.mxu0 0
        %4603 = vmatprep.subr.bf16.mxu0 0
        %4604 = vmatpush1.bf16.msra.mxu0 0
        %4605 = vmatprep.subr.bf16.mxu0 0
        %4606 = vmatpush1.bf16.msra.mxu0 0
        %4607 = vmatprep.subr.bf16.mxu0 0
        %4608 = vmatpush1.bf16.msra.mxu0 0
        %4609 = vmatprep.subr.bf16.mxu0 0
        %4610 = vmatpush1.bf16.msra.mxu0 0
        %4611 = vmatprep.subr.bf16.mxu0 0
        %4612 = vmatpush1.bf16.msra.mxu0 0
        %4613 = vmatprep.mubr.bf16.mxu0 0
        %4614 = vmatmul.mubr.bf16.gmra.mrb[0].mxu0 %v4576
        %v4615 = vpop.f32.mrb[0].mxu0
        %v4616 = vadd.f32 0.0, %v4615
        %v4617 = vpop.f32.mrb[0].mxu0
        %v4618 = vpop.f32.mrb[0].mxu0
        %v4619 = vpop.f32.mrb[0].mxu0
        %4620 = vdwg.mxu0
        %v4621 = vadd.f32 %v4571, %v4616
        %v4622 = vld [vmem:[%s4522] sm:$0xf]
        %v4623 = vld [vmem:[%s4522 + $0x4] sm:$0x1]
        %v4624 = vld [vmem:[%s1118] sm:$0x3]
        %v4627 = vunpack.c.l.b16 %v4622
        %v4628 = vunpack.c.l.b16 %v4623
        %v4629 = vpack.c.b16 %v4628, %v4627
        %v4631 = vshrl.u32 %v4629, 16
        %v4633 = vshll.u32 %v4629, 16
        %v4635 = vrot.slane %v4633, 1
        %v4636 = vor.u32 %v4631, %v4635
        %v4638 = vsel %vm689, %v4636, 0
        %v4641 = vand.u32 %v4624, %v696
        %4643 = vmatprep.subr.bf16.mxu0 0
        %4644 = vmatpush1.bf16.msra.mxu0 %v4641
        %4645 = vmatprep.subr.bf16.mxu0 0
        %4646 = vmatpush1.bf16.msra.mxu0 0
        %4647 = vmatprep.subr.bf16.mxu0 0
        %4648 = vmatpush1.bf16.msra.mxu0 0
        %4649 = vmatprep.subr.bf16.mxu0 0
        %4650 = vmatpush1.bf16.msra.mxu0 0
        %4651 = vmatprep.subr.bf16.mxu0 0
        %4652 = vmatpush1.bf16.msra.mxu0 0
        %4653 = vmatprep.subr.bf16.mxu0 0
        %4654 = vmatpush1.bf16.msra.mxu0 0
        %4655 = vmatprep.subr.bf16.mxu0 0
        %4656 = vmatpush1.bf16.msra.mxu0 0
        %4657 = vmatprep.subr.bf16.mxu0 0
        %4658 = vmatpush1.bf16.msra.mxu0 0
        %4659 = vmatprep.subr.bf16.mxu0 0
        %4660 = vmatpush1.bf16.msra.mxu0 0
        %4661 = vmatprep.subr.bf16.mxu0 0
        %4662 = vmatpush1.bf16.msra.mxu0 0
        %4663 = vmatprep.subr.bf16.mxu0 0
        %4664 = vmatpush1.bf16.msra.mxu0 0
        %4665 = vmatprep.subr.bf16.mxu0 0
        %4666 = vmatpush1.bf16.msra.mxu0 0
        %4667 = vmatprep.subr.bf16.mxu0 0
        %4668 = vmatpush1.bf16.msra.mxu0 0
        %4669 = vmatprep.subr.bf16.mxu0 0
        %4670 = vmatpush1.bf16.msra.mxu0 0
        %4671 = vmatprep.subr.bf16.mxu0 0
        %4672 = vmatpush1.bf16.msra.mxu0 0
        %4673 = vmatprep.subr.bf16.mxu0 0
        %4674 = vmatpush1.bf16.msra.mxu0 0
        %4675 = vmatprep.mubr.bf16.mxu0 0
        %4676 = vmatmul.mubr.bf16.gmra.mrb[0].mxu0 %v4638
        %v4677 = vpop.f32.mrb[0].mxu0
        %v4678 = vadd.f32 0.0, %v4677
        %v4679 = vpop.f32.mrb[0].mxu0
        %v4680 = vpop.f32.mrb[0].mxu0
        %v4681 = vpop.f32.mrb[0].mxu0
        %4682 = vdwg.mxu0
        %v4683 = vadd.f32 %v4621, %v4678
        %v4684 = vmul.f32 %v4683, %v1183
        %v4685 = vadd.f32 %v4684, %v1190
        %v4686 = vmin.f32 %v4685, 30.0
        %v4687 = vmul.f32 %v4686, 1.442695
        %v4688 = vpow.pop %v4687
        %v4689 = vadd.f32 %v4688, 2.0
        %v4690 = vmul.f32 %v4688, %v4689
        %v4691 = vadd.f32 %v4690, 2.0
        %v4692 = vrcp.pop %v4691
        %v4693 = vmul.f32 %v4692, 2.0
        %v4694 = vsub.f32 1.0, %v4693
        %v4695 = vmul.f32 %v4685, %v4694
        %v4696 = vpack.c.bf16 %v4695, %v4695
        %s4697 = scalar_lea.vmem %s667, 28 [#allocation3]
        %4698 = vst.msk [vmem:[%s4697] sm:$0xf] %vm1204, %v4696
        %s4699 = sand.u32 %s144, 1
        %s4700 = scalar_lea.sflag [#allocation4], %s4699
        %s4701 = sand.u32 %s144, 1
        %s4702 = smul.addr %s4701, 32
        %s4703 = scalar_lea.vmem [#allocation3], %s4702
        // Predicated region
        $region78: #{conv2d_bn_act.1} parent=72 // pred_check
          %p4704 = pneg %p154
        $region79: #{conv2d_bn_act.1} parent=72 // pred_check_branch
          %4706 = sbr.rel (%p4704) target = $region81
        $region80: #{conv2d_bn_act.1} parent=72 // pred_region
          %s4707 = smul.u32 8, %s22
          %s4709 = ssub.s32 512, 512
          %4710 = vsyncadd %s4700, %s4709
          %s4711 = sadd.s32 %s23, %s4707
          %s4712 = smul.addr %s4711, 64
          %s4713 = scalar_lea.hbm %s4, %s4712
          %s4714 = sshll.u32 %s4703, 4
          %s4715 = int_to_ptr.vmem [resolvable:$true] %s4714
          %4720 = dma.vmem_to_hbm [thread:$0]  %s4715, 512, %s4713, %s4700, 64, 64, 4
        $region81: #{conv2d_bn_act.1} parent=72 // pred_fallthru
          _
      $region73: #{conv2d_bn_act.1} parent=5 // pred_fallthru
        _
      %p4721 = scmp.le.s32.totalorder 2, %s13
      // Predicated region
      $region82: #{conv2d_bn_act.1} parent=5 // pred_check
        %p4722 = pneg %p4721
      $region83: #{conv2d_bn_act.1} parent=5 // pred_check_branch
        %4724 = sbr.rel (%p4722) target = $region85
      $region84: #{conv2d_bn_act.1} parent=5 // pred_region
        %s4725 = ssub.s32 %s13, 2
        // Predicated region
        $region86: #{conv2d_bn_act.1} parent=84 // pred_check
          %p4726 = pneg %p160
        $region87: #{conv2d_bn_act.1} parent=84 // pred_check_branch
          %4728 = sbr.rel (%p4726) target = $region89
        $region88: #{conv2d_bn_act.1} parent=84 // pred_region
          %s4729 = sand.u32 %s145, 1
          %s4730 = scalar_lea.sflag [#allocation4], %s4729
          %s4731 = sand.u32 %s145, 1
          %s4732 = smul.addr %s4731, 32
          %s4733 = scalar_lea.vmem [#allocation3], %s4732
          %4734 = dma.done %s4730, 512
        $region89: #{conv2d_bn_act.1} parent=84 // pred_fallthru
          _
      $region85: #{conv2d_bn_act.1} parent=5 // pred_fallthru
        _
    $region6: #{conv2d_bn_act.1} parent=1 // loop_footer
      %s17 = sadd.s32 1, %s13
    $region7: #{conv2d_bn_act.1} parent=1 // loop_footer_branch
      %12 = sbr.rel target = $region3
    $region8: #{conv2d_bn_act.1} parent=1 // loop_exit
      _
    %4735 = vsyncpa [#allocation4], 1
    %s4736 = scalar_lea.sflag [#allocation4], 1
    %4737 = vsyncpa %s4736, 1

</llo_original>
